<compile_context>
chip_gen: v7x
topology: tpu7x:2x2x1
jax: 0.10.0
libtpu: 0.0.40
codegen_flags: <defaults>
</compile_context>

<pallas_src>
import functools

import jax
import jax.numpy as jnp
import numpy as np
from jax import lax
from jax.experimental import pallas as pl
from jax.experimental.pallas import tpu as pltpu

LANES = 128
IM2COL_LANES = 128        # layer-0 contraction width (K0*C_in = 28 real cols, rest zero)

# (C_out, K, stride, padding, apply_silu) — mirrors the PyTorch Sequential.
LAYER_CFG = [
    (32, 7, 2, 3, True),
    (64, 5, 2, 2, True),
    (128, 3, 2, 0, True),
    (48, 3, 2, 0, True),
    (24, 3, 2, 0, False),   # last conv + BN, no SiLU, then Flatten
]


def _round_up(n, m):
    return (n + m - 1) // m * m


def _plan(c_in, length):
    """Static per-layer geometry for an input of shape (c_in, length)."""
    plan = []
    l_in = length
    for (c_out, k, stride, pad, silu) in LAYER_CFG:
        l_out = (l_in + 2 * pad - k) // stride + 1
        rows = _round_up(l_in + 2 * pad, 8)   # VMEM buffer rows (incl. conv padding)
        plan.append(dict(c_in=c_in, c_out=c_out, k=k, stride=stride, pad=pad,
                         silu=silu, l_in=l_in, l_out=l_out, rows=rows))
        l_in, c_in = l_out, c_out
    return plan


def _silu(y):
    # exact sigmoid with a single EUP transcendental: sigmoid(y) = 0.5*tanh(0.5*y)+0.5
    return y * (0.5 * jnp.tanh(0.5 * y) + 0.5)


def _fused_kernel(x_ref, w0, w1, w2, w3, w4, b_ref, o_ref,
                  a1, a2, a3, a4, *, plan, b_tile, cdtype):
    acts = (None, a1, a2, a3, a4)           # layer-i INPUT buffer (per-sample regions)
    weights = (w0, w1, w2, w3, w4)

    # ---- zero only the conv-padding rows that are actually read ------------
    # (data rows are fully overwritten each step; padded lanes stay zero because
    #  weights/bias are zero-padded; round-up tail rows are never read)
    for i in range(1, 5):
        lc = plan[i]
        buf = acts[i]
        max_acc = (lc["k"] - 1) + lc["stride"] * (lc["l_out"] - 1)   # last row read
        top = lc["pad"]
        bot_lo = lc["pad"] + lc["l_in"]
        bot_hi = max_acc + 1
        for s in range(b_tile):
            base = s * lc["rows"]
            if top > 0:
                buf[pl.ds(base, top), :] = jnp.zeros((top, LANES), jnp.float32)
            if bot_hi > bot_lo:
                buf[pl.ds(base + bot_lo, bot_hi - bot_lo), :] = (
                    jnp.zeros((bot_hi - bot_lo, LANES), jnp.float32))

    # ---- layer 0: one im2col matmul for the whole batch tile ---------------
    lc0, lc1 = plan[0], plan[1]
    l0 = lc0["l_out"]
    x_all = x_ref[...].reshape(b_tile * l0, IM2COL_LANES)      # (B_TILE*64, 128) cdtype
    acc0 = jnp.dot(x_all, w0[...], preferred_element_type=jnp.float32)
    y0 = acc0 + b_ref[pl.ds(0, 1), :]
    y0 = _silu(y0)
    for s in range(b_tile):
        a1[pl.ds(s * lc1["rows"] + lc1["pad"], l0), :] = y0[s * l0:(s + 1) * l0, :]

    # ---- layers 1..4, per sample (each sample owns its scratch region) -----
    for s in range(b_tile):
        for i in range(1, 5):
            lc = plan[i]
            buf = acts[i]
            w_ref = weights[i]
            base = s * lc["rows"]
            l_out, stride = lc["l_out"], lc["stride"]

            # Conv1d as K shifted strided-slice matmuls (bf16 operands, f32 acc).
            acc = jnp.dot(buf[pl.ds(base, l_out, stride=stride), :].astype(cdtype),
                          w_ref[0], preferred_element_type=jnp.float32)
            for k in range(1, lc["k"]):
                acc = acc + jnp.dot(
                    buf[pl.ds(base + k, l_out, stride=stride), :].astype(cdtype),
                    w_ref[k], preferred_element_type=jnp.float32)

            y = acc + b_ref[pl.ds(i, 1), :]       # folded BatchNorm shift
            if lc["silu"]:
                y = _silu(y)

            if i + 1 < 5:
                nxt = plan[i + 1]
                nbase = s * nxt["rows"] + nxt["pad"]
                acts[i + 1][pl.ds(nbase, l_out), :] = y       # lane-dense f32 store
            else:
                o_ref[s] = y.astype(o_ref.dtype)              # (L_fin, 128) store


def _im2col_layer0(x, lc0):
    """Wrapper-side im2col for layer 0: (B, C, T) -> (B, L0_out, 128)."""
    B, C, T = x.shape
    k, stride, pad, l_out = lc0["k"], lc0["stride"], lc0["pad"], lc0["l_out"]
    xp = jnp.pad(x, ((0, 0), (0, 0), (pad, pad)))
    idx = jnp.arange(l_out)[:, None] * stride + jnp.arange(k)[None, :]   # (l_out, K)
    cols = xp[:, :, idx]                                   # (B, C, l_out, K)
    cols = jnp.transpose(cols, (0, 2, 3, 1)).reshape(B, l_out, k * C)    # col = kk*C + ci
    return jnp.pad(cols, ((0, 0), (0, 0), (0, IM2COL_LANES - k * C)))


def pack_params(params, in_channels, length, compute_dtype=jnp.bfloat16):
    """Fold BN scale into conv weights, pad to 128 lanes, cast to compute dtype.
    Call ONCE (hoisted out of the per-forward path)."""
    plan = _plan(in_channels, length)

    lc0, p0 = plan[0], params[0]
    assert lc0["k"] * lc0["c_in"] <= IM2COL_LANES
    w0 = p0["w"] * p0["scale"][:, None, None]                           # (C_out, C_in, K)
    w0 = jnp.transpose(w0, (2, 1, 0)).reshape(lc0["k"] * lc0["c_in"], lc0["c_out"])
    w0p = jnp.zeros((IM2COL_LANES, LANES), jnp.float32)
    w0p = w0p.at[:w0.shape[0], :w0.shape[1]].set(w0)
    ws = [w0p.astype(compute_dtype)]
    biases = [jnp.zeros((LANES,), jnp.float32).at[:lc0["c_out"]].set(p0["bias"])]

    for p, lc in zip(params[1:], plan[1:]):
        w_fold = p["w"] * p["scale"][:, None, None]                     # (C_out, C_in, K)
        w_kio = jnp.transpose(w_fold, (2, 1, 0))                        # (K, C_in, C_out)
        wp = jnp.zeros((lc["k"], LANES, LANES), jnp.float32)
        wp = wp.at[:, :lc["c_in"], :lc["c_out"]].set(w_kio)
        ws.append(wp.astype(compute_dtype))
        biases.append(jnp.zeros((LANES,), jnp.float32).at[:lc["c_out"]].set(p["bias"]))

    b_all = jnp.zeros((8, LANES), jnp.float32).at[:len(biases)].set(jnp.stack(biases))
    return dict(ws=tuple(ws), bias=b_all)


def _pick_b_tile(batch):
    if batch <= 1:
        return 1
    # keep the grid length >= 2 so both v7x TensorCores get work; cap the tile at 8
    return min(8, max(1, batch // 2))


@jax.jit
def feature_network_medium(x, packed):
    """x: (B, C_in, T) float32 -> flattened features (B, 24 * L_final)."""
    B, C_in, T = x.shape
    plan = _plan(C_in, T)
    ws, b_all = packed["ws"], packed["bias"]
    cdtype = ws[0].dtype

    b_tile = _pick_b_tile(B)
    n_tiles = -(-B // b_tile)
    B_pad = n_tiles * b_tile
    if B_pad != B:
        x = jnp.pad(x, ((0, B_pad - B), (0, 0), (0, 0)))

    x_cols = _im2col_layer0(x, plan[0]).astype(cdtype)       # (B_pad, L0, 128)

    L0 = plan[0]["l_out"]
    last = plan[-1]
    L_fin, C_fin = last["l_out"], last["c_out"]

    kernel = functools.partial(_fused_kernel, plan=plan, b_tile=b_tile, cdtype=cdtype)

    grid_spec = pltpu.PrefetchScalarGridSpec(
        num_scalar_prefetch=0,
        grid=(n_tiles,),
        in_specs=(
            [pl.BlockSpec((b_tile, L0, IM2COL_LANES), lambda b: (b, 0, 0)),
             pl.BlockSpec((IM2COL_LANES, LANES), lambda b: (0, 0))]
            + [pl.BlockSpec((lc["k"], LANES, LANES), lambda b: (0, 0, 0))
               for lc in plan[1:]]
            + [pl.BlockSpec((8, LANES), lambda b: (0, 0))]
        ),
        out_specs=pl.BlockSpec((b_tile, L_fin, LANES), lambda b: (b, 0, 0)),
        scratch_shapes=[pltpu.VMEM((b_tile * lc["rows"], LANES), jnp.float32)
                        for lc in plan[1:]],
    )

    out = pl.pallas_call(
        kernel,
        out_shape=jax.ShapeDtypeStruct((B_pad, L_fin, LANES), jnp.float32),
        grid_spec=grid_spec,
        compiler_params=pltpu.CompilerParams(dimension_semantics=("parallel",)),
    )(x_cols, *ws, b_all)

    # nn.Flatten of (B, C_out, L_out) is channel-major:
    feat = jnp.transpose(out[:B, :, :C_fin], (0, 2, 1)).reshape(B, C_fin * L_fin)
    return feat


def init_params(key, in_channels):
    params = []
    c_in = in_channels
    eps = 1e-5
    for (c_out, k, _stride, _pad, _silu) in LAYER_CFG:
        key, kw, kg, kb, km, kv = jax.random.split(key, 6)
        fan_in = c_in * k
        w = jax.random.normal(kw, (c_out, c_in, k), jnp.float32) * jnp.sqrt(2.0 / fan_in)
        gamma = jax.random.uniform(kg, (c_out,), jnp.float32, 0.5, 1.5)
        beta = 0.1 * jax.random.normal(kb, (c_out,), jnp.float32)
        running_mean = 0.1 * jax.random.normal(km, (c_out,), jnp.float32)
        running_var = jax.random.uniform(kv, (c_out,), jnp.float32, 0.5, 1.5)
        scale = gamma / jnp.sqrt(running_var + eps)
        bias = beta - running_mean * scale
        params.append(dict(w=w, scale=scale, bias=bias))
        c_in = c_out
    return params


def _ref_forward(x, params, operand_dtype=jnp.float32):
    """Pure-JAX reference (lax.conv). operand_dtype=bfloat16 mirrors the
    kernel's bf16 MXU operands (f32 accumulation)."""
    for p, (c_out, k, stride, pad, silu) in zip(params, LAYER_CFG):
        w = (p["w"] * p["scale"][:, None, None]).astype(operand_dtype)
        y = lax.conv_general_dilated(
            x.astype(operand_dtype), w, window_strides=(stride,),
            padding=[(pad, pad)],
            dimension_numbers=("NCH", "OIH", "NCH"),
            preferred_element_type=jnp.float32,
            precision=lax.Precision.HIGHEST)
        y = y + p["bias"][None, :, None]
        if silu:
            y = y * jax.nn.sigmoid(y)
        x = y
    return x.reshape(x.shape[0], -1)


if __name__ == "__main__":
    key = jax.random.PRNGKey(0)
    kx, kp = jax.random.split(key)

    B, C, T = 8, 4, 128        # FeatureNetwork_medium(1, (4, 128)); B=8 exercises batch tiling
    x = jax.random.normal(kx, (B, C, T), jnp.float32)
    params = init_params(kp, C)

    # sequence lengths: 128 -> 64 -> 32 -> 15 -> 7 -> 3 ; 24 channels -> flatten 72

    # --- f32 path: strict semantic check against the exact f32 reference ----
    packed_f32 = pack_params(params, C, T, jnp.float32)
    out_f32 = jax.block_until_ready(feature_network_medium(x, packed_f32))
    assert out_f32.shape == (B, 72), out_f32.shape
    ref_f32 = _ref_forward(x, params, jnp.float32)
    np.testing.assert_allclose(np.asarray(out_f32), np.asarray(ref_f32),
                               rtol=5e-3, atol=5e-3)

    # --- bf16 fast path (default): check against a bf16-operand reference ---
    packed_bf16 = pack_params(params, C, T, jnp.bfloat16)
    out_bf16 = jax.block_until_ready(feature_network_medium(x, packed_bf16))
    assert out_bf16.shape == (B, 72), out_bf16.shape
    ref_bf16 = _ref_forward(x, params, jnp.bfloat16)
    np.testing.assert_allclose(np.asarray(out_bf16), np.asarray(ref_bf16),
                               rtol=3e-2, atol=3e-2)

    print("KERNEL_OK")
</pallas_src>

<mosaic_0001>
module attributes {stable_mosaic.version = 11 : i64} {
  func.func @_fused_kernel(%arg0: i32, %arg1: memref<4x64x128xf32, #tpu.memory_space<vmem>>, %arg2: memref<128x128xf32, #tpu.memory_space<vmem>>, %arg3: memref<5x128x128xf32, #tpu.memory_space<vmem>>, %arg4: memref<3x128x128xf32, #tpu.memory_space<vmem>>, %arg5: memref<3x128x128xf32, #tpu.memory_space<vmem>>, %arg6: memref<3x128x128xf32, #tpu.memory_space<vmem>>, %arg7: memref<8x128xf32, #tpu.memory_space<vmem>>, %arg8: memref<4x3x128xf32, #tpu.memory_space<vmem>>, %arg9: memref<288x128xf32, #tpu.memory_space<vmem>>, %arg10: memref<128x128xf32, #tpu.memory_space<vmem>>, %arg11: memref<64x128xf32, #tpu.memory_space<vmem>>, %arg12: memref<32x128xf32, #tpu.memory_space<vmem>>) attributes {dimension_semantics = [#tpu.dimension_semantics<parallel>], iteration_bounds = array<i64: 2>, scalar_prefetch = 0 : i64, scratch_operands = 4 : i64, tpu.core_type = #tpu.core_type<tc>, window_params = [{transform_indices = @transform_0, window_bounds = array<i64: 4, 64, 128>}, {pipeline_mode = #tpu.pipeline_mode<synchronous>, transform_indices = @transform_1, window_bounds = array<i64: 128, 128>}, {pipeline_mode = #tpu.pipeline_mode<synchronous>, transform_indices = @transform_2, window_bounds = array<i64: 5, 128, 128>}, {pipeline_mode = #tpu.pipeline_mode<synchronous>, transform_indices = @transform_3, window_bounds = array<i64: 3, 128, 128>}, {pipeline_mode = #tpu.pipeline_mode<synchronous>, transform_indices = @transform_4, window_bounds = array<i64: 3, 128, 128>}, {pipeline_mode = #tpu.pipeline_mode<synchronous>, transform_indices = @transform_5, window_bounds = array<i64: 3, 128, 128>}, {pipeline_mode = #tpu.pipeline_mode<synchronous>, transform_indices = @transform_6, window_bounds = array<i64: 8, 128>}, {transform_indices = @transform_7, window_bounds = array<i64: 4, 3, 128>}]} {
    %cst = arith.constant 0.000000e+00 : f32
    %0 = vector.broadcast %cst : f32 to vector<2x128xf32>
    %c0 = arith.constant 0 : index
    %c0_0 = arith.constant 0 : index
    %1 = vector.load %arg9[%c0, %c0_0] : memref<288x128xf32, #tpu.memory_space<vmem>>, vector<2x128xf32>
    tpu.vector_store %arg9[%c0, %c0_0], %0 {strides = array<i32>} : memref<288x128xf32, #tpu.memory_space<vmem>>, vector<2x128xf32>,
    %cst_1 = arith.constant 0.000000e+00 : f32
    %2 = vector.broadcast %cst_1 : f32 to vector<1x128xf32>
    %c66 = arith.constant 66 : index
    %c0_2 = arith.constant 0 : index
    %3 = vector.load %arg9[%c66, %c0_2] : memref<288x128xf32, #tpu.memory_space<vmem>>, vector<1x128xf32>
    tpu.vector_store %arg9[%c66, %c0_2], %2 {strides = array<i32>} : memref<288x128xf32, #tpu.memory_space<vmem>>, vector<1x128xf32>,
    %cst_3 = arith.constant 0.000000e+00 : f32
    %4 = vector.broadcast %cst_3 : f32 to vector<2x128xf32>
    %c72 = arith.constant 72 : index
    %c0_4 = arith.constant 0 : index
    %5 = vector.load %arg9[%c72, %c0_4] : memref<288x128xf32, #tpu.memory_space<vmem>>, vector<2x128xf32>
    tpu.vector_store %arg9[%c72, %c0_4], %4 {strides = array<i32>} : memref<288x128xf32, #tpu.memory_space<vmem>>, vector<2x128xf32>,
    %cst_5 = arith.constant 0.000000e+00 : f32
    %6 = vector.broadcast %cst_5 : f32 to vector<1x128xf32>
    %c138 = arith.constant 138 : index
    %c0_6 = arith.constant 0 : index
    %7 = vector.load %arg9[%c138, %c0_6] : memref<288x128xf32, #tpu.memory_space<vmem>>, vector<1x128xf32>
    tpu.vector_store %arg9[%c138, %c0_6], %6 {strides = array<i32>} : memref<288x128xf32, #tpu.memory_space<vmem>>, vector<1x128xf32>,
    %cst_7 = arith.constant 0.000000e+00 : f32
    %8 = vector.broadcast %cst_7 : f32 to vector<2x128xf32>
    %c144 = arith.constant 144 : index
    %c0_8 = arith.constant 0 : index
    %9 = vector.load %arg9[%c144, %c0_8] : memref<288x128xf32, #tpu.memory_space<vmem>>, vector<2x128xf32>
    tpu.vector_store %arg9[%c144, %c0_8], %8 {strides = array<i32>} : memref<288x128xf32, #tpu.memory_space<vmem>>, vector<2x128xf32>,
    %cst_9 = arith.constant 0.000000e+00 : f32
    %10 = vector.broadcast %cst_9 : f32 to vector<1x128xf32>
    %c210 = arith.constant 210 : index
    %c0_10 = arith.constant 0 : index
    %11 = vector.load %arg9[%c210, %c0_10] : memref<288x128xf32, #tpu.memory_space<vmem>>, vector<1x128xf32>
    tpu.vector_store %arg9[%c210, %c0_10], %10 {strides = array<i32>} : memref<288x128xf32, #tpu.memory_space<vmem>>, vector<1x128xf32>,
    %cst_11 = arith.constant 0.000000e+00 : f32
    %12 = vector.broadcast %cst_11 : f32 to vector<2x128xf32>
    %c216 = arith.constant 216 : index
    %c0_12 = arith.constant 0 : index
    %13 = vector.load %arg9[%c216, %c0_12] : memref<288x128xf32, #tpu.memory_space<vmem>>, vector<2x128xf32>
    tpu.vector_store %arg9[%c216, %c0_12], %12 {strides = array<i32>} : memref<288x128xf32, #tpu.memory_space<vmem>>, vector<2x128xf32>,
    %cst_13 = arith.constant 0.000000e+00 : f32
    %14 = vector.broadcast %cst_13 : f32 to vector<1x128xf32>
    %c282 = arith.constant 282 : index
    %c0_14 = arith.constant 0 : index
    %15 = vector.load %arg9[%c282, %c0_14] : memref<288x128xf32, #tpu.memory_space<vmem>>, vector<1x128xf32>
    tpu.vector_store %arg9[%c282, %c0_14], %14 {strides = array<i32>} : memref<288x128xf32, #tpu.memory_space<vmem>>, vector<1x128xf32>,
    %c0_15 = arith.constant 0 : index
    %c0_16 = arith.constant 0 : index
    %c0_17 = arith.constant 0 : index
    %16 = vector.load %arg1[%c0_15, %c0_16, %c0_17] : memref<4x64x128xf32, #tpu.memory_space<vmem>>, vector<4x64x128xf32>
    %17 = vector.shape_cast %16 : vector<4x64x128xf32> to vector<256x128xf32>
    %c0_18 = arith.constant 0 : index
    %c0_19 = arith.constant 0 : index
    %18 = vector.load %arg2[%c0_18, %c0_19] : memref<128x128xf32, #tpu.memory_space<vmem>>, vector<128x128xf32>
    %cst_20 = arith.constant dense<0.000000e+00> : vector<256x128xf32>
    %19 = tpu.matmul %17, %18, %cst_20 {dimension_numbers = #tpu.dot_dimension_numbers<[1], [0], [0], [1], [0, 0, 1, 1], [], []>} : vector<256x128xf32>, vector<128x128xf32>, vector<256x128xf32> -> vector<256x128xf32>
    %c0_21 = arith.constant 0 : index
    %c0_22 = arith.constant 0 : index
    %20 = vector.load %arg7[%c0_21, %c0_22] : memref<8x128xf32, #tpu.memory_space<vmem>>, vector<1x128xf32>
    %21 = vector.broadcast %20 : vector<1x128xf32> to vector<256x128xf32>
    %22 = arith.addf %19, %21 : vector<256x128xf32>
    %cst_23 = arith.constant 5.000000e-01 : f32
    %23 = vector.broadcast %cst_23 : f32 to vector<256x128xf32>
    %24 = arith.mulf %23, %22 : vector<256x128xf32>
    %25 = math.tanh %24 : vector<256x128xf32>
    %cst_24 = arith.constant 5.000000e-01 : f32
    %26 = vector.broadcast %cst_24 : f32 to vector<256x128xf32>
    %27 = arith.mulf %26, %25 : vector<256x128xf32>
    %cst_25 = arith.constant 5.000000e-01 : f32
    %28 = vector.broadcast %cst_25 : f32 to vector<256x128xf32>
    %29 = arith.addf %27, %28 : vector<256x128xf32>
    %30 = arith.mulf %22, %29 : vector<256x128xf32>
    %31 = vector.extract_strided_slice %30 {offsets = [0, 0], sizes = [64, 128], strides = [1, 1]} : vector<256x128xf32> to vector<64x128xf32>
    %c2 = arith.constant 2 : index
    %c0_26 = arith.constant 0 : index
    %32 = vector.load %arg9[%c2, %c0_26] : memref<288x128xf32, #tpu.memory_space<vmem>>, vector<64x128xf32>
    tpu.vector_store %arg9[%c2, %c0_26], %31 {strides = array<i32>} : memref<288x128xf32, #tpu.memory_space<vmem>>, vector<64x128xf32>,
    %33 = vector.extract_strided_slice %30 {offsets = [64, 0], sizes = [64, 128], strides = [1, 1]} : vector<256x128xf32> to vector<64x128xf32>
    %c74 = arith.constant 74 : index
    %c0_27 = arith.constant 0 : index
    %34 = vector.load %arg9[%c74, %c0_27] : memref<288x128xf32, #tpu.memory_space<vmem>>, vector<64x128xf32>
    tpu.vector_store %arg9[%c74, %c0_27], %33 {strides = array<i32>} : memref<288x128xf32, #tpu.memory_space<vmem>>, vector<64x128xf32>,
    %35 = vector.extract_strided_slice %30 {offsets = [128, 0], sizes = [64, 128], strides = [1, 1]} : vector<256x128xf32> to vector<64x128xf32>
    %c146 = arith.constant 146 : index
    %c0_28 = arith.constant 0 : index
    %36 = vector.load %arg9[%c146, %c0_28] : memref<288x128xf32, #tpu.memory_space<vmem>>, vector<64x128xf32>
    tpu.vector_store %arg9[%c146, %c0_28], %35 {strides = array<i32>} : memref<288x128xf32, #tpu.memory_space<vmem>>, vector<64x128xf32>,
    %37 = vector.extract_strided_slice %30 {offsets = [192, 0], sizes = [64, 128], strides = [1, 1]} : vector<256x128xf32> to vector<64x128xf32>
    %c218 = arith.constant 218 : index
    %c0_29 = arith.constant 0 : index
    %38 = vector.load %arg9[%c218, %c0_29] : memref<288x128xf32, #tpu.memory_space<vmem>>, vector<64x128xf32>
    tpu.vector_store %arg9[%c218, %c0_29], %37 {strides = array<i32>} : memref<288x128xf32, #tpu.memory_space<vmem>>, vector<64x128xf32>,
    %c0_30 = arith.constant 0 : index
    %c0_31 = arith.constant 0 : index
    %39 = tpu.strided_load %arg9[%c0_30, %c0_31] {strides = array<i32: 2, 1>} : memref<288x128xf32, #tpu.memory_space<vmem>>, vector<32x128xf32>
    %c0_32 = arith.constant 0 : index
    %c0_33 = arith.constant 0 : index
    %c0_34 = arith.constant 0 : index
    %40 = vector.load %arg3[%c0_32, %c0_33, %c0_34] : memref<5x128x128xf32, #tpu.memory_space<vmem>>, vector<1x128x128xf32>
    %41 = vector.shape_cast %40 : vector<1x128x128xf32> to vector<128x128xf32>
    %cst_35 = arith.constant dense<0.000000e+00> : vector<32x128xf32>
    %42 = tpu.matmul %39, %41, %cst_35 {dimension_numbers = #tpu.dot_dimension_numbers<[1], [0], [0], [1], [0, 0, 1, 1], [], []>} : vector<32x128xf32>, vector<128x128xf32>, vector<32x128xf32> -> vector<32x128xf32>
    %c1 = arith.constant 1 : index
    %c0_36 = arith.constant 0 : index
    %43 = tpu.strided_load %arg9[%c1, %c0_36] {strides = array<i32: 2, 1>} : memref<288x128xf32, #tpu.memory_space<vmem>>, vector<32x128xf32>
    %c1_37 = arith.constant 1 : index
    %c0_38 = arith.constant 0 : index
    %c0_39 = arith.constant 0 : index
    %44 = vector.load %arg3[%c1_37, %c0_38, %c0_39] : memref<5x128x128xf32, #tpu.memory_space<vmem>>, vector<1x128x128xf32>
    %45 = vector.shape_cast %44 : vector<1x128x128xf32> to vector<128x128xf32>
    %cst_40 = arith.constant dense<0.000000e+00> : vector<32x128xf32>
    %46 = tpu.matmul %43, %45, %cst_40 {dimension_numbers = #tpu.dot_dimension_numbers<[1], [0], [0], [1], [0, 0, 1, 1], [], []>} : vector<32x128xf32>, vector<128x128xf32>, vector<32x128xf32> -> vector<32x128xf32>
    %47 = arith.addf %42, %46 : vector<32x128xf32>
    %c2_41 = arith.constant 2 : index
    %c0_42 = arith.constant 0 : index
    %48 = tpu.strided_load %arg9[%c2_41, %c0_42] {strides = array<i32: 2, 1>} : memref<288x128xf32, #tpu.memory_space<vmem>>, vector<32x128xf32>
    %c2_43 = arith.constant 2 : index
    %c0_44 = arith.constant 0 : index
    %c0_45 = arith.constant 0 : index
    %49 = vector.load %arg3[%c2_43, %c0_44, %c0_45] : memref<5x128x128xf32, #tpu.memory_space<vmem>>, vector<1x128x128xf32>
    %50 = vector.shape_cast %49 : vector<1x128x128xf32> to vector<128x128xf32>
    %cst_46 = arith.constant dense<0.000000e+00> : vector<32x128xf32>
    %51 = tpu.matmul %48, %50, %cst_46 {dimension_numbers = #tpu.dot_dimension_numbers<[1], [0], [0], [1], [0, 0, 1, 1], [], []>} : vector<32x128xf32>, vector<128x128xf32>, vector<32x128xf32> -> vector<32x128xf32>
    %52 = arith.addf %47, %51 : vector<32x128xf32>
    %c3 = arith.constant 3 : index
    %c0_47 = arith.constant 0 : index
    %53 = tpu.strided_load %arg9[%c3, %c0_47] {strides = array<i32: 2, 1>} : memref<288x128xf32, #tpu.memory_space<vmem>>, vector<32x128xf32>
    %c3_48 = arith.constant 3 : index
    %c0_49 = arith.constant 0 : index
    %c0_50 = arith.constant 0 : index
    %54 = vector.load %arg3[%c3_48, %c0_49, %c0_50] : memref<5x128x128xf32, #tpu.memory_space<vmem>>, vector<1x128x128xf32>
    %55 = vector.shape_cast %54 : vector<1x128x128xf32> to vector<128x128xf32>
    %cst_51 = arith.constant dense<0.000000e+00> : vector<32x128xf32>
    %56 = tpu.matmul %53, %55, %cst_51 {dimension_numbers = #tpu.dot_dimension_numbers<[1], [0], [0], [1], [0, 0, 1, 1], [], []>} : vector<32x128xf32>, vector<128x128xf32>, vector<32x128xf32> -> vector<32x128xf32>
    %57 = arith.addf %52, %56 : vector<32x128xf32>
    %c4 = arith.constant 4 : index
    %c0_52 = arith.constant 0 : index
    %58 = tpu.strided_load %arg9[%c4, %c0_52] {strides = array<i32: 2, 1>} : memref<288x128xf32, #tpu.memory_space<vmem>>, vector<32x128xf32>
    %c4_53 = arith.constant 4 : index
    %c0_54 = arith.constant 0 : index
    %c0_55 = arith.constant 0 : index
    %59 = vector.load %arg3[%c4_53, %c0_54, %c0_55] : memref<5x128x128xf32, #tpu.memory_space<vmem>>, vector<1x128x128xf32>
    %60 = vector.shape_cast %59 : vector<1x128x128xf32> to vector<128x128xf32>
    %cst_56 = arith.constant dense<0.000000e+00> : vector<32x128xf32>
    %61 = tpu.matmul %58, %60, %cst_56 {dimension_numbers = #tpu.dot_dimension_numbers<[1], [0], [0], [1], [0, 0, 1, 1], [], []>} : vector<32x128xf32>, vector<128x128xf32>, vector<32x128xf32> -> vector<32x128xf32>
    %62 = arith.addf %57, %61 : vector<32x128xf32>
    %c1_57 = arith.constant 1 : index
    %c0_58 = arith.constant 0 : index
    %63 = vector.load %arg7[%c1_57, %c0_58] : memref<8x128xf32, #tpu.memory_space<vmem>>, vector<1x128xf32>
    %64 = vector.broadcast %63 : vector<1x128xf32> to vector<32x128xf32>
    %65 = arith.addf %62, %64 : vector<32x128xf32>
    %cst_59 = arith.constant 5.000000e-01 : f32
    %66 = vector.broadcast %cst_59 : f32 to vector<32x128xf32>
    %67 = arith.mulf %66, %65 : vector<32x128xf32>
    %68 = math.tanh %67 : vector<32x128xf32>
    %cst_60 = arith.constant 5.000000e-01 : f32
    %69 = vector.broadcast %cst_60 : f32 to vector<32x128xf32>
    %70 = arith.mulf %69, %68 : vector<32x128xf32>
    %cst_61 = arith.constant 5.000000e-01 : f32
    %71 = vector.broadcast %cst_61 : f32 to vector<32x128xf32>
    %72 = arith.addf %70, %71 : vector<32x128xf32>
    %73 = arith.mulf %65, %72 : vector<32x128xf32>
    %c0_62 = arith.constant 0 : index
    %c0_63 = arith.constant 0 : index
    %74 = vector.load %arg10[%c0_62, %c0_63] : memref<128x128xf32, #tpu.memory_space<vmem>>, vector<32x128xf32>
    tpu.vector_store %arg10[%c0_62, %c0_63], %73 {strides = array<i32>} : memref<128x128xf32, #tpu.memory_space<vmem>>, vector<32x128xf32>,
    %c0_64 = arith.constant 0 : index
    %c0_65 = arith.constant 0 : index
    %75 = tpu.strided_load %arg10[%c0_64, %c0_65] {strides = array<i32: 2, 1>} : memref<128x128xf32, #tpu.memory_space<vmem>>, vector<15x128xf32>
    %c0_66 = arith.constant 0 : index
    %c0_67 = arith.constant 0 : index
    %c0_68 = arith.constant 0 : index
    %76 = vector.load %arg4[%c0_66, %c0_67, %c0_68] : memref<3x128x128xf32, #tpu.memory_space<vmem>>, vector<1x128x128xf32>
    %77 = vector.shape_cast %76 : vector<1x128x128xf32> to vector<128x128xf32>
    %cst_69 = arith.constant dense<0.000000e+00> : vector<15x128xf32>
    %78 = tpu.matmul %75, %77, %cst_69 {dimension_numbers = #tpu.dot_dimension_numbers<[1], [0], [0], [1], [0, 0, 1, 1], [], []>} : vector<15x128xf32>, vector<128x128xf32>, vector<15x128xf32> -> vector<15x128xf32>
    %c1_70 = arith.constant 1 : index
    %c0_71 = arith.constant 0 : index
    %79 = tpu.strided_load %arg10[%c1_70, %c0_71] {strides = array<i32: 2, 1>} : memref<128x128xf32, #tpu.memory_space<vmem>>, vector<15x128xf32>
    %c1_72 = arith.constant 1 : index
    %c0_73 = arith.constant 0 : index
    %c0_74 = arith.constant 0 : index
    %80 = vector.load %arg4[%c1_72, %c0_73, %c0_74] : memref<3x128x128xf32, #tpu.memory_space<vmem>>, vector<1x128x128xf32>
    %81 = vector.shape_cast %80 : vector<1x128x128xf32> to vector<128x128xf32>
    %cst_75 = arith.constant dense<0.000000e+00> : vector<15x128xf32>
    %82 = tpu.matmul %79, %81, %cst_75 {dimension_numbers = #tpu.dot_dimension_numbers<[1], [0], [0], [1], [0, 0, 1, 1], [], []>} : vector<15x128xf32>, vector<128x128xf32>, vector<15x128xf32> -> vector<15x128xf32>
    %83 = arith.addf %78, %82 : vector<15x128xf32>
    %c2_76 = arith.constant 2 : index
    %c0_77 = arith.constant 0 : index
    %84 = tpu.strided_load %arg10[%c2_76, %c0_77] {strides = array<i32: 2, 1>} : memref<128x128xf32, #tpu.memory_space<vmem>>, vector<15x128xf32>
    %c2_78 = arith.constant 2 : index
    %c0_79 = arith.constant 0 : index
    %c0_80 = arith.constant 0 : index
    %85 = vector.load %arg4[%c2_78, %c0_79, %c0_80] : memref<3x128x128xf32, #tpu.memory_space<vmem>>, vector<1x128x128xf32>
    %86 = vector.shape_cast %85 : vector<1x128x128xf32> to vector<128x128xf32>
    %cst_81 = arith.constant dense<0.000000e+00> : vector<15x128xf32>
    %87 = tpu.matmul %84, %86, %cst_81 {dimension_numbers = #tpu.dot_dimension_numbers<[1], [0], [0], [1], [0, 0, 1, 1], [], []>} : vector<15x128xf32>, vector<128x128xf32>, vector<15x128xf32> -> vector<15x128xf32>
    %88 = arith.addf %83, %87 : vector<15x128xf32>
    %c2_82 = arith.constant 2 : index
    %c0_83 = arith.constant 0 : index
    %89 = vector.load %arg7[%c2_82, %c0_83] : memref<8x128xf32, #tpu.memory_space<vmem>>, vector<1x128xf32>
    %90 = vector.broadcast %89 : vector<1x128xf32> to vector<15x128xf32>
    %91 = arith.addf %88, %90 : vector<15x128xf32>
    %cst_84 = arith.constant 5.000000e-01 : f32
    %92 = vector.broadcast %cst_84 : f32 to vector<15x128xf32>
    %93 = arith.mulf %92, %91 : vector<15x128xf32>
    %94 = math.tanh %93 : vector<15x128xf32>
    %cst_85 = arith.constant 5.000000e-01 : f32
    %95 = vector.broadcast %cst_85 : f32 to vector<15x128xf32>
    %96 = arith.mulf %95, %94 : vector<15x128xf32>
    %cst_86 = arith.constant 5.000000e-01 : f32
    %97 = vector.broadcast %cst_86 : f32 to vector<15x128xf32>
    %98 = arith.addf %96, %97 : vector<15x128xf32>
    %99 = arith.mulf %91, %98 : vector<15x128xf32>
    %c0_87 = arith.constant 0 : index
    %c0_88 = arith.constant 0 : index
    %100 = vector.load %arg11[%c0_87, %c0_88] : memref<64x128xf32, #tpu.memory_space<vmem>>, vector<15x128xf32>
    tpu.vector_store %arg11[%c0_87, %c0_88], %99 {strides = array<i32>} : memref<64x128xf32, #tpu.memory_space<vmem>>, vector<15x128xf32>,
    %c0_89 = arith.constant 0 : index
    %c0_90 = arith.constant 0 : index
    %101 = tpu.strided_load %arg11[%c0_89, %c0_90] {strides = array<i32: 2, 1>} : memref<64x128xf32, #tpu.memory_space<vmem>>, vector<7x128xf32>
    %c0_91 = arith.constant 0 : index
    %c0_92 = arith.constant 0 : index
    %c0_93 = arith.constant 0 : index
    %102 = vector.load %arg5[%c0_91, %c0_92, %c0_93] : memref<3x128x128xf32, #tpu.memory_space<vmem>>, vector<1x128x128xf32>
    %103 = vector.shape_cast %102 : vector<1x128x128xf32> to vector<128x128xf32>
    %cst_94 = arith.constant dense<0.000000e+00> : vector<7x128xf32>
    %104 = tpu.matmul %101, %103, %cst_94 {dimension_numbers = #tpu.dot_dimension_numbers<[1], [0], [0], [1], [0, 0, 1, 1], [], []>} : vector<7x128xf32>, vector<128x128xf32>, vector<7x128xf32> -> vector<7x128xf32>
    %c1_95 = arith.constant 1 : index
    %c0_96 = arith.constant 0 : index
    %105 = tpu.strided_load %arg11[%c1_95, %c0_96] {strides = array<i32: 2, 1>} : memref<64x128xf32, #tpu.memory_space<vmem>>, vector<7x128xf32>
    %c1_97 = arith.constant 1 : index
    %c0_98 = arith.constant 0 : index
    %c0_99 = arith.constant 0 : index
    %106 = vector.load %arg5[%c1_97, %c0_98, %c0_99] : memref<3x128x128xf32, #tpu.memory_space<vmem>>, vector<1x128x128xf32>
    %107 = vector.shape_cast %106 : vector<1x128x128xf32> to vector<128x128xf32>
    %cst_100 = arith.constant dense<0.000000e+00> : vector<7x128xf32>
    %108 = tpu.matmul %105, %107, %cst_100 {dimension_numbers = #tpu.dot_dimension_numbers<[1], [0], [0], [1], [0, 0, 1, 1], [], []>} : vector<7x128xf32>, vector<128x128xf32>, vector<7x128xf32> -> vector<7x128xf32>
    %109 = arith.addf %104, %108 : vector<7x128xf32>
    %c2_101 = arith.constant 2 : index
    %c0_102 = arith.constant 0 : index
    %110 = tpu.strided_load %arg11[%c2_101, %c0_102] {strides = array<i32: 2, 1>} : memref<64x128xf32, #tpu.memory_space<vmem>>, vector<7x128xf32>
    %c2_103 = arith.constant 2 : index
    %c0_104 = arith.constant 0 : index
    %c0_105 = arith.constant 0 : index
    %111 = vector.load %arg5[%c2_103, %c0_104, %c0_105] : memref<3x128x128xf32, #tpu.memory_space<vmem>>, vector<1x128x128xf32>
    %112 = vector.shape_cast %111 : vector<1x128x128xf32> to vector<128x128xf32>
    %cst_106 = arith.constant dense<0.000000e+00> : vector<7x128xf32>
    %113 = tpu.matmul %110, %112, %cst_106 {dimension_numbers = #tpu.dot_dimension_numbers<[1], [0], [0], [1], [0, 0, 1, 1], [], []>} : vector<7x128xf32>, vector<128x128xf32>, vector<7x128xf32> -> vector<7x128xf32>
    %114 = arith.addf %109, %113 : vector<7x128xf32>
    %c3_107 = arith.constant 3 : index
    %c0_108 = arith.constant 0 : index
    %115 = vector.load %arg7[%c3_107, %c0_108] : memref<8x128xf32, #tpu.memory_space<vmem>>, vector<1x128xf32>
    %116 = vector.broadcast %115 : vector<1x128xf32> to vector<7x128xf32>
    %117 = arith.addf %114, %116 : vector<7x128xf32>
    %cst_109 = arith.constant 5.000000e-01 : f32
    %118 = vector.broadcast %cst_109 : f32 to vector<7x128xf32>
    %119 = arith.mulf %118, %117 : vector<7x128xf32>
    %120 = math.tanh %119 : vector<7x128xf32>
    %cst_110 = arith.constant 5.000000e-01 : f32
    %121 = vector.broadcast %cst_110 : f32 to vector<7x128xf32>
    %122 = arith.mulf %121, %120 : vector<7x128xf32>
    %cst_111 = arith.constant 5.000000e-01 : f32
    %123 = vector.broadcast %cst_111 : f32 to vector<7x128xf32>
    %124 = arith.addf %122, %123 : vector<7x128xf32>
    %125 = arith.mulf %117, %124 : vector<7x128xf32>
    %c0_112 = arith.constant 0 : index
    %c0_113 = arith.constant 0 : index
    %126 = vector.load %arg12[%c0_112, %c0_113] : memref<32x128xf32, #tpu.memory_space<vmem>>, vector<7x128xf32>
    tpu.vector_store %arg12[%c0_112, %c0_113], %125 {strides = array<i32>} : memref<32x128xf32, #tpu.memory_space<vmem>>, vector<7x128xf32>,
    %c0_114 = arith.constant 0 : index
    %c0_115 = arith.constant 0 : index
    %127 = tpu.strided_load %arg12[%c0_114, %c0_115] {strides = array<i32: 2, 1>} : memref<32x128xf32, #tpu.memory_space<vmem>>, vector<3x128xf32>
    %c0_116 = arith.constant 0 : index
    %c0_117 = arith.constant 0 : index
    %c0_118 = arith.constant 0 : index
    %128 = vector.load %arg6[%c0_116, %c0_117, %c0_118] : memref<3x128x128xf32, #tpu.memory_space<vmem>>, vector<1x128x128xf32>
    %129 = vector.shape_cast %128 : vector<1x128x128xf32> to vector<128x128xf32>
    %cst_119 = arith.constant dense<0.000000e+00> : vector<3x128xf32>
    %130 = tpu.matmul %127, %129, %cst_119 {dimension_numbers = #tpu.dot_dimension_numbers<[1], [0], [0], [1], [0, 0, 1, 1], [], []>} : vector<3x128xf32>, vector<128x128xf32>, vector<3x128xf32> -> vector<3x128xf32>
    %c1_120 = arith.constant 1 : index
    %c0_121 = arith.constant 0 : index
    %131 = tpu.strided_load %arg12[%c1_120, %c0_121] {strides = array<i32: 2, 1>} : memref<32x128xf32, #tpu.memory_space<vmem>>, vector<3x128xf32>
    %c1_122 = arith.constant 1 : index
    %c0_123 = arith.constant 0 : index
    %c0_124 = arith.constant 0 : index
    %132 = vector.load %arg6[%c1_122, %c0_123, %c0_124] : memref<3x128x128xf32, #tpu.memory_space<vmem>>, vector<1x128x128xf32>
    %133 = vector.shape_cast %132 : vector<1x128x128xf32> to vector<128x128xf32>
    %cst_125 = arith.constant dense<0.000000e+00> : vector<3x128xf32>
    %134 = tpu.matmul %131, %133, %cst_125 {dimension_numbers = #tpu.dot_dimension_numbers<[1], [0], [0], [1], [0, 0, 1, 1], [], []>} : vector<3x128xf32>, vector<128x128xf32>, vector<3x128xf32> -> vector<3x128xf32>
    %135 = arith.addf %130, %134 : vector<3x128xf32>
    %c2_126 = arith.constant 2 : index
    %c0_127 = arith.constant 0 : index
    %136 = tpu.strided_load %arg12[%c2_126, %c0_127] {strides = array<i32: 2, 1>} : memref<32x128xf32, #tpu.memory_space<vmem>>, vector<3x128xf32>
    %c2_128 = arith.constant 2 : index
    %c0_129 = arith.constant 0 : index
    %c0_130 = arith.constant 0 : index
    %137 = vector.load %arg6[%c2_128, %c0_129, %c0_130] : memref<3x128x128xf32, #tpu.memory_space<vmem>>, vector<1x128x128xf32>
    %138 = vector.shape_cast %137 : vector<1x128x128xf32> to vector<128x128xf32>
    %cst_131 = arith.constant dense<0.000000e+00> : vector<3x128xf32>
    %139 = tpu.matmul %136, %138, %cst_131 {dimension_numbers = #tpu.dot_dimension_numbers<[1], [0], [0], [1], [0, 0, 1, 1], [], []>} : vector<3x128xf32>, vector<128x128xf32>, vector<3x128xf32> -> vector<3x128xf32>
    %140 = arith.addf %135, %139 : vector<3x128xf32>
    %c4_132 = arith.constant 4 : index
    %c0_133 = arith.constant 0 : index
    %141 = vector.load %arg7[%c4_132, %c0_133] : memref<8x128xf32, #tpu.memory_space<vmem>>, vector<1x128xf32>
    %142 = vector.broadcast %141 : vector<1x128xf32> to vector<3x128xf32>
    %143 = arith.addf %140, %142 : vector<3x128xf32>
    %c0_134 = arith.constant 0 : index
    %c0_135 = arith.constant 0 : index
    %c0_136 = arith.constant 0 : index
    %144 = vector.load %arg8[%c0_134, %c0_135, %c0_136] : memref<4x3x128xf32, #tpu.memory_space<vmem>>, vector<1x3x128xf32>
    %145 = vector.shape_cast %144 : vector<1x3x128xf32> to vector<3x128xf32>
    %146 = vector.shape_cast %143 : vector<3x128xf32> to vector<1x3x128xf32>
    tpu.vector_store %arg8[%c0_134, %c0_135, %c0_136], %146 {strides = array<i32>} : memref<4x3x128xf32, #tpu.memory_space<vmem>>, vector<1x3x128xf32>,
    %c72_137 = arith.constant 72 : index
    %c0_138 = arith.constant 0 : index
    %147 = tpu.strided_load %arg9[%c72_137, %c0_138] {strides = array<i32: 2, 1>} : memref<288x128xf32, #tpu.memory_space<vmem>>, vector<32x128xf32>
    %c0_139 = arith.constant 0 : index
    %c0_140 = arith.constant 0 : index
    %c0_141 = arith.constant 0 : index
    %148 = vector.load %arg3[%c0_139, %c0_140, %c0_141] : memref<5x128x128xf32, #tpu.memory_space<vmem>>, vector<1x128x128xf32>
    %149 = vector.shape_cast %148 : vector<1x128x128xf32> to vector<128x128xf32>
    %cst_142 = arith.constant dense<0.000000e+00> : vector<32x128xf32>
    %150 = tpu.matmul %147, %149, %cst_142 {dimension_numbers = #tpu.dot_dimension_numbers<[1], [0], [0], [1], [0, 0, 1, 1], [], []>} : vector<32x128xf32>, vector<128x128xf32>, vector<32x128xf32> -> vector<32x128xf32>
    %c73 = arith.constant 73 : index
    %c0_143 = arith.constant 0 : index
    %151 = tpu.strided_load %arg9[%c73, %c0_143] {strides = array<i32: 2, 1>} : memref<288x128xf32, #tpu.memory_space<vmem>>, vector<32x128xf32>
    %c1_144 = arith.constant 1 : index
    %c0_145 = arith.constant 0 : index
    %c0_146 = arith.constant 0 : index
    %152 = vector.load %arg3[%c1_144, %c0_145, %c0_146] : memref<5x128x128xf32, #tpu.memory_space<vmem>>, vector<1x128x128xf32>
    %153 = vector.shape_cast %152 : vector<1x128x128xf32> to vector<128x128xf32>
    %cst_147 = arith.constant dense<0.000000e+00> : vector<32x128xf32>
    %154 = tpu.matmul %151, %153, %cst_147 {dimension_numbers = #tpu.dot_dimension_numbers<[1], [0], [0], [1], [0, 0, 1, 1], [], []>} : vector<32x128xf32>, vector<128x128xf32>, vector<32x128xf32> -> vector<32x128xf32>
    %155 = arith.addf %150, %154 : vector<32x128xf32>
    %c74_148 = arith.constant 74 : index
    %c0_149 = arith.constant 0 : index
    %156 = tpu.strided_load %arg9[%c74_148, %c0_149] {strides = array<i32: 2, 1>} : memref<288x128xf32, #tpu.memory_space<vmem>>, vector<32x128xf32>
    %c2_150 = arith.constant 2 : index
    %c0_151 = arith.constant 0 : index
    %c0_152 = arith.constant 0 : index
    %157 = vector.load %arg3[%c2_150, %c0_151, %c0_152] : memref<5x128x128xf32, #tpu.memory_space<vmem>>, vector<1x128x128xf32>
    %158 = vector.shape_cast %157 : vector<1x128x128xf32> to vector<128x128xf32>
    %cst_153 = arith.constant dense<0.000000e+00> : vector<32x128xf32>
    %159 = tpu.matmul %156, %158, %cst_153 {dimension_numbers = #tpu.dot_dimension_numbers<[1], [0], [0], [1], [0, 0, 1, 1], [], []>} : vector<32x128xf32>, vector<128x128xf32>, vector<32x128xf32> -> vector<32x128xf32>
    %160 = arith.addf %155, %159 : vector<32x128xf32>
    %c75 = arith.constant 75 : index
    %c0_154 = arith.constant 0 : index
    %161 = tpu.strided_load %arg9[%c75, %c0_154] {strides = array<i32: 2, 1>} : memref<288x128xf32, #tpu.memory_space<vmem>>, vector<32x128xf32>
    %c3_155 = arith.constant 3 : index
    %c0_156 = arith.constant 0 : index
    %c0_157 = arith.constant 0 : index
    %162 = vector.load %arg3[%c3_155, %c0_156, %c0_157] : memref<5x128x128xf32, #tpu.memory_space<vmem>>, vector<1x128x128xf32>
    %163 = vector.shape_cast %162 : vector<1x128x128xf32> to vector<128x128xf32>
    %cst_158 = arith.constant dense<0.000000e+00> : vector<32x128xf32>
    %164 = tpu.matmul %161, %163, %cst_158 {dimension_numbers = #tpu.dot_dimension_numbers<[1], [0], [0], [1], [0, 0, 1, 1], [], []>} : vector<32x128xf32>, vector<128x128xf32>, vector<32x128xf32> -> vector<32x128xf32>
    %165 = arith.addf %160, %164 : vector<32x128xf32>
    %c76 = arith.constant 76 : index
    %c0_159 = arith.constant 0 : index
    %166 = tpu.strided_load %arg9[%c76, %c0_159] {strides = array<i32: 2, 1>} : memref<288x128xf32, #tpu.memory_space<vmem>>, vector<32x128xf32>
    %c4_160 = arith.constant 4 : index
    %c0_161 = arith.constant 0 : index
    %c0_162 = arith.constant 0 : index
    %167 = vector.load %arg3[%c4_160, %c0_161, %c0_162] : memref<5x128x128xf32, #tpu.memory_space<vmem>>, vector<1x128x128xf32>
    %168 = vector.shape_cast %167 : vector<1x128x128xf32> to vector<128x128xf32>
    %cst_163 = arith.constant dense<0.000000e+00> : vector<32x128xf32>
    %169 = tpu.matmul %166, %168, %cst_163 {dimension_numbers = #tpu.dot_dimension_numbers<[1], [0], [0], [1], [0, 0, 1, 1], [], []>} : vector<32x128xf32>, vector<128x128xf32>, vector<32x128xf32> -> vector<32x128xf32>
    %170 = arith.addf %165, %169 : vector<32x128xf32>
    %c1_164 = arith.constant 1 : index
    %c0_165 = arith.constant 0 : index
    %171 = vector.load %arg7[%c1_164, %c0_165] : memref<8x128xf32, #tpu.memory_space<vmem>>, vector<1x128xf32>
    %172 = vector.broadcast %171 : vector<1x128xf32> to vector<32x128xf32>
    %173 = arith.addf %170, %172 : vector<32x128xf32>
    %cst_166 = arith.constant 5.000000e-01 : f32
    %174 = vector.broadcast %cst_166 : f32 to vector<32x128xf32>
    %175 = arith.mulf %174, %173 : vector<32x128xf32>
    %176 = math.tanh %175 : vector<32x128xf32>
    %cst_167 = arith.constant 5.000000e-01 : f32
    %177 = vector.broadcast %cst_167 : f32 to vector<32x128xf32>
    %178 = arith.mulf %177, %176 : vector<32x128xf32>
    %cst_168 = arith.constant 5.000000e-01 : f32
    %179 = vector.broadcast %cst_168 : f32 to vector<32x128xf32>
    %180 = arith.addf %178, %179 : vector<32x128xf32>
    %181 = arith.mulf %173, %180 : vector<32x128xf32>
    %c32 = arith.constant 32 : index
    %c0_169 = arith.constant 0 : index
    %182 = vector.load %arg10[%c32, %c0_169] : memref<128x128xf32, #tpu.memory_space<vmem>>, vector<32x128xf32>
    tpu.vector_store %arg10[%c32, %c0_169], %181 {strides = array<i32>} : memref<128x128xf32, #tpu.memory_space<vmem>>, vector<32x128xf32>,
    %c32_170 = arith.constant 32 : index
    %c0_171 = arith.constant 0 : index
    %183 = tpu.strided_load %arg10[%c32_170, %c0_171] {strides = array<i32: 2, 1>} : memref<128x128xf32, #tpu.memory_space<vmem>>, vector<15x128xf32>
    %c0_172 = arith.constant 0 : index
    %c0_173 = arith.constant 0 : index
    %c0_174 = arith.constant 0 : index
    %184 = vector.load %arg4[%c0_172, %c0_173, %c0_174] : memref<3x128x128xf32, #tpu.memory_space<vmem>>, vector<1x128x128xf32>
    %185 = vector.shape_cast %184 : vector<1x128x128xf32> to vector<128x128xf32>
    %cst_175 = arith.constant dense<0.000000e+00> : vector<15x128xf32>
    %186 = tpu.matmul %183, %185, %cst_175 {dimension_numbers = #tpu.dot_dimension_numbers<[1], [0], [0], [1], [0, 0, 1, 1], [], []>} : vector<15x128xf32>, vector<128x128xf32>, vector<15x128xf32> -> vector<15x128xf32>
    %c33 = arith.constant 33 : index
    %c0_176 = arith.constant 0 : index
    %187 = tpu.strided_load %arg10[%c33, %c0_176] {strides = array<i32: 2, 1>} : memref<128x128xf32, #tpu.memory_space<vmem>>, vector<15x128xf32>
    %c1_177 = arith.constant 1 : index
    %c0_178 = arith.constant 0 : index
    %c0_179 = arith.constant 0 : index
    %188 = vector.load %arg4[%c1_177, %c0_178, %c0_179] : memref<3x128x128xf32, #tpu.memory_space<vmem>>, vector<1x128x128xf32>
    %189 = vector.shape_cast %188 : vector<1x128x128xf32> to vector<128x128xf32>
    %cst_180 = arith.constant dense<0.000000e+00> : vector<15x128xf32>
    %190 = tpu.matmul %187, %189, %cst_180 {dimension_numbers = #tpu.dot_dimension_numbers<[1], [0], [0], [1], [0, 0, 1, 1], [], []>} : vector<15x128xf32>, vector<128x128xf32>, vector<15x128xf32> -> vector<15x128xf32>
    %191 = arith.addf %186, %190 : vector<15x128xf32>
    %c34 = arith.constant 34 : index
    %c0_181 = arith.constant 0 : index
    %192 = tpu.strided_load %arg10[%c34, %c0_181] {strides = array<i32: 2, 1>} : memref<128x128xf32, #tpu.memory_space<vmem>>, vector<15x128xf32>
    %c2_182 = arith.constant 2 : index
    %c0_183 = arith.constant 0 : index
    %c0_184 = arith.constant 0 : index
    %193 = vector.load %arg4[%c2_182, %c0_183, %c0_184] : memref<3x128x128xf32, #tpu.memory_space<vmem>>, vector<1x128x128xf32>
    %194 = vector.shape_cast %193 : vector<1x128x128xf32> to vector<128x128xf32>
    %cst_185 = arith.constant dense<0.000000e+00> : vector<15x128xf32>
    %195 = tpu.matmul %192, %194, %cst_185 {dimension_numbers = #tpu.dot_dimension_numbers<[1], [0], [0], [1], [0, 0, 1, 1], [], []>} : vector<15x128xf32>, vector<128x128xf32>, vector<15x128xf32> -> vector<15x128xf32>
    %196 = arith.addf %191, %195 : vector<15x128xf32>
    %c2_186 = arith.constant 2 : index
    %c0_187 = arith.constant 0 : index
    %197 = vector.load %arg7[%c2_186, %c0_187] : memref<8x128xf32, #tpu.memory_space<vmem>>, vector<1x128xf32>
    %198 = vector.broadcast %197 : vector<1x128xf32> to vector<15x128xf32>
    %199 = arith.addf %196, %198 : vector<15x128xf32>
    %cst_188 = arith.constant 5.000000e-01 : f32
    %200 = vector.broadcast %cst_188 : f32 to vector<15x128xf32>
    %201 = arith.mulf %200, %199 : vector<15x128xf32>
    %202 = math.tanh %201 : vector<15x128xf32>
    %cst_189 = arith.constant 5.000000e-01 : f32
    %203 = vector.broadcast %cst_189 : f32 to vector<15x128xf32>
    %204 = arith.mulf %203, %202 : vector<15x128xf32>
    %cst_190 = arith.constant 5.000000e-01 : f32
    %205 = vector.broadcast %cst_190 : f32 to vector<15x128xf32>
    %206 = arith.addf %204, %205 : vector<15x128xf32>
    %207 = arith.mulf %199, %206 : vector<15x128xf32>
    %c16 = arith.constant 16 : index
    %c0_191 = arith.constant 0 : index
    %208 = vector.load %arg11[%c16, %c0_191] : memref<64x128xf32, #tpu.memory_space<vmem>>, vector<15x128xf32>
    tpu.vector_store %arg11[%c16, %c0_191], %207 {strides = array<i32>} : memref<64x128xf32, #tpu.memory_space<vmem>>, vector<15x128xf32>,
    %c16_192 = arith.constant 16 : index
    %c0_193 = arith.constant 0 : index
    %209 = tpu.strided_load %arg11[%c16_192, %c0_193] {strides = array<i32: 2, 1>} : memref<64x128xf32, #tpu.memory_space<vmem>>, vector<7x128xf32>
    %c0_194 = arith.constant 0 : index
    %c0_195 = arith.constant 0 : index
    %c0_196 = arith.constant 0 : index
    %210 = vector.load %arg5[%c0_194, %c0_195, %c0_196] : memref<3x128x128xf32, #tpu.memory_space<vmem>>, vector<1x128x128xf32>
    %211 = vector.shape_cast %210 : vector<1x128x128xf32> to vector<128x128xf32>
    %cst_197 = arith.constant dense<0.000000e+00> : vector<7x128xf32>
    %212 = tpu.matmul %209, %211, %cst_197 {dimension_numbers = #tpu.dot_dimension_numbers<[1], [0], [0], [1], [0, 0, 1, 1], [], []>} : vector<7x128xf32>, vector<128x128xf32>, vector<7x128xf32> -> vector<7x128xf32>
    %c17 = arith.constant 17 : index
    %c0_198 = arith.constant 0 : index
    %213 = tpu.strided_load %arg11[%c17, %c0_198] {strides = array<i32: 2, 1>} : memref<64x128xf32, #tpu.memory_space<vmem>>, vector<7x128xf32>
    %c1_199 = arith.constant 1 : index
    %c0_200 = arith.constant 0 : index
    %c0_201 = arith.constant 0 : index
    %214 = vector.load %arg5[%c1_199, %c0_200, %c0_201] : memref<3x128x128xf32, #tpu.memory_space<vmem>>, vector<1x128x128xf32>
    %215 = vector.shape_cast %214 : vector<1x128x128xf32> to vector<128x128xf32>
    %cst_202 = arith.constant dense<0.000000e+00> : vector<7x128xf32>
    %216 = tpu.matmul %213, %215, %cst_202 {dimension_numbers = #tpu.dot_dimension_numbers<[1], [0], [0], [1], [0, 0, 1, 1], [], []>} : vector<7x128xf32>, vector<128x128xf32>, vector<7x128xf32> -> vector<7x128xf32>
    %217 = arith.addf %212, %216 : vector<7x128xf32>
    %c18 = arith.constant 18 : index
    %c0_203 = arith.constant 0 : index
    %218 = tpu.strided_load %arg11[%c18, %c0_203] {strides = array<i32: 2, 1>} : memref<64x128xf32, #tpu.memory_space<vmem>>, vector<7x128xf32>
    %c2_204 = arith.constant 2 : index
    %c0_205 = arith.constant 0 : index
    %c0_206 = arith.constant 0 : index
    %219 = vector.load %arg5[%c2_204, %c0_205, %c0_206] : memref<3x128x128xf32, #tpu.memory_space<vmem>>, vector<1x128x128xf32>
    %220 = vector.shape_cast %219 : vector<1x128x128xf32> to vector<128x128xf32>
    %cst_207 = arith.constant dense<0.000000e+00> : vector<7x128xf32>
    %221 = tpu.matmul %218, %220, %cst_207 {dimension_numbers = #tpu.dot_dimension_numbers<[1], [0], [0], [1], [0, 0, 1, 1], [], []>} : vector<7x128xf32>, vector<128x128xf32>, vector<7x128xf32> -> vector<7x128xf32>
    %222 = arith.addf %217, %221 : vector<7x128xf32>
    %c3_208 = arith.constant 3 : index
    %c0_209 = arith.constant 0 : index
    %223 = vector.load %arg7[%c3_208, %c0_209] : memref<8x128xf32, #tpu.memory_space<vmem>>, vector<1x128xf32>
    %224 = vector.broadcast %223 : vector<1x128xf32> to vector<7x128xf32>
    %225 = arith.addf %222, %224 : vector<7x128xf32>
    %cst_210 = arith.constant 5.000000e-01 : f32
    %226 = vector.broadcast %cst_210 : f32 to vector<7x128xf32>
    %227 = arith.mulf %226, %225 : vector<7x128xf32>
    %228 = math.tanh %227 : vector<7x128xf32>
    %cst_211 = arith.constant 5.000000e-01 : f32
    %229 = vector.broadcast %cst_211 : f32 to vector<7x128xf32>
    %230 = arith.mulf %229, %228 : vector<7x128xf32>
    %cst_212 = arith.constant 5.000000e-01 : f32
    %231 = vector.broadcast %cst_212 : f32 to vector<7x128xf32>
    %232 = arith.addf %230, %231 : vector<7x128xf32>
    %233 = arith.mulf %225, %232 : vector<7x128xf32>
    %c8 = arith.constant 8 : index
    %c0_213 = arith.constant 0 : index
    %234 = vector.load %arg12[%c8, %c0_213] : memref<32x128xf32, #tpu.memory_space<vmem>>, vector<7x128xf32>
    tpu.vector_store %arg12[%c8, %c0_213], %233 {strides = array<i32>} : memref<32x128xf32, #tpu.memory_space<vmem>>, vector<7x128xf32>,
    %c8_214 = arith.constant 8 : index
    %c0_215 = arith.constant 0 : index
    %235 = tpu.strided_load %arg12[%c8_214, %c0_215] {strides = array<i32: 2, 1>} : memref<32x128xf32, #tpu.memory_space<vmem>>, vector<3x128xf32>
    %c0_216 = arith.constant 0 : index
    %c0_217 = arith.constant 0 : index
    %c0_218 = arith.constant 0 : index
    %236 = vector.load %arg6[%c0_216, %c0_217, %c0_218] : memref<3x128x128xf32, #tpu.memory_space<vmem>>, vector<1x128x128xf32>
    %237 = vector.shape_cast %236 : vector<1x128x128xf32> to vector<128x128xf32>
    %cst_219 = arith.constant dense<0.000000e+00> : vector<3x128xf32>
    %238 = tpu.matmul %235, %237, %cst_219 {dimension_numbers = #tpu.dot_dimension_numbers<[1], [0], [0], [1], [0, 0, 1, 1], [], []>} : vector<3x128xf32>, vector<128x128xf32>, vector<3x128xf32> -> vector<3x128xf32>
    %c9 = arith.constant 9 : index
    %c0_220 = arith.constant 0 : index
    %239 = tpu.strided_load %arg12[%c9, %c0_220] {strides = array<i32: 2, 1>} : memref<32x128xf32, #tpu.memory_space<vmem>>, vector<3x128xf32>
    %c1_221 = arith.constant 1 : index
    %c0_222 = arith.constant 0 : index
    %c0_223 = arith.constant 0 : index
    %240 = vector.load %arg6[%c1_221, %c0_222, %c0_223] : memref<3x128x128xf32, #tpu.memory_space<vmem>>, vector<1x128x128xf32>
    %241 = vector.shape_cast %240 : vector<1x128x128xf32> to vector<128x128xf32>
    %cst_224 = arith.constant dense<0.000000e+00> : vector<3x128xf32>
    %242 = tpu.matmul %239, %241, %cst_224 {dimension_numbers = #tpu.dot_dimension_numbers<[1], [0], [0], [1], [0, 0, 1, 1], [], []>} : vector<3x128xf32>, vector<128x128xf32>, vector<3x128xf32> -> vector<3x128xf32>
    %243 = arith.addf %238, %242 : vector<3x128xf32>
    %c10 = arith.constant 10 : index
    %c0_225 = arith.constant 0 : index
    %244 = tpu.strided_load %arg12[%c10, %c0_225] {strides = array<i32: 2, 1>} : memref<32x128xf32, #tpu.memory_space<vmem>>, vector<3x128xf32>
    %c2_226 = arith.constant 2 : index
    %c0_227 = arith.constant 0 : index
    %c0_228 = arith.constant 0 : index
    %245 = vector.load %arg6[%c2_226, %c0_227, %c0_228] : memref<3x128x128xf32, #tpu.memory_space<vmem>>, vector<1x128x128xf32>
    %246 = vector.shape_cast %245 : vector<1x128x128xf32> to vector<128x128xf32>
    %cst_229 = arith.constant dense<0.000000e+00> : vector<3x128xf32>
    %247 = tpu.matmul %244, %246, %cst_229 {dimension_numbers = #tpu.dot_dimension_numbers<[1], [0], [0], [1], [0, 0, 1, 1], [], []>} : vector<3x128xf32>, vector<128x128xf32>, vector<3x128xf32> -> vector<3x128xf32>
    %248 = arith.addf %243, %247 : vector<3x128xf32>
    %c4_230 = arith.constant 4 : index
    %c0_231 = arith.constant 0 : index
    %249 = vector.load %arg7[%c4_230, %c0_231] : memref<8x128xf32, #tpu.memory_space<vmem>>, vector<1x128xf32>
    %250 = vector.broadcast %249 : vector<1x128xf32> to vector<3x128xf32>
    %251 = arith.addf %248, %250 : vector<3x128xf32>
    %c1_232 = arith.constant 1 : index
    %c0_233 = arith.constant 0 : index
    %c0_234 = arith.constant 0 : index
    %252 = vector.load %arg8[%c1_232, %c0_233, %c0_234] : memref<4x3x128xf32, #tpu.memory_space<vmem>>, vector<1x3x128xf32>
    %253 = vector.shape_cast %252 : vector<1x3x128xf32> to vector<3x128xf32>
    %254 = vector.shape_cast %251 : vector<3x128xf32> to vector<1x3x128xf32>
    tpu.vector_store %arg8[%c1_232, %c0_233, %c0_234], %254 {strides = array<i32>} : memref<4x3x128xf32, #tpu.memory_space<vmem>>, vector<1x3x128xf32>,
    %c144_235 = arith.constant 144 : index
    %c0_236 = arith.constant 0 : index
    %255 = tpu.strided_load %arg9[%c144_235, %c0_236] {strides = array<i32: 2, 1>} : memref<288x128xf32, #tpu.memory_space<vmem>>, vector<32x128xf32>
    %c0_237 = arith.constant 0 : index
    %c0_238 = arith.constant 0 : index
    %c0_239 = arith.constant 0 : index
    %256 = vector.load %arg3[%c0_237, %c0_238, %c0_239] : memref<5x128x128xf32, #tpu.memory_space<vmem>>, vector<1x128x128xf32>
    %257 = vector.shape_cast %256 : vector<1x128x128xf32> to vector<128x128xf32>
    %cst_240 = arith.constant dense<0.000000e+00> : vector<32x128xf32>
    %258 = tpu.matmul %255, %257, %cst_240 {dimension_numbers = #tpu.dot_dimension_numbers<[1], [0], [0], [1], [0, 0, 1, 1], [], []>} : vector<32x128xf32>, vector<128x128xf32>, vector<32x128xf32> -> vector<32x128xf32>
    %c145 = arith.constant 145 : index
    %c0_241 = arith.constant 0 : index
    %259 = tpu.strided_load %arg9[%c145, %c0_241] {strides = array<i32: 2, 1>} : memref<288x128xf32, #tpu.memory_space<vmem>>, vector<32x128xf32>
    %c1_242 = arith.constant 1 : index
    %c0_243 = arith.constant 0 : index
    %c0_244 = arith.constant 0 : index
    %260 = vector.load %arg3[%c1_242, %c0_243, %c0_244] : memref<5x128x128xf32, #tpu.memory_space<vmem>>, vector<1x128x128xf32>
    %261 = vector.shape_cast %260 : vector<1x128x128xf32> to vector<128x128xf32>
    %cst_245 = arith.constant dense<0.000000e+00> : vector<32x128xf32>
    %262 = tpu.matmul %259, %261, %cst_245 {dimension_numbers = #tpu.dot_dimension_numbers<[1], [0], [0], [1], [0, 0, 1, 1], [], []>} : vector<32x128xf32>, vector<128x128xf32>, vector<32x128xf32> -> vector<32x128xf32>
    %263 = arith.addf %258, %262 : vector<32x128xf32>
    %c146_246 = arith.constant 146 : index
    %c0_247 = arith.constant 0 : index
    %264 = tpu.strided_load %arg9[%c146_246, %c0_247] {strides = array<i32: 2, 1>} : memref<288x128xf32, #tpu.memory_space<vmem>>, vector<32x128xf32>
    %c2_248 = arith.constant 2 : index
    %c0_249 = arith.constant 0 : index
    %c0_250 = arith.constant 0 : index
    %265 = vector.load %arg3[%c2_248, %c0_249, %c0_250] : memref<5x128x128xf32, #tpu.memory_space<vmem>>, vector<1x128x128xf32>
    %266 = vector.shape_cast %265 : vector<1x128x128xf32> to vector<128x128xf32>
    %cst_251 = arith.constant dense<0.000000e+00> : vector<32x128xf32>
    %267 = tpu.matmul %264, %266, %cst_251 {dimension_numbers = #tpu.dot_dimension_numbers<[1], [0], [0], [1], [0, 0, 1, 1], [], []>} : vector<32x128xf32>, vector<128x128xf32>, vector<32x128xf32> -> vector<32x128xf32>
    %268 = arith.addf %263, %267 : vector<32x128xf32>
    %c147 = arith.constant 147 : index
    %c0_252 = arith.constant 0 : index
    %269 = tpu.strided_load %arg9[%c147, %c0_252] {strides = array<i32: 2, 1>} : memref<288x128xf32, #tpu.memory_space<vmem>>, vector<32x128xf32>
    %c3_253 = arith.constant 3 : index
    %c0_254 = arith.constant 0 : index
    %c0_255 = arith.constant 0 : index
    %270 = vector.load %arg3[%c3_253, %c0_254, %c0_255] : memref<5x128x128xf32, #tpu.memory_space<vmem>>, vector<1x128x128xf32>
    %271 = vector.shape_cast %270 : vector<1x128x128xf32> to vector<128x128xf32>
    %cst_256 = arith.constant dense<0.000000e+00> : vector<32x128xf32>
    %272 = tpu.matmul %269, %271, %cst_256 {dimension_numbers = #tpu.dot_dimension_numbers<[1], [0], [0], [1], [0, 0, 1, 1], [], []>} : vector<32x128xf32>, vector<128x128xf32>, vector<32x128xf32> -> vector<32x128xf32>
    %273 = arith.addf %268, %272 : vector<32x128xf32>
    %c148 = arith.constant 148 : index
    %c0_257 = arith.constant 0 : index
    %274 = tpu.strided_load %arg9[%c148, %c0_257] {strides = array<i32: 2, 1>} : memref<288x128xf32, #tpu.memory_space<vmem>>, vector<32x128xf32>
    %c4_258 = arith.constant 4 : index
    %c0_259 = arith.constant 0 : index
    %c0_260 = arith.constant 0 : index
    %275 = vector.load %arg3[%c4_258, %c0_259, %c0_260] : memref<5x128x128xf32, #tpu.memory_space<vmem>>, vector<1x128x128xf32>
    %276 = vector.shape_cast %275 : vector<1x128x128xf32> to vector<128x128xf32>
    %cst_261 = arith.constant dense<0.000000e+00> : vector<32x128xf32>
    %277 = tpu.matmul %274, %276, %cst_261 {dimension_numbers = #tpu.dot_dimension_numbers<[1], [0], [0], [1], [0, 0, 1, 1], [], []>} : vector<32x128xf32>, vector<128x128xf32>, vector<32x128xf32> -> vector<32x128xf32>
    %278 = arith.addf %273, %277 : vector<32x128xf32>
    %c1_262 = arith.constant 1 : index
    %c0_263 = arith.constant 0 : index
    %279 = vector.load %arg7[%c1_262, %c0_263] : memref<8x128xf32, #tpu.memory_space<vmem>>, vector<1x128xf32>
    %280 = vector.broadcast %279 : vector<1x128xf32> to vector<32x128xf32>
    %281 = arith.addf %278, %280 : vector<32x128xf32>
    %cst_264 = arith.constant 5.000000e-01 : f32
    %282 = vector.broadcast %cst_264 : f32 to vector<32x128xf32>
    %283 = arith.mulf %282, %281 : vector<32x128xf32>
    %284 = math.tanh %283 : vector<32x128xf32>
    %cst_265 = arith.constant 5.000000e-01 : f32
    %285 = vector.broadcast %cst_265 : f32 to vector<32x128xf32>
    %286 = arith.mulf %285, %284 : vector<32x128xf32>
    %cst_266 = arith.constant 5.000000e-01 : f32
    %287 = vector.broadcast %cst_266 : f32 to vector<32x128xf32>
    %288 = arith.addf %286, %287 : vector<32x128xf32>
    %289 = arith.mulf %281, %288 : vector<32x128xf32>
    %c64 = arith.constant 64 : index
    %c0_267 = arith.constant 0 : index
    %290 = vector.load %arg10[%c64, %c0_267] : memref<128x128xf32, #tpu.memory_space<vmem>>, vector<32x128xf32>
    tpu.vector_store %arg10[%c64, %c0_267], %289 {strides = array<i32>} : memref<128x128xf32, #tpu.memory_space<vmem>>, vector<32x128xf32>,
    %c64_268 = arith.constant 64 : index
    %c0_269 = arith.constant 0 : index
    %291 = tpu.strided_load %arg10[%c64_268, %c0_269] {strides = array<i32: 2, 1>} : memref<128x128xf32, #tpu.memory_space<vmem>>, vector<15x128xf32>
    %c0_270 = arith.constant 0 : index
    %c0_271 = arith.constant 0 : index
    %c0_272 = arith.constant 0 : index
    %292 = vector.load %arg4[%c0_270, %c0_271, %c0_272] : memref<3x128x128xf32, #tpu.memory_space<vmem>>, vector<1x128x128xf32>
    %293 = vector.shape_cast %292 : vector<1x128x128xf32> to vector<128x128xf32>
    %cst_273 = arith.constant dense<0.000000e+00> : vector<15x128xf32>
    %294 = tpu.matmul %291, %293, %cst_273 {dimension_numbers = #tpu.dot_dimension_numbers<[1], [0], [0], [1], [0, 0, 1, 1], [], []>} : vector<15x128xf32>, vector<128x128xf32>, vector<15x128xf32> -> vector<15x128xf32>
    %c65 = arith.constant 65 : index
    %c0_274 = arith.constant 0 : index
    %295 = tpu.strided_load %arg10[%c65, %c0_274] {strides = array<i32: 2, 1>} : memref<128x128xf32, #tpu.memory_space<vmem>>, vector<15x128xf32>
    %c1_275 = arith.constant 1 : index
    %c0_276 = arith.constant 0 : index
    %c0_277 = arith.constant 0 : index
    %296 = vector.load %arg4[%c1_275, %c0_276, %c0_277] : memref<3x128x128xf32, #tpu.memory_space<vmem>>, vector<1x128x128xf32>
    %297 = vector.shape_cast %296 : vector<1x128x128xf32> to vector<128x128xf32>
    %cst_278 = arith.constant dense<0.000000e+00> : vector<15x128xf32>
    %298 = tpu.matmul %295, %297, %cst_278 {dimension_numbers = #tpu.dot_dimension_numbers<[1], [0], [0], [1], [0, 0, 1, 1], [], []>} : vector<15x128xf32>, vector<128x128xf32>, vector<15x128xf32> -> vector<15x128xf32>
    %299 = arith.addf %294, %298 : vector<15x128xf32>
    %c66_279 = arith.constant 66 : index
    %c0_280 = arith.constant 0 : index
    %300 = tpu.strided_load %arg10[%c66_279, %c0_280] {strides = array<i32: 2, 1>} : memref<128x128xf32, #tpu.memory_space<vmem>>, vector<15x128xf32>
    %c2_281 = arith.constant 2 : index
    %c0_282 = arith.constant 0 : index
    %c0_283 = arith.constant 0 : index
    %301 = vector.load %arg4[%c2_281, %c0_282, %c0_283] : memref<3x128x128xf32, #tpu.memory_space<vmem>>, vector<1x128x128xf32>
    %302 = vector.shape_cast %301 : vector<1x128x128xf32> to vector<128x128xf32>
    %cst_284 = arith.constant dense<0.000000e+00> : vector<15x128xf32>
    %303 = tpu.matmul %300, %302, %cst_284 {dimension_numbers = #tpu.dot_dimension_numbers<[1], [0], [0], [1], [0, 0, 1, 1], [], []>} : vector<15x128xf32>, vector<128x128xf32>, vector<15x128xf32> -> vector<15x128xf32>
    %304 = arith.addf %299, %303 : vector<15x128xf32>
    %c2_285 = arith.constant 2 : index
    %c0_286 = arith.constant 0 : index
    %305 = vector.load %arg7[%c2_285, %c0_286] : memref<8x128xf32, #tpu.memory_space<vmem>>, vector<1x128xf32>
    %306 = vector.broadcast %305 : vector<1x128xf32> to vector<15x128xf32>
    %307 = arith.addf %304, %306 : vector<15x128xf32>
    %cst_287 = arith.constant 5.000000e-01 : f32
    %308 = vector.broadcast %cst_287 : f32 to vector<15x128xf32>
    %309 = arith.mulf %308, %307 : vector<15x128xf32>
    %310 = math.tanh %309 : vector<15x128xf32>
    %cst_288 = arith.constant 5.000000e-01 : f32
    %311 = vector.broadcast %cst_288 : f32 to vector<15x128xf32>
    %312 = arith.mulf %311, %310 : vector<15x128xf32>
    %cst_289 = arith.constant 5.000000e-01 : f32
    %313 = vector.broadcast %cst_289 : f32 to vector<15x128xf32>
    %314 = arith.addf %312, %313 : vector<15x128xf32>
    %315 = arith.mulf %307, %314 : vector<15x128xf32>
    %c32_290 = arith.constant 32 : index
    %c0_291 = arith.constant 0 : index
    %316 = vector.load %arg11[%c32_290, %c0_291] : memref<64x128xf32, #tpu.memory_space<vmem>>, vector<15x128xf32>
    tpu.vector_store %arg11[%c32_290, %c0_291], %315 {strides = array<i32>} : memref<64x128xf32, #tpu.memory_space<vmem>>, vector<15x128xf32>,
    %c32_292 = arith.constant 32 : index
    %c0_293 = arith.constant 0 : index
    %317 = tpu.strided_load %arg11[%c32_292, %c0_293] {strides = array<i32: 2, 1>} : memref<64x128xf32, #tpu.memory_space<vmem>>, vector<7x128xf32>
    %c0_294 = arith.constant 0 : index
    %c0_295 = arith.constant 0 : index
    %c0_296 = arith.constant 0 : index
    %318 = vector.load %arg5[%c0_294, %c0_295, %c0_296] : memref<3x128x128xf32, #tpu.memory_space<vmem>>, vector<1x128x128xf32>
    %319 = vector.shape_cast %318 : vector<1x128x128xf32> to vector<128x128xf32>
    %cst_297 = arith.constant dense<0.000000e+00> : vector<7x128xf32>
    %320 = tpu.matmul %317, %319, %cst_297 {dimension_numbers = #tpu.dot_dimension_numbers<[1], [0], [0], [1], [0, 0, 1, 1], [], []>} : vector<7x128xf32>, vector<128x128xf32>, vector<7x128xf32> -> vector<7x128xf32>
    %c33_298 = arith.constant 33 : index
    %c0_299 = arith.constant 0 : index
    %321 = tpu.strided_load %arg11[%c33_298, %c0_299] {strides = array<i32: 2, 1>} : memref<64x128xf32, #tpu.memory_space<vmem>>, vector<7x128xf32>
    %c1_300 = arith.constant 1 : index
    %c0_301 = arith.constant 0 : index
    %c0_302 = arith.constant 0 : index
    %322 = vector.load %arg5[%c1_300, %c0_301, %c0_302] : memref<3x128x128xf32, #tpu.memory_space<vmem>>, vector<1x128x128xf32>
    %323 = vector.shape_cast %322 : vector<1x128x128xf32> to vector<128x128xf32>
    %cst_303 = arith.constant dense<0.000000e+00> : vector<7x128xf32>
    %324 = tpu.matmul %321, %323, %cst_303 {dimension_numbers = #tpu.dot_dimension_numbers<[1], [0], [0], [1], [0, 0, 1, 1], [], []>} : vector<7x128xf32>, vector<128x128xf32>, vector<7x128xf32> -> vector<7x128xf32>
    %325 = arith.addf %320, %324 : vector<7x128xf32>
    %c34_304 = arith.constant 34 : index
    %c0_305 = arith.constant 0 : index
    %326 = tpu.strided_load %arg11[%c34_304, %c0_305] {strides = array<i32: 2, 1>} : memref<64x128xf32, #tpu.memory_space<vmem>>, vector<7x128xf32>
    %c2_306 = arith.constant 2 : index
    %c0_307 = arith.constant 0 : index
    %c0_308 = arith.constant 0 : index
    %327 = vector.load %arg5[%c2_306, %c0_307, %c0_308] : memref<3x128x128xf32, #tpu.memory_space<vmem>>, vector<1x128x128xf32>
    %328 = vector.shape_cast %327 : vector<1x128x128xf32> to vector<128x128xf32>
    %cst_309 = arith.constant dense<0.000000e+00> : vector<7x128xf32>
    %329 = tpu.matmul %326, %328, %cst_309 {dimension_numbers = #tpu.dot_dimension_numbers<[1], [0], [0], [1], [0, 0, 1, 1], [], []>} : vector<7x128xf32>, vector<128x128xf32>, vector<7x128xf32> -> vector<7x128xf32>
    %330 = arith.addf %325, %329 : vector<7x128xf32>
    %c3_310 = arith.constant 3 : index
    %c0_311 = arith.constant 0 : index
    %331 = vector.load %arg7[%c3_310, %c0_311] : memref<8x128xf32, #tpu.memory_space<vmem>>, vector<1x128xf32>
    %332 = vector.broadcast %331 : vector<1x128xf32> to vector<7x128xf32>
    %333 = arith.addf %330, %332 : vector<7x128xf32>
    %cst_312 = arith.constant 5.000000e-01 : f32
    %334 = vector.broadcast %cst_312 : f32 to vector<7x128xf32>
    %335 = arith.mulf %334, %333 : vector<7x128xf32>
    %336 = math.tanh %335 : vector<7x128xf32>
    %cst_313 = arith.constant 5.000000e-01 : f32
    %337 = vector.broadcast %cst_313 : f32 to vector<7x128xf32>
    %338 = arith.mulf %337, %336 : vector<7x128xf32>
    %cst_314 = arith.constant 5.000000e-01 : f32
    %339 = vector.broadcast %cst_314 : f32 to vector<7x128xf32>
    %340 = arith.addf %338, %339 : vector<7x128xf32>
    %341 = arith.mulf %333, %340 : vector<7x128xf32>
    %c16_315 = arith.constant 16 : index
    %c0_316 = arith.constant 0 : index
    %342 = vector.load %arg12[%c16_315, %c0_316] : memref<32x128xf32, #tpu.memory_space<vmem>>, vector<7x128xf32>
    tpu.vector_store %arg12[%c16_315, %c0_316], %341 {strides = array<i32>} : memref<32x128xf32, #tpu.memory_space<vmem>>, vector<7x128xf32>,
    %c16_317 = arith.constant 16 : index
    %c0_318 = arith.constant 0 : index
    %343 = tpu.strided_load %arg12[%c16_317, %c0_318] {strides = array<i32: 2, 1>} : memref<32x128xf32, #tpu.memory_space<vmem>>, vector<3x128xf32>
    %c0_319 = arith.constant 0 : index
    %c0_320 = arith.constant 0 : index
    %c0_321 = arith.constant 0 : index
    %344 = vector.load %arg6[%c0_319, %c0_320, %c0_321] : memref<3x128x128xf32, #tpu.memory_space<vmem>>, vector<1x128x128xf32>
    %345 = vector.shape_cast %344 : vector<1x128x128xf32> to vector<128x128xf32>
    %cst_322 = arith.constant dense<0.000000e+00> : vector<3x128xf32>
    %346 = tpu.matmul %343, %345, %cst_322 {dimension_numbers = #tpu.dot_dimension_numbers<[1], [0], [0], [1], [0, 0, 1, 1], [], []>} : vector<3x128xf32>, vector<128x128xf32>, vector<3x128xf32> -> vector<3x128xf32>
    %c17_323 = arith.constant 17 : index
    %c0_324 = arith.constant 0 : index
    %347 = tpu.strided_load %arg12[%c17_323, %c0_324] {strides = array<i32: 2, 1>} : memref<32x128xf32, #tpu.memory_space<vmem>>, vector<3x128xf32>
    %c1_325 = arith.constant 1 : index
    %c0_326 = arith.constant 0 : index
    %c0_327 = arith.constant 0 : index
    %348 = vector.load %arg6[%c1_325, %c0_326, %c0_327] : memref<3x128x128xf32, #tpu.memory_space<vmem>>, vector<1x128x128xf32>
    %349 = vector.shape_cast %348 : vector<1x128x128xf32> to vector<128x128xf32>
    %cst_328 = arith.constant dense<0.000000e+00> : vector<3x128xf32>
    %350 = tpu.matmul %347, %349, %cst_328 {dimension_numbers = #tpu.dot_dimension_numbers<[1], [0], [0], [1], [0, 0, 1, 1], [], []>} : vector<3x128xf32>, vector<128x128xf32>, vector<3x128xf32> -> vector<3x128xf32>
    %351 = arith.addf %346, %350 : vector<3x128xf32>
    %c18_329 = arith.constant 18 : index
    %c0_330 = arith.constant 0 : index
    %352 = tpu.strided_load %arg12[%c18_329, %c0_330] {strides = array<i32: 2, 1>} : memref<32x128xf32, #tpu.memory_space<vmem>>, vector<3x128xf32>
    %c2_331 = arith.constant 2 : index
    %c0_332 = arith.constant 0 : index
    %c0_333 = arith.constant 0 : index
    %353 = vector.load %arg6[%c2_331, %c0_332, %c0_333] : memref<3x128x128xf32, #tpu.memory_space<vmem>>, vector<1x128x128xf32>
    %354 = vector.shape_cast %353 : vector<1x128x128xf32> to vector<128x128xf32>
    %cst_334 = arith.constant dense<0.000000e+00> : vector<3x128xf32>
    %355 = tpu.matmul %352, %354, %cst_334 {dimension_numbers = #tpu.dot_dimension_numbers<[1], [0], [0], [1], [0, 0, 1, 1], [], []>} : vector<3x128xf32>, vector<128x128xf32>, vector<3x128xf32> -> vector<3x128xf32>
    %356 = arith.addf %351, %355 : vector<3x128xf32>
    %c4_335 = arith.constant 4 : index
    %c0_336 = arith.constant 0 : index
    %357 = vector.load %arg7[%c4_335, %c0_336] : memref<8x128xf32, #tpu.memory_space<vmem>>, vector<1x128xf32>
    %358 = vector.broadcast %357 : vector<1x128xf32> to vector<3x128xf32>
    %359 = arith.addf %356, %358 : vector<3x128xf32>
    %c2_337 = arith.constant 2 : index
    %c0_338 = arith.constant 0 : index
    %c0_339 = arith.constant 0 : index
    %360 = vector.load %arg8[%c2_337, %c0_338, %c0_339] : memref<4x3x128xf32, #tpu.memory_space<vmem>>, vector<1x3x128xf32>
    %361 = vector.shape_cast %360 : vector<1x3x128xf32> to vector<3x128xf32>
    %362 = vector.shape_cast %359 : vector<3x128xf32> to vector<1x3x128xf32>
    tpu.vector_store %arg8[%c2_337, %c0_338, %c0_339], %362 {strides = array<i32>} : memref<4x3x128xf32, #tpu.memory_space<vmem>>, vector<1x3x128xf32>,
    %c216_340 = arith.constant 216 : index
    %c0_341 = arith.constant 0 : index
    %363 = tpu.strided_load %arg9[%c216_340, %c0_341] {strides = array<i32: 2, 1>} : memref<288x128xf32, #tpu.memory_space<vmem>>, vector<32x128xf32>
    %c0_342 = arith.constant 0 : index
    %c0_343 = arith.constant 0 : index
    %c0_344 = arith.constant 0 : index
    %364 = vector.load %arg3[%c0_342, %c0_343, %c0_344] : memref<5x128x128xf32, #tpu.memory_space<vmem>>, vector<1x128x128xf32>
    %365 = vector.shape_cast %364 : vector<1x128x128xf32> to vector<128x128xf32>
    %cst_345 = arith.constant dense<0.000000e+00> : vector<32x128xf32>
    %366 = tpu.matmul %363, %365, %cst_345 {dimension_numbers = #tpu.dot_dimension_numbers<[1], [0], [0], [1], [0, 0, 1, 1], [], []>} : vector<32x128xf32>, vector<128x128xf32>, vector<32x128xf32> -> vector<32x128xf32>
    %c217 = arith.constant 217 : index
    %c0_346 = arith.constant 0 : index
    %367 = tpu.strided_load %arg9[%c217, %c0_346] {strides = array<i32: 2, 1>} : memref<288x128xf32, #tpu.memory_space<vmem>>, vector<32x128xf32>
    %c1_347 = arith.constant 1 : index
    %c0_348 = arith.constant 0 : index
    %c0_349 = arith.constant 0 : index
    %368 = vector.load %arg3[%c1_347, %c0_348, %c0_349] : memref<5x128x128xf32, #tpu.memory_space<vmem>>, vector<1x128x128xf32>
    %369 = vector.shape_cast %368 : vector<1x128x128xf32> to vector<128x128xf32>
    %cst_350 = arith.constant dense<0.000000e+00> : vector<32x128xf32>
    %370 = tpu.matmul %367, %369, %cst_350 {dimension_numbers = #tpu.dot_dimension_numbers<[1], [0], [0], [1], [0, 0, 1, 1], [], []>} : vector<32x128xf32>, vector<128x128xf32>, vector<32x128xf32> -> vector<32x128xf32>
    %371 = arith.addf %366, %370 : vector<32x128xf32>
    %c218_351 = arith.constant 218 : index
    %c0_352 = arith.constant 0 : index
    %372 = tpu.strided_load %arg9[%c218_351, %c0_352] {strides = array<i32: 2, 1>} : memref<288x128xf32, #tpu.memory_space<vmem>>, vector<32x128xf32>
    %c2_353 = arith.constant 2 : index
    %c0_354 = arith.constant 0 : index
    %c0_355 = arith.constant 0 : index
    %373 = vector.load %arg3[%c2_353, %c0_354, %c0_355] : memref<5x128x128xf32, #tpu.memory_space<vmem>>, vector<1x128x128xf32>
    %374 = vector.shape_cast %373 : vector<1x128x128xf32> to vector<128x128xf32>
    %cst_356 = arith.constant dense<0.000000e+00> : vector<32x128xf32>
    %375 = tpu.matmul %372, %374, %cst_356 {dimension_numbers = #tpu.dot_dimension_numbers<[1], [0], [0], [1], [0, 0, 1, 1], [], []>} : vector<32x128xf32>, vector<128x128xf32>, vector<32x128xf32> -> vector<32x128xf32>
    %376 = arith.addf %371, %375 : vector<32x128xf32>
    %c219 = arith.constant 219 : index
    %c0_357 = arith.constant 0 : index
    %377 = tpu.strided_load %arg9[%c219, %c0_357] {strides = array<i32: 2, 1>} : memref<288x128xf32, #tpu.memory_space<vmem>>, vector<32x128xf32>
    %c3_358 = arith.constant 3 : index
    %c0_359 = arith.constant 0 : index
    %c0_360 = arith.constant 0 : index
    %378 = vector.load %arg3[%c3_358, %c0_359, %c0_360] : memref<5x128x128xf32, #tpu.memory_space<vmem>>, vector<1x128x128xf32>
    %379 = vector.shape_cast %378 : vector<1x128x128xf32> to vector<128x128xf32>
    %cst_361 = arith.constant dense<0.000000e+00> : vector<32x128xf32>
    %380 = tpu.matmul %377, %379, %cst_361 {dimension_numbers = #tpu.dot_dimension_numbers<[1], [0], [0], [1], [0, 0, 1, 1], [], []>} : vector<32x128xf32>, vector<128x128xf32>, vector<32x128xf32> -> vector<32x128xf32>
    %381 = arith.addf %376, %380 : vector<32x128xf32>
    %c220 = arith.constant 220 : index
    %c0_362 = arith.constant 0 : index
    %382 = tpu.strided_load %arg9[%c220, %c0_362] {strides = array<i32: 2, 1>} : memref<288x128xf32, #tpu.memory_space<vmem>>, vector<32x128xf32>
    %c4_363 = arith.constant 4 : index
    %c0_364 = arith.constant 0 : index
    %c0_365 = arith.constant 0 : index
    %383 = vector.load %arg3[%c4_363, %c0_364, %c0_365] : memref<5x128x128xf32, #tpu.memory_space<vmem>>, vector<1x128x128xf32>
    %384 = vector.shape_cast %383 : vector<1x128x128xf32> to vector<128x128xf32>
    %cst_366 = arith.constant dense<0.000000e+00> : vector<32x128xf32>
    %385 = tpu.matmul %382, %384, %cst_366 {dimension_numbers = #tpu.dot_dimension_numbers<[1], [0], [0], [1], [0, 0, 1, 1], [], []>} : vector<32x128xf32>, vector<128x128xf32>, vector<32x128xf32> -> vector<32x128xf32>
    %386 = arith.addf %381, %385 : vector<32x128xf32>
    %c1_367 = arith.constant 1 : index
    %c0_368 = arith.constant 0 : index
    %387 = vector.load %arg7[%c1_367, %c0_368] : memref<8x128xf32, #tpu.memory_space<vmem>>, vector<1x128xf32>
    %388 = vector.broadcast %387 : vector<1x128xf32> to vector<32x128xf32>
    %389 = arith.addf %386, %388 : vector<32x128xf32>
    %cst_369 = arith.constant 5.000000e-01 : f32
    %390 = vector.broadcast %cst_369 : f32 to vector<32x128xf32>
    %391 = arith.mulf %390, %389 : vector<32x128xf32>
    %392 = math.tanh %391 : vector<32x128xf32>
    %cst_370 = arith.constant 5.000000e-01 : f32
    %393 = vector.broadcast %cst_370 : f32 to vector<32x128xf32>
    %394 = arith.mulf %393, %392 : vector<32x128xf32>
    %cst_371 = arith.constant 5.000000e-01 : f32
    %395 = vector.broadcast %cst_371 : f32 to vector<32x128xf32>
    %396 = arith.addf %394, %395 : vector<32x128xf32>
    %397 = arith.mulf %389, %396 : vector<32x128xf32>
    %c96 = arith.constant 96 : index
    %c0_372 = arith.constant 0 : index
    %398 = vector.load %arg10[%c96, %c0_372] : memref<128x128xf32, #tpu.memory_space<vmem>>, vector<32x128xf32>
    tpu.vector_store %arg10[%c96, %c0_372], %397 {strides = array<i32>} : memref<128x128xf32, #tpu.memory_space<vmem>>, vector<32x128xf32>,
    %c96_373 = arith.constant 96 : index
    %c0_374 = arith.constant 0 : index
    %399 = tpu.strided_load %arg10[%c96_373, %c0_374] {strides = array<i32: 2, 1>} : memref<128x128xf32, #tpu.memory_space<vmem>>, vector<15x128xf32>
    %c0_375 = arith.constant 0 : index
    %c0_376 = arith.constant 0 : index
    %c0_377 = arith.constant 0 : index
    %400 = vector.load %arg4[%c0_375, %c0_376, %c0_377] : memref<3x128x128xf32, #tpu.memory_space<vmem>>, vector<1x128x128xf32>
    %401 = vector.shape_cast %400 : vector<1x128x128xf32> to vector<128x128xf32>
    %cst_378 = arith.constant dense<0.000000e+00> : vector<15x128xf32>
    %402 = tpu.matmul %399, %401, %cst_378 {dimension_numbers = #tpu.dot_dimension_numbers<[1], [0], [0], [1], [0, 0, 1, 1], [], []>} : vector<15x128xf32>, vector<128x128xf32>, vector<15x128xf32> -> vector<15x128xf32>
    %c97 = arith.constant 97 : index
    %c0_379 = arith.constant 0 : index
    %403 = tpu.strided_load %arg10[%c97, %c0_379] {strides = array<i32: 2, 1>} : memref<128x128xf32, #tpu.memory_space<vmem>>, vector<15x128xf32>
    %c1_380 = arith.constant 1 : index
    %c0_381 = arith.constant 0 : index
    %c0_382 = arith.constant 0 : index
    %404 = vector.load %arg4[%c1_380, %c0_381, %c0_382] : memref<3x128x128xf32, #tpu.memory_space<vmem>>, vector<1x128x128xf32>
    %405 = vector.shape_cast %404 : vector<1x128x128xf32> to vector<128x128xf32>
    %cst_383 = arith.constant dense<0.000000e+00> : vector<15x128xf32>
    %406 = tpu.matmul %403, %405, %cst_383 {dimension_numbers = #tpu.dot_dimension_numbers<[1], [0], [0], [1], [0, 0, 1, 1], [], []>} : vector<15x128xf32>, vector<128x128xf32>, vector<15x128xf32> -> vector<15x128xf32>
    %407 = arith.addf %402, %406 : vector<15x128xf32>
    %c98 = arith.constant 98 : index
    %c0_384 = arith.constant 0 : index
    %408 = tpu.strided_load %arg10[%c98, %c0_384] {strides = array<i32: 2, 1>} : memref<128x128xf32, #tpu.memory_space<vmem>>, vector<15x128xf32>
    %c2_385 = arith.constant 2 : index
    %c0_386 = arith.constant 0 : index
    %c0_387 = arith.constant 0 : index
    %409 = vector.load %arg4[%c2_385, %c0_386, %c0_387] : memref<3x128x128xf32, #tpu.memory_space<vmem>>, vector<1x128x128xf32>
    %410 = vector.shape_cast %409 : vector<1x128x128xf32> to vector<128x128xf32>
    %cst_388 = arith.constant dense<0.000000e+00> : vector<15x128xf32>
    %411 = tpu.matmul %408, %410, %cst_388 {dimension_numbers = #tpu.dot_dimension_numbers<[1], [0], [0], [1], [0, 0, 1, 1], [], []>} : vector<15x128xf32>, vector<128x128xf32>, vector<15x128xf32> -> vector<15x128xf32>
    %412 = arith.addf %407, %411 : vector<15x128xf32>
    %c2_389 = arith.constant 2 : index
    %c0_390 = arith.constant 0 : index
    %413 = vector.load %arg7[%c2_389, %c0_390] : memref<8x128xf32, #tpu.memory_space<vmem>>, vector<1x128xf32>
    %414 = vector.broadcast %413 : vector<1x128xf32> to vector<15x128xf32>
    %415 = arith.addf %412, %414 : vector<15x128xf32>
    %cst_391 = arith.constant 5.000000e-01 : f32
    %416 = vector.broadcast %cst_391 : f32 to vector<15x128xf32>
    %417 = arith.mulf %416, %415 : vector<15x128xf32>
    %418 = math.tanh %417 : vector<15x128xf32>
    %cst_392 = arith.constant 5.000000e-01 : f32
    %419 = vector.broadcast %cst_392 : f32 to vector<15x128xf32>
    %420 = arith.mulf %419, %418 : vector<15x128xf32>
    %cst_393 = arith.constant 5.000000e-01 : f32
    %421 = vector.broadcast %cst_393 : f32 to vector<15x128xf32>
    %422 = arith.addf %420, %421 : vector<15x128xf32>
    %423 = arith.mulf %415, %422 : vector<15x128xf32>
    %c48 = arith.constant 48 : index
    %c0_394 = arith.constant 0 : index
    %424 = vector.load %arg11[%c48, %c0_394] : memref<64x128xf32, #tpu.memory_space<vmem>>, vector<15x128xf32>
    tpu.vector_store %arg11[%c48, %c0_394], %423 {strides = array<i32>} : memref<64x128xf32, #tpu.memory_space<vmem>>, vector<15x128xf32>,
    %c48_395 = arith.constant 48 : index
    %c0_396 = arith.constant 0 : index
    %425 = tpu.strided_load %arg11[%c48_395, %c0_396] {strides = array<i32: 2, 1>} : memref<64x128xf32, #tpu.memory_space<vmem>>, vector<7x128xf32>
    %c0_397 = arith.constant 0 : index
    %c0_398 = arith.constant 0 : index
    %c0_399 = arith.constant 0 : index
    %426 = vector.load %arg5[%c0_397, %c0_398, %c0_399] : memref<3x128x128xf32, #tpu.memory_space<vmem>>, vector<1x128x128xf32>
    %427 = vector.shape_cast %426 : vector<1x128x128xf32> to vector<128x128xf32>
    %cst_400 = arith.constant dense<0.000000e+00> : vector<7x128xf32>
    %428 = tpu.matmul %425, %427, %cst_400 {dimension_numbers = #tpu.dot_dimension_numbers<[1], [0], [0], [1], [0, 0, 1, 1], [], []>} : vector<7x128xf32>, vector<128x128xf32>, vector<7x128xf32> -> vector<7x128xf32>
    %c49 = arith.constant 49 : index
    %c0_401 = arith.constant 0 : index
    %429 = tpu.strided_load %arg11[%c49, %c0_401] {strides = array<i32: 2, 1>} : memref<64x128xf32, #tpu.memory_space<vmem>>, vector<7x128xf32>
    %c1_402 = arith.constant 1 : index
    %c0_403 = arith.constant 0 : index
    %c0_404 = arith.constant 0 : index
    %430 = vector.load %arg5[%c1_402, %c0_403, %c0_404] : memref<3x128x128xf32, #tpu.memory_space<vmem>>, vector<1x128x128xf32>
    %431 = vector.shape_cast %430 : vector<1x128x128xf32> to vector<128x128xf32>
    %cst_405 = arith.constant dense<0.000000e+00> : vector<7x128xf32>
    %432 = tpu.matmul %429, %431, %cst_405 {dimension_numbers = #tpu.dot_dimension_numbers<[1], [0], [0], [1], [0, 0, 1, 1], [], []>} : vector<7x128xf32>, vector<128x128xf32>, vector<7x128xf32> -> vector<7x128xf32>
    %433 = arith.addf %428, %432 : vector<7x128xf32>
    %c50 = arith.constant 50 : index
    %c0_406 = arith.constant 0 : index
    %434 = tpu.strided_load %arg11[%c50, %c0_406] {strides = array<i32: 2, 1>} : memref<64x128xf32, #tpu.memory_space<vmem>>, vector<7x128xf32>
    %c2_407 = arith.constant 2 : index
    %c0_408 = arith.constant 0 : index
    %c0_409 = arith.constant 0 : index
    %435 = vector.load %arg5[%c2_407, %c0_408, %c0_409] : memref<3x128x128xf32, #tpu.memory_space<vmem>>, vector<1x128x128xf32>
    %436 = vector.shape_cast %435 : vector<1x128x128xf32> to vector<128x128xf32>
    %cst_410 = arith.constant dense<0.000000e+00> : vector<7x128xf32>
    %437 = tpu.matmul %434, %436, %cst_410 {dimension_numbers = #tpu.dot_dimension_numbers<[1], [0], [0], [1], [0, 0, 1, 1], [], []>} : vector<7x128xf32>, vector<128x128xf32>, vector<7x128xf32> -> vector<7x128xf32>
    %438 = arith.addf %433, %437 : vector<7x128xf32>
    %c3_411 = arith.constant 3 : index
    %c0_412 = arith.constant 0 : index
    %439 = vector.load %arg7[%c3_411, %c0_412] : memref<8x128xf32, #tpu.memory_space<vmem>>, vector<1x128xf32>
    %440 = vector.broadcast %439 : vector<1x128xf32> to vector<7x128xf32>
    %441 = arith.addf %438, %440 : vector<7x128xf32>
    %cst_413 = arith.constant 5.000000e-01 : f32
    %442 = vector.broadcast %cst_413 : f32 to vector<7x128xf32>
    %443 = arith.mulf %442, %441 : vector<7x128xf32>
    %444 = math.tanh %443 : vector<7x128xf32>
    %cst_414 = arith.constant 5.000000e-01 : f32
    %445 = vector.broadcast %cst_414 : f32 to vector<7x128xf32>
    %446 = arith.mulf %445, %444 : vector<7x128xf32>
    %cst_415 = arith.constant 5.000000e-01 : f32
    %447 = vector.broadcast %cst_415 : f32 to vector<7x128xf32>
    %448 = arith.addf %446, %447 : vector<7x128xf32>
    %449 = arith.mulf %441, %448 : vector<7x128xf32>
    %c24 = arith.constant 24 : index
    %c0_416 = arith.constant 0 : index
    %450 = vector.load %arg12[%c24, %c0_416] : memref<32x128xf32, #tpu.memory_space<vmem>>, vector<7x128xf32>
    tpu.vector_store %arg12[%c24, %c0_416], %449 {strides = array<i32>} : memref<32x128xf32, #tpu.memory_space<vmem>>, vector<7x128xf32>,
    %c24_417 = arith.constant 24 : index
    %c0_418 = arith.constant 0 : index
    %451 = tpu.strided_load %arg12[%c24_417, %c0_418] {strides = array<i32: 2, 1>} : memref<32x128xf32, #tpu.memory_space<vmem>>, vector<3x128xf32>
    %c0_419 = arith.constant 0 : index
    %c0_420 = arith.constant 0 : index
    %c0_421 = arith.constant 0 : index
    %452 = vector.load %arg6[%c0_419, %c0_420, %c0_421] : memref<3x128x128xf32, #tpu.memory_space<vmem>>, vector<1x128x128xf32>
    %453 = vector.shape_cast %452 : vector<1x128x128xf32> to vector<128x128xf32>
    %cst_422 = arith.constant dense<0.000000e+00> : vector<3x128xf32>
    %454 = tpu.matmul %451, %453, %cst_422 {dimension_numbers = #tpu.dot_dimension_numbers<[1], [0], [0], [1], [0, 0, 1, 1], [], []>} : vector<3x128xf32>, vector<128x128xf32>, vector<3x128xf32> -> vector<3x128xf32>
    %c25 = arith.constant 25 : index
    %c0_423 = arith.constant 0 : index
    %455 = tpu.strided_load %arg12[%c25, %c0_423] {strides = array<i32: 2, 1>} : memref<32x128xf32, #tpu.memory_space<vmem>>, vector<3x128xf32>
    %c1_424 = arith.constant 1 : index
    %c0_425 = arith.constant 0 : index
    %c0_426 = arith.constant 0 : index
    %456 = vector.load %arg6[%c1_424, %c0_425, %c0_426] : memref<3x128x128xf32, #tpu.memory_space<vmem>>, vector<1x128x128xf32>
    %457 = vector.shape_cast %456 : vector<1x128x128xf32> to vector<128x128xf32>
    %cst_427 = arith.constant dense<0.000000e+00> : vector<3x128xf32>
    %458 = tpu.matmul %455, %457, %cst_427 {dimension_numbers = #tpu.dot_dimension_numbers<[1], [0], [0], [1], [0, 0, 1, 1], [], []>} : vector<3x128xf32>, vector<128x128xf32>, vector<3x128xf32> -> vector<3x128xf32>
    %459 = arith.addf %454, %458 : vector<3x128xf32>
    %c26 = arith.constant 26 : index
    %c0_428 = arith.constant 0 : index
    %460 = tpu.strided_load %arg12[%c26, %c0_428] {strides = array<i32: 2, 1>} : memref<32x128xf32, #tpu.memory_space<vmem>>, vector<3x128xf32>
    %c2_429 = arith.constant 2 : index
    %c0_430 = arith.constant 0 : index
    %c0_431 = arith.constant 0 : index
    %461 = vector.load %arg6[%c2_429, %c0_430, %c0_431] : memref<3x128x128xf32, #tpu.memory_space<vmem>>, vector<1x128x128xf32>
    %462 = vector.shape_cast %461 : vector<1x128x128xf32> to vector<128x128xf32>
    %cst_432 = arith.constant dense<0.000000e+00> : vector<3x128xf32>
    %463 = tpu.matmul %460, %462, %cst_432 {dimension_numbers = #tpu.dot_dimension_numbers<[1], [0], [0], [1], [0, 0, 1, 1], [], []>} : vector<3x128xf32>, vector<128x128xf32>, vector<3x128xf32> -> vector<3x128xf32>
    %464 = arith.addf %459, %463 : vector<3x128xf32>
    %c4_433 = arith.constant 4 : index
    %c0_434 = arith.constant 0 : index
    %465 = vector.load %arg7[%c4_433, %c0_434] : memref<8x128xf32, #tpu.memory_space<vmem>>, vector<1x128xf32>
    %466 = vector.broadcast %465 : vector<1x128xf32> to vector<3x128xf32>
    %467 = arith.addf %464, %466 : vector<3x128xf32>
    %c3_435 = arith.constant 3 : index
    %c0_436 = arith.constant 0 : index
    %c0_437 = arith.constant 0 : index
    %468 = vector.load %arg8[%c3_435, %c0_436, %c0_437] : memref<4x3x128xf32, #tpu.memory_space<vmem>>, vector<1x3x128xf32>
    %469 = vector.shape_cast %468 : vector<1x3x128xf32> to vector<3x128xf32>
    %470 = vector.shape_cast %467 : vector<3x128xf32> to vector<1x3x128xf32>
    tpu.vector_store %arg8[%c3_435, %c0_436, %c0_437], %470 {strides = array<i32>} : memref<4x3x128xf32, #tpu.memory_space<vmem>>, vector<1x3x128xf32>,
    return
  }
  func.func @transform_0(%arg0: i32) -> (i32, i32, i32) {
    %c0_i32 = arith.constant 0 : i32
    %c0_i32_0 = arith.constant 0 : i32
    %c0_i32_1 = arith.constant 0 : i32
    return %arg0, %c0_i32, %c0_i32_0 : i32, i32, i32
  }
  func.func @transform_1(%arg0: i32) -> (i32, i32) {
    %c0_i32 = arith.constant 0 : i32
    %c0_i32_0 = arith.constant 0 : i32
    %c0_i32_1 = arith.constant 0 : i32
    return %c0_i32, %c0_i32_0 : i32, i32
  }
  func.func @transform_2(%arg0: i32) -> (i32, i32, i32) {
    %c0_i32 = arith.constant 0 : i32
    %c0_i32_0 = arith.constant 0 : i32
    %c0_i32_1 = arith.constant 0 : i32
    %c0_i32_2 = arith.constant 0 : i32
    return %c0_i32, %c0_i32_0, %c0_i32_1 : i32, i32, i32
  }
  func.func @transform_3(%arg0: i32) -> (i32, i32, i32) {
    %c0_i32 = arith.constant 0 : i32
    %c0_i32_0 = arith.constant 0 : i32
    %c0_i32_1 = arith.constant 0 : i32
    %c0_i32_2 = arith.constant 0 : i32
    return %c0_i32, %c0_i32_0, %c0_i32_1 : i32, i32, i32
  }
  func.func @transform_4(%arg0: i32) -> (i32, i32, i32) {
    %c0_i32 = arith.constant 0 : i32
    %c0_i32_0 = arith.constant 0 : i32
    %c0_i32_1 = arith.constant 0 : i32
    %c0_i32_2 = arith.constant 0 : i32
    return %c0_i32, %c0_i32_0, %c0_i32_1 : i32, i32, i32
  }
  func.func @transform_5(%arg0: i32) -> (i32, i32, i32) {
    %c0_i32 = arith.constant 0 : i32
    %c0_i32_0 = arith.constant 0 : i32
    %c0_i32_1 = arith.constant 0 : i32
    %c0_i32_2 = arith.constant 0 : i32
    return %c0_i32, %c0_i32_0, %c0_i32_1 : i32, i32, i32
  }
  func.func @transform_6(%arg0: i32) -> (i32, i32) {
    %c0_i32 = arith.constant 0 : i32
    %c0_i32_0 = arith.constant 0 : i32
    %c0_i32_1 = arith.constant 0 : i32
    return %c0_i32, %c0_i32_0 : i32, i32
  }
  func.func @transform_7(%arg0: i32) -> (i32, i32, i32) {
    %c0_i32 = arith.constant 0 : i32
    %c0_i32_0 = arith.constant 0 : i32
    %c0_i32_1 = arith.constant 0 : i32
    return %arg0, %c0_i32, %c0_i32_0 : i32, i32, i32
  }
}

</mosaic_0001>

<llo_original>
// kernel: feature_network_medium.1
$region0: #{feature_network_medium.1}
  #allocation0 [shape = 'u32[]', space=smem, size = 0x4, offset = 0x4, fixed_abs, tag = 'smem constant byte address 0x4 - core index']
  #allocation1 [shape = 'u32[144,128]{1,0:T(1,128)}', space=vmem, size = 0x12000, scoped, tag = 'internal scratch']
  #allocation2 [shape = 'f32[288,128]{1,0:T(8,128)}', space=vmem, size = 0x24000, scoped, tag = 'scratch operand']
  #allocation3 [shape = 'f32[128,128]{1,0:T(8,128)}', space=vmem, size = 0x10000, scoped, tag = 'scratch operand']
  #allocation4 [shape = 'f32[64,128]{1,0:T(8,128)}', space=vmem, size = 0x8000, scoped, tag = 'scratch operand']
  #allocation5 [shape = 'f32[32,128]{1,0:T(8,128)}', space=vmem, size = 0x4000, scoped, tag = 'scratch operand']
  %s0 = inlined_call_operand.vmem [shape: f32[8,64,128], index: 0, kind: input, shape index: {}]
  %s1 = inlined_call_operand.vmem [shape: f32[128,128], index: 1, kind: input, shape index: {}]
  %s2 = inlined_call_operand.vmem [shape: f32[5,128,128], index: 2, kind: input, shape index: {}]
  %s3 = inlined_call_operand.vmem [shape: f32[3,128,128], index: 3, kind: input, shape index: {}]
  %s4 = inlined_call_operand.vmem [shape: f32[3,128,128], index: 4, kind: input, shape index: {}]
  %s5 = inlined_call_operand.vmem [shape: f32[3,128,128], index: 5, kind: input, shape index: {}]
  %s6 = inlined_call_operand.vmem [shape: f32[8,128], index: 6, kind: input, shape index: {}]
  %s7 = inlined_call_operand.vmem [shape: f32[8,3,128], index: 7, kind: output, shape index: {}]
  %s8 = sld [smem:[#allocation0]]
  $region61: #{feature_network_medium.1} parent=0
    _
  %s10 = ssub.s32 1, %s8
  %s11 = scalar_select 0, %s10, %s8
  loop: start=0, step=1, limit=4
  $region2: #{feature_network_medium.1} parent=0 // loop_pre_header
    _
  $region3: #{feature_network_medium.1} parent=0 // loop_header
    %s13 = sphi 0, %s17
    %p14 = scmp.ge.s32.totalorder %s13, 4
    %s23 = sphi 0, %s25
    %s26 = sphi 0, %s23
    %s27 = sphi 0, %s26
    %s43 = sphi 0, %s27
    %s47 = sphi 0, %s47
    %s49 = sphi 0, %s47
    %s50 = sphi 0, %s49
    %s64 = sphi 0, %s50
    %s68 = sphi 0, %s68
    %s70 = sphi 0, %s68
    %s71 = sphi 0, %s70
    %s85 = sphi 0, %s71
    %s89 = sphi 0, %s89
    %s91 = sphi 0, %s89
    %s92 = sphi 0, %s91
    %s106 = sphi 0, %s92
    %s110 = sphi 0, %s110
    %s112 = sphi 0, %s110
    %s113 = sphi 0, %s112
    %s127 = sphi 0, %s113
    %s131 = sphi 0, %s131
    %s133 = sphi 0, %s131
    %s134 = sphi 0, %s133
    %s148 = sphi 0, %s134
    %s152 = sphi 0, %s152
    %s154 = sphi 0, %s152
    %s155 = sphi 0, %s154
    %s169 = sphi 0, %s155
    %s175 = sphi 0, %s177
    %s178 = sphi 0, %s175
    %s179 = sphi 0, %s178
    %s195 = sphi 0, %s179
  $region4: #{feature_network_medium.1} parent=0 // loop_header_branch
    %16 = sbr.rel (%p14) target = $region8
  $region5: #{feature_network_medium.1} parent=0 // loop_body
    %s18 = ssub.s32 %s13, 1
    %s19 = ssub.s32 %s13, 2
    %s20 = sadd.s32 %s13, 1
    %s21 = ssub.s32 %s13, %s20
    %p22 = scmp.eq.s32.totalorder %s21, 0
    %s24 = sadd.s32 %s23, 1
    %s25 = scalar_select %p22, %s23, %s24
    %p28 = pneg %p22
    %p29 = scmp.eq.s32.totalorder %s13, 1
    %p30 = por %p28, %p29
    %p31 = scmp.ne.s32.totalorder %s23, %s26
    %p32 = scmp.eq.s32.totalorder %s13, 0
    %p33 = por %p31, %p32
    %p34 = scmp.ne.s32.totalorder %s23, %s26
    %p35 = scmp.eq.s32.totalorder %s18, 1
    %p36 = por %p34, %p35
    %p37 = scmp.ne.s32.totalorder %s26, %s27
    %p38 = scmp.eq.s32.totalorder %s18, 0
    %p39 = por %p37, %p38
    %p40 = scmp.ne.s32.totalorder %s26, %s27
    %p41 = scmp.eq.s32.totalorder %s19, 1
    %p42 = por %p40, %p41
    %p44 = scmp.ne.s32.totalorder %s27, %s43
    %p45 = scmp.eq.s32.totalorder %s19, 0
    %p46 = por %p44, %p45
    %s48 = sadd.s32 %s47, 1
    %p51 = scmp.eq.s32.totalorder %s13, 1
    %p52 = scmp.ne.s32.totalorder %s47, %s49
    %p53 = scmp.eq.s32.totalorder %s13, 0
    %p54 = por %p52, %p53
    %p55 = scmp.ne.s32.totalorder %s47, %s49
    %p56 = scmp.eq.s32.totalorder %s18, 1
    %p57 = por %p55, %p56
    %p58 = scmp.ne.s32.totalorder %s49, %s50
    %p59 = scmp.eq.s32.totalorder %s18, 0
    %p60 = por %p58, %p59
    %p61 = scmp.ne.s32.totalorder %s49, %s50
    %p62 = scmp.eq.s32.totalorder %s19, 1
    %p63 = por %p61, %p62
    %p65 = scmp.ne.s32.totalorder %s50, %s64
    %p66 = scmp.eq.s32.totalorder %s19, 0
    %p67 = por %p65, %p66
    %s69 = sadd.s32 %s68, 1
    %p72 = scmp.eq.s32.totalorder %s13, 1
    %p73 = scmp.ne.s32.totalorder %s68, %s70
    %p74 = scmp.eq.s32.totalorder %s13, 0
    %p75 = por %p73, %p74
    %p76 = scmp.ne.s32.totalorder %s68, %s70
    %p77 = scmp.eq.s32.totalorder %s18, 1
    %p78 = por %p76, %p77
    %p79 = scmp.ne.s32.totalorder %s70, %s71
    %p80 = scmp.eq.s32.totalorder %s18, 0
    %p81 = por %p79, %p80
    %p82 = scmp.ne.s32.totalorder %s70, %s71
    %p83 = scmp.eq.s32.totalorder %s19, 1
    %p84 = por %p82, %p83
    %p86 = scmp.ne.s32.totalorder %s71, %s85
    %p87 = scmp.eq.s32.totalorder %s19, 0
    %p88 = por %p86, %p87
    %s90 = sadd.s32 %s89, 1
    %p93 = scmp.eq.s32.totalorder %s13, 1
    %p94 = scmp.ne.s32.totalorder %s89, %s91
    %p95 = scmp.eq.s32.totalorder %s13, 0
    %p96 = por %p94, %p95
    %p97 = scmp.ne.s32.totalorder %s89, %s91
    %p98 = scmp.eq.s32.totalorder %s18, 1
    %p99 = por %p97, %p98
    %p100 = scmp.ne.s32.totalorder %s91, %s92
    %p101 = scmp.eq.s32.totalorder %s18, 0
    %p102 = por %p100, %p101
    %p103 = scmp.ne.s32.totalorder %s91, %s92
    %p104 = scmp.eq.s32.totalorder %s19, 1
    %p105 = por %p103, %p104
    %p107 = scmp.ne.s32.totalorder %s92, %s106
    %p108 = scmp.eq.s32.totalorder %s19, 0
    %p109 = por %p107, %p108
    %s111 = sadd.s32 %s110, 1
    %p114 = scmp.eq.s32.totalorder %s13, 1
    %p115 = scmp.ne.s32.totalorder %s110, %s112
    %p116 = scmp.eq.s32.totalorder %s13, 0
    %p117 = por %p115, %p116
    %p118 = scmp.ne.s32.totalorder %s110, %s112
    %p119 = scmp.eq.s32.totalorder %s18, 1
    %p120 = por %p118, %p119
    %p121 = scmp.ne.s32.totalorder %s112, %s113
    %p122 = scmp.eq.s32.totalorder %s18, 0
    %p123 = por %p121, %p122
    %p124 = scmp.ne.s32.totalorder %s112, %s113
    %p125 = scmp.eq.s32.totalorder %s19, 1
    %p126 = por %p124, %p125
    %p128 = scmp.ne.s32.totalorder %s113, %s127
    %p129 = scmp.eq.s32.totalorder %s19, 0
    %p130 = por %p128, %p129
    %s132 = sadd.s32 %s131, 1
    %p135 = scmp.eq.s32.totalorder %s13, 1
    %p136 = scmp.ne.s32.totalorder %s131, %s133
    %p137 = scmp.eq.s32.totalorder %s13, 0
    %p138 = por %p136, %p137
    %p139 = scmp.ne.s32.totalorder %s131, %s133
    %p140 = scmp.eq.s32.totalorder %s18, 1
    %p141 = por %p139, %p140
    %p142 = scmp.ne.s32.totalorder %s133, %s134
    %p143 = scmp.eq.s32.totalorder %s18, 0
    %p144 = por %p142, %p143
    %p145 = scmp.ne.s32.totalorder %s133, %s134
    %p146 = scmp.eq.s32.totalorder %s19, 1
    %p147 = por %p145, %p146
    %p149 = scmp.ne.s32.totalorder %s134, %s148
    %p150 = scmp.eq.s32.totalorder %s19, 0
    %p151 = por %p149, %p150
    %s153 = sadd.s32 %s152, 1
    %p156 = scmp.eq.s32.totalorder %s13, 1
    %p157 = scmp.ne.s32.totalorder %s152, %s154
    %p158 = scmp.eq.s32.totalorder %s13, 0
    %p159 = por %p157, %p158
    %p160 = scmp.ne.s32.totalorder %s152, %s154
    %p161 = scmp.eq.s32.totalorder %s18, 1
    %p162 = por %p160, %p161
    %p163 = scmp.ne.s32.totalorder %s154, %s155
    %p164 = scmp.eq.s32.totalorder %s18, 0
    %p165 = por %p163, %p164
    %p166 = scmp.ne.s32.totalorder %s154, %s155
    %p167 = scmp.eq.s32.totalorder %s19, 1
    %p168 = por %p166, %p167
    %p170 = scmp.ne.s32.totalorder %s155, %s169
    %p171 = scmp.eq.s32.totalorder %s19, 0
    %p172 = por %p170, %p171
    %s173 = ssub.s32 %s13, %s20
    %p174 = scmp.eq.s32.totalorder %s173, 0
    %s176 = sadd.s32 %s175, 1
    %s177 = scalar_select %p174, %s175, %s176
    %p180 = pneg %p174
    %p181 = scmp.eq.s32.totalorder %s13, 1
    %p182 = por %p180, %p181
    %p183 = scmp.ne.s32.totalorder %s175, %s178
    %p184 = scmp.eq.s32.totalorder %s13, 0
    %p185 = por %p183, %p184
    %p186 = scmp.ne.s32.totalorder %s175, %s178
    %p187 = scmp.eq.s32.totalorder %s18, 1
    %p188 = por %p186, %p187
    %p189 = scmp.ne.s32.totalorder %s178, %s179
    %p190 = scmp.eq.s32.totalorder %s18, 0
    %p191 = por %p189, %p190
    %p192 = scmp.ne.s32.totalorder %s178, %s179
    %p193 = scmp.eq.s32.totalorder %s19, 1
    %p194 = por %p192, %p193
    %p196 = scmp.ne.s32.totalorder %s179, %s195
    %p197 = scmp.eq.s32.totalorder %s19, 0
    %p198 = por %p196, %p197
    %p199 = scmp.le.s32.totalorder 1, %s13
    %p200 = scmp.lt.s32.totalorder %s13, 3
    %p201 = pnand %p199, %p200
    %p202 = pneg %p201
    // Predicated region
    $region9: #{feature_network_medium.1} parent=5 // pred_check
      _
    $region10: #{feature_network_medium.1} parent=5 // pred_check_branch
      %204 = sbr.rel (%p201) target = $region12
    $region11: #{feature_network_medium.1} parent=5 // pred_region
      %s205 = ssub.s32 %s13, 1
      // Predicated region
      $region13: #{feature_network_medium.1} parent=11 // pred_check
        %p206 = pneg %p60
      $region14: #{feature_network_medium.1} parent=11 // pred_check_branch
        %208 = sbr.rel (%p206) target = $region16
      $region15: #{feature_network_medium.1} parent=11 // pred_region
        _
      $region16: #{feature_network_medium.1} parent=11 // pred_fallthru
        _
      // Predicated region
      $region17: #{feature_network_medium.1} parent=11 // pred_check
        %p209 = pneg %p81
      $region18: #{feature_network_medium.1} parent=11 // pred_check_branch
        %211 = sbr.rel (%p209) target = $region20
      $region19: #{feature_network_medium.1} parent=11 // pred_region
        _
      $region20: #{feature_network_medium.1} parent=11 // pred_fallthru
        _
      // Predicated region
      $region21: #{feature_network_medium.1} parent=11 // pred_check
        %p212 = pneg %p102
      $region22: #{feature_network_medium.1} parent=11 // pred_check_branch
        %214 = sbr.rel (%p212) target = $region24
      $region23: #{feature_network_medium.1} parent=11 // pred_region
        _
      $region24: #{feature_network_medium.1} parent=11 // pred_fallthru
        _
      // Predicated region
      $region25: #{feature_network_medium.1} parent=11 // pred_check
        %p215 = pneg %p123
      $region26: #{feature_network_medium.1} parent=11 // pred_check_branch
        %217 = sbr.rel (%p215) target = $region28
      $region27: #{feature_network_medium.1} parent=11 // pred_region
        _
      $region28: #{feature_network_medium.1} parent=11 // pred_fallthru
        _
      // Predicated region
      $region29: #{feature_network_medium.1} parent=11 // pred_check
        %p218 = pneg %p144
      $region30: #{feature_network_medium.1} parent=11 // pred_check_branch
        %220 = sbr.rel (%p218) target = $region32
      $region31: #{feature_network_medium.1} parent=11 // pred_region
        _
      $region32: #{feature_network_medium.1} parent=11 // pred_fallthru
        _
      // Predicated region
      $region33: #{feature_network_medium.1} parent=11 // pred_check
        %p221 = pneg %p165
      $region34: #{feature_network_medium.1} parent=11 // pred_check_branch
        %223 = sbr.rel (%p221) target = $region36
      $region35: #{feature_network_medium.1} parent=11 // pred_region
        _
      $region36: #{feature_network_medium.1} parent=11 // pred_fallthru
        _
    $region12: #{feature_network_medium.1} parent=5 // pred_fallthru
      _
    %p224 = scmp.lt.s32.totalorder %s13, 2
    // Predicated region
    $region37: #{feature_network_medium.1} parent=5 // pred_check
      %p225 = pneg %p224
    $region38: #{feature_network_medium.1} parent=5 // pred_check_branch
      %227 = sbr.rel (%p225) target = $region40
    $region39: #{feature_network_medium.1} parent=5 // pred_region
      // Predicated region
      $region41: #{feature_network_medium.1} parent=39 // pred_check
        %p228 = pneg %p33
      $region42: #{feature_network_medium.1} parent=39 // pred_check_branch
        %230 = sbr.rel (%p228) target = $region44
      $region43: #{feature_network_medium.1} parent=39 // pred_region
        %s231 = smul.u32 4, %s13
        %p232 = scmp.lt.s32.totalorder %s231, 7
        %s233 = scalar_select %p232, %s231, 7
        %s234 = smul.addr %s233, 8
        %s235 = smul.addr %s234, 8
        %s236 = scalar_lea.vmem %s0, %s235
        %s237 = smul.u32 4, %s13
      $region44: #{feature_network_medium.1} parent=39 // pred_fallthru
        _
    $region40: #{feature_network_medium.1} parent=5 // pred_fallthru
      _
    %p238 = scmp.le.s32.totalorder 1, %s13
    %p239 = scmp.lt.s32.totalorder %s13, 3
    %p240 = pnand %p238, %p239
    %p241 = pneg %p240
    // Predicated region
    $region45: #{feature_network_medium.1} parent=5 // pred_check
      _
    $region46: #{feature_network_medium.1} parent=5 // pred_check_branch
      %243 = sbr.rel (%p240) target = $region48
    $region47: #{feature_network_medium.1} parent=5 // pred_region
      %s244 = ssub.s32 %s13, 1
      %s245 = smul.u32 4, %s18
      %p246 = scmp.lt.s32.totalorder %s245, 7
      %s247 = scalar_select %p246, %s245, 7
      %s248 = smul.addr %s247, 8
      %s249 = smul.addr %s248, 8
      %s250 = scalar_lea.vmem %s0, %s249
      %p251 = pneg %p39
      %p252 = pneg %p36
      %p253 = pneg %p60
      %p254 = pneg %p57
      %p255 = pneg %p81
      %p256 = pneg %p78
      %p257 = pneg %p102
      %p258 = pneg %p99
      %p259 = pneg %p123
      %p260 = pneg %p120
      %p261 = pneg %p144
      %p262 = pneg %p141
      %p263 = pneg %p165
      %p264 = pneg %p162
      %p265 = pneg %p191
      %p266 = pneg %p188
      %s267 = smul.u32 4, %s18
      %p268 = scmp.lt.s32.totalorder %s267, 7
      %s269 = scalar_select %p268, %s267, 7
      %s270 = smul.addr %s269, 4
      %s271 = scalar_lea.vmem %s7, %s270
      %s272 = smul.u32 4, %s18
      %p273 = scmp.lt.s32.totalorder %s272, 7
      %s274 = scalar_select %p273, %s272, 7
      %s275 = smul.addr %s274, 8
      %s276 = smul.addr %s275, 8
      %s277 = scalar_lea.vmem %s0, %s276
      %s278 = smul.u32 4, %s18
      %s279 = smul.u32 4, %s18
      %p280 = scmp.lt.s32.totalorder %s279, 7
      %s281 = scalar_select %p280, %s279, 7
      %s282 = smul.addr %s281, 4
      %s283 = scalar_lea.vmem %s7, %s282
      %s284 = smul.u32 4, %s18
      %285 = vst [vmem:[#allocation2] sm:$0x3] 0.0
      %286 = vst [vmem:[#allocation2 + $0x42] sm:$0x1] 0.0
      %287 = vst [vmem:[#allocation2 + $0x48] sm:$0x3] 0.0
      %288 = vst [vmem:[#allocation2 + $0x8a] sm:$0x1] 0.0
      %289 = vst [vmem:[#allocation2 + $0x90] sm:$0x3] 0.0
      %290 = vst [vmem:[#allocation2 + $0xd2] sm:$0x1] 0.0
      %291 = vst [vmem:[#allocation2 + $0xd8] sm:$0x3] 0.0
      %292 = vst [vmem:[#allocation2 + $0x11a] sm:$0x1] 0.0
      %v293 = vld [vmem:[%s277] sm:$0xff]
      %v294 = vld [vmem:[%s277 + $0x8] sm:$0xff]
      %v295 = vld [vmem:[%s277 + $0x10] sm:$0xff]
      %v296 = vld [vmem:[%s277 + $0x18] sm:$0xff]
      %v297 = vld [vmem:[%s277 + $0x20] sm:$0xff]
      %v298 = vld [vmem:[%s277 + $0x28] sm:$0xff]
      %v299 = vld [vmem:[%s277 + $0x30] sm:$0xff]
      %v300 = vld [vmem:[%s277 + $0x38] sm:$0xff]
      %v301 = vld [vmem:[%s277 + $0x40] sm:$0xff]
      %v302 = vld [vmem:[%s277 + $0x48] sm:$0xff]
      %v303 = vld [vmem:[%s277 + $0x50] sm:$0xff]
      %v304 = vld [vmem:[%s277 + $0x58] sm:$0xff]
      %v305 = vld [vmem:[%s277 + $0x60] sm:$0xff]
      %v306 = vld [vmem:[%s277 + $0x68] sm:$0xff]
      %v307 = vld [vmem:[%s277 + $0x70] sm:$0xff]
      %v308 = vld [vmem:[%s277 + $0x78] sm:$0xff]
      %v309 = vld [vmem:[%s277 + $0x80] sm:$0xff]
      %v310 = vld [vmem:[%s277 + $0x88] sm:$0xff]
      %v311 = vld [vmem:[%s277 + $0x90] sm:$0xff]
      %v312 = vld [vmem:[%s277 + $0x98] sm:$0xff]
      %v313 = vld [vmem:[%s277 + $0xa0] sm:$0xff]
      %v314 = vld [vmem:[%s277 + $0xa8] sm:$0xff]
      %v315 = vld [vmem:[%s277 + $0xb0] sm:$0xff]
      %v316 = vld [vmem:[%s277 + $0xb8] sm:$0xff]
      %v317 = vld [vmem:[%s277 + $0xc0] sm:$0xff]
      %v318 = vld [vmem:[%s277 + $0xc8] sm:$0xff]
      %v319 = vld [vmem:[%s277 + $0xd0] sm:$0xff]
      %v320 = vld [vmem:[%s277 + $0xd8] sm:$0xff]
      %v321 = vld [vmem:[%s277 + $0xe0] sm:$0xff]
      %v322 = vld [vmem:[%s277 + $0xe8] sm:$0xff]
      %v323 = vld [vmem:[%s277 + $0xf0] sm:$0xff]
      %v324 = vld [vmem:[%s277 + $0xf8] sm:$0xff]
      %v325 = vld [vmem:[%s1] sm:$0xff]
      %v326 = vld [vmem:[%s1 + $0x8] sm:$0xff]
      %v327 = vld [vmem:[%s1 + $0x10] sm:$0xff]
      %v328 = vld [vmem:[%s1 + $0x18] sm:$0xff]
      %v329 = vld [vmem:[%s1 + $0x20] sm:$0xff]
      %v330 = vld [vmem:[%s1 + $0x28] sm:$0xff]
      %v331 = vld [vmem:[%s1 + $0x30] sm:$0xff]
      %v332 = vld [vmem:[%s1 + $0x38] sm:$0xff]
      %v333 = vld [vmem:[%s1 + $0x40] sm:$0xff]
      %v334 = vld [vmem:[%s1 + $0x48] sm:$0xff]
      %v335 = vld [vmem:[%s1 + $0x50] sm:$0xff]
      %v336 = vld [vmem:[%s1 + $0x58] sm:$0xff]
      %v337 = vld [vmem:[%s1 + $0x60] sm:$0xff]
      %v338 = vld [vmem:[%s1 + $0x68] sm:$0xff]
      %v339 = vld [vmem:[%s1 + $0x70] sm:$0xff]
      %v340 = vld [vmem:[%s1 + $0x78] sm:$0xff]
      %v341 = vld [vmem:[%s6] sm:$0x1]
      %v342 = vlaneseq
      %v343 = vshrl.u32 %v342, 7
      %v344 = vsub.s32 0, %v343
      %v345 = vrot.slane %v341, %v344
      %346 = vmatprep.subr.mxu0 0.0
      %347 = vmatpush1.msra.mxu0 %v325
      %348 = vmatprep.subr.mxu0 0.0
      %349 = vmatpush1.msra.mxu0 %v326
      %350 = vmatprep.subr.mxu0 0.0
      %351 = vmatpush1.msra.mxu0 %v327
      %352 = vmatprep.subr.mxu0 0.0
      %353 = vmatpush1.msra.mxu0 %v328
      %354 = vmatprep.subr.mxu0 0.0
      %355 = vmatpush1.msra.mxu0 %v329
      %356 = vmatprep.subr.mxu0 0.0
      %357 = vmatpush1.msra.mxu0 %v330
      %358 = vmatprep.subr.mxu0 0.0
      %359 = vmatpush1.msra.mxu0 %v331
      %360 = vmatprep.subr.mxu0 0.0
      %361 = vmatpush1.msra.mxu0 %v332
      %362 = vmatprep.subr.mxu0 0.0
      %363 = vmatpush1.msra.mxu0 %v333
      %364 = vmatprep.subr.mxu0 0.0
      %365 = vmatpush1.msra.mxu0 %v334
      %366 = vmatprep.subr.mxu0 0.0
      %367 = vmatpush1.msra.mxu0 %v335
      %368 = vmatprep.subr.mxu0 0.0
      %369 = vmatpush1.msra.mxu0 %v336
      %370 = vmatprep.subr.mxu0 0.0
      %371 = vmatpush1.msra.mxu0 %v337
      %372 = vmatprep.subr.mxu0 0.0
      %373 = vmatpush1.msra.mxu0 %v338
      %374 = vmatprep.subr.mxu0 0.0
      %375 = vmatpush1.msra.mxu0 %v339
      %376 = vmatprep.subr.mxu0 0.0
      %377 = vmatpush1.msra.mxu0 %v340
      %378 = vmatprep.subr.mxu0 0.0
      %379 = vmatpush1.msra.mxu0 0.0
      %380 = vmatprep.subr.mxu0 0.0
      %381 = vmatpush1.msra.mxu0 0.0
      %382 = vmatprep.subr.mxu0 0.0
      %383 = vmatpush1.msra.mxu0 0.0
      %384 = vmatprep.subr.mxu0 0.0
      %385 = vmatpush1.msra.mxu0 0.0
      %386 = vmatprep.subr.mxu0 0.0
      %387 = vmatpush1.msra.mxu0 0.0
      %388 = vmatprep.subr.mxu0 0.0
      %389 = vmatpush1.msra.mxu0 0.0
      %390 = vmatprep.subr.mxu0 0.0
      %391 = vmatpush1.msra.mxu0 0.0
      %392 = vmatprep.subr.mxu0 0.0
      %393 = vmatpush1.msra.mxu0 0.0
      %394 = vmatprep.subr.mxu0 0.0
      %395 = vmatpush1.msra.mxu0 0.0
      %396 = vmatprep.subr.mxu0 0.0
      %397 = vmatpush1.msra.mxu0 0.0
      %398 = vmatprep.subr.mxu0 0.0
      %399 = vmatpush1.msra.mxu0 0.0
      %400 = vmatprep.subr.mxu0 0.0
      %401 = vmatpush1.msra.mxu0 0.0
      %402 = vmatprep.subr.mxu0 0.0
      %403 = vmatpush1.msra.mxu0 0.0
      %404 = vmatprep.subr.mxu0 0.0
      %405 = vmatpush1.msra.mxu0 0.0
      %406 = vmatprep.subr.mxu0 0.0
      %407 = vmatpush1.msra.mxu0 0.0
      %408 = vmatprep.subr.mxu0 0.0
      %409 = vmatpush1.msra.mxu0 0.0
      %410 = vmatprep.mubr.f32.mxu0 0.0
      %411 = vmatmul.mubr.f32.gmra.mrb[0].mxu0 %v293
      %v412 = vpop.f32.mrb[0].mxu0
      %v413 = vadd.f32 %v345, %v412
      %v414 = vpop.f32.mrb[0].mxu0
      %415 = vmatprep.mubr.f32.mxu0 0.0
      %416 = vmatmul.mubr.f32.gmra.mrb[0].mxu0 %v294
      %v417 = vpop.f32.mrb[0].mxu0
      %v418 = vadd.f32 %v345, %v417
      %v419 = vpop.f32.mrb[0].mxu0
      %420 = vmatprep.mubr.f32.mxu0 0.0
      %421 = vmatmul.mubr.f32.gmra.mrb[0].mxu0 %v295
      %v422 = vpop.f32.mrb[0].mxu0
      %v423 = vadd.f32 %v345, %v422
      %v424 = vpop.f32.mrb[0].mxu0
      %425 = vmatprep.mubr.f32.mxu0 0.0
      %426 = vmatmul.mubr.f32.gmra.mrb[0].mxu0 %v296
      %v427 = vpop.f32.mrb[0].mxu0
      %v428 = vadd.f32 %v345, %v427
      %v429 = vpop.f32.mrb[0].mxu0
      %430 = vmatprep.mubr.f32.mxu0 0.0
      %431 = vmatmul.mubr.f32.gmra.mrb[0].mxu0 %v297
      %v432 = vpop.f32.mrb[0].mxu0
      %v433 = vadd.f32 %v345, %v432
      %v434 = vpop.f32.mrb[0].mxu0
      %435 = vmatprep.mubr.f32.mxu0 0.0
      %436 = vmatmul.mubr.f32.gmra.mrb[0].mxu0 %v298
      %v437 = vpop.f32.mrb[0].mxu0
      %v438 = vadd.f32 %v345, %v437
      %v439 = vpop.f32.mrb[0].mxu0
      %440 = vmatprep.mubr.f32.mxu0 0.0
      %441 = vmatmul.mubr.f32.gmra.mrb[0].mxu0 %v299
      %v442 = vpop.f32.mrb[0].mxu0
      %v443 = vadd.f32 %v345, %v442
      %v444 = vpop.f32.mrb[0].mxu0
      %445 = vmatprep.mubr.f32.mxu0 0.0
      %446 = vmatmul.mubr.f32.gmra.mrb[0].mxu0 %v300
      %v447 = vpop.f32.mrb[0].mxu0
      %v448 = vadd.f32 %v345, %v447
      %v449 = vpop.f32.mrb[0].mxu0
      %450 = vmatprep.mubr.f32.mxu0 0.0
      %451 = vmatmul.mubr.f32.gmra.mrb[0].mxu0 %v301
      %v452 = vpop.f32.mrb[0].mxu0
      %v453 = vadd.f32 %v345, %v452
      %v454 = vpop.f32.mrb[0].mxu0
      %455 = vmatprep.mubr.f32.mxu0 0.0
      %456 = vmatmul.mubr.f32.gmra.mrb[0].mxu0 %v302
      %v457 = vpop.f32.mrb[0].mxu0
      %v458 = vadd.f32 %v345, %v457
      %v459 = vpop.f32.mrb[0].mxu0
      %460 = vmatprep.mubr.f32.mxu0 0.0
      %461 = vmatmul.mubr.f32.gmra.mrb[0].mxu0 %v303
      %v462 = vpop.f32.mrb[0].mxu0
      %v463 = vadd.f32 %v345, %v462
      %v464 = vpop.f32.mrb[0].mxu0
      %465 = vmatprep.mubr.f32.mxu0 0.0
      %466 = vmatmul.mubr.f32.gmra.mrb[0].mxu0 %v304
      %v467 = vpop.f32.mrb[0].mxu0
      %v468 = vadd.f32 %v345, %v467
      %v469 = vpop.f32.mrb[0].mxu0
      %470 = vmatprep.mubr.f32.mxu0 0.0
      %471 = vmatmul.mubr.f32.gmra.mrb[0].mxu0 %v305
      %v472 = vpop.f32.mrb[0].mxu0
      %v473 = vadd.f32 %v345, %v472
      %v474 = vpop.f32.mrb[0].mxu0
      %475 = vmatprep.mubr.f32.mxu0 0.0
      %476 = vmatmul.mubr.f32.gmra.mrb[0].mxu0 %v306
      %v477 = vpop.f32.mrb[0].mxu0
      %v478 = vadd.f32 %v345, %v477
      %v479 = vpop.f32.mrb[0].mxu0
      %480 = vmatprep.mubr.f32.mxu0 0.0
      %481 = vmatmul.mubr.f32.gmra.mrb[0].mxu0 %v307
      %v482 = vpop.f32.mrb[0].mxu0
      %v483 = vadd.f32 %v345, %v482
      %v484 = vpop.f32.mrb[0].mxu0
      %485 = vmatprep.mubr.f32.mxu0 0.0
      %486 = vmatmul.mubr.f32.gmra.mrb[0].mxu0 %v308
      %v487 = vpop.f32.mrb[0].mxu0
      %v488 = vadd.f32 %v345, %v487
      %v489 = vpop.f32.mrb[0].mxu0
      %490 = vmatprep.mubr.f32.mxu0 0.0
      %491 = vmatmul.mubr.f32.gmra.mrb[0].mxu0 %v309
      %v492 = vpop.f32.mrb[0].mxu0
      %v493 = vadd.f32 %v345, %v492
      %v494 = vpop.f32.mrb[0].mxu0
      %495 = vmatprep.mubr.f32.mxu0 0.0
      %496 = vmatmul.mubr.f32.gmra.mrb[0].mxu0 %v310
      %v497 = vpop.f32.mrb[0].mxu0
      %v498 = vadd.f32 %v345, %v497
      %v499 = vpop.f32.mrb[0].mxu0
      %500 = vmatprep.mubr.f32.mxu0 0.0
      %501 = vmatmul.mubr.f32.gmra.mrb[0].mxu0 %v311
      %v502 = vpop.f32.mrb[0].mxu0
      %v503 = vadd.f32 %v345, %v502
      %v504 = vpop.f32.mrb[0].mxu0
      %505 = vmatprep.mubr.f32.mxu0 0.0
      %506 = vmatmul.mubr.f32.gmra.mrb[0].mxu0 %v312
      %v507 = vpop.f32.mrb[0].mxu0
      %v508 = vadd.f32 %v345, %v507
      %v509 = vpop.f32.mrb[0].mxu0
      %510 = vmatprep.mubr.f32.mxu0 0.0
      %511 = vmatmul.mubr.f32.gmra.mrb[0].mxu0 %v313
      %v512 = vpop.f32.mrb[0].mxu0
      %v513 = vadd.f32 %v345, %v512
      %v514 = vpop.f32.mrb[0].mxu0
      %515 = vmatprep.mubr.f32.mxu0 0.0
      %516 = vmatmul.mubr.f32.gmra.mrb[0].mxu0 %v314
      %v517 = vpop.f32.mrb[0].mxu0
      %v518 = vadd.f32 %v345, %v517
      %v519 = vpop.f32.mrb[0].mxu0
      %520 = vmatprep.mubr.f32.mxu0 0.0
      %521 = vmatmul.mubr.f32.gmra.mrb[0].mxu0 %v315
      %v522 = vpop.f32.mrb[0].mxu0
      %v523 = vadd.f32 %v345, %v522
      %v524 = vpop.f32.mrb[0].mxu0
      %525 = vmatprep.mubr.f32.mxu0 0.0
      %526 = vmatmul.mubr.f32.gmra.mrb[0].mxu0 %v316
      %v527 = vpop.f32.mrb[0].mxu0
      %v528 = vadd.f32 %v345, %v527
      %v529 = vpop.f32.mrb[0].mxu0
      %530 = vmatprep.mubr.f32.mxu0 0.0
      %531 = vmatmul.mubr.f32.gmra.mrb[0].mxu0 %v317
      %v532 = vpop.f32.mrb[0].mxu0
      %v533 = vadd.f32 %v345, %v532
      %v534 = vpop.f32.mrb[0].mxu0
      %535 = vmatprep.mubr.f32.mxu0 0.0
      %536 = vmatmul.mubr.f32.gmra.mrb[0].mxu0 %v318
      %v537 = vpop.f32.mrb[0].mxu0
      %v538 = vadd.f32 %v345, %v537
      %v539 = vpop.f32.mrb[0].mxu0
      %540 = vmatprep.mubr.f32.mxu0 0.0
      %541 = vmatmul.mubr.f32.gmra.mrb[0].mxu0 %v319
      %v542 = vpop.f32.mrb[0].mxu0
      %v543 = vadd.f32 %v345, %v542
      %v544 = vpop.f32.mrb[0].mxu0
      %545 = vmatprep.mubr.f32.mxu0 0.0
      %546 = vmatmul.mubr.f32.gmra.mrb[0].mxu0 %v320
      %v547 = vpop.f32.mrb[0].mxu0
      %v548 = vadd.f32 %v345, %v547
      %v549 = vpop.f32.mrb[0].mxu0
      %550 = vmatprep.mubr.f32.mxu0 0.0
      %551 = vmatmul.mubr.f32.gmra.mrb[0].mxu0 %v321
      %v552 = vpop.f32.mrb[0].mxu0
      %v553 = vadd.f32 %v345, %v552
      %v554 = vpop.f32.mrb[0].mxu0
      %555 = vmatprep.mubr.f32.mxu0 0.0
      %556 = vmatmul.mubr.f32.gmra.mrb[0].mxu0 %v322
      %v557 = vpop.f32.mrb[0].mxu0
      %v558 = vadd.f32 %v345, %v557
      %v559 = vpop.f32.mrb[0].mxu0
      %560 = vmatprep.mubr.f32.mxu0 0.0
      %561 = vmatmul.mubr.f32.gmra.mrb[0].mxu0 %v323
      %v562 = vpop.f32.mrb[0].mxu0
      %v563 = vadd.f32 %v345, %v562
      %v564 = vpop.f32.mrb[0].mxu0
      %565 = vmatprep.mubr.f32.mxu0 0.0
      %566 = vmatmul.mubr.f32.gmra.mrb[0].mxu0 %v324
      %v567 = vpop.f32.mrb[0].mxu0
      %v568 = vadd.f32 %v345, %v567
      %v569 = vpop.f32.mrb[0].mxu0
      %570 = vdwg.mxu0
      %v571 = vmul.f32 %v413, 0.5
      %v572 = vmul.f32 %v418, 0.5
      %v573 = vmul.f32 %v423, 0.5
      %v574 = vmul.f32 %v428, 0.5
      %v575 = vmul.f32 %v433, 0.5
      %v576 = vmul.f32 %v438, 0.5
      %v577 = vmul.f32 %v443, 0.5
      %v578 = vmul.f32 %v448, 0.5
      %v579 = vmul.f32 %v453, 0.5
      %v580 = vmul.f32 %v458, 0.5
      %v581 = vmul.f32 %v463, 0.5
      %v582 = vmul.f32 %v468, 0.5
      %v583 = vmul.f32 %v473, 0.5
      %v584 = vmul.f32 %v478, 0.5
      %v585 = vmul.f32 %v483, 0.5
      %v586 = vmul.f32 %v488, 0.5
      %v587 = vmul.f32 %v493, 0.5
      %v588 = vmul.f32 %v498, 0.5
      %v589 = vmul.f32 %v503, 0.5
      %v590 = vmul.f32 %v508, 0.5
      %v591 = vmul.f32 %v513, 0.5
      %v592 = vmul.f32 %v518, 0.5
      %v593 = vmul.f32 %v523, 0.5
      %v594 = vmul.f32 %v528, 0.5
      %v595 = vmul.f32 %v533, 0.5
      %v596 = vmul.f32 %v538, 0.5
      %v597 = vmul.f32 %v543, 0.5
      %v598 = vmul.f32 %v548, 0.5
      %v599 = vmul.f32 %v553, 0.5
      %v600 = vmul.f32 %v558, 0.5
      %v601 = vmul.f32 %v563, 0.5
      %v602 = vmul.f32 %v568, 0.5
      %v603 = vtanh.pop %v571
      %v604 = vtanh.pop %v572
      %v605 = vtanh.pop %v573
      %v606 = vtanh.pop %v574
      %v607 = vtanh.pop %v575
      %v608 = vtanh.pop %v576
      %v609 = vtanh.pop %v577
      %v610 = vtanh.pop %v578
      %v611 = vtanh.pop %v579
      %v612 = vtanh.pop %v580
      %v613 = vtanh.pop %v581
      %v614 = vtanh.pop %v582
      %v615 = vtanh.pop %v583
      %v616 = vtanh.pop %v584
      %v617 = vtanh.pop %v585
      %v618 = vtanh.pop %v586
      %v619 = vtanh.pop %v587
      %v620 = vtanh.pop %v588
      %v621 = vtanh.pop %v589
      %v622 = vtanh.pop %v590
      %v623 = vtanh.pop %v591
      %v624 = vtanh.pop %v592
      %v625 = vtanh.pop %v593
      %v626 = vtanh.pop %v594
      %v627 = vtanh.pop %v595
      %v628 = vtanh.pop %v596
      %v629 = vtanh.pop %v597
      %v630 = vtanh.pop %v598
      %v631 = vtanh.pop %v599
      %v632 = vtanh.pop %v600
      %v633 = vtanh.pop %v601
      %v634 = vtanh.pop %v602
      %v635 = vmul.f32 %v603, 0.5
      %v636 = vmul.f32 %v604, 0.5
      %v637 = vmul.f32 %v605, 0.5
      %v638 = vmul.f32 %v606, 0.5
      %v639 = vmul.f32 %v607, 0.5
      %v640 = vmul.f32 %v608, 0.5
      %v641 = vmul.f32 %v609, 0.5
      %v642 = vmul.f32 %v610, 0.5
      %v643 = vmul.f32 %v611, 0.5
      %v644 = vmul.f32 %v612, 0.5
      %v645 = vmul.f32 %v613, 0.5
      %v646 = vmul.f32 %v614, 0.5
      %v647 = vmul.f32 %v615, 0.5
      %v648 = vmul.f32 %v616, 0.5
      %v649 = vmul.f32 %v617, 0.5
      %v650 = vmul.f32 %v618, 0.5
      %v651 = vmul.f32 %v619, 0.5
      %v652 = vmul.f32 %v620, 0.5
      %v653 = vmul.f32 %v621, 0.5
      %v654 = vmul.f32 %v622, 0.5
      %v655 = vmul.f32 %v623, 0.5
      %v656 = vmul.f32 %v624, 0.5
      %v657 = vmul.f32 %v625, 0.5
      %v658 = vmul.f32 %v626, 0.5
      %v659 = vmul.f32 %v627, 0.5
      %v660 = vmul.f32 %v628, 0.5
      %v661 = vmul.f32 %v629, 0.5
      %v662 = vmul.f32 %v630, 0.5
      %v663 = vmul.f32 %v631, 0.5
      %v664 = vmul.f32 %v632, 0.5
      %v665 = vmul.f32 %v633, 0.5
      %v666 = vmul.f32 %v634, 0.5
      %v667 = vadd.f32 %v635, 0.5
      %v668 = vadd.f32 %v636, 0.5
      %v669 = vadd.f32 %v637, 0.5
      %v670 = vadd.f32 %v638, 0.5
      %v671 = vadd.f32 %v639, 0.5
      %v672 = vadd.f32 %v640, 0.5
      %v673 = vadd.f32 %v641, 0.5
      %v674 = vadd.f32 %v642, 0.5
      %v675 = vadd.f32 %v643, 0.5
      %v676 = vadd.f32 %v644, 0.5
      %v677 = vadd.f32 %v645, 0.5
      %v678 = vadd.f32 %v646, 0.5
      %v679 = vadd.f32 %v647, 0.5
      %v680 = vadd.f32 %v648, 0.5
      %v681 = vadd.f32 %v649, 0.5
      %v682 = vadd.f32 %v650, 0.5
      %v683 = vadd.f32 %v651, 0.5
      %v684 = vadd.f32 %v652, 0.5
      %v685 = vadd.f32 %v653, 0.5
      %v686 = vadd.f32 %v654, 0.5
      %v687 = vadd.f32 %v655, 0.5
      %v688 = vadd.f32 %v656, 0.5
      %v689 = vadd.f32 %v657, 0.5
      %v690 = vadd.f32 %v658, 0.5
      %v691 = vadd.f32 %v659, 0.5
      %v692 = vadd.f32 %v660, 0.5
      %v693 = vadd.f32 %v661, 0.5
      %v694 = vadd.f32 %v662, 0.5
      %v695 = vadd.f32 %v663, 0.5
      %v696 = vadd.f32 %v664, 0.5
      %v697 = vadd.f32 %v665, 0.5
      %v698 = vadd.f32 %v666, 0.5
      %v699 = vmul.f32 %v413, %v667
      %v700 = vmul.f32 %v418, %v668
      %v701 = vmul.f32 %v423, %v669
      %v702 = vmul.f32 %v428, %v670
      %v703 = vmul.f32 %v433, %v671
      %v704 = vmul.f32 %v438, %v672
      %v705 = vmul.f32 %v443, %v673
      %v706 = vmul.f32 %v448, %v674
      %v707 = vmul.f32 %v453, %v675
      %v708 = vmul.f32 %v458, %v676
      %v709 = vmul.f32 %v463, %v677
      %v710 = vmul.f32 %v468, %v678
      %v711 = vmul.f32 %v473, %v679
      %v712 = vmul.f32 %v478, %v680
      %v713 = vmul.f32 %v483, %v681
      %v714 = vmul.f32 %v488, %v682
      %v715 = vmul.f32 %v493, %v683
      %v716 = vmul.f32 %v498, %v684
      %v717 = vmul.f32 %v503, %v685
      %v718 = vmul.f32 %v508, %v686
      %v719 = vmul.f32 %v513, %v687
      %v720 = vmul.f32 %v518, %v688
      %v721 = vmul.f32 %v523, %v689
      %v722 = vmul.f32 %v528, %v690
      %v723 = vmul.f32 %v533, %v691
      %v724 = vmul.f32 %v538, %v692
      %v725 = vmul.f32 %v543, %v693
      %v726 = vmul.f32 %v548, %v694
      %v727 = vmul.f32 %v553, %v695
      %v728 = vmul.f32 %v558, %v696
      %v729 = vmul.f32 %v563, %v697
      %v730 = vmul.f32 %v568, %v698
      %731 = vst [vmem:[#allocation2 + $0x2] sm:$0xff] %v699
      %732 = vst [vmem:[#allocation2 + $0xa] sm:$0xff] %v700
      %733 = vst [vmem:[#allocation2 + $0x12] sm:$0xff] %v701
      %734 = vst [vmem:[#allocation2 + $0x1a] sm:$0xff] %v702
      %735 = vst [vmem:[#allocation2 + $0x22] sm:$0xff] %v703
      %736 = vst [vmem:[#allocation2 + $0x2a] sm:$0xff] %v704
      %737 = vst [vmem:[#allocation2 + $0x32] sm:$0xff] %v705
      %738 = vst [vmem:[#allocation2 + $0x3a] sm:$0xff] %v706
      %739 = vst [vmem:[#allocation2 + $0x4a] sm:$0xff] %v707
      %740 = vst [vmem:[#allocation2 + $0x52] sm:$0xff] %v708
      %741 = vst [vmem:[#allocation2 + $0x5a] sm:$0xff] %v709
      %742 = vst [vmem:[#allocation2 + $0x62] sm:$0xff] %v710
      %743 = vst [vmem:[#allocation2 + $0x6a] sm:$0xff] %v711
      %744 = vst [vmem:[#allocation2 + $0x72] sm:$0xff] %v712
      %745 = vst [vmem:[#allocation2 + $0x7a] sm:$0xff] %v713
      %746 = vst [vmem:[#allocation2 + $0x82] sm:$0xff] %v714
      %747 = vst [vmem:[#allocation2 + $0x92] sm:$0xff] %v715
      %748 = vst [vmem:[#allocation2 + $0x9a] sm:$0xff] %v716
      %749 = vst [vmem:[#allocation2 + $0xa2] sm:$0xff] %v717
      %750 = vst [vmem:[#allocation2 + $0xaa] sm:$0xff] %v718
      %751 = vst [vmem:[#allocation2 + $0xb2] sm:$0xff] %v719
      %752 = vst [vmem:[#allocation2 + $0xba] sm:$0xff] %v720
      %753 = vst [vmem:[#allocation2 + $0xc2] sm:$0xff] %v721
      %754 = vst [vmem:[#allocation2 + $0xca] sm:$0xff] %v722
      %755 = vst [vmem:[#allocation2 + $0xda] sm:$0xff] %v723
      %756 = vst [vmem:[#allocation2 + $0xe2] sm:$0xff] %v724
      %757 = vst [vmem:[#allocation2 + $0xea] sm:$0xff] %v725
      %758 = vst [vmem:[#allocation2 + $0xf2] sm:$0xff] %v726
      %759 = vst [vmem:[#allocation2 + $0xfa] sm:$0xff] %v727
      %760 = vst [vmem:[#allocation2 + $0x102] sm:$0xff] %v728
      %761 = vst [vmem:[#allocation2 + $0x10a] sm:$0xff] %v729
      %762 = vst [vmem:[#allocation2 + $0x112] sm:$0xff] %v730
      %v763 = vld [vmem:[#allocation2] ss:$2 sm:$0xff]
      %s764 = scalar_lea.vmem [#allocation2], 16
      %v765 = vld [vmem:[%s764] ss:$2 sm:$0xff]
      %s766 = scalar_lea.vmem [#allocation2], 32
      %v767 = vld [vmem:[%s766] ss:$2 sm:$0xff]
      %s768 = scalar_lea.vmem [#allocation2], 48
      %v769 = vld [vmem:[%s768] ss:$2 sm:$0xff]
      %v770 = vld [vmem:[%s2] sm:$0xff]
      %v771 = vld [vmem:[%s2 + $0x8] sm:$0xff]
      %v772 = vld [vmem:[%s2 + $0x10] sm:$0xff]
      %v773 = vld [vmem:[%s2 + $0x18] sm:$0xff]
      %v774 = vld [vmem:[%s2 + $0x20] sm:$0xff]
      %v775 = vld [vmem:[%s2 + $0x28] sm:$0xff]
      %v776 = vld [vmem:[%s2 + $0x30] sm:$0xff]
      %v777 = vld [vmem:[%s2 + $0x38] sm:$0xff]
      %v778 = vld [vmem:[%s2 + $0x40] sm:$0xff]
      %v779 = vld [vmem:[%s2 + $0x48] sm:$0xff]
      %v780 = vld [vmem:[%s2 + $0x50] sm:$0xff]
      %v781 = vld [vmem:[%s2 + $0x58] sm:$0xff]
      %v782 = vld [vmem:[%s2 + $0x60] sm:$0xff]
      %v783 = vld [vmem:[%s2 + $0x68] sm:$0xff]
      %v784 = vld [vmem:[%s2 + $0x70] sm:$0xff]
      %v785 = vld [vmem:[%s2 + $0x78] sm:$0xff]
      %s786 = scalar_lea.vmem [#allocation2], 1
      %v787 = vld [vmem:[%s786] ss:$2 sm:$0xff]
      %s788 = scalar_lea.vmem [#allocation2], 17
      %v789 = vld [vmem:[%s788] ss:$2 sm:$0xff]
      %s790 = scalar_lea.vmem [#allocation2], 33
      %v791 = vld [vmem:[%s790] ss:$2 sm:$0xff]
      %s792 = scalar_lea.vmem [#allocation2], 49
      %v793 = vld [vmem:[%s792] ss:$2 sm:$0xff]
      %s794 = scalar_lea.vmem %s2, 128
      %v795 = vld [vmem:[%s794] sm:$0xff]
      %v796 = vld [vmem:[%s794 + $0x8] sm:$0xff]
      %v797 = vld [vmem:[%s794 + $0x10] sm:$0xff]
      %v798 = vld [vmem:[%s794 + $0x18] sm:$0xff]
      %v799 = vld [vmem:[%s794 + $0x20] sm:$0xff]
      %v800 = vld [vmem:[%s794 + $0x28] sm:$0xff]
      %v801 = vld [vmem:[%s794 + $0x30] sm:$0xff]
      %v802 = vld [vmem:[%s794 + $0x38] sm:$0xff]
      %v803 = vld [vmem:[%s794 + $0x40] sm:$0xff]
      %v804 = vld [vmem:[%s794 + $0x48] sm:$0xff]
      %v805 = vld [vmem:[%s794 + $0x50] sm:$0xff]
      %v806 = vld [vmem:[%s794 + $0x58] sm:$0xff]
      %v807 = vld [vmem:[%s794 + $0x60] sm:$0xff]
      %v808 = vld [vmem:[%s794 + $0x68] sm:$0xff]
      %v809 = vld [vmem:[%s794 + $0x70] sm:$0xff]
      %v810 = vld [vmem:[%s794 + $0x78] sm:$0xff]
      %811 = vmatprep.subr.mxu0 0.0
      %812 = vmatpush1.msra.mxu0 %v795
      %813 = vmatprep.subr.mxu0 0.0
      %814 = vmatpush1.msra.mxu0 %v796
      %815 = vmatprep.subr.mxu0 0.0
      %816 = vmatpush1.msra.mxu0 %v797
      %817 = vmatprep.subr.mxu0 0.0
      %818 = vmatpush1.msra.mxu0 %v798
      %819 = vmatprep.subr.mxu0 0.0
      %820 = vmatpush1.msra.mxu0 %v799
      %821 = vmatprep.subr.mxu0 0.0
      %822 = vmatpush1.msra.mxu0 %v800
      %823 = vmatprep.subr.mxu0 0.0
      %824 = vmatpush1.msra.mxu0 %v801
      %825 = vmatprep.subr.mxu0 0.0
      %826 = vmatpush1.msra.mxu0 %v802
      %827 = vmatprep.subr.mxu0 0.0
      %828 = vmatpush1.msra.mxu0 %v803
      %829 = vmatprep.subr.mxu0 0.0
      %830 = vmatpush1.msra.mxu0 %v804
      %831 = vmatprep.subr.mxu0 0.0
      %832 = vmatpush1.msra.mxu0 %v805
      %833 = vmatprep.subr.mxu0 0.0
      %834 = vmatpush1.msra.mxu0 %v806
      %835 = vmatprep.subr.mxu0 0.0
      %836 = vmatpush1.msra.mxu0 %v807
      %837 = vmatprep.subr.mxu0 0.0
      %838 = vmatpush1.msra.mxu0 %v808
      %839 = vmatprep.subr.mxu0 0.0
      %840 = vmatpush1.msra.mxu0 %v809
      %841 = vmatprep.subr.mxu0 0.0
      %842 = vmatpush1.msra.mxu0 %v810
      %843 = vmatprep.subr.mxu0 0.0
      %844 = vmatpush1.msra.mxu0 0.0
      %845 = vmatprep.subr.mxu0 0.0
      %846 = vmatpush1.msra.mxu0 0.0
      %847 = vmatprep.subr.mxu0 0.0
      %848 = vmatpush1.msra.mxu0 0.0
      %849 = vmatprep.subr.mxu0 0.0
      %850 = vmatpush1.msra.mxu0 0.0
      %851 = vmatprep.subr.mxu0 0.0
      %852 = vmatpush1.msra.mxu0 0.0
      %853 = vmatprep.subr.mxu0 0.0
      %854 = vmatpush1.msra.mxu0 0.0
      %855 = vmatprep.subr.mxu0 0.0
      %856 = vmatpush1.msra.mxu0 0.0
      %857 = vmatprep.subr.mxu0 0.0
      %858 = vmatpush1.msra.mxu0 0.0
      %859 = vmatprep.subr.mxu0 0.0
      %860 = vmatpush1.msra.mxu0 0.0
      %861 = vmatprep.subr.mxu0 0.0
      %862 = vmatpush1.msra.mxu0 0.0
      %863 = vmatprep.subr.mxu0 0.0
      %864 = vmatpush1.msra.mxu0 0.0
      %865 = vmatprep.subr.mxu0 0.0
      %866 = vmatpush1.msra.mxu0 0.0
      %867 = vmatprep.subr.mxu0 0.0
      %868 = vmatpush1.msra.mxu0 0.0
      %869 = vmatprep.subr.mxu0 0.0
      %870 = vmatpush1.msra.mxu0 0.0
      %871 = vmatprep.subr.mxu0 0.0
      %872 = vmatpush1.msra.mxu0 0.0
      %873 = vmatprep.subr.mxu0 0.0
      %874 = vmatpush1.msra.mxu0 0.0
      %875 = vmatprep.mubr.f32.mxu0 0.0
      %876 = vmatmul.mubr.f32.gmra.mrb[0].mxu0 %v787
      %v877 = vpop.f32.mrb[0].mxu0
      %v878 = vadd.f32 0.0, %v877
      %v879 = vpop.f32.mrb[0].mxu0
      %880 = vmatprep.mubr.f32.mxu0 0.0
      %881 = vmatmul.mubr.f32.gmra.mrb[0].mxu0 %v789
      %v882 = vpop.f32.mrb[0].mxu0
      %v883 = vadd.f32 0.0, %v882
      %v884 = vpop.f32.mrb[0].mxu0
      %885 = vmatprep.mubr.f32.mxu0 0.0
      %886 = vmatmul.mubr.f32.gmra.mrb[0].mxu0 %v791
      %v887 = vpop.f32.mrb[0].mxu0
      %v888 = vadd.f32 0.0, %v887
      %v889 = vpop.f32.mrb[0].mxu0
      %890 = vmatprep.mubr.f32.mxu0 0.0
      %891 = vmatmul.mubr.f32.gmra.mrb[0].mxu0 %v793
      %v892 = vpop.f32.mrb[0].mxu0
      %v893 = vadd.f32 0.0, %v892
      %v894 = vpop.f32.mrb[0].mxu0
      %895 = vdwg.mxu0
      %896 = vmatprep.subr.mxu0 0.0
      %897 = vmatpush1.msra.mxu0 %v770
      %898 = vmatprep.subr.mxu0 0.0
      %899 = vmatpush1.msra.mxu0 %v771
      %900 = vmatprep.subr.mxu0 0.0
      %901 = vmatpush1.msra.mxu0 %v772
      %902 = vmatprep.subr.mxu0 0.0
      %903 = vmatpush1.msra.mxu0 %v773
      %904 = vmatprep.subr.mxu0 0.0
      %905 = vmatpush1.msra.mxu0 %v774
      %906 = vmatprep.subr.mxu0 0.0
      %907 = vmatpush1.msra.mxu0 %v775
      %908 = vmatprep.subr.mxu0 0.0
      %909 = vmatpush1.msra.mxu0 %v776
      %910 = vmatprep.subr.mxu0 0.0
      %911 = vmatpush1.msra.mxu0 %v777
      %912 = vmatprep.subr.mxu0 0.0
      %913 = vmatpush1.msra.mxu0 %v778
      %914 = vmatprep.subr.mxu0 0.0
      %915 = vmatpush1.msra.mxu0 %v779
      %916 = vmatprep.subr.mxu0 0.0
      %917 = vmatpush1.msra.mxu0 %v780
      %918 = vmatprep.subr.mxu0 0.0
      %919 = vmatpush1.msra.mxu0 %v781
      %920 = vmatprep.subr.mxu0 0.0
      %921 = vmatpush1.msra.mxu0 %v782
      %922 = vmatprep.subr.mxu0 0.0
      %923 = vmatpush1.msra.mxu0 %v783
      %924 = vmatprep.subr.mxu0 0.0
      %925 = vmatpush1.msra.mxu0 %v784
      %926 = vmatprep.subr.mxu0 0.0
      %927 = vmatpush1.msra.mxu0 %v785
      %928 = vmatprep.subr.mxu0 0.0
      %929 = vmatpush1.msra.mxu0 0.0
      %930 = vmatprep.subr.mxu0 0.0
      %931 = vmatpush1.msra.mxu0 0.0
      %932 = vmatprep.subr.mxu0 0.0
      %933 = vmatpush1.msra.mxu0 0.0
      %934 = vmatprep.subr.mxu0 0.0
      %935 = vmatpush1.msra.mxu0 0.0
      %936 = vmatprep.subr.mxu0 0.0
      %937 = vmatpush1.msra.mxu0 0.0
      %938 = vmatprep.subr.mxu0 0.0
      %939 = vmatpush1.msra.mxu0 0.0
      %940 = vmatprep.subr.mxu0 0.0
      %941 = vmatpush1.msra.mxu0 0.0
      %942 = vmatprep.subr.mxu0 0.0
      %943 = vmatpush1.msra.mxu0 0.0
      %944 = vmatprep.subr.mxu0 0.0
      %945 = vmatpush1.msra.mxu0 0.0
      %946 = vmatprep.subr.mxu0 0.0
      %947 = vmatpush1.msra.mxu0 0.0
      %948 = vmatprep.subr.mxu0 0.0
      %949 = vmatpush1.msra.mxu0 0.0
      %950 = vmatprep.subr.mxu0 0.0
      %951 = vmatpush1.msra.mxu0 0.0
      %952 = vmatprep.subr.mxu0 0.0
      %953 = vmatpush1.msra.mxu0 0.0
      %954 = vmatprep.subr.mxu0 0.0
      %955 = vmatpush1.msra.mxu0 0.0
      %956 = vmatprep.subr.mxu0 0.0
      %957 = vmatpush1.msra.mxu0 0.0
      %958 = vmatprep.subr.mxu0 0.0
      %959 = vmatpush1.msra.mxu0 0.0
      %960 = vmatprep.mubr.f32.mxu0 0.0
      %961 = vmatmul.mubr.f32.gmra.mrb[0].mxu0 %v763
      %v962 = vpop.f32.mrb[0].mxu0
      %v963 = vadd.f32 %v878, %v962
      %v964 = vpop.f32.mrb[0].mxu0
      %965 = vmatprep.mubr.f32.mxu0 0.0
      %966 = vmatmul.mubr.f32.gmra.mrb[0].mxu0 %v765
      %v967 = vpop.f32.mrb[0].mxu0
      %v968 = vadd.f32 %v883, %v967
      %v969 = vpop.f32.mrb[0].mxu0
      %970 = vmatprep.mubr.f32.mxu0 0.0
      %971 = vmatmul.mubr.f32.gmra.mrb[0].mxu0 %v767
      %v972 = vpop.f32.mrb[0].mxu0
      %v973 = vadd.f32 %v888, %v972
      %v974 = vpop.f32.mrb[0].mxu0
      %975 = vmatprep.mubr.f32.mxu0 0.0
      %976 = vmatmul.mubr.f32.gmra.mrb[0].mxu0 %v769
      %v977 = vpop.f32.mrb[0].mxu0
      %v978 = vadd.f32 %v893, %v977
      %v979 = vpop.f32.mrb[0].mxu0
      %980 = vdwg.mxu0
      %s981 = scalar_lea.vmem [#allocation2], 2
      %v982 = vld [vmem:[%s981] ss:$2 sm:$0xff]
      %s983 = scalar_lea.vmem [#allocation2], 18
      %v984 = vld [vmem:[%s983] ss:$2 sm:$0xff]
      %s985 = scalar_lea.vmem [#allocation2], 34
      %v986 = vld [vmem:[%s985] ss:$2 sm:$0xff]
      %s987 = scalar_lea.vmem [#allocation2], 50
      %v988 = vld [vmem:[%s987] ss:$2 sm:$0xff]
      %s989 = scalar_lea.vmem %s2, 256
      %v990 = vld [vmem:[%s989] sm:$0xff]
      %v991 = vld [vmem:[%s989 + $0x8] sm:$0xff]
      %v992 = vld [vmem:[%s989 + $0x10] sm:$0xff]
      %v993 = vld [vmem:[%s989 + $0x18] sm:$0xff]
      %v994 = vld [vmem:[%s989 + $0x20] sm:$0xff]
      %v995 = vld [vmem:[%s989 + $0x28] sm:$0xff]
      %v996 = vld [vmem:[%s989 + $0x30] sm:$0xff]
      %v997 = vld [vmem:[%s989 + $0x38] sm:$0xff]
      %v998 = vld [vmem:[%s989 + $0x40] sm:$0xff]
      %v999 = vld [vmem:[%s989 + $0x48] sm:$0xff]
      %v1000 = vld [vmem:[%s989 + $0x50] sm:$0xff]
      %v1001 = vld [vmem:[%s989 + $0x58] sm:$0xff]
      %v1002 = vld [vmem:[%s989 + $0x60] sm:$0xff]
      %v1003 = vld [vmem:[%s989 + $0x68] sm:$0xff]
      %v1004 = vld [vmem:[%s989 + $0x70] sm:$0xff]
      %v1005 = vld [vmem:[%s989 + $0x78] sm:$0xff]
      %1006 = vmatprep.subr.mxu0 0.0
      %1007 = vmatpush1.msra.mxu0 %v990
      %1008 = vmatprep.subr.mxu0 0.0
      %1009 = vmatpush1.msra.mxu0 %v991
      %1010 = vmatprep.subr.mxu0 0.0
      %1011 = vmatpush1.msra.mxu0 %v992
      %1012 = vmatprep.subr.mxu0 0.0
      %1013 = vmatpush1.msra.mxu0 %v993
      %1014 = vmatprep.subr.mxu0 0.0
      %1015 = vmatpush1.msra.mxu0 %v994
      %1016 = vmatprep.subr.mxu0 0.0
      %1017 = vmatpush1.msra.mxu0 %v995
      %1018 = vmatprep.subr.mxu0 0.0
      %1019 = vmatpush1.msra.mxu0 %v996
      %1020 = vmatprep.subr.mxu0 0.0
      %1021 = vmatpush1.msra.mxu0 %v997
      %1022 = vmatprep.subr.mxu0 0.0
      %1023 = vmatpush1.msra.mxu0 %v998
      %1024 = vmatprep.subr.mxu0 0.0
      %1025 = vmatpush1.msra.mxu0 %v999
      %1026 = vmatprep.subr.mxu0 0.0
      %1027 = vmatpush1.msra.mxu0 %v1000
      %1028 = vmatprep.subr.mxu0 0.0
      %1029 = vmatpush1.msra.mxu0 %v1001
      %1030 = vmatprep.subr.mxu0 0.0
      %1031 = vmatpush1.msra.mxu0 %v1002
      %1032 = vmatprep.subr.mxu0 0.0
      %1033 = vmatpush1.msra.mxu0 %v1003
      %1034 = vmatprep.subr.mxu0 0.0
      %1035 = vmatpush1.msra.mxu0 %v1004
      %1036 = vmatprep.subr.mxu0 0.0
      %1037 = vmatpush1.msra.mxu0 %v1005
      %1038 = vmatprep.subr.mxu0 0.0
      %1039 = vmatpush1.msra.mxu0 0.0
      %1040 = vmatprep.subr.mxu0 0.0
      %1041 = vmatpush1.msra.mxu0 0.0
      %1042 = vmatprep.subr.mxu0 0.0
      %1043 = vmatpush1.msra.mxu0 0.0
      %1044 = vmatprep.subr.mxu0 0.0
      %1045 = vmatpush1.msra.mxu0 0.0
      %1046 = vmatprep.subr.mxu0 0.0
      %1047 = vmatpush1.msra.mxu0 0.0
      %1048 = vmatprep.subr.mxu0 0.0
      %1049 = vmatpush1.msra.mxu0 0.0
      %1050 = vmatprep.subr.mxu0 0.0
      %1051 = vmatpush1.msra.mxu0 0.0
      %1052 = vmatprep.subr.mxu0 0.0
      %1053 = vmatpush1.msra.mxu0 0.0
      %1054 = vmatprep.subr.mxu0 0.0
      %1055 = vmatpush1.msra.mxu0 0.0
      %1056 = vmatprep.subr.mxu0 0.0
      %1057 = vmatpush1.msra.mxu0 0.0
      %1058 = vmatprep.subr.mxu0 0.0
      %1059 = vmatpush1.msra.mxu0 0.0
      %1060 = vmatprep.subr.mxu0 0.0
      %1061 = vmatpush1.msra.mxu0 0.0
      %1062 = vmatprep.subr.mxu0 0.0
      %1063 = vmatpush1.msra.mxu0 0.0
      %1064 = vmatprep.subr.mxu0 0.0
      %1065 = vmatpush1.msra.mxu0 0.0
      %1066 = vmatprep.subr.mxu0 0.0
      %1067 = vmatpush1.msra.mxu0 0.0
      %1068 = vmatprep.subr.mxu0 0.0
      %1069 = vmatpush1.msra.mxu0 0.0
      %1070 = vmatprep.mubr.f32.mxu0 0.0
      %1071 = vmatmul.mubr.f32.gmra.mrb[0].mxu0 %v982
      %v1072 = vpop.f32.mrb[0].mxu0
      %v1073 = vadd.f32 0.0, %v1072
      %v1074 = vpop.f32.mrb[0].mxu0
      %1075 = vmatprep.mubr.f32.mxu0 0.0
      %1076 = vmatmul.mubr.f32.gmra.mrb[0].mxu0 %v984
      %v1077 = vpop.f32.mrb[0].mxu0
      %v1078 = vadd.f32 0.0, %v1077
      %v1079 = vpop.f32.mrb[0].mxu0
      %1080 = vmatprep.mubr.f32.mxu0 0.0
      %1081 = vmatmul.mubr.f32.gmra.mrb[0].mxu0 %v986
      %v1082 = vpop.f32.mrb[0].mxu0
      %v1083 = vadd.f32 0.0, %v1082
      %v1084 = vpop.f32.mrb[0].mxu0
      %1085 = vmatprep.mubr.f32.mxu0 0.0
      %1086 = vmatmul.mubr.f32.gmra.mrb[0].mxu0 %v988
      %v1087 = vpop.f32.mrb[0].mxu0
      %v1088 = vadd.f32 0.0, %v1087
      %v1089 = vpop.f32.mrb[0].mxu0
      %1090 = vdwg.mxu0
      %v1091 = vadd.f32 %v963, %v1073
      %v1092 = vadd.f32 %v968, %v1078
      %v1093 = vadd.f32 %v973, %v1083
      %v1094 = vadd.f32 %v978, %v1088
      %s1095 = scalar_lea.vmem [#allocation2], 3
      %v1096 = vld [vmem:[%s1095] ss:$2 sm:$0xff]
      %s1097 = scalar_lea.vmem [#allocation2], 19
      %v1098 = vld [vmem:[%s1097] ss:$2 sm:$0xff]
      %s1099 = scalar_lea.vmem [#allocation2], 35
      %v1100 = vld [vmem:[%s1099] ss:$2 sm:$0xff]
      %s1101 = scalar_lea.vmem [#allocation2], 51
      %v1102 = vld [vmem:[%s1101] ss:$2 sm:$0xff]
      %s1103 = scalar_lea.vmem %s2, 384
      %v1104 = vld [vmem:[%s1103] sm:$0xff]
      %v1105 = vld [vmem:[%s1103 + $0x8] sm:$0xff]
      %v1106 = vld [vmem:[%s1103 + $0x10] sm:$0xff]
      %v1107 = vld [vmem:[%s1103 + $0x18] sm:$0xff]
      %v1108 = vld [vmem:[%s1103 + $0x20] sm:$0xff]
      %v1109 = vld [vmem:[%s1103 + $0x28] sm:$0xff]
      %v1110 = vld [vmem:[%s1103 + $0x30] sm:$0xff]
      %v1111 = vld [vmem:[%s1103 + $0x38] sm:$0xff]
      %v1112 = vld [vmem:[%s1103 + $0x40] sm:$0xff]
      %v1113 = vld [vmem:[%s1103 + $0x48] sm:$0xff]
      %v1114 = vld [vmem:[%s1103 + $0x50] sm:$0xff]
      %v1115 = vld [vmem:[%s1103 + $0x58] sm:$0xff]
      %v1116 = vld [vmem:[%s1103 + $0x60] sm:$0xff]
      %v1117 = vld [vmem:[%s1103 + $0x68] sm:$0xff]
      %v1118 = vld [vmem:[%s1103 + $0x70] sm:$0xff]
      %v1119 = vld [vmem:[%s1103 + $0x78] sm:$0xff]
      %1120 = vmatprep.subr.mxu0 0.0
      %1121 = vmatpush1.msra.mxu0 %v1104
      %1122 = vmatprep.subr.mxu0 0.0
      %1123 = vmatpush1.msra.mxu0 %v1105
      %1124 = vmatprep.subr.mxu0 0.0
      %1125 = vmatpush1.msra.mxu0 %v1106
      %1126 = vmatprep.subr.mxu0 0.0
      %1127 = vmatpush1.msra.mxu0 %v1107
      %1128 = vmatprep.subr.mxu0 0.0
      %1129 = vmatpush1.msra.mxu0 %v1108
      %1130 = vmatprep.subr.mxu0 0.0
      %1131 = vmatpush1.msra.mxu0 %v1109
      %1132 = vmatprep.subr.mxu0 0.0
      %1133 = vmatpush1.msra.mxu0 %v1110
      %1134 = vmatprep.subr.mxu0 0.0
      %1135 = vmatpush1.msra.mxu0 %v1111
      %1136 = vmatprep.subr.mxu0 0.0
      %1137 = vmatpush1.msra.mxu0 %v1112
      %1138 = vmatprep.subr.mxu0 0.0
      %1139 = vmatpush1.msra.mxu0 %v1113
      %1140 = vmatprep.subr.mxu0 0.0
      %1141 = vmatpush1.msra.mxu0 %v1114
      %1142 = vmatprep.subr.mxu0 0.0
      %1143 = vmatpush1.msra.mxu0 %v1115
      %1144 = vmatprep.subr.mxu0 0.0
      %1145 = vmatpush1.msra.mxu0 %v1116
      %1146 = vmatprep.subr.mxu0 0.0
      %1147 = vmatpush1.msra.mxu0 %v1117
      %1148 = vmatprep.subr.mxu0 0.0
      %1149 = vmatpush1.msra.mxu0 %v1118
      %1150 = vmatprep.subr.mxu0 0.0
      %1151 = vmatpush1.msra.mxu0 %v1119
      %1152 = vmatprep.subr.mxu0 0.0
      %1153 = vmatpush1.msra.mxu0 0.0
      %1154 = vmatprep.subr.mxu0 0.0
      %1155 = vmatpush1.msra.mxu0 0.0
      %1156 = vmatprep.subr.mxu0 0.0
      %1157 = vmatpush1.msra.mxu0 0.0
      %1158 = vmatprep.subr.mxu0 0.0
      %1159 = vmatpush1.msra.mxu0 0.0
      %1160 = vmatprep.subr.mxu0 0.0
      %1161 = vmatpush1.msra.mxu0 0.0
      %1162 = vmatprep.subr.mxu0 0.0
      %1163 = vmatpush1.msra.mxu0 0.0
      %1164 = vmatprep.subr.mxu0 0.0
      %1165 = vmatpush1.msra.mxu0 0.0
      %1166 = vmatprep.subr.mxu0 0.0
      %1167 = vmatpush1.msra.mxu0 0.0
      %1168 = vmatprep.subr.mxu0 0.0
      %1169 = vmatpush1.msra.mxu0 0.0
      %1170 = vmatprep.subr.mxu0 0.0
      %1171 = vmatpush1.msra.mxu0 0.0
      %1172 = vmatprep.subr.mxu0 0.0
      %1173 = vmatpush1.msra.mxu0 0.0
      %1174 = vmatprep.subr.mxu0 0.0
      %1175 = vmatpush1.msra.mxu0 0.0
      %1176 = vmatprep.subr.mxu0 0.0
      %1177 = vmatpush1.msra.mxu0 0.0
      %1178 = vmatprep.subr.mxu0 0.0
      %1179 = vmatpush1.msra.mxu0 0.0
      %1180 = vmatprep.subr.mxu0 0.0
      %1181 = vmatpush1.msra.mxu0 0.0
      %1182 = vmatprep.subr.mxu0 0.0
      %1183 = vmatpush1.msra.mxu0 0.0
      %1184 = vmatprep.mubr.f32.mxu0 0.0
      %1185 = vmatmul.mubr.f32.gmra.mrb[0].mxu0 %v1096
      %v1186 = vpop.f32.mrb[0].mxu0
      %v1187 = vadd.f32 0.0, %v1186
      %v1188 = vpop.f32.mrb[0].mxu0
      %1189 = vmatprep.mubr.f32.mxu0 0.0
      %1190 = vmatmul.mubr.f32.gmra.mrb[0].mxu0 %v1098
      %v1191 = vpop.f32.mrb[0].mxu0
      %v1192 = vadd.f32 0.0, %v1191
      %v1193 = vpop.f32.mrb[0].mxu0
      %1194 = vmatprep.mubr.f32.mxu0 0.0
      %1195 = vmatmul.mubr.f32.gmra.mrb[0].mxu0 %v1100
      %v1196 = vpop.f32.mrb[0].mxu0
      %v1197 = vadd.f32 0.0, %v1196
      %v1198 = vpop.f32.mrb[0].mxu0
      %1199 = vmatprep.mubr.f32.mxu0 0.0
      %1200 = vmatmul.mubr.f32.gmra.mrb[0].mxu0 %v1102
      %v1201 = vpop.f32.mrb[0].mxu0
      %v1202 = vadd.f32 0.0, %v1201
      %v1203 = vpop.f32.mrb[0].mxu0
      %1204 = vdwg.mxu0
      %v1205 = vadd.f32 %v1091, %v1187
      %v1206 = vadd.f32 %v1092, %v1192
      %v1207 = vadd.f32 %v1093, %v1197
      %v1208 = vadd.f32 %v1094, %v1202
      %s1209 = scalar_lea.vmem [#allocation2], 4
      %v1210 = vld [vmem:[%s1209] ss:$2 sm:$0xff]
      %s1211 = scalar_lea.vmem [#allocation2], 20
      %v1212 = vld [vmem:[%s1211] ss:$2 sm:$0xff]
      %s1213 = scalar_lea.vmem [#allocation2], 36
      %v1214 = vld [vmem:[%s1213] ss:$2 sm:$0xff]
      %s1215 = scalar_lea.vmem [#allocation2], 52
      %v1216 = vld [vmem:[%s1215] ss:$2 sm:$0xff]
      %s1217 = scalar_lea.vmem %s2, 512
      %v1218 = vld [vmem:[%s1217] sm:$0xff]
      %v1219 = vld [vmem:[%s1217 + $0x8] sm:$0xff]
      %v1220 = vld [vmem:[%s1217 + $0x10] sm:$0xff]
      %v1221 = vld [vmem:[%s1217 + $0x18] sm:$0xff]
      %v1222 = vld [vmem:[%s1217 + $0x20] sm:$0xff]
      %v1223 = vld [vmem:[%s1217 + $0x28] sm:$0xff]
      %v1224 = vld [vmem:[%s1217 + $0x30] sm:$0xff]
      %v1225 = vld [vmem:[%s1217 + $0x38] sm:$0xff]
      %v1226 = vld [vmem:[%s1217 + $0x40] sm:$0xff]
      %v1227 = vld [vmem:[%s1217 + $0x48] sm:$0xff]
      %v1228 = vld [vmem:[%s1217 + $0x50] sm:$0xff]
      %v1229 = vld [vmem:[%s1217 + $0x58] sm:$0xff]
      %v1230 = vld [vmem:[%s1217 + $0x60] sm:$0xff]
      %v1231 = vld [vmem:[%s1217 + $0x68] sm:$0xff]
      %v1232 = vld [vmem:[%s1217 + $0x70] sm:$0xff]
      %v1233 = vld [vmem:[%s1217 + $0x78] sm:$0xff]
      %1234 = vmatprep.subr.mxu0 0.0
      %1235 = vmatpush1.msra.mxu0 %v1218
      %1236 = vmatprep.subr.mxu0 0.0
      %1237 = vmatpush1.msra.mxu0 %v1219
      %1238 = vmatprep.subr.mxu0 0.0
      %1239 = vmatpush1.msra.mxu0 %v1220
      %1240 = vmatprep.subr.mxu0 0.0
      %1241 = vmatpush1.msra.mxu0 %v1221
      %1242 = vmatprep.subr.mxu0 0.0
      %1243 = vmatpush1.msra.mxu0 %v1222
      %1244 = vmatprep.subr.mxu0 0.0
      %1245 = vmatpush1.msra.mxu0 %v1223
      %1246 = vmatprep.subr.mxu0 0.0
      %1247 = vmatpush1.msra.mxu0 %v1224
      %1248 = vmatprep.subr.mxu0 0.0
      %1249 = vmatpush1.msra.mxu0 %v1225
      %1250 = vmatprep.subr.mxu0 0.0
      %1251 = vmatpush1.msra.mxu0 %v1226
      %1252 = vmatprep.subr.mxu0 0.0
      %1253 = vmatpush1.msra.mxu0 %v1227
      %1254 = vmatprep.subr.mxu0 0.0
      %1255 = vmatpush1.msra.mxu0 %v1228
      %1256 = vmatprep.subr.mxu0 0.0
      %1257 = vmatpush1.msra.mxu0 %v1229
      %1258 = vmatprep.subr.mxu0 0.0
      %1259 = vmatpush1.msra.mxu0 %v1230
      %1260 = vmatprep.subr.mxu0 0.0
      %1261 = vmatpush1.msra.mxu0 %v1231
      %1262 = vmatprep.subr.mxu0 0.0
      %1263 = vmatpush1.msra.mxu0 %v1232
      %1264 = vmatprep.subr.mxu0 0.0
      %1265 = vmatpush1.msra.mxu0 %v1233
      %1266 = vmatprep.subr.mxu0 0.0
      %1267 = vmatpush1.msra.mxu0 0.0
      %1268 = vmatprep.subr.mxu0 0.0
      %1269 = vmatpush1.msra.mxu0 0.0
      %1270 = vmatprep.subr.mxu0 0.0
      %1271 = vmatpush1.msra.mxu0 0.0
      %1272 = vmatprep.subr.mxu0 0.0
      %1273 = vmatpush1.msra.mxu0 0.0
      %1274 = vmatprep.subr.mxu0 0.0
      %1275 = vmatpush1.msra.mxu0 0.0
      %1276 = vmatprep.subr.mxu0 0.0
      %1277 = vmatpush1.msra.mxu0 0.0
      %1278 = vmatprep.subr.mxu0 0.0
      %1279 = vmatpush1.msra.mxu0 0.0
      %1280 = vmatprep.subr.mxu0 0.0
      %1281 = vmatpush1.msra.mxu0 0.0
      %1282 = vmatprep.subr.mxu0 0.0
      %1283 = vmatpush1.msra.mxu0 0.0
      %1284 = vmatprep.subr.mxu0 0.0
      %1285 = vmatpush1.msra.mxu0 0.0
      %1286 = vmatprep.subr.mxu0 0.0
      %1287 = vmatpush1.msra.mxu0 0.0
      %1288 = vmatprep.subr.mxu0 0.0
      %1289 = vmatpush1.msra.mxu0 0.0
      %1290 = vmatprep.subr.mxu0 0.0
      %1291 = vmatpush1.msra.mxu0 0.0
      %1292 = vmatprep.subr.mxu0 0.0
      %1293 = vmatpush1.msra.mxu0 0.0
      %1294 = vmatprep.subr.mxu0 0.0
      %1295 = vmatpush1.msra.mxu0 0.0
      %1296 = vmatprep.subr.mxu0 0.0
      %1297 = vmatpush1.msra.mxu0 0.0
      %1298 = vmatprep.mubr.f32.mxu0 0.0
      %1299 = vmatmul.mubr.f32.gmra.mrb[0].mxu0 %v1210
      %v1300 = vpop.f32.mrb[0].mxu0
      %v1301 = vadd.f32 0.0, %v1300
      %v1302 = vpop.f32.mrb[0].mxu0
      %1303 = vmatprep.mubr.f32.mxu0 0.0
      %1304 = vmatmul.mubr.f32.gmra.mrb[0].mxu0 %v1212
      %v1305 = vpop.f32.mrb[0].mxu0
      %v1306 = vadd.f32 0.0, %v1305
      %v1307 = vpop.f32.mrb[0].mxu0
      %1308 = vmatprep.mubr.f32.mxu0 0.0
      %1309 = vmatmul.mubr.f32.gmra.mrb[0].mxu0 %v1214
      %v1310 = vpop.f32.mrb[0].mxu0
      %v1311 = vadd.f32 0.0, %v1310
      %v1312 = vpop.f32.mrb[0].mxu0
      %1313 = vmatprep.mubr.f32.mxu0 0.0
      %1314 = vmatmul.mubr.f32.gmra.mrb[0].mxu0 %v1216
      %v1315 = vpop.f32.mrb[0].mxu0
      %v1316 = vadd.f32 0.0, %v1315
      %v1317 = vpop.f32.mrb[0].mxu0
      %1318 = vdwg.mxu0
      %v1319 = vadd.f32 %v1205, %v1301
      %v1320 = vadd.f32 %v1206, %v1306
      %v1321 = vadd.f32 %v1207, %v1311
      %v1322 = vadd.f32 %v1208, %v1316
      %v1323 = vld [vmem:[%s6 + $0x1] sm:$0x1]
      %v1324 = vlaneseq
      %v1325 = vshrl.u32 %v1324, 7
      %v1326 = vsub.s32 0, %v1325
      %v1327 = vrot.slane %v1323, %v1326
      %v1328 = vadd.f32 %v1319, %v1327
      %v1329 = vadd.f32 %v1320, %v1327
      %v1330 = vadd.f32 %v1321, %v1327
      %v1331 = vadd.f32 %v1322, %v1327
      %v1332 = vmul.f32 %v1328, 0.5
      %v1333 = vmul.f32 %v1329, 0.5
      %v1334 = vmul.f32 %v1330, 0.5
      %v1335 = vmul.f32 %v1331, 0.5
      %v1336 = vtanh.pop %v1332
      %v1337 = vtanh.pop %v1333
      %v1338 = vtanh.pop %v1334
      %v1339 = vtanh.pop %v1335
      %v1340 = vmul.f32 %v1336, 0.5
      %v1341 = vmul.f32 %v1337, 0.5
      %v1342 = vmul.f32 %v1338, 0.5
      %v1343 = vmul.f32 %v1339, 0.5
      %v1344 = vadd.f32 %v1340, 0.5
      %v1345 = vadd.f32 %v1341, 0.5
      %v1346 = vadd.f32 %v1342, 0.5
      %v1347 = vadd.f32 %v1343, 0.5
      %v1348 = vmul.f32 %v1328, %v1344
      %v1349 = vmul.f32 %v1329, %v1345
      %v1350 = vmul.f32 %v1330, %v1346
      %v1351 = vmul.f32 %v1331, %v1347
      %1352 = vst [vmem:[#allocation3] sm:$0xff] %v1348
      %1353 = vst [vmem:[#allocation3 + $0x8] sm:$0xff] %v1349
      %1354 = vst [vmem:[#allocation3 + $0x10] sm:$0xff] %v1350
      %1355 = vst [vmem:[#allocation3 + $0x18] sm:$0xff] %v1351
      %v1356 = vld [vmem:[#allocation3] ss:$2 sm:$0xff]
      %s1357 = scalar_lea.vmem [#allocation3], 16
      %v1358 = vld [vmem:[%s1357] ss:$2 sm:$0x7f]
      %v1359 = vld [vmem:[%s3] sm:$0xff]
      %v1360 = vld [vmem:[%s3 + $0x8] sm:$0xff]
      %v1361 = vld [vmem:[%s3 + $0x10] sm:$0xff]
      %v1362 = vld [vmem:[%s3 + $0x18] sm:$0xff]
      %v1363 = vld [vmem:[%s3 + $0x20] sm:$0xff]
      %v1364 = vld [vmem:[%s3 + $0x28] sm:$0xff]
      %v1365 = vld [vmem:[%s3 + $0x30] sm:$0xff]
      %v1366 = vld [vmem:[%s3 + $0x38] sm:$0xff]
      %v1367 = vld [vmem:[%s3 + $0x40] sm:$0xff]
      %v1368 = vld [vmem:[%s3 + $0x48] sm:$0xff]
      %v1369 = vld [vmem:[%s3 + $0x50] sm:$0xff]
      %v1370 = vld [vmem:[%s3 + $0x58] sm:$0xff]
      %v1371 = vld [vmem:[%s3 + $0x60] sm:$0xff]
      %v1372 = vld [vmem:[%s3 + $0x68] sm:$0xff]
      %v1373 = vld [vmem:[%s3 + $0x70] sm:$0xff]
      %v1374 = vld [vmem:[%s3 + $0x78] sm:$0xff]
      %s1375 = scalar_lea.vmem [#allocation3], 1
      %v1376 = vld [vmem:[%s1375] ss:$2 sm:$0xff]
      %s1377 = scalar_lea.vmem [#allocation3], 17
      %v1378 = vld [vmem:[%s1377] ss:$2 sm:$0x7f]
      %s1379 = scalar_lea.vmem %s3, 128
      %v1380 = vld [vmem:[%s1379] sm:$0xff]
      %v1381 = vld [vmem:[%s1379 + $0x8] sm:$0xff]
      %v1382 = vld [vmem:[%s1379 + $0x10] sm:$0xff]
      %v1383 = vld [vmem:[%s1379 + $0x18] sm:$0xff]
      %v1384 = vld [vmem:[%s1379 + $0x20] sm:$0xff]
      %v1385 = vld [vmem:[%s1379 + $0x28] sm:$0xff]
      %v1386 = vld [vmem:[%s1379 + $0x30] sm:$0xff]
      %v1387 = vld [vmem:[%s1379 + $0x38] sm:$0xff]
      %v1388 = vld [vmem:[%s1379 + $0x40] sm:$0xff]
      %v1389 = vld [vmem:[%s1379 + $0x48] sm:$0xff]
      %v1390 = vld [vmem:[%s1379 + $0x50] sm:$0xff]
      %v1391 = vld [vmem:[%s1379 + $0x58] sm:$0xff]
      %v1392 = vld [vmem:[%s1379 + $0x60] sm:$0xff]
      %v1393 = vld [vmem:[%s1379 + $0x68] sm:$0xff]
      %v1394 = vld [vmem:[%s1379 + $0x70] sm:$0xff]
      %v1395 = vld [vmem:[%s1379 + $0x78] sm:$0xff]
      %1396 = vmatprep.subr.mxu0 0.0
      %1397 = vmatpush1.msra.mxu0 %v1380
      %1398 = vmatprep.subr.mxu0 0.0
      %1399 = vmatpush1.msra.mxu0 %v1381
      %1400 = vmatprep.subr.mxu0 0.0
      %1401 = vmatpush1.msra.mxu0 %v1382
      %1402 = vmatprep.subr.mxu0 0.0
      %1403 = vmatpush1.msra.mxu0 %v1383
      %1404 = vmatprep.subr.mxu0 0.0
      %1405 = vmatpush1.msra.mxu0 %v1384
      %1406 = vmatprep.subr.mxu0 0.0
      %1407 = vmatpush1.msra.mxu0 %v1385
      %1408 = vmatprep.subr.mxu0 0.0
      %1409 = vmatpush1.msra.mxu0 %v1386
      %1410 = vmatprep.subr.mxu0 0.0
      %1411 = vmatpush1.msra.mxu0 %v1387
      %1412 = vmatprep.subr.mxu0 0.0
      %1413 = vmatpush1.msra.mxu0 %v1388
      %1414 = vmatprep.subr.mxu0 0.0
      %1415 = vmatpush1.msra.mxu0 %v1389
      %1416 = vmatprep.subr.mxu0 0.0
      %1417 = vmatpush1.msra.mxu0 %v1390
      %1418 = vmatprep.subr.mxu0 0.0
      %1419 = vmatpush1.msra.mxu0 %v1391
      %1420 = vmatprep.subr.mxu0 0.0
      %1421 = vmatpush1.msra.mxu0 %v1392
      %1422 = vmatprep.subr.mxu0 0.0
      %1423 = vmatpush1.msra.mxu0 %v1393
      %1424 = vmatprep.subr.mxu0 0.0
      %1425 = vmatpush1.msra.mxu0 %v1394
      %1426 = vmatprep.subr.mxu0 0.0
      %1427 = vmatpush1.msra.mxu0 %v1395
      %1428 = vmatprep.subr.mxu0 0.0
      %1429 = vmatpush1.msra.mxu0 0.0
      %1430 = vmatprep.subr.mxu0 0.0
      %1431 = vmatpush1.msra.mxu0 0.0
      %1432 = vmatprep.subr.mxu0 0.0
      %1433 = vmatpush1.msra.mxu0 0.0
      %1434 = vmatprep.subr.mxu0 0.0
      %1435 = vmatpush1.msra.mxu0 0.0
      %1436 = vmatprep.subr.mxu0 0.0
      %1437 = vmatpush1.msra.mxu0 0.0
      %1438 = vmatprep.subr.mxu0 0.0
      %1439 = vmatpush1.msra.mxu0 0.0
      %1440 = vmatprep.subr.mxu0 0.0
      %1441 = vmatpush1.msra.mxu0 0.0
      %1442 = vmatprep.subr.mxu0 0.0
      %1443 = vmatpush1.msra.mxu0 0.0
      %1444 = vmatprep.subr.mxu0 0.0
      %1445 = vmatpush1.msra.mxu0 0.0
      %1446 = vmatprep.subr.mxu0 0.0
      %1447 = vmatpush1.msra.mxu0 0.0
      %1448 = vmatprep.subr.mxu0 0.0
      %1449 = vmatpush1.msra.mxu0 0.0
      %1450 = vmatprep.subr.mxu0 0.0
      %1451 = vmatpush1.msra.mxu0 0.0
      %1452 = vmatprep.subr.mxu0 0.0
      %1453 = vmatpush1.msra.mxu0 0.0
      %1454 = vmatprep.subr.mxu0 0.0
      %1455 = vmatpush1.msra.mxu0 0.0
      %1456 = vmatprep.subr.mxu0 0.0
      %1457 = vmatpush1.msra.mxu0 0.0
      %1458 = vmatprep.subr.mxu0 0.0
      %1459 = vmatpush1.msra.mxu0 0.0
      %1460 = vmatprep.mubr.f32.mxu0 0.0
      %1461 = vmatmul.mubr.f32.gmra.mrb[0].mxu0 %v1376
      %v1462 = vpop.f32.mrb[0].mxu0
      %v1463 = vadd.f32 0.0, %v1462
      %v1464 = vpop.f32.mrb[0].mxu0
      %1465 = vmatprep.mubr.f32.mxu0 0.0
      %1466 = vmatmul.mubr.f32.gmra.mrb[0].mxu0 %v1378
      %v1467 = vpop.f32.mrb[0].mxu0
      %v1468 = vadd.f32 0.0, %v1467
      %v1469 = vpop.f32.mrb[0].mxu0
      %1470 = vdwg.mxu0
      %1471 = vmatprep.subr.mxu0 0.0
      %1472 = vmatpush1.msra.mxu0 %v1359
      %1473 = vmatprep.subr.mxu0 0.0
      %1474 = vmatpush1.msra.mxu0 %v1360
      %1475 = vmatprep.subr.mxu0 0.0
      %1476 = vmatpush1.msra.mxu0 %v1361
      %1477 = vmatprep.subr.mxu0 0.0
      %1478 = vmatpush1.msra.mxu0 %v1362
      %1479 = vmatprep.subr.mxu0 0.0
      %1480 = vmatpush1.msra.mxu0 %v1363
      %1481 = vmatprep.subr.mxu0 0.0
      %1482 = vmatpush1.msra.mxu0 %v1364
      %1483 = vmatprep.subr.mxu0 0.0
      %1484 = vmatpush1.msra.mxu0 %v1365
      %1485 = vmatprep.subr.mxu0 0.0
      %1486 = vmatpush1.msra.mxu0 %v1366
      %1487 = vmatprep.subr.mxu0 0.0
      %1488 = vmatpush1.msra.mxu0 %v1367
      %1489 = vmatprep.subr.mxu0 0.0
      %1490 = vmatpush1.msra.mxu0 %v1368
      %1491 = vmatprep.subr.mxu0 0.0
      %1492 = vmatpush1.msra.mxu0 %v1369
      %1493 = vmatprep.subr.mxu0 0.0
      %1494 = vmatpush1.msra.mxu0 %v1370
      %1495 = vmatprep.subr.mxu0 0.0
      %1496 = vmatpush1.msra.mxu0 %v1371
      %1497 = vmatprep.subr.mxu0 0.0
      %1498 = vmatpush1.msra.mxu0 %v1372
      %1499 = vmatprep.subr.mxu0 0.0
      %1500 = vmatpush1.msra.mxu0 %v1373
      %1501 = vmatprep.subr.mxu0 0.0
      %1502 = vmatpush1.msra.mxu0 %v1374
      %1503 = vmatprep.subr.mxu0 0.0
      %1504 = vmatpush1.msra.mxu0 0.0
      %1505 = vmatprep.subr.mxu0 0.0
      %1506 = vmatpush1.msra.mxu0 0.0
      %1507 = vmatprep.subr.mxu0 0.0
      %1508 = vmatpush1.msra.mxu0 0.0
      %1509 = vmatprep.subr.mxu0 0.0
      %1510 = vmatpush1.msra.mxu0 0.0
      %1511 = vmatprep.subr.mxu0 0.0
      %1512 = vmatpush1.msra.mxu0 0.0
      %1513 = vmatprep.subr.mxu0 0.0
      %1514 = vmatpush1.msra.mxu0 0.0
      %1515 = vmatprep.subr.mxu0 0.0
      %1516 = vmatpush1.msra.mxu0 0.0
      %1517 = vmatprep.subr.mxu0 0.0
      %1518 = vmatpush1.msra.mxu0 0.0
      %1519 = vmatprep.subr.mxu0 0.0
      %1520 = vmatpush1.msra.mxu0 0.0
      %1521 = vmatprep.subr.mxu0 0.0
      %1522 = vmatpush1.msra.mxu0 0.0
      %1523 = vmatprep.subr.mxu0 0.0
      %1524 = vmatpush1.msra.mxu0 0.0
      %1525 = vmatprep.subr.mxu0 0.0
      %1526 = vmatpush1.msra.mxu0 0.0
      %1527 = vmatprep.subr.mxu0 0.0
      %1528 = vmatpush1.msra.mxu0 0.0
      %1529 = vmatprep.subr.mxu0 0.0
      %1530 = vmatpush1.msra.mxu0 0.0
      %1531 = vmatprep.subr.mxu0 0.0
      %1532 = vmatpush1.msra.mxu0 0.0
      %1533 = vmatprep.subr.mxu0 0.0
      %1534 = vmatpush1.msra.mxu0 0.0
      %1535 = vmatprep.mubr.f32.mxu0 0.0
      %1536 = vmatmul.mubr.f32.gmra.mrb[0].mxu0 %v1356
      %v1537 = vpop.f32.mrb[0].mxu0
      %v1538 = vadd.f32 %v1463, %v1537
      %v1539 = vpop.f32.mrb[0].mxu0
      %1540 = vmatprep.mubr.f32.mxu0 0.0
      %1541 = vmatmul.mubr.f32.gmra.mrb[0].mxu0 %v1358
      %v1542 = vpop.f32.mrb[0].mxu0
      %v1543 = vadd.f32 %v1468, %v1542
      %v1544 = vpop.f32.mrb[0].mxu0
      %1545 = vdwg.mxu0
      %s1546 = scalar_lea.vmem [#allocation3], 2
      %v1547 = vld [vmem:[%s1546] ss:$2 sm:$0xff]
      %s1548 = scalar_lea.vmem [#allocation3], 18
      %v1549 = vld [vmem:[%s1548] ss:$2 sm:$0x7f]
      %s1550 = scalar_lea.vmem %s3, 256
      %v1551 = vld [vmem:[%s1550] sm:$0xff]
      %v1552 = vld [vmem:[%s1550 + $0x8] sm:$0xff]
      %v1553 = vld [vmem:[%s1550 + $0x10] sm:$0xff]
      %v1554 = vld [vmem:[%s1550 + $0x18] sm:$0xff]
      %v1555 = vld [vmem:[%s1550 + $0x20] sm:$0xff]
      %v1556 = vld [vmem:[%s1550 + $0x28] sm:$0xff]
      %v1557 = vld [vmem:[%s1550 + $0x30] sm:$0xff]
      %v1558 = vld [vmem:[%s1550 + $0x38] sm:$0xff]
      %v1559 = vld [vmem:[%s1550 + $0x40] sm:$0xff]
      %v1560 = vld [vmem:[%s1550 + $0x48] sm:$0xff]
      %v1561 = vld [vmem:[%s1550 + $0x50] sm:$0xff]
      %v1562 = vld [vmem:[%s1550 + $0x58] sm:$0xff]
      %v1563 = vld [vmem:[%s1550 + $0x60] sm:$0xff]
      %v1564 = vld [vmem:[%s1550 + $0x68] sm:$0xff]
      %v1565 = vld [vmem:[%s1550 + $0x70] sm:$0xff]
      %v1566 = vld [vmem:[%s1550 + $0x78] sm:$0xff]
      %1567 = vmatprep.subr.mxu0 0.0
      %1568 = vmatpush1.msra.mxu0 %v1551
      %1569 = vmatprep.subr.mxu0 0.0
      %1570 = vmatpush1.msra.mxu0 %v1552
      %1571 = vmatprep.subr.mxu0 0.0
      %1572 = vmatpush1.msra.mxu0 %v1553
      %1573 = vmatprep.subr.mxu0 0.0
      %1574 = vmatpush1.msra.mxu0 %v1554
      %1575 = vmatprep.subr.mxu0 0.0
      %1576 = vmatpush1.msra.mxu0 %v1555
      %1577 = vmatprep.subr.mxu0 0.0
      %1578 = vmatpush1.msra.mxu0 %v1556
      %1579 = vmatprep.subr.mxu0 0.0
      %1580 = vmatpush1.msra.mxu0 %v1557
      %1581 = vmatprep.subr.mxu0 0.0
      %1582 = vmatpush1.msra.mxu0 %v1558
      %1583 = vmatprep.subr.mxu0 0.0
      %1584 = vmatpush1.msra.mxu0 %v1559
      %1585 = vmatprep.subr.mxu0 0.0
      %1586 = vmatpush1.msra.mxu0 %v1560
      %1587 = vmatprep.subr.mxu0 0.0
      %1588 = vmatpush1.msra.mxu0 %v1561
      %1589 = vmatprep.subr.mxu0 0.0
      %1590 = vmatpush1.msra.mxu0 %v1562
      %1591 = vmatprep.subr.mxu0 0.0
      %1592 = vmatpush1.msra.mxu0 %v1563
      %1593 = vmatprep.subr.mxu0 0.0
      %1594 = vmatpush1.msra.mxu0 %v1564
      %1595 = vmatprep.subr.mxu0 0.0
      %1596 = vmatpush1.msra.mxu0 %v1565
      %1597 = vmatprep.subr.mxu0 0.0
      %1598 = vmatpush1.msra.mxu0 %v1566
      %1599 = vmatprep.subr.mxu0 0.0
      %1600 = vmatpush1.msra.mxu0 0.0
      %1601 = vmatprep.subr.mxu0 0.0
      %1602 = vmatpush1.msra.mxu0 0.0
      %1603 = vmatprep.subr.mxu0 0.0
      %1604 = vmatpush1.msra.mxu0 0.0
      %1605 = vmatprep.subr.mxu0 0.0
      %1606 = vmatpush1.msra.mxu0 0.0
      %1607 = vmatprep.subr.mxu0 0.0
      %1608 = vmatpush1.msra.mxu0 0.0
      %1609 = vmatprep.subr.mxu0 0.0
      %1610 = vmatpush1.msra.mxu0 0.0
      %1611 = vmatprep.subr.mxu0 0.0
      %1612 = vmatpush1.msra.mxu0 0.0
      %1613 = vmatprep.subr.mxu0 0.0
      %1614 = vmatpush1.msra.mxu0 0.0
      %1615 = vmatprep.subr.mxu0 0.0
      %1616 = vmatpush1.msra.mxu0 0.0
      %1617 = vmatprep.subr.mxu0 0.0
      %1618 = vmatpush1.msra.mxu0 0.0
      %1619 = vmatprep.subr.mxu0 0.0
      %1620 = vmatpush1.msra.mxu0 0.0
      %1621 = vmatprep.subr.mxu0 0.0
      %1622 = vmatpush1.msra.mxu0 0.0
      %1623 = vmatprep.subr.mxu0 0.0
      %1624 = vmatpush1.msra.mxu0 0.0
      %1625 = vmatprep.subr.mxu0 0.0
      %1626 = vmatpush1.msra.mxu0 0.0
      %1627 = vmatprep.subr.mxu0 0.0
      %1628 = vmatpush1.msra.mxu0 0.0
      %1629 = vmatprep.subr.mxu0 0.0
      %1630 = vmatpush1.msra.mxu0 0.0
      %1631 = vmatprep.mubr.f32.mxu0 0.0
      %1632 = vmatmul.mubr.f32.gmra.mrb[0].mxu0 %v1547
      %v1633 = vpop.f32.mrb[0].mxu0
      %v1634 = vadd.f32 0.0, %v1633
      %v1635 = vpop.f32.mrb[0].mxu0
      %1636 = vmatprep.mubr.f32.mxu0 0.0
      %1637 = vmatmul.mubr.f32.gmra.mrb[0].mxu0 %v1549
      %v1638 = vpop.f32.mrb[0].mxu0
      %v1639 = vadd.f32 0.0, %v1638
      %v1640 = vpop.f32.mrb[0].mxu0
      %1641 = vdwg.mxu0
      %v1642 = vadd.f32 %v1538, %v1634
      %v1643 = vadd.f32 %v1543, %v1639
      %v1644 = vld [vmem:[%s6 + $0x2] sm:$0x1]
      %v1645 = vlaneseq
      %v1646 = vshrl.u32 %v1645, 7
      %v1647 = vsub.s32 0, %v1646
      %v1648 = vrot.slane %v1644, %v1647
      %v1649 = vadd.f32 %v1642, %v1648
      %v1650 = vadd.f32 %v1643, %v1648
      %v1651 = vmul.f32 %v1649, 0.5
      %v1652 = vmul.f32 %v1650, 0.5
      %v1653 = vtanh.pop %v1651
      %v1654 = vtanh.pop %v1652
      %v1655 = vmul.f32 %v1653, 0.5
      %v1656 = vmul.f32 %v1654, 0.5
      %v1657 = vadd.f32 %v1655, 0.5
      %v1658 = vadd.f32 %v1656, 0.5
      %v1659 = vmul.f32 %v1649, %v1657
      %v1660 = vmul.f32 %v1650, %v1658
      %1661 = vst [vmem:[#allocation4] sm:$0xff] %v1659
      %1662 = vst [vmem:[#allocation4 + $0x8] sm:$0x7f] %v1660
      %v1663 = vld [vmem:[#allocation4] ss:$2 sm:$0x7f]
      %v1664 = vld [vmem:[%s4] sm:$0xff]
      %v1665 = vld [vmem:[%s4 + $0x8] sm:$0xff]
      %v1666 = vld [vmem:[%s4 + $0x10] sm:$0xff]
      %v1667 = vld [vmem:[%s4 + $0x18] sm:$0xff]
      %v1668 = vld [vmem:[%s4 + $0x20] sm:$0xff]
      %v1669 = vld [vmem:[%s4 + $0x28] sm:$0xff]
      %v1670 = vld [vmem:[%s4 + $0x30] sm:$0xff]
      %v1671 = vld [vmem:[%s4 + $0x38] sm:$0xff]
      %v1672 = vld [vmem:[%s4 + $0x40] sm:$0xff]
      %v1673 = vld [vmem:[%s4 + $0x48] sm:$0xff]
      %v1674 = vld [vmem:[%s4 + $0x50] sm:$0xff]
      %v1675 = vld [vmem:[%s4 + $0x58] sm:$0xff]
      %v1676 = vld [vmem:[%s4 + $0x60] sm:$0xff]
      %v1677 = vld [vmem:[%s4 + $0x68] sm:$0xff]
      %v1678 = vld [vmem:[%s4 + $0x70] sm:$0xff]
      %v1679 = vld [vmem:[%s4 + $0x78] sm:$0xff]
      %s1680 = scalar_lea.vmem [#allocation4], 1
      %v1681 = vld [vmem:[%s1680] ss:$2 sm:$0x7f]
      %s1682 = scalar_lea.vmem %s4, 128
      %v1683 = vld [vmem:[%s1682] sm:$0xff]
      %v1684 = vld [vmem:[%s1682 + $0x8] sm:$0xff]
      %v1685 = vld [vmem:[%s1682 + $0x10] sm:$0xff]
      %v1686 = vld [vmem:[%s1682 + $0x18] sm:$0xff]
      %v1687 = vld [vmem:[%s1682 + $0x20] sm:$0xff]
      %v1688 = vld [vmem:[%s1682 + $0x28] sm:$0xff]
      %v1689 = vld [vmem:[%s1682 + $0x30] sm:$0xff]
      %v1690 = vld [vmem:[%s1682 + $0x38] sm:$0xff]
      %v1691 = vld [vmem:[%s1682 + $0x40] sm:$0xff]
      %v1692 = vld [vmem:[%s1682 + $0x48] sm:$0xff]
      %v1693 = vld [vmem:[%s1682 + $0x50] sm:$0xff]
      %v1694 = vld [vmem:[%s1682 + $0x58] sm:$0xff]
      %v1695 = vld [vmem:[%s1682 + $0x60] sm:$0xff]
      %v1696 = vld [vmem:[%s1682 + $0x68] sm:$0xff]
      %v1697 = vld [vmem:[%s1682 + $0x70] sm:$0xff]
      %v1698 = vld [vmem:[%s1682 + $0x78] sm:$0xff]
      %1699 = vmatprep.subr.mxu0 0.0
      %1700 = vmatpush1.msra.mxu0 %v1683
      %1701 = vmatprep.subr.mxu0 0.0
      %1702 = vmatpush1.msra.mxu0 %v1684
      %1703 = vmatprep.subr.mxu0 0.0
      %1704 = vmatpush1.msra.mxu0 %v1685
      %1705 = vmatprep.subr.mxu0 0.0
      %1706 = vmatpush1.msra.mxu0 %v1686
      %1707 = vmatprep.subr.mxu0 0.0
      %1708 = vmatpush1.msra.mxu0 %v1687
      %1709 = vmatprep.subr.mxu0 0.0
      %1710 = vmatpush1.msra.mxu0 %v1688
      %1711 = vmatprep.subr.mxu0 0.0
      %1712 = vmatpush1.msra.mxu0 %v1689
      %1713 = vmatprep.subr.mxu0 0.0
      %1714 = vmatpush1.msra.mxu0 %v1690
      %1715 = vmatprep.subr.mxu0 0.0
      %1716 = vmatpush1.msra.mxu0 %v1691
      %1717 = vmatprep.subr.mxu0 0.0
      %1718 = vmatpush1.msra.mxu0 %v1692
      %1719 = vmatprep.subr.mxu0 0.0
      %1720 = vmatpush1.msra.mxu0 %v1693
      %1721 = vmatprep.subr.mxu0 0.0
      %1722 = vmatpush1.msra.mxu0 %v1694
      %1723 = vmatprep.subr.mxu0 0.0
      %1724 = vmatpush1.msra.mxu0 %v1695
      %1725 = vmatprep.subr.mxu0 0.0
      %1726 = vmatpush1.msra.mxu0 %v1696
      %1727 = vmatprep.subr.mxu0 0.0
      %1728 = vmatpush1.msra.mxu0 %v1697
      %1729 = vmatprep.subr.mxu0 0.0
      %1730 = vmatpush1.msra.mxu0 %v1698
      %1731 = vmatprep.subr.mxu0 0.0
      %1732 = vmatpush1.msra.mxu0 0.0
      %1733 = vmatprep.subr.mxu0 0.0
      %1734 = vmatpush1.msra.mxu0 0.0
      %1735 = vmatprep.subr.mxu0 0.0
      %1736 = vmatpush1.msra.mxu0 0.0
      %1737 = vmatprep.subr.mxu0 0.0
      %1738 = vmatpush1.msra.mxu0 0.0
      %1739 = vmatprep.subr.mxu0 0.0
      %1740 = vmatpush1.msra.mxu0 0.0
      %1741 = vmatprep.subr.mxu0 0.0
      %1742 = vmatpush1.msra.mxu0 0.0
      %1743 = vmatprep.subr.mxu0 0.0
      %1744 = vmatpush1.msra.mxu0 0.0
      %1745 = vmatprep.subr.mxu0 0.0
      %1746 = vmatpush1.msra.mxu0 0.0
      %1747 = vmatprep.subr.mxu0 0.0
      %1748 = vmatpush1.msra.mxu0 0.0
      %1749 = vmatprep.subr.mxu0 0.0
      %1750 = vmatpush1.msra.mxu0 0.0
      %1751 = vmatprep.subr.mxu0 0.0
      %1752 = vmatpush1.msra.mxu0 0.0
      %1753 = vmatprep.subr.mxu0 0.0
      %1754 = vmatpush1.msra.mxu0 0.0
      %1755 = vmatprep.subr.mxu0 0.0
      %1756 = vmatpush1.msra.mxu0 0.0
      %1757 = vmatprep.subr.mxu0 0.0
      %1758 = vmatpush1.msra.mxu0 0.0
      %1759 = vmatprep.subr.mxu0 0.0
      %1760 = vmatpush1.msra.mxu0 0.0
      %1761 = vmatprep.subr.mxu0 0.0
      %1762 = vmatpush1.msra.mxu0 0.0
      %1763 = vmatprep.mubr.f32.mxu0 0.0
      %1764 = vmatmul.mubr.f32.gmra.mrb[0].mxu0 %v1681
      %v1765 = vpop.f32.mrb[0].mxu0
      %v1766 = vadd.f32 0.0, %v1765
      %v1767 = vpop.f32.mrb[0].mxu0
      %1768 = vdwg.mxu0
      %1769 = vmatprep.subr.mxu0 0.0
      %1770 = vmatpush1.msra.mxu0 %v1664
      %1771 = vmatprep.subr.mxu0 0.0
      %1772 = vmatpush1.msra.mxu0 %v1665
      %1773 = vmatprep.subr.mxu0 0.0
      %1774 = vmatpush1.msra.mxu0 %v1666
      %1775 = vmatprep.subr.mxu0 0.0
      %1776 = vmatpush1.msra.mxu0 %v1667
      %1777 = vmatprep.subr.mxu0 0.0
      %1778 = vmatpush1.msra.mxu0 %v1668
      %1779 = vmatprep.subr.mxu0 0.0
      %1780 = vmatpush1.msra.mxu0 %v1669
      %1781 = vmatprep.subr.mxu0 0.0
      %1782 = vmatpush1.msra.mxu0 %v1670
      %1783 = vmatprep.subr.mxu0 0.0
      %1784 = vmatpush1.msra.mxu0 %v1671
      %1785 = vmatprep.subr.mxu0 0.0
      %1786 = vmatpush1.msra.mxu0 %v1672
      %1787 = vmatprep.subr.mxu0 0.0
      %1788 = vmatpush1.msra.mxu0 %v1673
      %1789 = vmatprep.subr.mxu0 0.0
      %1790 = vmatpush1.msra.mxu0 %v1674
      %1791 = vmatprep.subr.mxu0 0.0
      %1792 = vmatpush1.msra.mxu0 %v1675
      %1793 = vmatprep.subr.mxu0 0.0
      %1794 = vmatpush1.msra.mxu0 %v1676
      %1795 = vmatprep.subr.mxu0 0.0
      %1796 = vmatpush1.msra.mxu0 %v1677
      %1797 = vmatprep.subr.mxu0 0.0
      %1798 = vmatpush1.msra.mxu0 %v1678
      %1799 = vmatprep.subr.mxu0 0.0
      %1800 = vmatpush1.msra.mxu0 %v1679
      %1801 = vmatprep.subr.mxu0 0.0
      %1802 = vmatpush1.msra.mxu0 0.0
      %1803 = vmatprep.subr.mxu0 0.0
      %1804 = vmatpush1.msra.mxu0 0.0
      %1805 = vmatprep.subr.mxu0 0.0
      %1806 = vmatpush1.msra.mxu0 0.0
      %1807 = vmatprep.subr.mxu0 0.0
      %1808 = vmatpush1.msra.mxu0 0.0
      %1809 = vmatprep.subr.mxu0 0.0
      %1810 = vmatpush1.msra.mxu0 0.0
      %1811 = vmatprep.subr.mxu0 0.0
      %1812 = vmatpush1.msra.mxu0 0.0
      %1813 = vmatprep.subr.mxu0 0.0
      %1814 = vmatpush1.msra.mxu0 0.0
      %1815 = vmatprep.subr.mxu0 0.0
      %1816 = vmatpush1.msra.mxu0 0.0
      %1817 = vmatprep.subr.mxu0 0.0
      %1818 = vmatpush1.msra.mxu0 0.0
      %1819 = vmatprep.subr.mxu0 0.0
      %1820 = vmatpush1.msra.mxu0 0.0
      %1821 = vmatprep.subr.mxu0 0.0
      %1822 = vmatpush1.msra.mxu0 0.0
      %1823 = vmatprep.subr.mxu0 0.0
      %1824 = vmatpush1.msra.mxu0 0.0
      %1825 = vmatprep.subr.mxu0 0.0
      %1826 = vmatpush1.msra.mxu0 0.0
      %1827 = vmatprep.subr.mxu0 0.0
      %1828 = vmatpush1.msra.mxu0 0.0
      %1829 = vmatprep.subr.mxu0 0.0
      %1830 = vmatpush1.msra.mxu0 0.0
      %1831 = vmatprep.subr.mxu0 0.0
      %1832 = vmatpush1.msra.mxu0 0.0
      %1833 = vmatprep.mubr.f32.mxu0 0.0
      %1834 = vmatmul.mubr.f32.gmra.mrb[0].mxu0 %v1663
      %v1835 = vpop.f32.mrb[0].mxu0
      %v1836 = vadd.f32 %v1766, %v1835
      %v1837 = vpop.f32.mrb[0].mxu0
      %1838 = vdwg.mxu0
      %s1839 = scalar_lea.vmem [#allocation4], 2
      %v1840 = vld [vmem:[%s1839] ss:$2 sm:$0x7f]
      %s1841 = scalar_lea.vmem %s4, 256
      %v1842 = vld [vmem:[%s1841] sm:$0xff]
      %v1843 = vld [vmem:[%s1841 + $0x8] sm:$0xff]
      %v1844 = vld [vmem:[%s1841 + $0x10] sm:$0xff]
      %v1845 = vld [vmem:[%s1841 + $0x18] sm:$0xff]
      %v1846 = vld [vmem:[%s1841 + $0x20] sm:$0xff]
      %v1847 = vld [vmem:[%s1841 + $0x28] sm:$0xff]
      %v1848 = vld [vmem:[%s1841 + $0x30] sm:$0xff]
      %v1849 = vld [vmem:[%s1841 + $0x38] sm:$0xff]
      %v1850 = vld [vmem:[%s1841 + $0x40] sm:$0xff]
      %v1851 = vld [vmem:[%s1841 + $0x48] sm:$0xff]
      %v1852 = vld [vmem:[%s1841 + $0x50] sm:$0xff]
      %v1853 = vld [vmem:[%s1841 + $0x58] sm:$0xff]
      %v1854 = vld [vmem:[%s1841 + $0x60] sm:$0xff]
      %v1855 = vld [vmem:[%s1841 + $0x68] sm:$0xff]
      %v1856 = vld [vmem:[%s1841 + $0x70] sm:$0xff]
      %v1857 = vld [vmem:[%s1841 + $0x78] sm:$0xff]
      %1858 = vmatprep.subr.mxu0 0.0
      %1859 = vmatpush1.msra.mxu0 %v1842
      %1860 = vmatprep.subr.mxu0 0.0
      %1861 = vmatpush1.msra.mxu0 %v1843
      %1862 = vmatprep.subr.mxu0 0.0
      %1863 = vmatpush1.msra.mxu0 %v1844
      %1864 = vmatprep.subr.mxu0 0.0
      %1865 = vmatpush1.msra.mxu0 %v1845
      %1866 = vmatprep.subr.mxu0 0.0
      %1867 = vmatpush1.msra.mxu0 %v1846
      %1868 = vmatprep.subr.mxu0 0.0
      %1869 = vmatpush1.msra.mxu0 %v1847
      %1870 = vmatprep.subr.mxu0 0.0
      %1871 = vmatpush1.msra.mxu0 %v1848
      %1872 = vmatprep.subr.mxu0 0.0
      %1873 = vmatpush1.msra.mxu0 %v1849
      %1874 = vmatprep.subr.mxu0 0.0
      %1875 = vmatpush1.msra.mxu0 %v1850
      %1876 = vmatprep.subr.mxu0 0.0
      %1877 = vmatpush1.msra.mxu0 %v1851
      %1878 = vmatprep.subr.mxu0 0.0
      %1879 = vmatpush1.msra.mxu0 %v1852
      %1880 = vmatprep.subr.mxu0 0.0
      %1881 = vmatpush1.msra.mxu0 %v1853
      %1882 = vmatprep.subr.mxu0 0.0
      %1883 = vmatpush1.msra.mxu0 %v1854
      %1884 = vmatprep.subr.mxu0 0.0
      %1885 = vmatpush1.msra.mxu0 %v1855
      %1886 = vmatprep.subr.mxu0 0.0
      %1887 = vmatpush1.msra.mxu0 %v1856
      %1888 = vmatprep.subr.mxu0 0.0
      %1889 = vmatpush1.msra.mxu0 %v1857
      %1890 = vmatprep.subr.mxu0 0.0
      %1891 = vmatpush1.msra.mxu0 0.0
      %1892 = vmatprep.subr.mxu0 0.0
      %1893 = vmatpush1.msra.mxu0 0.0
      %1894 = vmatprep.subr.mxu0 0.0
      %1895 = vmatpush1.msra.mxu0 0.0
      %1896 = vmatprep.subr.mxu0 0.0
      %1897 = vmatpush1.msra.mxu0 0.0
      %1898 = vmatprep.subr.mxu0 0.0
      %1899 = vmatpush1.msra.mxu0 0.0
      %1900 = vmatprep.subr.mxu0 0.0
      %1901 = vmatpush1.msra.mxu0 0.0
      %1902 = vmatprep.subr.mxu0 0.0
      %1903 = vmatpush1.msra.mxu0 0.0
      %1904 = vmatprep.subr.mxu0 0.0
      %1905 = vmatpush1.msra.mxu0 0.0
      %1906 = vmatprep.subr.mxu0 0.0
      %1907 = vmatpush1.msra.mxu0 0.0
      %1908 = vmatprep.subr.mxu0 0.0
      %1909 = vmatpush1.msra.mxu0 0.0
      %1910 = vmatprep.subr.mxu0 0.0
      %1911 = vmatpush1.msra.mxu0 0.0
      %1912 = vmatprep.subr.mxu0 0.0
      %1913 = vmatpush1.msra.mxu0 0.0
      %1914 = vmatprep.subr.mxu0 0.0
      %1915 = vmatpush1.msra.mxu0 0.0
      %1916 = vmatprep.subr.mxu0 0.0
      %1917 = vmatpush1.msra.mxu0 0.0
      %1918 = vmatprep.subr.mxu0 0.0
      %1919 = vmatpush1.msra.mxu0 0.0
      %1920 = vmatprep.subr.mxu0 0.0
      %1921 = vmatpush1.msra.mxu0 0.0
      %1922 = vmatprep.mubr.f32.mxu0 0.0
      %1923 = vmatmul.mubr.f32.gmra.mrb[0].mxu0 %v1840
      %v1924 = vpop.f32.mrb[0].mxu0
      %v1925 = vadd.f32 0.0, %v1924
      %v1926 = vpop.f32.mrb[0].mxu0
      %1927 = vdwg.mxu0
      %v1928 = vadd.f32 %v1836, %v1925
      %v1929 = vld [vmem:[%s6 + $0x3] sm:$0x1]
      %v1930 = vlaneseq
      %v1931 = vshrl.u32 %v1930, 7
      %v1932 = vsub.s32 0, %v1931
      %v1933 = vrot.slane %v1929, %v1932
      %v1934 = vadd.f32 %v1928, %v1933
      %v1935 = vmul.f32 %v1934, 0.5
      %v1936 = vtanh.pop %v1935
      %v1937 = vmul.f32 %v1936, 0.5
      %v1938 = vadd.f32 %v1937, 0.5
      %v1939 = vmul.f32 %v1934, %v1938
      %1940 = vst [vmem:[#allocation5] sm:$0x7f] %v1939
      %v1941 = vld [vmem:[#allocation5] ss:$2 sm:$0x7]
      %v1942 = vld [vmem:[%s5] sm:$0xff]
      %v1943 = vld [vmem:[%s5 + $0x8] sm:$0xff]
      %v1944 = vld [vmem:[%s5 + $0x10] sm:$0xff]
      %v1945 = vld [vmem:[%s5 + $0x18] sm:$0xff]
      %v1946 = vld [vmem:[%s5 + $0x20] sm:$0xff]
      %v1947 = vld [vmem:[%s5 + $0x28] sm:$0xff]
      %v1948 = vld [vmem:[%s5 + $0x30] sm:$0xff]
      %v1949 = vld [vmem:[%s5 + $0x38] sm:$0xff]
      %v1950 = vld [vmem:[%s5 + $0x40] sm:$0xff]
      %v1951 = vld [vmem:[%s5 + $0x48] sm:$0xff]
      %v1952 = vld [vmem:[%s5 + $0x50] sm:$0xff]
      %v1953 = vld [vmem:[%s5 + $0x58] sm:$0xff]
      %v1954 = vld [vmem:[%s5 + $0x60] sm:$0xff]
      %v1955 = vld [vmem:[%s5 + $0x68] sm:$0xff]
      %v1956 = vld [vmem:[%s5 + $0x70] sm:$0xff]
      %v1957 = vld [vmem:[%s5 + $0x78] sm:$0xff]
      %s1958 = scalar_lea.vmem [#allocation5], 1
      %v1959 = vld [vmem:[%s1958] ss:$2 sm:$0x7]
      %s1960 = scalar_lea.vmem %s5, 128
      %v1961 = vld [vmem:[%s1960] sm:$0xff]
      %v1962 = vld [vmem:[%s1960 + $0x8] sm:$0xff]
      %v1963 = vld [vmem:[%s1960 + $0x10] sm:$0xff]
      %v1964 = vld [vmem:[%s1960 + $0x18] sm:$0xff]
      %v1965 = vld [vmem:[%s1960 + $0x20] sm:$0xff]
      %v1966 = vld [vmem:[%s1960 + $0x28] sm:$0xff]
      %v1967 = vld [vmem:[%s1960 + $0x30] sm:$0xff]
      %v1968 = vld [vmem:[%s1960 + $0x38] sm:$0xff]
      %v1969 = vld [vmem:[%s1960 + $0x40] sm:$0xff]
      %v1970 = vld [vmem:[%s1960 + $0x48] sm:$0xff]
      %v1971 = vld [vmem:[%s1960 + $0x50] sm:$0xff]
      %v1972 = vld [vmem:[%s1960 + $0x58] sm:$0xff]
      %v1973 = vld [vmem:[%s1960 + $0x60] sm:$0xff]
      %v1974 = vld [vmem:[%s1960 + $0x68] sm:$0xff]
      %v1975 = vld [vmem:[%s1960 + $0x70] sm:$0xff]
      %v1976 = vld [vmem:[%s1960 + $0x78] sm:$0xff]
      %1977 = vmatprep.subr.mxu0 0.0
      %1978 = vmatpush1.msra.mxu0 %v1961
      %1979 = vmatprep.subr.mxu0 0.0
      %1980 = vmatpush1.msra.mxu0 %v1962
      %1981 = vmatprep.subr.mxu0 0.0
      %1982 = vmatpush1.msra.mxu0 %v1963
      %1983 = vmatprep.subr.mxu0 0.0
      %1984 = vmatpush1.msra.mxu0 %v1964
      %1985 = vmatprep.subr.mxu0 0.0
      %1986 = vmatpush1.msra.mxu0 %v1965
      %1987 = vmatprep.subr.mxu0 0.0
      %1988 = vmatpush1.msra.mxu0 %v1966
      %1989 = vmatprep.subr.mxu0 0.0
      %1990 = vmatpush1.msra.mxu0 %v1967
      %1991 = vmatprep.subr.mxu0 0.0
      %1992 = vmatpush1.msra.mxu0 %v1968
      %1993 = vmatprep.subr.mxu0 0.0
      %1994 = vmatpush1.msra.mxu0 %v1969
      %1995 = vmatprep.subr.mxu0 0.0
      %1996 = vmatpush1.msra.mxu0 %v1970
      %1997 = vmatprep.subr.mxu0 0.0
      %1998 = vmatpush1.msra.mxu0 %v1971
      %1999 = vmatprep.subr.mxu0 0.0
      %2000 = vmatpush1.msra.mxu0 %v1972
      %2001 = vmatprep.subr.mxu0 0.0
      %2002 = vmatpush1.msra.mxu0 %v1973
      %2003 = vmatprep.subr.mxu0 0.0
      %2004 = vmatpush1.msra.mxu0 %v1974
      %2005 = vmatprep.subr.mxu0 0.0
      %2006 = vmatpush1.msra.mxu0 %v1975
      %2007 = vmatprep.subr.mxu0 0.0
      %2008 = vmatpush1.msra.mxu0 %v1976
      %2009 = vmatprep.subr.mxu0 0.0
      %2010 = vmatpush1.msra.mxu0 0.0
      %2011 = vmatprep.subr.mxu0 0.0
      %2012 = vmatpush1.msra.mxu0 0.0
      %2013 = vmatprep.subr.mxu0 0.0
      %2014 = vmatpush1.msra.mxu0 0.0
      %2015 = vmatprep.subr.mxu0 0.0
      %2016 = vmatpush1.msra.mxu0 0.0
      %2017 = vmatprep.subr.mxu0 0.0
      %2018 = vmatpush1.msra.mxu0 0.0
      %2019 = vmatprep.subr.mxu0 0.0
      %2020 = vmatpush1.msra.mxu0 0.0
      %2021 = vmatprep.subr.mxu0 0.0
      %2022 = vmatpush1.msra.mxu0 0.0
      %2023 = vmatprep.subr.mxu0 0.0
      %2024 = vmatpush1.msra.mxu0 0.0
      %2025 = vmatprep.subr.mxu0 0.0
      %2026 = vmatpush1.msra.mxu0 0.0
      %2027 = vmatprep.subr.mxu0 0.0
      %2028 = vmatpush1.msra.mxu0 0.0
      %2029 = vmatprep.subr.mxu0 0.0
      %2030 = vmatpush1.msra.mxu0 0.0
      %2031 = vmatprep.subr.mxu0 0.0
      %2032 = vmatpush1.msra.mxu0 0.0
      %2033 = vmatprep.subr.mxu0 0.0
      %2034 = vmatpush1.msra.mxu0 0.0
      %2035 = vmatprep.subr.mxu0 0.0
      %2036 = vmatpush1.msra.mxu0 0.0
      %2037 = vmatprep.subr.mxu0 0.0
      %2038 = vmatpush1.msra.mxu0 0.0
      %2039 = vmatprep.subr.mxu0 0.0
      %2040 = vmatpush1.msra.mxu0 0.0
      %2041 = vmatprep.mubr.f32.mxu0 0.0
      %2042 = vmatmul.mubr.f32.gmra.mrb[0].mxu0 %v1959
      %v2043 = vpop.f32.mrb[0].mxu0
      %v2044 = vadd.f32 0.0, %v2043
      %v2045 = vpop.f32.mrb[0].mxu0
      %2046 = vdwg.mxu0
      %2047 = vmatprep.subr.mxu0 0.0
      %2048 = vmatpush1.msra.mxu0 %v1942
      %2049 = vmatprep.subr.mxu0 0.0
      %2050 = vmatpush1.msra.mxu0 %v1943
      %2051 = vmatprep.subr.mxu0 0.0
      %2052 = vmatpush1.msra.mxu0 %v1944
      %2053 = vmatprep.subr.mxu0 0.0
      %2054 = vmatpush1.msra.mxu0 %v1945
      %2055 = vmatprep.subr.mxu0 0.0
      %2056 = vmatpush1.msra.mxu0 %v1946
      %2057 = vmatprep.subr.mxu0 0.0
      %2058 = vmatpush1.msra.mxu0 %v1947
      %2059 = vmatprep.subr.mxu0 0.0
      %2060 = vmatpush1.msra.mxu0 %v1948
      %2061 = vmatprep.subr.mxu0 0.0
      %2062 = vmatpush1.msra.mxu0 %v1949
      %2063 = vmatprep.subr.mxu0 0.0
      %2064 = vmatpush1.msra.mxu0 %v1950
      %2065 = vmatprep.subr.mxu0 0.0
      %2066 = vmatpush1.msra.mxu0 %v1951
      %2067 = vmatprep.subr.mxu0 0.0
      %2068 = vmatpush1.msra.mxu0 %v1952
      %2069 = vmatprep.subr.mxu0 0.0
      %2070 = vmatpush1.msra.mxu0 %v1953
      %2071 = vmatprep.subr.mxu0 0.0
      %2072 = vmatpush1.msra.mxu0 %v1954
      %2073 = vmatprep.subr.mxu0 0.0
      %2074 = vmatpush1.msra.mxu0 %v1955
      %2075 = vmatprep.subr.mxu0 0.0
      %2076 = vmatpush1.msra.mxu0 %v1956
      %2077 = vmatprep.subr.mxu0 0.0
      %2078 = vmatpush1.msra.mxu0 %v1957
      %2079 = vmatprep.subr.mxu0 0.0
      %2080 = vmatpush1.msra.mxu0 0.0
      %2081 = vmatprep.subr.mxu0 0.0
      %2082 = vmatpush1.msra.mxu0 0.0
      %2083 = vmatprep.subr.mxu0 0.0
      %2084 = vmatpush1.msra.mxu0 0.0
      %2085 = vmatprep.subr.mxu0 0.0
      %2086 = vmatpush1.msra.mxu0 0.0
      %2087 = vmatprep.subr.mxu0 0.0
      %2088 = vmatpush1.msra.mxu0 0.0
      %2089 = vmatprep.subr.mxu0 0.0
      %2090 = vmatpush1.msra.mxu0 0.0
      %2091 = vmatprep.subr.mxu0 0.0
      %2092 = vmatpush1.msra.mxu0 0.0
      %2093 = vmatprep.subr.mxu0 0.0
      %2094 = vmatpush1.msra.mxu0 0.0
      %2095 = vmatprep.subr.mxu0 0.0
      %2096 = vmatpush1.msra.mxu0 0.0
      %2097 = vmatprep.subr.mxu0 0.0
      %2098 = vmatpush1.msra.mxu0 0.0
      %2099 = vmatprep.subr.mxu0 0.0
      %2100 = vmatpush1.msra.mxu0 0.0
      %2101 = vmatprep.subr.mxu0 0.0
      %2102 = vmatpush1.msra.mxu0 0.0
      %2103 = vmatprep.subr.mxu0 0.0
      %2104 = vmatpush1.msra.mxu0 0.0
      %2105 = vmatprep.subr.mxu0 0.0
      %2106 = vmatpush1.msra.mxu0 0.0
      %2107 = vmatprep.subr.mxu0 0.0
      %2108 = vmatpush1.msra.mxu0 0.0
      %2109 = vmatprep.subr.mxu0 0.0
      %2110 = vmatpush1.msra.mxu0 0.0
      %2111 = vmatprep.mubr.f32.mxu0 0.0
      %2112 = vmatmul.mubr.f32.gmra.mrb[0].mxu0 %v1941
      %v2113 = vpop.f32.mrb[0].mxu0
      %v2114 = vadd.f32 %v2044, %v2113
      %v2115 = vpop.f32.mrb[0].mxu0
      %2116 = vdwg.mxu0
      %s2117 = scalar_lea.vmem [#allocation5], 2
      %v2118 = vld [vmem:[%s2117] ss:$2 sm:$0x7]
      %s2119 = scalar_lea.vmem %s5, 256
      %v2120 = vld [vmem:[%s2119] sm:$0xff]
      %v2121 = vld [vmem:[%s2119 + $0x8] sm:$0xff]
      %v2122 = vld [vmem:[%s2119 + $0x10] sm:$0xff]
      %v2123 = vld [vmem:[%s2119 + $0x18] sm:$0xff]
      %v2124 = vld [vmem:[%s2119 + $0x20] sm:$0xff]
      %v2125 = vld [vmem:[%s2119 + $0x28] sm:$0xff]
      %v2126 = vld [vmem:[%s2119 + $0x30] sm:$0xff]
      %v2127 = vld [vmem:[%s2119 + $0x38] sm:$0xff]
      %v2128 = vld [vmem:[%s2119 + $0x40] sm:$0xff]
      %v2129 = vld [vmem:[%s2119 + $0x48] sm:$0xff]
      %v2130 = vld [vmem:[%s2119 + $0x50] sm:$0xff]
      %v2131 = vld [vmem:[%s2119 + $0x58] sm:$0xff]
      %v2132 = vld [vmem:[%s2119 + $0x60] sm:$0xff]
      %v2133 = vld [vmem:[%s2119 + $0x68] sm:$0xff]
      %v2134 = vld [vmem:[%s2119 + $0x70] sm:$0xff]
      %v2135 = vld [vmem:[%s2119 + $0x78] sm:$0xff]
      %2136 = vmatprep.subr.mxu0 0.0
      %2137 = vmatpush1.msra.mxu0 %v2120
      %2138 = vmatprep.subr.mxu0 0.0
      %2139 = vmatpush1.msra.mxu0 %v2121
      %2140 = vmatprep.subr.mxu0 0.0
      %2141 = vmatpush1.msra.mxu0 %v2122
      %2142 = vmatprep.subr.mxu0 0.0
      %2143 = vmatpush1.msra.mxu0 %v2123
      %2144 = vmatprep.subr.mxu0 0.0
      %2145 = vmatpush1.msra.mxu0 %v2124
      %2146 = vmatprep.subr.mxu0 0.0
      %2147 = vmatpush1.msra.mxu0 %v2125
      %2148 = vmatprep.subr.mxu0 0.0
      %2149 = vmatpush1.msra.mxu0 %v2126
      %2150 = vmatprep.subr.mxu0 0.0
      %2151 = vmatpush1.msra.mxu0 %v2127
      %2152 = vmatprep.subr.mxu0 0.0
      %2153 = vmatpush1.msra.mxu0 %v2128
      %2154 = vmatprep.subr.mxu0 0.0
      %2155 = vmatpush1.msra.mxu0 %v2129
      %2156 = vmatprep.subr.mxu0 0.0
      %2157 = vmatpush1.msra.mxu0 %v2130
      %2158 = vmatprep.subr.mxu0 0.0
      %2159 = vmatpush1.msra.mxu0 %v2131
      %2160 = vmatprep.subr.mxu0 0.0
      %2161 = vmatpush1.msra.mxu0 %v2132
      %2162 = vmatprep.subr.mxu0 0.0
      %2163 = vmatpush1.msra.mxu0 %v2133
      %2164 = vmatprep.subr.mxu0 0.0
      %2165 = vmatpush1.msra.mxu0 %v2134
      %2166 = vmatprep.subr.mxu0 0.0
      %2167 = vmatpush1.msra.mxu0 %v2135
      %2168 = vmatprep.subr.mxu0 0.0
      %2169 = vmatpush1.msra.mxu0 0.0
      %2170 = vmatprep.subr.mxu0 0.0
      %2171 = vmatpush1.msra.mxu0 0.0
      %2172 = vmatprep.subr.mxu0 0.0
      %2173 = vmatpush1.msra.mxu0 0.0
      %2174 = vmatprep.subr.mxu0 0.0
      %2175 = vmatpush1.msra.mxu0 0.0
      %2176 = vmatprep.subr.mxu0 0.0
      %2177 = vmatpush1.msra.mxu0 0.0
      %2178 = vmatprep.subr.mxu0 0.0
      %2179 = vmatpush1.msra.mxu0 0.0
      %2180 = vmatprep.subr.mxu0 0.0
      %2181 = vmatpush1.msra.mxu0 0.0
      %2182 = vmatprep.subr.mxu0 0.0
      %2183 = vmatpush1.msra.mxu0 0.0
      %2184 = vmatprep.subr.mxu0 0.0
      %2185 = vmatpush1.msra.mxu0 0.0
      %2186 = vmatprep.subr.mxu0 0.0
      %2187 = vmatpush1.msra.mxu0 0.0
      %2188 = vmatprep.subr.mxu0 0.0
      %2189 = vmatpush1.msra.mxu0 0.0
      %2190 = vmatprep.subr.mxu0 0.0
      %2191 = vmatpush1.msra.mxu0 0.0
      %2192 = vmatprep.subr.mxu0 0.0
      %2193 = vmatpush1.msra.mxu0 0.0
      %2194 = vmatprep.subr.mxu0 0.0
      %2195 = vmatpush1.msra.mxu0 0.0
      %2196 = vmatprep.subr.mxu0 0.0
      %2197 = vmatpush1.msra.mxu0 0.0
      %2198 = vmatprep.subr.mxu0 0.0
      %2199 = vmatpush1.msra.mxu0 0.0
      %2200 = vmatprep.mubr.f32.mxu0 0.0
      %2201 = vmatmul.mubr.f32.gmra.mrb[0].mxu0 %v2118
      %v2202 = vpop.f32.mrb[0].mxu0
      %v2203 = vadd.f32 0.0, %v2202
      %v2204 = vpop.f32.mrb[0].mxu0
      %2205 = vdwg.mxu0
      %v2206 = vadd.f32 %v2114, %v2203
      %v2207 = vld [vmem:[%s6 + $0x4] sm:$0x1]
      %v2208 = vlaneseq
      %v2209 = vshrl.u32 %v2208, 7
      %v2210 = vsub.s32 0, %v2209
      %v2211 = vrot.slane %v2207, %v2210
      %v2212 = vadd.f32 %v2206, %v2211
      %2213 = vst [vmem:[%s283] sm:$0x7] %v2212
      %s2214 = scalar_lea.vmem [#allocation2], 72
      %v2215 = vld [vmem:[%s2214] ss:$2 sm:$0xff]
      %s2216 = scalar_lea.vmem [#allocation2], 88
      %v2217 = vld [vmem:[%s2216] ss:$2 sm:$0xff]
      %s2218 = scalar_lea.vmem [#allocation2], 104
      %v2219 = vld [vmem:[%s2218] ss:$2 sm:$0xff]
      %s2220 = scalar_lea.vmem [#allocation2], 120
      %v2221 = vld [vmem:[%s2220] ss:$2 sm:$0xff]
      %v2222 = vld [vmem:[%s2] sm:$0xff]
      %v2223 = vld [vmem:[%s2 + $0x8] sm:$0xff]
      %v2224 = vld [vmem:[%s2 + $0x10] sm:$0xff]
      %v2225 = vld [vmem:[%s2 + $0x18] sm:$0xff]
      %v2226 = vld [vmem:[%s2 + $0x20] sm:$0xff]
      %v2227 = vld [vmem:[%s2 + $0x28] sm:$0xff]
      %v2228 = vld [vmem:[%s2 + $0x30] sm:$0xff]
      %v2229 = vld [vmem:[%s2 + $0x38] sm:$0xff]
      %v2230 = vld [vmem:[%s2 + $0x40] sm:$0xff]
      %v2231 = vld [vmem:[%s2 + $0x48] sm:$0xff]
      %v2232 = vld [vmem:[%s2 + $0x50] sm:$0xff]
      %v2233 = vld [vmem:[%s2 + $0x58] sm:$0xff]
      %v2234 = vld [vmem:[%s2 + $0x60] sm:$0xff]
      %v2235 = vld [vmem:[%s2 + $0x68] sm:$0xff]
      %v2236 = vld [vmem:[%s2 + $0x70] sm:$0xff]
      %v2237 = vld [vmem:[%s2 + $0x78] sm:$0xff]
      %s2238 = scalar_lea.vmem [#allocation2], 73
      %v2239 = vld [vmem:[%s2238] ss:$2 sm:$0xff]
      %s2240 = scalar_lea.vmem [#allocation2], 89
      %v2241 = vld [vmem:[%s2240] ss:$2 sm:$0xff]
      %s2242 = scalar_lea.vmem [#allocation2], 105
      %v2243 = vld [vmem:[%s2242] ss:$2 sm:$0xff]
      %s2244 = scalar_lea.vmem [#allocation2], 121
      %v2245 = vld [vmem:[%s2244] ss:$2 sm:$0xff]
      %v2246 = vld [vmem:[%s794] sm:$0xff]
      %v2247 = vld [vmem:[%s794 + $0x8] sm:$0xff]
      %v2248 = vld [vmem:[%s794 + $0x10] sm:$0xff]
      %v2249 = vld [vmem:[%s794 + $0x18] sm:$0xff]
      %v2250 = vld [vmem:[%s794 + $0x20] sm:$0xff]
      %v2251 = vld [vmem:[%s794 + $0x28] sm:$0xff]
      %v2252 = vld [vmem:[%s794 + $0x30] sm:$0xff]
      %v2253 = vld [vmem:[%s794 + $0x38] sm:$0xff]
      %v2254 = vld [vmem:[%s794 + $0x40] sm:$0xff]
      %v2255 = vld [vmem:[%s794 + $0x48] sm:$0xff]
      %v2256 = vld [vmem:[%s794 + $0x50] sm:$0xff]
      %v2257 = vld [vmem:[%s794 + $0x58] sm:$0xff]
      %v2258 = vld [vmem:[%s794 + $0x60] sm:$0xff]
      %v2259 = vld [vmem:[%s794 + $0x68] sm:$0xff]
      %v2260 = vld [vmem:[%s794 + $0x70] sm:$0xff]
      %v2261 = vld [vmem:[%s794 + $0x78] sm:$0xff]
      %2262 = vmatprep.subr.mxu0 0.0
      %2263 = vmatpush1.msra.mxu0 %v2246
      %2264 = vmatprep.subr.mxu0 0.0
      %2265 = vmatpush1.msra.mxu0 %v2247
      %2266 = vmatprep.subr.mxu0 0.0
      %2267 = vmatpush1.msra.mxu0 %v2248
      %2268 = vmatprep.subr.mxu0 0.0
      %2269 = vmatpush1.msra.mxu0 %v2249
      %2270 = vmatprep.subr.mxu0 0.0
      %2271 = vmatpush1.msra.mxu0 %v2250
      %2272 = vmatprep.subr.mxu0 0.0
      %2273 = vmatpush1.msra.mxu0 %v2251
      %2274 = vmatprep.subr.mxu0 0.0
      %2275 = vmatpush1.msra.mxu0 %v2252
      %2276 = vmatprep.subr.mxu0 0.0
      %2277 = vmatpush1.msra.mxu0 %v2253
      %2278 = vmatprep.subr.mxu0 0.0
      %2279 = vmatpush1.msra.mxu0 %v2254
      %2280 = vmatprep.subr.mxu0 0.0
      %2281 = vmatpush1.msra.mxu0 %v2255
      %2282 = vmatprep.subr.mxu0 0.0
      %2283 = vmatpush1.msra.mxu0 %v2256
      %2284 = vmatprep.subr.mxu0 0.0
      %2285 = vmatpush1.msra.mxu0 %v2257
      %2286 = vmatprep.subr.mxu0 0.0
      %2287 = vmatpush1.msra.mxu0 %v2258
      %2288 = vmatprep.subr.mxu0 0.0
      %2289 = vmatpush1.msra.mxu0 %v2259
      %2290 = vmatprep.subr.mxu0 0.0
      %2291 = vmatpush1.msra.mxu0 %v2260
      %2292 = vmatprep.subr.mxu0 0.0
      %2293 = vmatpush1.msra.mxu0 %v2261
      %2294 = vmatprep.subr.mxu0 0.0
      %2295 = vmatpush1.msra.mxu0 0.0
      %2296 = vmatprep.subr.mxu0 0.0
      %2297 = vmatpush1.msra.mxu0 0.0
      %2298 = vmatprep.subr.mxu0 0.0
      %2299 = vmatpush1.msra.mxu0 0.0
      %2300 = vmatprep.subr.mxu0 0.0
      %2301 = vmatpush1.msra.mxu0 0.0
      %2302 = vmatprep.subr.mxu0 0.0
      %2303 = vmatpush1.msra.mxu0 0.0
      %2304 = vmatprep.subr.mxu0 0.0
      %2305 = vmatpush1.msra.mxu0 0.0
      %2306 = vmatprep.subr.mxu0 0.0
      %2307 = vmatpush1.msra.mxu0 0.0
      %2308 = vmatprep.subr.mxu0 0.0
      %2309 = vmatpush1.msra.mxu0 0.0
      %2310 = vmatprep.subr.mxu0 0.0
      %2311 = vmatpush1.msra.mxu0 0.0
      %2312 = vmatprep.subr.mxu0 0.0
      %2313 = vmatpush1.msra.mxu0 0.0
      %2314 = vmatprep.subr.mxu0 0.0
      %2315 = vmatpush1.msra.mxu0 0.0
      %2316 = vmatprep.subr.mxu0 0.0
      %2317 = vmatpush1.msra.mxu0 0.0
      %2318 = vmatprep.subr.mxu0 0.0
      %2319 = vmatpush1.msra.mxu0 0.0
      %2320 = vmatprep.subr.mxu0 0.0
      %2321 = vmatpush1.msra.mxu0 0.0
      %2322 = vmatprep.subr.mxu0 0.0
      %2323 = vmatpush1.msra.mxu0 0.0
      %2324 = vmatprep.subr.mxu0 0.0
      %2325 = vmatpush1.msra.mxu0 0.0
      %2326 = vmatprep.mubr.f32.mxu0 0.0
      %2327 = vmatmul.mubr.f32.gmra.mrb[0].mxu0 %v2239
      %v2328 = vpop.f32.mrb[0].mxu0
      %v2329 = vadd.f32 0.0, %v2328
      %v2330 = vpop.f32.mrb[0].mxu0
      %2331 = vmatprep.mubr.f32.mxu0 0.0
      %2332 = vmatmul.mubr.f32.gmra.mrb[0].mxu0 %v2241
      %v2333 = vpop.f32.mrb[0].mxu0
      %v2334 = vadd.f32 0.0, %v2333
      %v2335 = vpop.f32.mrb[0].mxu0
      %2336 = vmatprep.mubr.f32.mxu0 0.0
      %2337 = vmatmul.mubr.f32.gmra.mrb[0].mxu0 %v2243
      %v2338 = vpop.f32.mrb[0].mxu0
      %v2339 = vadd.f32 0.0, %v2338
      %v2340 = vpop.f32.mrb[0].mxu0
      %2341 = vmatprep.mubr.f32.mxu0 0.0
      %2342 = vmatmul.mubr.f32.gmra.mrb[0].mxu0 %v2245
      %v2343 = vpop.f32.mrb[0].mxu0
      %v2344 = vadd.f32 0.0, %v2343
      %v2345 = vpop.f32.mrb[0].mxu0
      %2346 = vdwg.mxu0
      %2347 = vmatprep.subr.mxu0 0.0
      %2348 = vmatpush1.msra.mxu0 %v2222
      %2349 = vmatprep.subr.mxu0 0.0
      %2350 = vmatpush1.msra.mxu0 %v2223
      %2351 = vmatprep.subr.mxu0 0.0
      %2352 = vmatpush1.msra.mxu0 %v2224
      %2353 = vmatprep.subr.mxu0 0.0
      %2354 = vmatpush1.msra.mxu0 %v2225
      %2355 = vmatprep.subr.mxu0 0.0
      %2356 = vmatpush1.msra.mxu0 %v2226
      %2357 = vmatprep.subr.mxu0 0.0
      %2358 = vmatpush1.msra.mxu0 %v2227
      %2359 = vmatprep.subr.mxu0 0.0
      %2360 = vmatpush1.msra.mxu0 %v2228
      %2361 = vmatprep.subr.mxu0 0.0
      %2362 = vmatpush1.msra.mxu0 %v2229
      %2363 = vmatprep.subr.mxu0 0.0
      %2364 = vmatpush1.msra.mxu0 %v2230
      %2365 = vmatprep.subr.mxu0 0.0
      %2366 = vmatpush1.msra.mxu0 %v2231
      %2367 = vmatprep.subr.mxu0 0.0
      %2368 = vmatpush1.msra.mxu0 %v2232
      %2369 = vmatprep.subr.mxu0 0.0
      %2370 = vmatpush1.msra.mxu0 %v2233
      %2371 = vmatprep.subr.mxu0 0.0
      %2372 = vmatpush1.msra.mxu0 %v2234
      %2373 = vmatprep.subr.mxu0 0.0
      %2374 = vmatpush1.msra.mxu0 %v2235
      %2375 = vmatprep.subr.mxu0 0.0
      %2376 = vmatpush1.msra.mxu0 %v2236
      %2377 = vmatprep.subr.mxu0 0.0
      %2378 = vmatpush1.msra.mxu0 %v2237
      %2379 = vmatprep.subr.mxu0 0.0
      %2380 = vmatpush1.msra.mxu0 0.0
      %2381 = vmatprep.subr.mxu0 0.0
      %2382 = vmatpush1.msra.mxu0 0.0
      %2383 = vmatprep.subr.mxu0 0.0
      %2384 = vmatpush1.msra.mxu0 0.0
      %2385 = vmatprep.subr.mxu0 0.0
      %2386 = vmatpush1.msra.mxu0 0.0
      %2387 = vmatprep.subr.mxu0 0.0
      %2388 = vmatpush1.msra.mxu0 0.0
      %2389 = vmatprep.subr.mxu0 0.0
      %2390 = vmatpush1.msra.mxu0 0.0
      %2391 = vmatprep.subr.mxu0 0.0
      %2392 = vmatpush1.msra.mxu0 0.0
      %2393 = vmatprep.subr.mxu0 0.0
      %2394 = vmatpush1.msra.mxu0 0.0
      %2395 = vmatprep.subr.mxu0 0.0
      %2396 = vmatpush1.msra.mxu0 0.0
      %2397 = vmatprep.subr.mxu0 0.0
      %2398 = vmatpush1.msra.mxu0 0.0
      %2399 = vmatprep.subr.mxu0 0.0
      %2400 = vmatpush1.msra.mxu0 0.0
      %2401 = vmatprep.subr.mxu0 0.0
      %2402 = vmatpush1.msra.mxu0 0.0
      %2403 = vmatprep.subr.mxu0 0.0
      %2404 = vmatpush1.msra.mxu0 0.0
      %2405 = vmatprep.subr.mxu0 0.0
      %2406 = vmatpush1.msra.mxu0 0.0
      %2407 = vmatprep.subr.mxu0 0.0
      %2408 = vmatpush1.msra.mxu0 0.0
      %2409 = vmatprep.subr.mxu0 0.0
      %2410 = vmatpush1.msra.mxu0 0.0
      %2411 = vmatprep.mubr.f32.mxu0 0.0
      %2412 = vmatmul.mubr.f32.gmra.mrb[0].mxu0 %v2215
      %v2413 = vpop.f32.mrb[0].mxu0
      %v2414 = vadd.f32 %v2329, %v2413
      %v2415 = vpop.f32.mrb[0].mxu0
      %2416 = vmatprep.mubr.f32.mxu0 0.0
      %2417 = vmatmul.mubr.f32.gmra.mrb[0].mxu0 %v2217
      %v2418 = vpop.f32.mrb[0].mxu0
      %v2419 = vadd.f32 %v2334, %v2418
      %v2420 = vpop.f32.mrb[0].mxu0
      %2421 = vmatprep.mubr.f32.mxu0 0.0
      %2422 = vmatmul.mubr.f32.gmra.mrb[0].mxu0 %v2219
      %v2423 = vpop.f32.mrb[0].mxu0
      %v2424 = vadd.f32 %v2339, %v2423
      %v2425 = vpop.f32.mrb[0].mxu0
      %2426 = vmatprep.mubr.f32.mxu0 0.0
      %2427 = vmatmul.mubr.f32.gmra.mrb[0].mxu0 %v2221
      %v2428 = vpop.f32.mrb[0].mxu0
      %v2429 = vadd.f32 %v2344, %v2428
      %v2430 = vpop.f32.mrb[0].mxu0
      %2431 = vdwg.mxu0
      %s2432 = scalar_lea.vmem [#allocation2], 74
      %v2433 = vld [vmem:[%s2432] ss:$2 sm:$0xff]
      %s2434 = scalar_lea.vmem [#allocation2], 90
      %v2435 = vld [vmem:[%s2434] ss:$2 sm:$0xff]
      %s2436 = scalar_lea.vmem [#allocation2], 106
      %v2437 = vld [vmem:[%s2436] ss:$2 sm:$0xff]
      %s2438 = scalar_lea.vmem [#allocation2], 122
      %v2439 = vld [vmem:[%s2438] ss:$2 sm:$0xff]
      %v2440 = vld [vmem:[%s989] sm:$0xff]
      %v2441 = vld [vmem:[%s989 + $0x8] sm:$0xff]
      %v2442 = vld [vmem:[%s989 + $0x10] sm:$0xff]
      %v2443 = vld [vmem:[%s989 + $0x18] sm:$0xff]
      %v2444 = vld [vmem:[%s989 + $0x20] sm:$0xff]
      %v2445 = vld [vmem:[%s989 + $0x28] sm:$0xff]
      %v2446 = vld [vmem:[%s989 + $0x30] sm:$0xff]
      %v2447 = vld [vmem:[%s989 + $0x38] sm:$0xff]
      %v2448 = vld [vmem:[%s989 + $0x40] sm:$0xff]
      %v2449 = vld [vmem:[%s989 + $0x48] sm:$0xff]
      %v2450 = vld [vmem:[%s989 + $0x50] sm:$0xff]
      %v2451 = vld [vmem:[%s989 + $0x58] sm:$0xff]
      %v2452 = vld [vmem:[%s989 + $0x60] sm:$0xff]
      %v2453 = vld [vmem:[%s989 + $0x68] sm:$0xff]
      %v2454 = vld [vmem:[%s989 + $0x70] sm:$0xff]
      %v2455 = vld [vmem:[%s989 + $0x78] sm:$0xff]
      %2456 = vmatprep.subr.mxu0 0.0
      %2457 = vmatpush1.msra.mxu0 %v2440
      %2458 = vmatprep.subr.mxu0 0.0
      %2459 = vmatpush1.msra.mxu0 %v2441
      %2460 = vmatprep.subr.mxu0 0.0
      %2461 = vmatpush1.msra.mxu0 %v2442
      %2462 = vmatprep.subr.mxu0 0.0
      %2463 = vmatpush1.msra.mxu0 %v2443
      %2464 = vmatprep.subr.mxu0 0.0
      %2465 = vmatpush1.msra.mxu0 %v2444
      %2466 = vmatprep.subr.mxu0 0.0
      %2467 = vmatpush1.msra.mxu0 %v2445
      %2468 = vmatprep.subr.mxu0 0.0
      %2469 = vmatpush1.msra.mxu0 %v2446
      %2470 = vmatprep.subr.mxu0 0.0
      %2471 = vmatpush1.msra.mxu0 %v2447
      %2472 = vmatprep.subr.mxu0 0.0
      %2473 = vmatpush1.msra.mxu0 %v2448
      %2474 = vmatprep.subr.mxu0 0.0
      %2475 = vmatpush1.msra.mxu0 %v2449
      %2476 = vmatprep.subr.mxu0 0.0
      %2477 = vmatpush1.msra.mxu0 %v2450
      %2478 = vmatprep.subr.mxu0 0.0
      %2479 = vmatpush1.msra.mxu0 %v2451
      %2480 = vmatprep.subr.mxu0 0.0
      %2481 = vmatpush1.msra.mxu0 %v2452
      %2482 = vmatprep.subr.mxu0 0.0
      %2483 = vmatpush1.msra.mxu0 %v2453
      %2484 = vmatprep.subr.mxu0 0.0
      %2485 = vmatpush1.msra.mxu0 %v2454
      %2486 = vmatprep.subr.mxu0 0.0
      %2487 = vmatpush1.msra.mxu0 %v2455
      %2488 = vmatprep.subr.mxu0 0.0
      %2489 = vmatpush1.msra.mxu0 0.0
      %2490 = vmatprep.subr.mxu0 0.0
      %2491 = vmatpush1.msra.mxu0 0.0
      %2492 = vmatprep.subr.mxu0 0.0
      %2493 = vmatpush1.msra.mxu0 0.0
      %2494 = vmatprep.subr.mxu0 0.0
      %2495 = vmatpush1.msra.mxu0 0.0
      %2496 = vmatprep.subr.mxu0 0.0
      %2497 = vmatpush1.msra.mxu0 0.0
      %2498 = vmatprep.subr.mxu0 0.0
      %2499 = vmatpush1.msra.mxu0 0.0
      %2500 = vmatprep.subr.mxu0 0.0
      %2501 = vmatpush1.msra.mxu0 0.0
      %2502 = vmatprep.subr.mxu0 0.0
      %2503 = vmatpush1.msra.mxu0 0.0
      %2504 = vmatprep.subr.mxu0 0.0
      %2505 = vmatpush1.msra.mxu0 0.0
      %2506 = vmatprep.subr.mxu0 0.0
      %2507 = vmatpush1.msra.mxu0 0.0
      %2508 = vmatprep.subr.mxu0 0.0
      %2509 = vmatpush1.msra.mxu0 0.0
      %2510 = vmatprep.subr.mxu0 0.0
      %2511 = vmatpush1.msra.mxu0 0.0
      %2512 = vmatprep.subr.mxu0 0.0
      %2513 = vmatpush1.msra.mxu0 0.0
      %2514 = vmatprep.subr.mxu0 0.0
      %2515 = vmatpush1.msra.mxu0 0.0
      %2516 = vmatprep.subr.mxu0 0.0
      %2517 = vmatpush1.msra.mxu0 0.0
      %2518 = vmatprep.subr.mxu0 0.0
      %2519 = vmatpush1.msra.mxu0 0.0
      %2520 = vmatprep.mubr.f32.mxu0 0.0
      %2521 = vmatmul.mubr.f32.gmra.mrb[0].mxu0 %v2433
      %v2522 = vpop.f32.mrb[0].mxu0
      %v2523 = vadd.f32 0.0, %v2522
      %v2524 = vpop.f32.mrb[0].mxu0
      %2525 = vmatprep.mubr.f32.mxu0 0.0
      %2526 = vmatmul.mubr.f32.gmra.mrb[0].mxu0 %v2435
      %v2527 = vpop.f32.mrb[0].mxu0
      %v2528 = vadd.f32 0.0, %v2527
      %v2529 = vpop.f32.mrb[0].mxu0
      %2530 = vmatprep.mubr.f32.mxu0 0.0
      %2531 = vmatmul.mubr.f32.gmra.mrb[0].mxu0 %v2437
      %v2532 = vpop.f32.mrb[0].mxu0
      %v2533 = vadd.f32 0.0, %v2532
      %v2534 = vpop.f32.mrb[0].mxu0
      %2535 = vmatprep.mubr.f32.mxu0 0.0
      %2536 = vmatmul.mubr.f32.gmra.mrb[0].mxu0 %v2439
      %v2537 = vpop.f32.mrb[0].mxu0
      %v2538 = vadd.f32 0.0, %v2537
      %v2539 = vpop.f32.mrb[0].mxu0
      %2540 = vdwg.mxu0
      %v2541 = vadd.f32 %v2414, %v2523
      %v2542 = vadd.f32 %v2419, %v2528
      %v2543 = vadd.f32 %v2424, %v2533
      %v2544 = vadd.f32 %v2429, %v2538
      %s2545 = scalar_lea.vmem [#allocation2], 75
      %v2546 = vld [vmem:[%s2545] ss:$2 sm:$0xff]
      %s2547 = scalar_lea.vmem [#allocation2], 91
      %v2548 = vld [vmem:[%s2547] ss:$2 sm:$0xff]
      %s2549 = scalar_lea.vmem [#allocation2], 107
      %v2550 = vld [vmem:[%s2549] ss:$2 sm:$0xff]
      %s2551 = scalar_lea.vmem [#allocation2], 123
      %v2552 = vld [vmem:[%s2551] ss:$2 sm:$0xff]
      %v2553 = vld [vmem:[%s1103] sm:$0xff]
      %v2554 = vld [vmem:[%s1103 + $0x8] sm:$0xff]
      %v2555 = vld [vmem:[%s1103 + $0x10] sm:$0xff]
      %v2556 = vld [vmem:[%s1103 + $0x18] sm:$0xff]
      %v2557 = vld [vmem:[%s1103 + $0x20] sm:$0xff]
      %v2558 = vld [vmem:[%s1103 + $0x28] sm:$0xff]
      %v2559 = vld [vmem:[%s1103 + $0x30] sm:$0xff]
      %v2560 = vld [vmem:[%s1103 + $0x38] sm:$0xff]
      %v2561 = vld [vmem:[%s1103 + $0x40] sm:$0xff]
      %v2562 = vld [vmem:[%s1103 + $0x48] sm:$0xff]
      %v2563 = vld [vmem:[%s1103 + $0x50] sm:$0xff]
      %v2564 = vld [vmem:[%s1103 + $0x58] sm:$0xff]
      %v2565 = vld [vmem:[%s1103 + $0x60] sm:$0xff]
      %v2566 = vld [vmem:[%s1103 + $0x68] sm:$0xff]
      %v2567 = vld [vmem:[%s1103 + $0x70] sm:$0xff]
      %v2568 = vld [vmem:[%s1103 + $0x78] sm:$0xff]
      %2569 = vmatprep.subr.mxu0 0.0
      %2570 = vmatpush1.msra.mxu0 %v2553
      %2571 = vmatprep.subr.mxu0 0.0
      %2572 = vmatpush1.msra.mxu0 %v2554
      %2573 = vmatprep.subr.mxu0 0.0
      %2574 = vmatpush1.msra.mxu0 %v2555
      %2575 = vmatprep.subr.mxu0 0.0
      %2576 = vmatpush1.msra.mxu0 %v2556
      %2577 = vmatprep.subr.mxu0 0.0
      %2578 = vmatpush1.msra.mxu0 %v2557
      %2579 = vmatprep.subr.mxu0 0.0
      %2580 = vmatpush1.msra.mxu0 %v2558
      %2581 = vmatprep.subr.mxu0 0.0
      %2582 = vmatpush1.msra.mxu0 %v2559
      %2583 = vmatprep.subr.mxu0 0.0
      %2584 = vmatpush1.msra.mxu0 %v2560
      %2585 = vmatprep.subr.mxu0 0.0
      %2586 = vmatpush1.msra.mxu0 %v2561
      %2587 = vmatprep.subr.mxu0 0.0
      %2588 = vmatpush1.msra.mxu0 %v2562
      %2589 = vmatprep.subr.mxu0 0.0
      %2590 = vmatpush1.msra.mxu0 %v2563
      %2591 = vmatprep.subr.mxu0 0.0
      %2592 = vmatpush1.msra.mxu0 %v2564
      %2593 = vmatprep.subr.mxu0 0.0
      %2594 = vmatpush1.msra.mxu0 %v2565
      %2595 = vmatprep.subr.mxu0 0.0
      %2596 = vmatpush1.msra.mxu0 %v2566
      %2597 = vmatprep.subr.mxu0 0.0
      %2598 = vmatpush1.msra.mxu0 %v2567
      %2599 = vmatprep.subr.mxu0 0.0
      %2600 = vmatpush1.msra.mxu0 %v2568
      %2601 = vmatprep.subr.mxu0 0.0
      %2602 = vmatpush1.msra.mxu0 0.0
      %2603 = vmatprep.subr.mxu0 0.0
      %2604 = vmatpush1.msra.mxu0 0.0
      %2605 = vmatprep.subr.mxu0 0.0
      %2606 = vmatpush1.msra.mxu0 0.0
      %2607 = vmatprep.subr.mxu0 0.0
      %2608 = vmatpush1.msra.mxu0 0.0
      %2609 = vmatprep.subr.mxu0 0.0
      %2610 = vmatpush1.msra.mxu0 0.0
      %2611 = vmatprep.subr.mxu0 0.0
      %2612 = vmatpush1.msra.mxu0 0.0
      %2613 = vmatprep.subr.mxu0 0.0
      %2614 = vmatpush1.msra.mxu0 0.0
      %2615 = vmatprep.subr.mxu0 0.0
      %2616 = vmatpush1.msra.mxu0 0.0
      %2617 = vmatprep.subr.mxu0 0.0
      %2618 = vmatpush1.msra.mxu0 0.0
      %2619 = vmatprep.subr.mxu0 0.0
      %2620 = vmatpush1.msra.mxu0 0.0
      %2621 = vmatprep.subr.mxu0 0.0
      %2622 = vmatpush1.msra.mxu0 0.0
      %2623 = vmatprep.subr.mxu0 0.0
      %2624 = vmatpush1.msra.mxu0 0.0
      %2625 = vmatprep.subr.mxu0 0.0
      %2626 = vmatpush1.msra.mxu0 0.0
      %2627 = vmatprep.subr.mxu0 0.0
      %2628 = vmatpush1.msra.mxu0 0.0
      %2629 = vmatprep.subr.mxu0 0.0
      %2630 = vmatpush1.msra.mxu0 0.0
      %2631 = vmatprep.subr.mxu0 0.0
      %2632 = vmatpush1.msra.mxu0 0.0
      %2633 = vmatprep.mubr.f32.mxu0 0.0
      %2634 = vmatmul.mubr.f32.gmra.mrb[0].mxu0 %v2546
      %v2635 = vpop.f32.mrb[0].mxu0
      %v2636 = vadd.f32 0.0, %v2635
      %v2637 = vpop.f32.mrb[0].mxu0
      %2638 = vmatprep.mubr.f32.mxu0 0.0
      %2639 = vmatmul.mubr.f32.gmra.mrb[0].mxu0 %v2548
      %v2640 = vpop.f32.mrb[0].mxu0
      %v2641 = vadd.f32 0.0, %v2640
      %v2642 = vpop.f32.mrb[0].mxu0
      %2643 = vmatprep.mubr.f32.mxu0 0.0
      %2644 = vmatmul.mubr.f32.gmra.mrb[0].mxu0 %v2550
      %v2645 = vpop.f32.mrb[0].mxu0
      %v2646 = vadd.f32 0.0, %v2645
      %v2647 = vpop.f32.mrb[0].mxu0
      %2648 = vmatprep.mubr.f32.mxu0 0.0
      %2649 = vmatmul.mubr.f32.gmra.mrb[0].mxu0 %v2552
      %v2650 = vpop.f32.mrb[0].mxu0
      %v2651 = vadd.f32 0.0, %v2650
      %v2652 = vpop.f32.mrb[0].mxu0
      %2653 = vdwg.mxu0
      %v2654 = vadd.f32 %v2541, %v2636
      %v2655 = vadd.f32 %v2542, %v2641
      %v2656 = vadd.f32 %v2543, %v2646
      %v2657 = vadd.f32 %v2544, %v2651
      %s2658 = scalar_lea.vmem [#allocation2], 76
      %v2659 = vld [vmem:[%s2658] ss:$2 sm:$0xff]
      %s2660 = scalar_lea.vmem [#allocation2], 92
      %v2661 = vld [vmem:[%s2660] ss:$2 sm:$0xff]
      %s2662 = scalar_lea.vmem [#allocation2], 108
      %v2663 = vld [vmem:[%s2662] ss:$2 sm:$0xff]
      %s2664 = scalar_lea.vmem [#allocation2], 124
      %v2665 = vld [vmem:[%s2664] ss:$2 sm:$0xff]
      %v2666 = vld [vmem:[%s1217] sm:$0xff]
      %v2667 = vld [vmem:[%s1217 + $0x8] sm:$0xff]
      %v2668 = vld [vmem:[%s1217 + $0x10] sm:$0xff]
      %v2669 = vld [vmem:[%s1217 + $0x18] sm:$0xff]
      %v2670 = vld [vmem:[%s1217 + $0x20] sm:$0xff]
      %v2671 = vld [vmem:[%s1217 + $0x28] sm:$0xff]
      %v2672 = vld [vmem:[%s1217 + $0x30] sm:$0xff]
      %v2673 = vld [vmem:[%s1217 + $0x38] sm:$0xff]
      %v2674 = vld [vmem:[%s1217 + $0x40] sm:$0xff]
      %v2675 = vld [vmem:[%s1217 + $0x48] sm:$0xff]
      %v2676 = vld [vmem:[%s1217 + $0x50] sm:$0xff]
      %v2677 = vld [vmem:[%s1217 + $0x58] sm:$0xff]
      %v2678 = vld [vmem:[%s1217 + $0x60] sm:$0xff]
      %v2679 = vld [vmem:[%s1217 + $0x68] sm:$0xff]
      %v2680 = vld [vmem:[%s1217 + $0x70] sm:$0xff]
      %v2681 = vld [vmem:[%s1217 + $0x78] sm:$0xff]
      %2682 = vmatprep.subr.mxu0 0.0
      %2683 = vmatpush1.msra.mxu0 %v2666
      %2684 = vmatprep.subr.mxu0 0.0
      %2685 = vmatpush1.msra.mxu0 %v2667
      %2686 = vmatprep.subr.mxu0 0.0
      %2687 = vmatpush1.msra.mxu0 %v2668
      %2688 = vmatprep.subr.mxu0 0.0
      %2689 = vmatpush1.msra.mxu0 %v2669
      %2690 = vmatprep.subr.mxu0 0.0
      %2691 = vmatpush1.msra.mxu0 %v2670
      %2692 = vmatprep.subr.mxu0 0.0
      %2693 = vmatpush1.msra.mxu0 %v2671
      %2694 = vmatprep.subr.mxu0 0.0
      %2695 = vmatpush1.msra.mxu0 %v2672
      %2696 = vmatprep.subr.mxu0 0.0
      %2697 = vmatpush1.msra.mxu0 %v2673
      %2698 = vmatprep.subr.mxu0 0.0
      %2699 = vmatpush1.msra.mxu0 %v2674
      %2700 = vmatprep.subr.mxu0 0.0
      %2701 = vmatpush1.msra.mxu0 %v2675
      %2702 = vmatprep.subr.mxu0 0.0
      %2703 = vmatpush1.msra.mxu0 %v2676
      %2704 = vmatprep.subr.mxu0 0.0
      %2705 = vmatpush1.msra.mxu0 %v2677
      %2706 = vmatprep.subr.mxu0 0.0
      %2707 = vmatpush1.msra.mxu0 %v2678
      %2708 = vmatprep.subr.mxu0 0.0
      %2709 = vmatpush1.msra.mxu0 %v2679
      %2710 = vmatprep.subr.mxu0 0.0
      %2711 = vmatpush1.msra.mxu0 %v2680
      %2712 = vmatprep.subr.mxu0 0.0
      %2713 = vmatpush1.msra.mxu0 %v2681
      %2714 = vmatprep.subr.mxu0 0.0
      %2715 = vmatpush1.msra.mxu0 0.0
      %2716 = vmatprep.subr.mxu0 0.0
      %2717 = vmatpush1.msra.mxu0 0.0
      %2718 = vmatprep.subr.mxu0 0.0
      %2719 = vmatpush1.msra.mxu0 0.0
      %2720 = vmatprep.subr.mxu0 0.0
      %2721 = vmatpush1.msra.mxu0 0.0
      %2722 = vmatprep.subr.mxu0 0.0
      %2723 = vmatpush1.msra.mxu0 0.0
      %2724 = vmatprep.subr.mxu0 0.0
      %2725 = vmatpush1.msra.mxu0 0.0
      %2726 = vmatprep.subr.mxu0 0.0
      %2727 = vmatpush1.msra.mxu0 0.0
      %2728 = vmatprep.subr.mxu0 0.0
      %2729 = vmatpush1.msra.mxu0 0.0
      %2730 = vmatprep.subr.mxu0 0.0
      %2731 = vmatpush1.msra.mxu0 0.0
      %2732 = vmatprep.subr.mxu0 0.0
      %2733 = vmatpush1.msra.mxu0 0.0
      %2734 = vmatprep.subr.mxu0 0.0
      %2735 = vmatpush1.msra.mxu0 0.0
      %2736 = vmatprep.subr.mxu0 0.0
      %2737 = vmatpush1.msra.mxu0 0.0
      %2738 = vmatprep.subr.mxu0 0.0
      %2739 = vmatpush1.msra.mxu0 0.0
      %2740 = vmatprep.subr.mxu0 0.0
      %2741 = vmatpush1.msra.mxu0 0.0
      %2742 = vmatprep.subr.mxu0 0.0
      %2743 = vmatpush1.msra.mxu0 0.0
      %2744 = vmatprep.subr.mxu0 0.0
      %2745 = vmatpush1.msra.mxu0 0.0
      %2746 = vmatprep.mubr.f32.mxu0 0.0
      %2747 = vmatmul.mubr.f32.gmra.mrb[0].mxu0 %v2659
      %v2748 = vpop.f32.mrb[0].mxu0
      %v2749 = vadd.f32 0.0, %v2748
      %v2750 = vpop.f32.mrb[0].mxu0
      %2751 = vmatprep.mubr.f32.mxu0 0.0
      %2752 = vmatmul.mubr.f32.gmra.mrb[0].mxu0 %v2661
      %v2753 = vpop.f32.mrb[0].mxu0
      %v2754 = vadd.f32 0.0, %v2753
      %v2755 = vpop.f32.mrb[0].mxu0
      %2756 = vmatprep.mubr.f32.mxu0 0.0
      %2757 = vmatmul.mubr.f32.gmra.mrb[0].mxu0 %v2663
      %v2758 = vpop.f32.mrb[0].mxu0
      %v2759 = vadd.f32 0.0, %v2758
      %v2760 = vpop.f32.mrb[0].mxu0
      %2761 = vmatprep.mubr.f32.mxu0 0.0
      %2762 = vmatmul.mubr.f32.gmra.mrb[0].mxu0 %v2665
      %v2763 = vpop.f32.mrb[0].mxu0
      %v2764 = vadd.f32 0.0, %v2763
      %v2765 = vpop.f32.mrb[0].mxu0
      %2766 = vdwg.mxu0
      %v2767 = vadd.f32 %v2654, %v2749
      %v2768 = vadd.f32 %v2655, %v2754
      %v2769 = vadd.f32 %v2656, %v2759
      %v2770 = vadd.f32 %v2657, %v2764
      %v2771 = vld [vmem:[%s6 + $0x1] sm:$0x1]
      %v2772 = vlaneseq
      %v2773 = vshrl.u32 %v2772, 7
      %v2774 = vsub.s32 0, %v2773
      %v2775 = vrot.slane %v2771, %v2774
      %v2776 = vadd.f32 %v2767, %v2775
      %v2777 = vadd.f32 %v2768, %v2775
      %v2778 = vadd.f32 %v2769, %v2775
      %v2779 = vadd.f32 %v2770, %v2775
      %v2780 = vmul.f32 %v2776, 0.5
      %v2781 = vmul.f32 %v2777, 0.5
      %v2782 = vmul.f32 %v2778, 0.5
      %v2783 = vmul.f32 %v2779, 0.5
      %v2784 = vtanh.pop %v2780
      %v2785 = vtanh.pop %v2781
      %v2786 = vtanh.pop %v2782
      %v2787 = vtanh.pop %v2783
      %v2788 = vmul.f32 %v2784, 0.5
      %v2789 = vmul.f32 %v2785, 0.5
      %v2790 = vmul.f32 %v2786, 0.5
      %v2791 = vmul.f32 %v2787, 0.5
      %v2792 = vadd.f32 %v2788, 0.5
      %v2793 = vadd.f32 %v2789, 0.5
      %v2794 = vadd.f32 %v2790, 0.5
      %v2795 = vadd.f32 %v2791, 0.5
      %v2796 = vmul.f32 %v2776, %v2792
      %v2797 = vmul.f32 %v2777, %v2793
      %v2798 = vmul.f32 %v2778, %v2794
      %v2799 = vmul.f32 %v2779, %v2795
      %2800 = vst [vmem:[#allocation3 + $0x20] sm:$0xff] %v2796
      %2801 = vst [vmem:[#allocation3 + $0x28] sm:$0xff] %v2797
      %2802 = vst [vmem:[#allocation3 + $0x30] sm:$0xff] %v2798
      %2803 = vst [vmem:[#allocation3 + $0x38] sm:$0xff] %v2799
      %s2804 = scalar_lea.vmem [#allocation3], 32
      %v2805 = vld [vmem:[%s2804] ss:$2 sm:$0xff]
      %s2806 = scalar_lea.vmem [#allocation3], 48
      %v2807 = vld [vmem:[%s2806] ss:$2 sm:$0x7f]
      %v2808 = vld [vmem:[%s3] sm:$0xff]
      %v2809 = vld [vmem:[%s3 + $0x8] sm:$0xff]
      %v2810 = vld [vmem:[%s3 + $0x10] sm:$0xff]
      %v2811 = vld [vmem:[%s3 + $0x18] sm:$0xff]
      %v2812 = vld [vmem:[%s3 + $0x20] sm:$0xff]
      %v2813 = vld [vmem:[%s3 + $0x28] sm:$0xff]
      %v2814 = vld [vmem:[%s3 + $0x30] sm:$0xff]
      %v2815 = vld [vmem:[%s3 + $0x38] sm:$0xff]
      %v2816 = vld [vmem:[%s3 + $0x40] sm:$0xff]
      %v2817 = vld [vmem:[%s3 + $0x48] sm:$0xff]
      %v2818 = vld [vmem:[%s3 + $0x50] sm:$0xff]
      %v2819 = vld [vmem:[%s3 + $0x58] sm:$0xff]
      %v2820 = vld [vmem:[%s3 + $0x60] sm:$0xff]
      %v2821 = vld [vmem:[%s3 + $0x68] sm:$0xff]
      %v2822 = vld [vmem:[%s3 + $0x70] sm:$0xff]
      %v2823 = vld [vmem:[%s3 + $0x78] sm:$0xff]
      %s2824 = scalar_lea.vmem [#allocation3], 33
      %v2825 = vld [vmem:[%s2824] ss:$2 sm:$0xff]
      %s2826 = scalar_lea.vmem [#allocation3], 49
      %v2827 = vld [vmem:[%s2826] ss:$2 sm:$0x7f]
      %v2828 = vld [vmem:[%s1379] sm:$0xff]
      %v2829 = vld [vmem:[%s1379 + $0x8] sm:$0xff]
      %v2830 = vld [vmem:[%s1379 + $0x10] sm:$0xff]
      %v2831 = vld [vmem:[%s1379 + $0x18] sm:$0xff]
      %v2832 = vld [vmem:[%s1379 + $0x20] sm:$0xff]
      %v2833 = vld [vmem:[%s1379 + $0x28] sm:$0xff]
      %v2834 = vld [vmem:[%s1379 + $0x30] sm:$0xff]
      %v2835 = vld [vmem:[%s1379 + $0x38] sm:$0xff]
      %v2836 = vld [vmem:[%s1379 + $0x40] sm:$0xff]
      %v2837 = vld [vmem:[%s1379 + $0x48] sm:$0xff]
      %v2838 = vld [vmem:[%s1379 + $0x50] sm:$0xff]
      %v2839 = vld [vmem:[%s1379 + $0x58] sm:$0xff]
      %v2840 = vld [vmem:[%s1379 + $0x60] sm:$0xff]
      %v2841 = vld [vmem:[%s1379 + $0x68] sm:$0xff]
      %v2842 = vld [vmem:[%s1379 + $0x70] sm:$0xff]
      %v2843 = vld [vmem:[%s1379 + $0x78] sm:$0xff]
      %2844 = vmatprep.subr.mxu0 0.0
      %2845 = vmatpush1.msra.mxu0 %v2828
      %2846 = vmatprep.subr.mxu0 0.0
      %2847 = vmatpush1.msra.mxu0 %v2829
      %2848 = vmatprep.subr.mxu0 0.0
      %2849 = vmatpush1.msra.mxu0 %v2830
      %2850 = vmatprep.subr.mxu0 0.0
      %2851 = vmatpush1.msra.mxu0 %v2831
      %2852 = vmatprep.subr.mxu0 0.0
      %2853 = vmatpush1.msra.mxu0 %v2832
      %2854 = vmatprep.subr.mxu0 0.0
      %2855 = vmatpush1.msra.mxu0 %v2833
      %2856 = vmatprep.subr.mxu0 0.0
      %2857 = vmatpush1.msra.mxu0 %v2834
      %2858 = vmatprep.subr.mxu0 0.0
      %2859 = vmatpush1.msra.mxu0 %v2835
      %2860 = vmatprep.subr.mxu0 0.0
      %2861 = vmatpush1.msra.mxu0 %v2836
      %2862 = vmatprep.subr.mxu0 0.0
      %2863 = vmatpush1.msra.mxu0 %v2837
      %2864 = vmatprep.subr.mxu0 0.0
      %2865 = vmatpush1.msra.mxu0 %v2838
      %2866 = vmatprep.subr.mxu0 0.0
      %2867 = vmatpush1.msra.mxu0 %v2839
      %2868 = vmatprep.subr.mxu0 0.0
      %2869 = vmatpush1.msra.mxu0 %v2840
      %2870 = vmatprep.subr.mxu0 0.0
      %2871 = vmatpush1.msra.mxu0 %v2841
      %2872 = vmatprep.subr.mxu0 0.0
      %2873 = vmatpush1.msra.mxu0 %v2842
      %2874 = vmatprep.subr.mxu0 0.0
      %2875 = vmatpush1.msra.mxu0 %v2843
      %2876 = vmatprep.subr.mxu0 0.0
      %2877 = vmatpush1.msra.mxu0 0.0
      %2878 = vmatprep.subr.mxu0 0.0
      %2879 = vmatpush1.msra.mxu0 0.0
      %2880 = vmatprep.subr.mxu0 0.0
      %2881 = vmatpush1.msra.mxu0 0.0
      %2882 = vmatprep.subr.mxu0 0.0
      %2883 = vmatpush1.msra.mxu0 0.0
      %2884 = vmatprep.subr.mxu0 0.0
      %2885 = vmatpush1.msra.mxu0 0.0
      %2886 = vmatprep.subr.mxu0 0.0
      %2887 = vmatpush1.msra.mxu0 0.0
      %2888 = vmatprep.subr.mxu0 0.0
      %2889 = vmatpush1.msra.mxu0 0.0
      %2890 = vmatprep.subr.mxu0 0.0
      %2891 = vmatpush1.msra.mxu0 0.0
      %2892 = vmatprep.subr.mxu0 0.0
      %2893 = vmatpush1.msra.mxu0 0.0
      %2894 = vmatprep.subr.mxu0 0.0
      %2895 = vmatpush1.msra.mxu0 0.0
      %2896 = vmatprep.subr.mxu0 0.0
      %2897 = vmatpush1.msra.mxu0 0.0
      %2898 = vmatprep.subr.mxu0 0.0
      %2899 = vmatpush1.msra.mxu0 0.0
      %2900 = vmatprep.subr.mxu0 0.0
      %2901 = vmatpush1.msra.mxu0 0.0
      %2902 = vmatprep.subr.mxu0 0.0
      %2903 = vmatpush1.msra.mxu0 0.0
      %2904 = vmatprep.subr.mxu0 0.0
      %2905 = vmatpush1.msra.mxu0 0.0
      %2906 = vmatprep.subr.mxu0 0.0
      %2907 = vmatpush1.msra.mxu0 0.0
      %2908 = vmatprep.mubr.f32.mxu0 0.0
      %2909 = vmatmul.mubr.f32.gmra.mrb[0].mxu0 %v2825
      %v2910 = vpop.f32.mrb[0].mxu0
      %v2911 = vadd.f32 0.0, %v2910
      %v2912 = vpop.f32.mrb[0].mxu0
      %2913 = vmatprep.mubr.f32.mxu0 0.0
      %2914 = vmatmul.mubr.f32.gmra.mrb[0].mxu0 %v2827
      %v2915 = vpop.f32.mrb[0].mxu0
      %v2916 = vadd.f32 0.0, %v2915
      %v2917 = vpop.f32.mrb[0].mxu0
      %2918 = vdwg.mxu0
      %2919 = vmatprep.subr.mxu0 0.0
      %2920 = vmatpush1.msra.mxu0 %v2808
      %2921 = vmatprep.subr.mxu0 0.0
      %2922 = vmatpush1.msra.mxu0 %v2809
      %2923 = vmatprep.subr.mxu0 0.0
      %2924 = vmatpush1.msra.mxu0 %v2810
      %2925 = vmatprep.subr.mxu0 0.0
      %2926 = vmatpush1.msra.mxu0 %v2811
      %2927 = vmatprep.subr.mxu0 0.0
      %2928 = vmatpush1.msra.mxu0 %v2812
      %2929 = vmatprep.subr.mxu0 0.0
      %2930 = vmatpush1.msra.mxu0 %v2813
      %2931 = vmatprep.subr.mxu0 0.0
      %2932 = vmatpush1.msra.mxu0 %v2814
      %2933 = vmatprep.subr.mxu0 0.0
      %2934 = vmatpush1.msra.mxu0 %v2815
      %2935 = vmatprep.subr.mxu0 0.0
      %2936 = vmatpush1.msra.mxu0 %v2816
      %2937 = vmatprep.subr.mxu0 0.0
      %2938 = vmatpush1.msra.mxu0 %v2817
      %2939 = vmatprep.subr.mxu0 0.0
      %2940 = vmatpush1.msra.mxu0 %v2818
      %2941 = vmatprep.subr.mxu0 0.0
      %2942 = vmatpush1.msra.mxu0 %v2819
      %2943 = vmatprep.subr.mxu0 0.0
      %2944 = vmatpush1.msra.mxu0 %v2820
      %2945 = vmatprep.subr.mxu0 0.0
      %2946 = vmatpush1.msra.mxu0 %v2821
      %2947 = vmatprep.subr.mxu0 0.0
      %2948 = vmatpush1.msra.mxu0 %v2822
      %2949 = vmatprep.subr.mxu0 0.0
      %2950 = vmatpush1.msra.mxu0 %v2823
      %2951 = vmatprep.subr.mxu0 0.0
      %2952 = vmatpush1.msra.mxu0 0.0
      %2953 = vmatprep.subr.mxu0 0.0
      %2954 = vmatpush1.msra.mxu0 0.0
      %2955 = vmatprep.subr.mxu0 0.0
      %2956 = vmatpush1.msra.mxu0 0.0
      %2957 = vmatprep.subr.mxu0 0.0
      %2958 = vmatpush1.msra.mxu0 0.0
      %2959 = vmatprep.subr.mxu0 0.0
      %2960 = vmatpush1.msra.mxu0 0.0
      %2961 = vmatprep.subr.mxu0 0.0
      %2962 = vmatpush1.msra.mxu0 0.0
      %2963 = vmatprep.subr.mxu0 0.0
      %2964 = vmatpush1.msra.mxu0 0.0
      %2965 = vmatprep.subr.mxu0 0.0
      %2966 = vmatpush1.msra.mxu0 0.0
      %2967 = vmatprep.subr.mxu0 0.0
      %2968 = vmatpush1.msra.mxu0 0.0
      %2969 = vmatprep.subr.mxu0 0.0
      %2970 = vmatpush1.msra.mxu0 0.0
      %2971 = vmatprep.subr.mxu0 0.0
      %2972 = vmatpush1.msra.mxu0 0.0
      %2973 = vmatprep.subr.mxu0 0.0
      %2974 = vmatpush1.msra.mxu0 0.0
      %2975 = vmatprep.subr.mxu0 0.0
      %2976 = vmatpush1.msra.mxu0 0.0
      %2977 = vmatprep.subr.mxu0 0.0
      %2978 = vmatpush1.msra.mxu0 0.0
      %2979 = vmatprep.subr.mxu0 0.0
      %2980 = vmatpush1.msra.mxu0 0.0
      %2981 = vmatprep.subr.mxu0 0.0
      %2982 = vmatpush1.msra.mxu0 0.0
      %2983 = vmatprep.mubr.f32.mxu0 0.0
      %2984 = vmatmul.mubr.f32.gmra.mrb[0].mxu0 %v2805
      %v2985 = vpop.f32.mrb[0].mxu0
      %v2986 = vadd.f32 %v2911, %v2985
      %v2987 = vpop.f32.mrb[0].mxu0
      %2988 = vmatprep.mubr.f32.mxu0 0.0
      %2989 = vmatmul.mubr.f32.gmra.mrb[0].mxu0 %v2807
      %v2990 = vpop.f32.mrb[0].mxu0
      %v2991 = vadd.f32 %v2916, %v2990
      %v2992 = vpop.f32.mrb[0].mxu0
      %2993 = vdwg.mxu0
      %s2994 = scalar_lea.vmem [#allocation3], 34
      %v2995 = vld [vmem:[%s2994] ss:$2 sm:$0xff]
      %s2996 = scalar_lea.vmem [#allocation3], 50
      %v2997 = vld [vmem:[%s2996] ss:$2 sm:$0x7f]
      %v2998 = vld [vmem:[%s1550] sm:$0xff]
      %v2999 = vld [vmem:[%s1550 + $0x8] sm:$0xff]
      %v3000 = vld [vmem:[%s1550 + $0x10] sm:$0xff]
      %v3001 = vld [vmem:[%s1550 + $0x18] sm:$0xff]
      %v3002 = vld [vmem:[%s1550 + $0x20] sm:$0xff]
      %v3003 = vld [vmem:[%s1550 + $0x28] sm:$0xff]
      %v3004 = vld [vmem:[%s1550 + $0x30] sm:$0xff]
      %v3005 = vld [vmem:[%s1550 + $0x38] sm:$0xff]
      %v3006 = vld [vmem:[%s1550 + $0x40] sm:$0xff]
      %v3007 = vld [vmem:[%s1550 + $0x48] sm:$0xff]
      %v3008 = vld [vmem:[%s1550 + $0x50] sm:$0xff]
      %v3009 = vld [vmem:[%s1550 + $0x58] sm:$0xff]
      %v3010 = vld [vmem:[%s1550 + $0x60] sm:$0xff]
      %v3011 = vld [vmem:[%s1550 + $0x68] sm:$0xff]
      %v3012 = vld [vmem:[%s1550 + $0x70] sm:$0xff]
      %v3013 = vld [vmem:[%s1550 + $0x78] sm:$0xff]
      %3014 = vmatprep.subr.mxu0 0.0
      %3015 = vmatpush1.msra.mxu0 %v2998
      %3016 = vmatprep.subr.mxu0 0.0
      %3017 = vmatpush1.msra.mxu0 %v2999
      %3018 = vmatprep.subr.mxu0 0.0
      %3019 = vmatpush1.msra.mxu0 %v3000
      %3020 = vmatprep.subr.mxu0 0.0
      %3021 = vmatpush1.msra.mxu0 %v3001
      %3022 = vmatprep.subr.mxu0 0.0
      %3023 = vmatpush1.msra.mxu0 %v3002
      %3024 = vmatprep.subr.mxu0 0.0
      %3025 = vmatpush1.msra.mxu0 %v3003
      %3026 = vmatprep.subr.mxu0 0.0
      %3027 = vmatpush1.msra.mxu0 %v3004
      %3028 = vmatprep.subr.mxu0 0.0
      %3029 = vmatpush1.msra.mxu0 %v3005
      %3030 = vmatprep.subr.mxu0 0.0
      %3031 = vmatpush1.msra.mxu0 %v3006
      %3032 = vmatprep.subr.mxu0 0.0
      %3033 = vmatpush1.msra.mxu0 %v3007
      %3034 = vmatprep.subr.mxu0 0.0
      %3035 = vmatpush1.msra.mxu0 %v3008
      %3036 = vmatprep.subr.mxu0 0.0
      %3037 = vmatpush1.msra.mxu0 %v3009
      %3038 = vmatprep.subr.mxu0 0.0
      %3039 = vmatpush1.msra.mxu0 %v3010
      %3040 = vmatprep.subr.mxu0 0.0
      %3041 = vmatpush1.msra.mxu0 %v3011
      %3042 = vmatprep.subr.mxu0 0.0
      %3043 = vmatpush1.msra.mxu0 %v3012
      %3044 = vmatprep.subr.mxu0 0.0
      %3045 = vmatpush1.msra.mxu0 %v3013
      %3046 = vmatprep.subr.mxu0 0.0
      %3047 = vmatpush1.msra.mxu0 0.0
      %3048 = vmatprep.subr.mxu0 0.0
      %3049 = vmatpush1.msra.mxu0 0.0
      %3050 = vmatprep.subr.mxu0 0.0
      %3051 = vmatpush1.msra.mxu0 0.0
      %3052 = vmatprep.subr.mxu0 0.0
      %3053 = vmatpush1.msra.mxu0 0.0
      %3054 = vmatprep.subr.mxu0 0.0
      %3055 = vmatpush1.msra.mxu0 0.0
      %3056 = vmatprep.subr.mxu0 0.0
      %3057 = vmatpush1.msra.mxu0 0.0
      %3058 = vmatprep.subr.mxu0 0.0
      %3059 = vmatpush1.msra.mxu0 0.0
      %3060 = vmatprep.subr.mxu0 0.0
      %3061 = vmatpush1.msra.mxu0 0.0
      %3062 = vmatprep.subr.mxu0 0.0
      %3063 = vmatpush1.msra.mxu0 0.0
      %3064 = vmatprep.subr.mxu0 0.0
      %3065 = vmatpush1.msra.mxu0 0.0
      %3066 = vmatprep.subr.mxu0 0.0
      %3067 = vmatpush1.msra.mxu0 0.0
      %3068 = vmatprep.subr.mxu0 0.0
      %3069 = vmatpush1.msra.mxu0 0.0
      %3070 = vmatprep.subr.mxu0 0.0
      %3071 = vmatpush1.msra.mxu0 0.0
      %3072 = vmatprep.subr.mxu0 0.0
      %3073 = vmatpush1.msra.mxu0 0.0
      %3074 = vmatprep.subr.mxu0 0.0
      %3075 = vmatpush1.msra.mxu0 0.0
      %3076 = vmatprep.subr.mxu0 0.0
      %3077 = vmatpush1.msra.mxu0 0.0
      %3078 = vmatprep.mubr.f32.mxu0 0.0
      %3079 = vmatmul.mubr.f32.gmra.mrb[0].mxu0 %v2995
      %v3080 = vpop.f32.mrb[0].mxu0
      %v3081 = vadd.f32 0.0, %v3080
      %v3082 = vpop.f32.mrb[0].mxu0
      %3083 = vmatprep.mubr.f32.mxu0 0.0
      %3084 = vmatmul.mubr.f32.gmra.mrb[0].mxu0 %v2997
      %v3085 = vpop.f32.mrb[0].mxu0
      %v3086 = vadd.f32 0.0, %v3085
      %v3087 = vpop.f32.mrb[0].mxu0
      %3088 = vdwg.mxu0
      %v3089 = vadd.f32 %v2986, %v3081
      %v3090 = vadd.f32 %v2991, %v3086
      %v3091 = vld [vmem:[%s6 + $0x2] sm:$0x1]
      %v3092 = vlaneseq
      %v3093 = vshrl.u32 %v3092, 7
      %v3094 = vsub.s32 0, %v3093
      %v3095 = vrot.slane %v3091, %v3094
      %v3096 = vadd.f32 %v3089, %v3095
      %v3097 = vadd.f32 %v3090, %v3095
      %v3098 = vmul.f32 %v3096, 0.5
      %v3099 = vmul.f32 %v3097, 0.5
      %v3100 = vtanh.pop %v3098
      %v3101 = vtanh.pop %v3099
      %v3102 = vmul.f32 %v3100, 0.5
      %v3103 = vmul.f32 %v3101, 0.5
      %v3104 = vadd.f32 %v3102, 0.5
      %v3105 = vadd.f32 %v3103, 0.5
      %v3106 = vmul.f32 %v3096, %v3104
      %v3107 = vmul.f32 %v3097, %v3105
      %3108 = vst [vmem:[#allocation4 + $0x10] sm:$0xff] %v3106
      %3109 = vst [vmem:[#allocation4 + $0x18] sm:$0x7f] %v3107
      %s3110 = scalar_lea.vmem [#allocation4], 16
      %v3111 = vld [vmem:[%s3110] ss:$2 sm:$0x7f]
      %v3112 = vld [vmem:[%s4] sm:$0xff]
      %v3113 = vld [vmem:[%s4 + $0x8] sm:$0xff]
      %v3114 = vld [vmem:[%s4 + $0x10] sm:$0xff]
      %v3115 = vld [vmem:[%s4 + $0x18] sm:$0xff]
      %v3116 = vld [vmem:[%s4 + $0x20] sm:$0xff]
      %v3117 = vld [vmem:[%s4 + $0x28] sm:$0xff]
      %v3118 = vld [vmem:[%s4 + $0x30] sm:$0xff]
      %v3119 = vld [vmem:[%s4 + $0x38] sm:$0xff]
      %v3120 = vld [vmem:[%s4 + $0x40] sm:$0xff]
      %v3121 = vld [vmem:[%s4 + $0x48] sm:$0xff]
      %v3122 = vld [vmem:[%s4 + $0x50] sm:$0xff]
      %v3123 = vld [vmem:[%s4 + $0x58] sm:$0xff]
      %v3124 = vld [vmem:[%s4 + $0x60] sm:$0xff]
      %v3125 = vld [vmem:[%s4 + $0x68] sm:$0xff]
      %v3126 = vld [vmem:[%s4 + $0x70] sm:$0xff]
      %v3127 = vld [vmem:[%s4 + $0x78] sm:$0xff]
      %s3128 = scalar_lea.vmem [#allocation4], 17
      %v3129 = vld [vmem:[%s3128] ss:$2 sm:$0x7f]
      %v3130 = vld [vmem:[%s1682] sm:$0xff]
      %v3131 = vld [vmem:[%s1682 + $0x8] sm:$0xff]
      %v3132 = vld [vmem:[%s1682 + $0x10] sm:$0xff]
      %v3133 = vld [vmem:[%s1682 + $0x18] sm:$0xff]
      %v3134 = vld [vmem:[%s1682 + $0x20] sm:$0xff]
      %v3135 = vld [vmem:[%s1682 + $0x28] sm:$0xff]
      %v3136 = vld [vmem:[%s1682 + $0x30] sm:$0xff]
      %v3137 = vld [vmem:[%s1682 + $0x38] sm:$0xff]
      %v3138 = vld [vmem:[%s1682 + $0x40] sm:$0xff]
      %v3139 = vld [vmem:[%s1682 + $0x48] sm:$0xff]
      %v3140 = vld [vmem:[%s1682 + $0x50] sm:$0xff]
      %v3141 = vld [vmem:[%s1682 + $0x58] sm:$0xff]
      %v3142 = vld [vmem:[%s1682 + $0x60] sm:$0xff]
      %v3143 = vld [vmem:[%s1682 + $0x68] sm:$0xff]
      %v3144 = vld [vmem:[%s1682 + $0x70] sm:$0xff]
      %v3145 = vld [vmem:[%s1682 + $0x78] sm:$0xff]
      %3146 = vmatprep.subr.mxu0 0.0
      %3147 = vmatpush1.msra.mxu0 %v3130
      %3148 = vmatprep.subr.mxu0 0.0
      %3149 = vmatpush1.msra.mxu0 %v3131
      %3150 = vmatprep.subr.mxu0 0.0
      %3151 = vmatpush1.msra.mxu0 %v3132
      %3152 = vmatprep.subr.mxu0 0.0
      %3153 = vmatpush1.msra.mxu0 %v3133
      %3154 = vmatprep.subr.mxu0 0.0
      %3155 = vmatpush1.msra.mxu0 %v3134
      %3156 = vmatprep.subr.mxu0 0.0
      %3157 = vmatpush1.msra.mxu0 %v3135
      %3158 = vmatprep.subr.mxu0 0.0
      %3159 = vmatpush1.msra.mxu0 %v3136
      %3160 = vmatprep.subr.mxu0 0.0
      %3161 = vmatpush1.msra.mxu0 %v3137
      %3162 = vmatprep.subr.mxu0 0.0
      %3163 = vmatpush1.msra.mxu0 %v3138
      %3164 = vmatprep.subr.mxu0 0.0
      %3165 = vmatpush1.msra.mxu0 %v3139
      %3166 = vmatprep.subr.mxu0 0.0
      %3167 = vmatpush1.msra.mxu0 %v3140
      %3168 = vmatprep.subr.mxu0 0.0
      %3169 = vmatpush1.msra.mxu0 %v3141
      %3170 = vmatprep.subr.mxu0 0.0
      %3171 = vmatpush1.msra.mxu0 %v3142
      %3172 = vmatprep.subr.mxu0 0.0
      %3173 = vmatpush1.msra.mxu0 %v3143
      %3174 = vmatprep.subr.mxu0 0.0
      %3175 = vmatpush1.msra.mxu0 %v3144
      %3176 = vmatprep.subr.mxu0 0.0
      %3177 = vmatpush1.msra.mxu0 %v3145
      %3178 = vmatprep.subr.mxu0 0.0
      %3179 = vmatpush1.msra.mxu0 0.0
      %3180 = vmatprep.subr.mxu0 0.0
      %3181 = vmatpush1.msra.mxu0 0.0
      %3182 = vmatprep.subr.mxu0 0.0
      %3183 = vmatpush1.msra.mxu0 0.0
      %3184 = vmatprep.subr.mxu0 0.0
      %3185 = vmatpush1.msra.mxu0 0.0
      %3186 = vmatprep.subr.mxu0 0.0
      %3187 = vmatpush1.msra.mxu0 0.0
      %3188 = vmatprep.subr.mxu0 0.0
      %3189 = vmatpush1.msra.mxu0 0.0
      %3190 = vmatprep.subr.mxu0 0.0
      %3191 = vmatpush1.msra.mxu0 0.0
      %3192 = vmatprep.subr.mxu0 0.0
      %3193 = vmatpush1.msra.mxu0 0.0
      %3194 = vmatprep.subr.mxu0 0.0
      %3195 = vmatpush1.msra.mxu0 0.0
      %3196 = vmatprep.subr.mxu0 0.0
      %3197 = vmatpush1.msra.mxu0 0.0
      %3198 = vmatprep.subr.mxu0 0.0
      %3199 = vmatpush1.msra.mxu0 0.0
      %3200 = vmatprep.subr.mxu0 0.0
      %3201 = vmatpush1.msra.mxu0 0.0
      %3202 = vmatprep.subr.mxu0 0.0
      %3203 = vmatpush1.msra.mxu0 0.0
      %3204 = vmatprep.subr.mxu0 0.0
      %3205 = vmatpush1.msra.mxu0 0.0
      %3206 = vmatprep.subr.mxu0 0.0
      %3207 = vmatpush1.msra.mxu0 0.0
      %3208 = vmatprep.subr.mxu0 0.0
      %3209 = vmatpush1.msra.mxu0 0.0
      %3210 = vmatprep.mubr.f32.mxu0 0.0
      %3211 = vmatmul.mubr.f32.gmra.mrb[0].mxu0 %v3129
      %v3212 = vpop.f32.mrb[0].mxu0
      %v3213 = vadd.f32 0.0, %v3212
      %v3214 = vpop.f32.mrb[0].mxu0
      %3215 = vdwg.mxu0
      %3216 = vmatprep.subr.mxu0 0.0
      %3217 = vmatpush1.msra.mxu0 %v3112
      %3218 = vmatprep.subr.mxu0 0.0
      %3219 = vmatpush1.msra.mxu0 %v3113
      %3220 = vmatprep.subr.mxu0 0.0
      %3221 = vmatpush1.msra.mxu0 %v3114
      %3222 = vmatprep.subr.mxu0 0.0
      %3223 = vmatpush1.msra.mxu0 %v3115
      %3224 = vmatprep.subr.mxu0 0.0
      %3225 = vmatpush1.msra.mxu0 %v3116
      %3226 = vmatprep.subr.mxu0 0.0
      %3227 = vmatpush1.msra.mxu0 %v3117
      %3228 = vmatprep.subr.mxu0 0.0
      %3229 = vmatpush1.msra.mxu0 %v3118
      %3230 = vmatprep.subr.mxu0 0.0
      %3231 = vmatpush1.msra.mxu0 %v3119
      %3232 = vmatprep.subr.mxu0 0.0
      %3233 = vmatpush1.msra.mxu0 %v3120
      %3234 = vmatprep.subr.mxu0 0.0
      %3235 = vmatpush1.msra.mxu0 %v3121
      %3236 = vmatprep.subr.mxu0 0.0
      %3237 = vmatpush1.msra.mxu0 %v3122
      %3238 = vmatprep.subr.mxu0 0.0
      %3239 = vmatpush1.msra.mxu0 %v3123
      %3240 = vmatprep.subr.mxu0 0.0
      %3241 = vmatpush1.msra.mxu0 %v3124
      %3242 = vmatprep.subr.mxu0 0.0
      %3243 = vmatpush1.msra.mxu0 %v3125
      %3244 = vmatprep.subr.mxu0 0.0
      %3245 = vmatpush1.msra.mxu0 %v3126
      %3246 = vmatprep.subr.mxu0 0.0
      %3247 = vmatpush1.msra.mxu0 %v3127
      %3248 = vmatprep.subr.mxu0 0.0
      %3249 = vmatpush1.msra.mxu0 0.0
      %3250 = vmatprep.subr.mxu0 0.0
      %3251 = vmatpush1.msra.mxu0 0.0
      %3252 = vmatprep.subr.mxu0 0.0
      %3253 = vmatpush1.msra.mxu0 0.0
      %3254 = vmatprep.subr.mxu0 0.0
      %3255 = vmatpush1.msra.mxu0 0.0
      %3256 = vmatprep.subr.mxu0 0.0
      %3257 = vmatpush1.msra.mxu0 0.0
      %3258 = vmatprep.subr.mxu0 0.0
      %3259 = vmatpush1.msra.mxu0 0.0
      %3260 = vmatprep.subr.mxu0 0.0
      %3261 = vmatpush1.msra.mxu0 0.0
      %3262 = vmatprep.subr.mxu0 0.0
      %3263 = vmatpush1.msra.mxu0 0.0
      %3264 = vmatprep.subr.mxu0 0.0
      %3265 = vmatpush1.msra.mxu0 0.0
      %3266 = vmatprep.subr.mxu0 0.0
      %3267 = vmatpush1.msra.mxu0 0.0
      %3268 = vmatprep.subr.mxu0 0.0
      %3269 = vmatpush1.msra.mxu0 0.0
      %3270 = vmatprep.subr.mxu0 0.0
      %3271 = vmatpush1.msra.mxu0 0.0
      %3272 = vmatprep.subr.mxu0 0.0
      %3273 = vmatpush1.msra.mxu0 0.0
      %3274 = vmatprep.subr.mxu0 0.0
      %3275 = vmatpush1.msra.mxu0 0.0
      %3276 = vmatprep.subr.mxu0 0.0
      %3277 = vmatpush1.msra.mxu0 0.0
      %3278 = vmatprep.subr.mxu0 0.0
      %3279 = vmatpush1.msra.mxu0 0.0
      %3280 = vmatprep.mubr.f32.mxu0 0.0
      %3281 = vmatmul.mubr.f32.gmra.mrb[0].mxu0 %v3111
      %v3282 = vpop.f32.mrb[0].mxu0
      %v3283 = vadd.f32 %v3213, %v3282
      %v3284 = vpop.f32.mrb[0].mxu0
      %3285 = vdwg.mxu0
      %s3286 = scalar_lea.vmem [#allocation4], 18
      %v3287 = vld [vmem:[%s3286] ss:$2 sm:$0x7f]
      %v3288 = vld [vmem:[%s1841] sm:$0xff]
      %v3289 = vld [vmem:[%s1841 + $0x8] sm:$0xff]
      %v3290 = vld [vmem:[%s1841 + $0x10] sm:$0xff]
      %v3291 = vld [vmem:[%s1841 + $0x18] sm:$0xff]
      %v3292 = vld [vmem:[%s1841 + $0x20] sm:$0xff]
      %v3293 = vld [vmem:[%s1841 + $0x28] sm:$0xff]
      %v3294 = vld [vmem:[%s1841 + $0x30] sm:$0xff]
      %v3295 = vld [vmem:[%s1841 + $0x38] sm:$0xff]
      %v3296 = vld [vmem:[%s1841 + $0x40] sm:$0xff]
      %v3297 = vld [vmem:[%s1841 + $0x48] sm:$0xff]
      %v3298 = vld [vmem:[%s1841 + $0x50] sm:$0xff]
      %v3299 = vld [vmem:[%s1841 + $0x58] sm:$0xff]
      %v3300 = vld [vmem:[%s1841 + $0x60] sm:$0xff]
      %v3301 = vld [vmem:[%s1841 + $0x68] sm:$0xff]
      %v3302 = vld [vmem:[%s1841 + $0x70] sm:$0xff]
      %v3303 = vld [vmem:[%s1841 + $0x78] sm:$0xff]
      %3304 = vmatprep.subr.mxu0 0.0
      %3305 = vmatpush1.msra.mxu0 %v3288
      %3306 = vmatprep.subr.mxu0 0.0
      %3307 = vmatpush1.msra.mxu0 %v3289
      %3308 = vmatprep.subr.mxu0 0.0
      %3309 = vmatpush1.msra.mxu0 %v3290
      %3310 = vmatprep.subr.mxu0 0.0
      %3311 = vmatpush1.msra.mxu0 %v3291
      %3312 = vmatprep.subr.mxu0 0.0
      %3313 = vmatpush1.msra.mxu0 %v3292
      %3314 = vmatprep.subr.mxu0 0.0
      %3315 = vmatpush1.msra.mxu0 %v3293
      %3316 = vmatprep.subr.mxu0 0.0
      %3317 = vmatpush1.msra.mxu0 %v3294
      %3318 = vmatprep.subr.mxu0 0.0
      %3319 = vmatpush1.msra.mxu0 %v3295
      %3320 = vmatprep.subr.mxu0 0.0
      %3321 = vmatpush1.msra.mxu0 %v3296
      %3322 = vmatprep.subr.mxu0 0.0
      %3323 = vmatpush1.msra.mxu0 %v3297
      %3324 = vmatprep.subr.mxu0 0.0
      %3325 = vmatpush1.msra.mxu0 %v3298
      %3326 = vmatprep.subr.mxu0 0.0
      %3327 = vmatpush1.msra.mxu0 %v3299
      %3328 = vmatprep.subr.mxu0 0.0
      %3329 = vmatpush1.msra.mxu0 %v3300
      %3330 = vmatprep.subr.mxu0 0.0
      %3331 = vmatpush1.msra.mxu0 %v3301
      %3332 = vmatprep.subr.mxu0 0.0
      %3333 = vmatpush1.msra.mxu0 %v3302
      %3334 = vmatprep.subr.mxu0 0.0
      %3335 = vmatpush1.msra.mxu0 %v3303
      %3336 = vmatprep.subr.mxu0 0.0
      %3337 = vmatpush1.msra.mxu0 0.0
      %3338 = vmatprep.subr.mxu0 0.0
      %3339 = vmatpush1.msra.mxu0 0.0
      %3340 = vmatprep.subr.mxu0 0.0
      %3341 = vmatpush1.msra.mxu0 0.0
      %3342 = vmatprep.subr.mxu0 0.0
      %3343 = vmatpush1.msra.mxu0 0.0
      %3344 = vmatprep.subr.mxu0 0.0
      %3345 = vmatpush1.msra.mxu0 0.0
      %3346 = vmatprep.subr.mxu0 0.0
      %3347 = vmatpush1.msra.mxu0 0.0
      %3348 = vmatprep.subr.mxu0 0.0
      %3349 = vmatpush1.msra.mxu0 0.0
      %3350 = vmatprep.subr.mxu0 0.0
      %3351 = vmatpush1.msra.mxu0 0.0
      %3352 = vmatprep.subr.mxu0 0.0
      %3353 = vmatpush1.msra.mxu0 0.0
      %3354 = vmatprep.subr.mxu0 0.0
      %3355 = vmatpush1.msra.mxu0 0.0
      %3356 = vmatprep.subr.mxu0 0.0
      %3357 = vmatpush1.msra.mxu0 0.0
      %3358 = vmatprep.subr.mxu0 0.0
      %3359 = vmatpush1.msra.mxu0 0.0
      %3360 = vmatprep.subr.mxu0 0.0
      %3361 = vmatpush1.msra.mxu0 0.0
      %3362 = vmatprep.subr.mxu0 0.0
      %3363 = vmatpush1.msra.mxu0 0.0
      %3364 = vmatprep.subr.mxu0 0.0
      %3365 = vmatpush1.msra.mxu0 0.0
      %3366 = vmatprep.subr.mxu0 0.0
      %3367 = vmatpush1.msra.mxu0 0.0
      %3368 = vmatprep.mubr.f32.mxu0 0.0
      %3369 = vmatmul.mubr.f32.gmra.mrb[0].mxu0 %v3287
      %v3370 = vpop.f32.mrb[0].mxu0
      %v3371 = vadd.f32 0.0, %v3370
      %v3372 = vpop.f32.mrb[0].mxu0
      %3373 = vdwg.mxu0
      %v3374 = vadd.f32 %v3283, %v3371
      %v3375 = vld [vmem:[%s6 + $0x3] sm:$0x1]
      %v3376 = vlaneseq
      %v3377 = vshrl.u32 %v3376, 7
      %v3378 = vsub.s32 0, %v3377
      %v3379 = vrot.slane %v3375, %v3378
      %v3380 = vadd.f32 %v3374, %v3379
      %v3381 = vmul.f32 %v3380, 0.5
      %v3382 = vtanh.pop %v3381
      %v3383 = vmul.f32 %v3382, 0.5
      %v3384 = vadd.f32 %v3383, 0.5
      %v3385 = vmul.f32 %v3380, %v3384
      %3386 = vst [vmem:[#allocation5 + $0x8] sm:$0x7f] %v3385
      %s3387 = scalar_lea.vmem [#allocation5], 8
      %v3388 = vld [vmem:[%s3387] ss:$2 sm:$0x7]
      %v3389 = vld [vmem:[%s5] sm:$0xff]
      %v3390 = vld [vmem:[%s5 + $0x8] sm:$0xff]
      %v3391 = vld [vmem:[%s5 + $0x10] sm:$0xff]
      %v3392 = vld [vmem:[%s5 + $0x18] sm:$0xff]
      %v3393 = vld [vmem:[%s5 + $0x20] sm:$0xff]
      %v3394 = vld [vmem:[%s5 + $0x28] sm:$0xff]
      %v3395 = vld [vmem:[%s5 + $0x30] sm:$0xff]
      %v3396 = vld [vmem:[%s5 + $0x38] sm:$0xff]
      %v3397 = vld [vmem:[%s5 + $0x40] sm:$0xff]
      %v3398 = vld [vmem:[%s5 + $0x48] sm:$0xff]
      %v3399 = vld [vmem:[%s5 + $0x50] sm:$0xff]
      %v3400 = vld [vmem:[%s5 + $0x58] sm:$0xff]
      %v3401 = vld [vmem:[%s5 + $0x60] sm:$0xff]
      %v3402 = vld [vmem:[%s5 + $0x68] sm:$0xff]
      %v3403 = vld [vmem:[%s5 + $0x70] sm:$0xff]
      %v3404 = vld [vmem:[%s5 + $0x78] sm:$0xff]
      %s3405 = scalar_lea.vmem [#allocation5], 9
      %v3406 = vld [vmem:[%s3405] ss:$2 sm:$0x7]
      %v3407 = vld [vmem:[%s1960] sm:$0xff]
      %v3408 = vld [vmem:[%s1960 + $0x8] sm:$0xff]
      %v3409 = vld [vmem:[%s1960 + $0x10] sm:$0xff]
      %v3410 = vld [vmem:[%s1960 + $0x18] sm:$0xff]
      %v3411 = vld [vmem:[%s1960 + $0x20] sm:$0xff]
      %v3412 = vld [vmem:[%s1960 + $0x28] sm:$0xff]
      %v3413 = vld [vmem:[%s1960 + $0x30] sm:$0xff]
      %v3414 = vld [vmem:[%s1960 + $0x38] sm:$0xff]
      %v3415 = vld [vmem:[%s1960 + $0x40] sm:$0xff]
      %v3416 = vld [vmem:[%s1960 + $0x48] sm:$0xff]
      %v3417 = vld [vmem:[%s1960 + $0x50] sm:$0xff]
      %v3418 = vld [vmem:[%s1960 + $0x58] sm:$0xff]
      %v3419 = vld [vmem:[%s1960 + $0x60] sm:$0xff]
      %v3420 = vld [vmem:[%s1960 + $0x68] sm:$0xff]
      %v3421 = vld [vmem:[%s1960 + $0x70] sm:$0xff]
      %v3422 = vld [vmem:[%s1960 + $0x78] sm:$0xff]
      %3423 = vmatprep.subr.mxu0 0.0
      %3424 = vmatpush1.msra.mxu0 %v3407
      %3425 = vmatprep.subr.mxu0 0.0
      %3426 = vmatpush1.msra.mxu0 %v3408
      %3427 = vmatprep.subr.mxu0 0.0
      %3428 = vmatpush1.msra.mxu0 %v3409
      %3429 = vmatprep.subr.mxu0 0.0
      %3430 = vmatpush1.msra.mxu0 %v3410
      %3431 = vmatprep.subr.mxu0 0.0
      %3432 = vmatpush1.msra.mxu0 %v3411
      %3433 = vmatprep.subr.mxu0 0.0
      %3434 = vmatpush1.msra.mxu0 %v3412
      %3435 = vmatprep.subr.mxu0 0.0
      %3436 = vmatpush1.msra.mxu0 %v3413
      %3437 = vmatprep.subr.mxu0 0.0
      %3438 = vmatpush1.msra.mxu0 %v3414
      %3439 = vmatprep.subr.mxu0 0.0
      %3440 = vmatpush1.msra.mxu0 %v3415
      %3441 = vmatprep.subr.mxu0 0.0
      %3442 = vmatpush1.msra.mxu0 %v3416
      %3443 = vmatprep.subr.mxu0 0.0
      %3444 = vmatpush1.msra.mxu0 %v3417
      %3445 = vmatprep.subr.mxu0 0.0
      %3446 = vmatpush1.msra.mxu0 %v3418
      %3447 = vmatprep.subr.mxu0 0.0
      %3448 = vmatpush1.msra.mxu0 %v3419
      %3449 = vmatprep.subr.mxu0 0.0
      %3450 = vmatpush1.msra.mxu0 %v3420
      %3451 = vmatprep.subr.mxu0 0.0
      %3452 = vmatpush1.msra.mxu0 %v3421
      %3453 = vmatprep.subr.mxu0 0.0
      %3454 = vmatpush1.msra.mxu0 %v3422
      %3455 = vmatprep.subr.mxu0 0.0
      %3456 = vmatpush1.msra.mxu0 0.0
      %3457 = vmatprep.subr.mxu0 0.0
      %3458 = vmatpush1.msra.mxu0 0.0
      %3459 = vmatprep.subr.mxu0 0.0
      %3460 = vmatpush1.msra.mxu0 0.0
      %3461 = vmatprep.subr.mxu0 0.0
      %3462 = vmatpush1.msra.mxu0 0.0
      %3463 = vmatprep.subr.mxu0 0.0
      %3464 = vmatpush1.msra.mxu0 0.0
      %3465 = vmatprep.subr.mxu0 0.0
      %3466 = vmatpush1.msra.mxu0 0.0
      %3467 = vmatprep.subr.mxu0 0.0
      %3468 = vmatpush1.msra.mxu0 0.0
      %3469 = vmatprep.subr.mxu0 0.0
      %3470 = vmatpush1.msra.mxu0 0.0
      %3471 = vmatprep.subr.mxu0 0.0
      %3472 = vmatpush1.msra.mxu0 0.0
      %3473 = vmatprep.subr.mxu0 0.0
      %3474 = vmatpush1.msra.mxu0 0.0
      %3475 = vmatprep.subr.mxu0 0.0
      %3476 = vmatpush1.msra.mxu0 0.0
      %3477 = vmatprep.subr.mxu0 0.0
      %3478 = vmatpush1.msra.mxu0 0.0
      %3479 = vmatprep.subr.mxu0 0.0
      %3480 = vmatpush1.msra.mxu0 0.0
      %3481 = vmatprep.subr.mxu0 0.0
      %3482 = vmatpush1.msra.mxu0 0.0
      %3483 = vmatprep.subr.mxu0 0.0
      %3484 = vmatpush1.msra.mxu0 0.0
      %3485 = vmatprep.subr.mxu0 0.0
      %3486 = vmatpush1.msra.mxu0 0.0
      %3487 = vmatprep.mubr.f32.mxu0 0.0
      %3488 = vmatmul.mubr.f32.gmra.mrb[0].mxu0 %v3406
      %v3489 = vpop.f32.mrb[0].mxu0
      %v3490 = vadd.f32 0.0, %v3489
      %v3491 = vpop.f32.mrb[0].mxu0
      %3492 = vdwg.mxu0
      %3493 = vmatprep.subr.mxu0 0.0
      %3494 = vmatpush1.msra.mxu0 %v3389
      %3495 = vmatprep.subr.mxu0 0.0
      %3496 = vmatpush1.msra.mxu0 %v3390
      %3497 = vmatprep.subr.mxu0 0.0
      %3498 = vmatpush1.msra.mxu0 %v3391
      %3499 = vmatprep.subr.mxu0 0.0
      %3500 = vmatpush1.msra.mxu0 %v3392
      %3501 = vmatprep.subr.mxu0 0.0
      %3502 = vmatpush1.msra.mxu0 %v3393
      %3503 = vmatprep.subr.mxu0 0.0
      %3504 = vmatpush1.msra.mxu0 %v3394
      %3505 = vmatprep.subr.mxu0 0.0
      %3506 = vmatpush1.msra.mxu0 %v3395
      %3507 = vmatprep.subr.mxu0 0.0
      %3508 = vmatpush1.msra.mxu0 %v3396
      %3509 = vmatprep.subr.mxu0 0.0
      %3510 = vmatpush1.msra.mxu0 %v3397
      %3511 = vmatprep.subr.mxu0 0.0
      %3512 = vmatpush1.msra.mxu0 %v3398
      %3513 = vmatprep.subr.mxu0 0.0
      %3514 = vmatpush1.msra.mxu0 %v3399
      %3515 = vmatprep.subr.mxu0 0.0
      %3516 = vmatpush1.msra.mxu0 %v3400
      %3517 = vmatprep.subr.mxu0 0.0
      %3518 = vmatpush1.msra.mxu0 %v3401
      %3519 = vmatprep.subr.mxu0 0.0
      %3520 = vmatpush1.msra.mxu0 %v3402
      %3521 = vmatprep.subr.mxu0 0.0
      %3522 = vmatpush1.msra.mxu0 %v3403
      %3523 = vmatprep.subr.mxu0 0.0
      %3524 = vmatpush1.msra.mxu0 %v3404
      %3525 = vmatprep.subr.mxu0 0.0
      %3526 = vmatpush1.msra.mxu0 0.0
      %3527 = vmatprep.subr.mxu0 0.0
      %3528 = vmatpush1.msra.mxu0 0.0
      %3529 = vmatprep.subr.mxu0 0.0
      %3530 = vmatpush1.msra.mxu0 0.0
      %3531 = vmatprep.subr.mxu0 0.0
      %3532 = vmatpush1.msra.mxu0 0.0
      %3533 = vmatprep.subr.mxu0 0.0
      %3534 = vmatpush1.msra.mxu0 0.0
      %3535 = vmatprep.subr.mxu0 0.0
      %3536 = vmatpush1.msra.mxu0 0.0
      %3537 = vmatprep.subr.mxu0 0.0
      %3538 = vmatpush1.msra.mxu0 0.0
      %3539 = vmatprep.subr.mxu0 0.0
      %3540 = vmatpush1.msra.mxu0 0.0
      %3541 = vmatprep.subr.mxu0 0.0
      %3542 = vmatpush1.msra.mxu0 0.0
      %3543 = vmatprep.subr.mxu0 0.0
      %3544 = vmatpush1.msra.mxu0 0.0
      %3545 = vmatprep.subr.mxu0 0.0
      %3546 = vmatpush1.msra.mxu0 0.0
      %3547 = vmatprep.subr.mxu0 0.0
      %3548 = vmatpush1.msra.mxu0 0.0
      %3549 = vmatprep.subr.mxu0 0.0
      %3550 = vmatpush1.msra.mxu0 0.0
      %3551 = vmatprep.subr.mxu0 0.0
      %3552 = vmatpush1.msra.mxu0 0.0
      %3553 = vmatprep.subr.mxu0 0.0
      %3554 = vmatpush1.msra.mxu0 0.0
      %3555 = vmatprep.subr.mxu0 0.0
      %3556 = vmatpush1.msra.mxu0 0.0
      %3557 = vmatprep.mubr.f32.mxu0 0.0
      %3558 = vmatmul.mubr.f32.gmra.mrb[0].mxu0 %v3388
      %v3559 = vpop.f32.mrb[0].mxu0
      %v3560 = vadd.f32 %v3490, %v3559
      %v3561 = vpop.f32.mrb[0].mxu0
      %3562 = vdwg.mxu0
      %s3563 = scalar_lea.vmem [#allocation5], 10
      %v3564 = vld [vmem:[%s3563] ss:$2 sm:$0x7]
      %v3565 = vld [vmem:[%s2119] sm:$0xff]
      %v3566 = vld [vmem:[%s2119 + $0x8] sm:$0xff]
      %v3567 = vld [vmem:[%s2119 + $0x10] sm:$0xff]
      %v3568 = vld [vmem:[%s2119 + $0x18] sm:$0xff]
      %v3569 = vld [vmem:[%s2119 + $0x20] sm:$0xff]
      %v3570 = vld [vmem:[%s2119 + $0x28] sm:$0xff]
      %v3571 = vld [vmem:[%s2119 + $0x30] sm:$0xff]
      %v3572 = vld [vmem:[%s2119 + $0x38] sm:$0xff]
      %v3573 = vld [vmem:[%s2119 + $0x40] sm:$0xff]
      %v3574 = vld [vmem:[%s2119 + $0x48] sm:$0xff]
      %v3575 = vld [vmem:[%s2119 + $0x50] sm:$0xff]
      %v3576 = vld [vmem:[%s2119 + $0x58] sm:$0xff]
      %v3577 = vld [vmem:[%s2119 + $0x60] sm:$0xff]
      %v3578 = vld [vmem:[%s2119 + $0x68] sm:$0xff]
      %v3579 = vld [vmem:[%s2119 + $0x70] sm:$0xff]
      %v3580 = vld [vmem:[%s2119 + $0x78] sm:$0xff]
      %3581 = vmatprep.subr.mxu0 0.0
      %3582 = vmatpush1.msra.mxu0 %v3565
      %3583 = vmatprep.subr.mxu0 0.0
      %3584 = vmatpush1.msra.mxu0 %v3566
      %3585 = vmatprep.subr.mxu0 0.0
      %3586 = vmatpush1.msra.mxu0 %v3567
      %3587 = vmatprep.subr.mxu0 0.0
      %3588 = vmatpush1.msra.mxu0 %v3568
      %3589 = vmatprep.subr.mxu0 0.0
      %3590 = vmatpush1.msra.mxu0 %v3569
      %3591 = vmatprep.subr.mxu0 0.0
      %3592 = vmatpush1.msra.mxu0 %v3570
      %3593 = vmatprep.subr.mxu0 0.0
      %3594 = vmatpush1.msra.mxu0 %v3571
      %3595 = vmatprep.subr.mxu0 0.0
      %3596 = vmatpush1.msra.mxu0 %v3572
      %3597 = vmatprep.subr.mxu0 0.0
      %3598 = vmatpush1.msra.mxu0 %v3573
      %3599 = vmatprep.subr.mxu0 0.0
      %3600 = vmatpush1.msra.mxu0 %v3574
      %3601 = vmatprep.subr.mxu0 0.0
      %3602 = vmatpush1.msra.mxu0 %v3575
      %3603 = vmatprep.subr.mxu0 0.0
      %3604 = vmatpush1.msra.mxu0 %v3576
      %3605 = vmatprep.subr.mxu0 0.0
      %3606 = vmatpush1.msra.mxu0 %v3577
      %3607 = vmatprep.subr.mxu0 0.0
      %3608 = vmatpush1.msra.mxu0 %v3578
      %3609 = vmatprep.subr.mxu0 0.0
      %3610 = vmatpush1.msra.mxu0 %v3579
      %3611 = vmatprep.subr.mxu0 0.0
      %3612 = vmatpush1.msra.mxu0 %v3580
      %3613 = vmatprep.subr.mxu0 0.0
      %3614 = vmatpush1.msra.mxu0 0.0
      %3615 = vmatprep.subr.mxu0 0.0
      %3616 = vmatpush1.msra.mxu0 0.0
      %3617 = vmatprep.subr.mxu0 0.0
      %3618 = vmatpush1.msra.mxu0 0.0
      %3619 = vmatprep.subr.mxu0 0.0
      %3620 = vmatpush1.msra.mxu0 0.0
      %3621 = vmatprep.subr.mxu0 0.0
      %3622 = vmatpush1.msra.mxu0 0.0
      %3623 = vmatprep.subr.mxu0 0.0
      %3624 = vmatpush1.msra.mxu0 0.0
      %3625 = vmatprep.subr.mxu0 0.0
      %3626 = vmatpush1.msra.mxu0 0.0
      %3627 = vmatprep.subr.mxu0 0.0
      %3628 = vmatpush1.msra.mxu0 0.0
      %3629 = vmatprep.subr.mxu0 0.0
      %3630 = vmatpush1.msra.mxu0 0.0
      %3631 = vmatprep.subr.mxu0 0.0
      %3632 = vmatpush1.msra.mxu0 0.0
      %3633 = vmatprep.subr.mxu0 0.0
      %3634 = vmatpush1.msra.mxu0 0.0
      %3635 = vmatprep.subr.mxu0 0.0
      %3636 = vmatpush1.msra.mxu0 0.0
      %3637 = vmatprep.subr.mxu0 0.0
      %3638 = vmatpush1.msra.mxu0 0.0
      %3639 = vmatprep.subr.mxu0 0.0
      %3640 = vmatpush1.msra.mxu0 0.0
      %3641 = vmatprep.subr.mxu0 0.0
      %3642 = vmatpush1.msra.mxu0 0.0
      %3643 = vmatprep.subr.mxu0 0.0
      %3644 = vmatpush1.msra.mxu0 0.0
      %3645 = vmatprep.mubr.f32.mxu0 0.0
      %3646 = vmatmul.mubr.f32.gmra.mrb[0].mxu0 %v3564
      %v3647 = vpop.f32.mrb[0].mxu0
      %v3648 = vadd.f32 0.0, %v3647
      %v3649 = vpop.f32.mrb[0].mxu0
      %3650 = vdwg.mxu0
      %v3651 = vadd.f32 %v3560, %v3648
      %v3652 = vld [vmem:[%s6 + $0x4] sm:$0x1]
      %v3653 = vlaneseq
      %v3654 = vshrl.u32 %v3653, 7
      %v3655 = vsub.s32 0, %v3654
      %v3656 = vrot.slane %v3652, %v3655
      %v3657 = vadd.f32 %v3651, %v3656
      %s3658 = scalar_lea.vmem %s283, 4
      %3659 = vst [vmem:[%s3658] sm:$0x7] %v3657
      %s3660 = scalar_lea.vmem [#allocation2], 144
      %v3661 = vld [vmem:[%s3660] ss:$2 sm:$0xff]
      %s3662 = scalar_lea.vmem [#allocation2], 160
      %v3663 = vld [vmem:[%s3662] ss:$2 sm:$0xff]
      %s3664 = scalar_lea.vmem [#allocation2], 176
      %v3665 = vld [vmem:[%s3664] ss:$2 sm:$0xff]
      %s3666 = scalar_lea.vmem [#allocation2], 192
      %v3667 = vld [vmem:[%s3666] ss:$2 sm:$0xff]
      %v3668 = vld [vmem:[%s2] sm:$0xff]
      %v3669 = vld [vmem:[%s2 + $0x8] sm:$0xff]
      %v3670 = vld [vmem:[%s2 + $0x10] sm:$0xff]
      %v3671 = vld [vmem:[%s2 + $0x18] sm:$0xff]
      %v3672 = vld [vmem:[%s2 + $0x20] sm:$0xff]
      %v3673 = vld [vmem:[%s2 + $0x28] sm:$0xff]
      %v3674 = vld [vmem:[%s2 + $0x30] sm:$0xff]
      %v3675 = vld [vmem:[%s2 + $0x38] sm:$0xff]
      %v3676 = vld [vmem:[%s2 + $0x40] sm:$0xff]
      %v3677 = vld [vmem:[%s2 + $0x48] sm:$0xff]
      %v3678 = vld [vmem:[%s2 + $0x50] sm:$0xff]
      %v3679 = vld [vmem:[%s2 + $0x58] sm:$0xff]
      %v3680 = vld [vmem:[%s2 + $0x60] sm:$0xff]
      %v3681 = vld [vmem:[%s2 + $0x68] sm:$0xff]
      %v3682 = vld [vmem:[%s2 + $0x70] sm:$0xff]
      %v3683 = vld [vmem:[%s2 + $0x78] sm:$0xff]
      %s3684 = scalar_lea.vmem [#allocation2], 145
      %v3685 = vld [vmem:[%s3684] ss:$2 sm:$0xff]
      %s3686 = scalar_lea.vmem [#allocation2], 161
      %v3687 = vld [vmem:[%s3686] ss:$2 sm:$0xff]
      %s3688 = scalar_lea.vmem [#allocation2], 177
      %v3689 = vld [vmem:[%s3688] ss:$2 sm:$0xff]
      %s3690 = scalar_lea.vmem [#allocation2], 193
      %v3691 = vld [vmem:[%s3690] ss:$2 sm:$0xff]
      %v3692 = vld [vmem:[%s794] sm:$0xff]
      %v3693 = vld [vmem:[%s794 + $0x8] sm:$0xff]
      %v3694 = vld [vmem:[%s794 + $0x10] sm:$0xff]
      %v3695 = vld [vmem:[%s794 + $0x18] sm:$0xff]
      %v3696 = vld [vmem:[%s794 + $0x20] sm:$0xff]
      %v3697 = vld [vmem:[%s794 + $0x28] sm:$0xff]
      %v3698 = vld [vmem:[%s794 + $0x30] sm:$0xff]
      %v3699 = vld [vmem:[%s794 + $0x38] sm:$0xff]
      %v3700 = vld [vmem:[%s794 + $0x40] sm:$0xff]
      %v3701 = vld [vmem:[%s794 + $0x48] sm:$0xff]
      %v3702 = vld [vmem:[%s794 + $0x50] sm:$0xff]
      %v3703 = vld [vmem:[%s794 + $0x58] sm:$0xff]
      %v3704 = vld [vmem:[%s794 + $0x60] sm:$0xff]
      %v3705 = vld [vmem:[%s794 + $0x68] sm:$0xff]
      %v3706 = vld [vmem:[%s794 + $0x70] sm:$0xff]
      %v3707 = vld [vmem:[%s794 + $0x78] sm:$0xff]
      %3708 = vmatprep.subr.mxu0 0.0
      %3709 = vmatpush1.msra.mxu0 %v3692
      %3710 = vmatprep.subr.mxu0 0.0
      %3711 = vmatpush1.msra.mxu0 %v3693
      %3712 = vmatprep.subr.mxu0 0.0
      %3713 = vmatpush1.msra.mxu0 %v3694
      %3714 = vmatprep.subr.mxu0 0.0
      %3715 = vmatpush1.msra.mxu0 %v3695
      %3716 = vmatprep.subr.mxu0 0.0
      %3717 = vmatpush1.msra.mxu0 %v3696
      %3718 = vmatprep.subr.mxu0 0.0
      %3719 = vmatpush1.msra.mxu0 %v3697
      %3720 = vmatprep.subr.mxu0 0.0
      %3721 = vmatpush1.msra.mxu0 %v3698
      %3722 = vmatprep.subr.mxu0 0.0
      %3723 = vmatpush1.msra.mxu0 %v3699
      %3724 = vmatprep.subr.mxu0 0.0
      %3725 = vmatpush1.msra.mxu0 %v3700
      %3726 = vmatprep.subr.mxu0 0.0
      %3727 = vmatpush1.msra.mxu0 %v3701
      %3728 = vmatprep.subr.mxu0 0.0
      %3729 = vmatpush1.msra.mxu0 %v3702
      %3730 = vmatprep.subr.mxu0 0.0
      %3731 = vmatpush1.msra.mxu0 %v3703
      %3732 = vmatprep.subr.mxu0 0.0
      %3733 = vmatpush1.msra.mxu0 %v3704
      %3734 = vmatprep.subr.mxu0 0.0
      %3735 = vmatpush1.msra.mxu0 %v3705
      %3736 = vmatprep.subr.mxu0 0.0
      %3737 = vmatpush1.msra.mxu0 %v3706
      %3738 = vmatprep.subr.mxu0 0.0
      %3739 = vmatpush1.msra.mxu0 %v3707
      %3740 = vmatprep.subr.mxu0 0.0
      %3741 = vmatpush1.msra.mxu0 0.0
      %3742 = vmatprep.subr.mxu0 0.0
      %3743 = vmatpush1.msra.mxu0 0.0
      %3744 = vmatprep.subr.mxu0 0.0
      %3745 = vmatpush1.msra.mxu0 0.0
      %3746 = vmatprep.subr.mxu0 0.0
      %3747 = vmatpush1.msra.mxu0 0.0
      %3748 = vmatprep.subr.mxu0 0.0
      %3749 = vmatpush1.msra.mxu0 0.0
      %3750 = vmatprep.subr.mxu0 0.0
      %3751 = vmatpush1.msra.mxu0 0.0
      %3752 = vmatprep.subr.mxu0 0.0
      %3753 = vmatpush1.msra.mxu0 0.0
      %3754 = vmatprep.subr.mxu0 0.0
      %3755 = vmatpush1.msra.mxu0 0.0
      %3756 = vmatprep.subr.mxu0 0.0
      %3757 = vmatpush1.msra.mxu0 0.0
      %3758 = vmatprep.subr.mxu0 0.0
      %3759 = vmatpush1.msra.mxu0 0.0
      %3760 = vmatprep.subr.mxu0 0.0
      %3761 = vmatpush1.msra.mxu0 0.0
      %3762 = vmatprep.subr.mxu0 0.0
      %3763 = vmatpush1.msra.mxu0 0.0
      %3764 = vmatprep.subr.mxu0 0.0
      %3765 = vmatpush1.msra.mxu0 0.0
      %3766 = vmatprep.subr.mxu0 0.0
      %3767 = vmatpush1.msra.mxu0 0.0
      %3768 = vmatprep.subr.mxu0 0.0
      %3769 = vmatpush1.msra.mxu0 0.0
      %3770 = vmatprep.subr.mxu0 0.0
      %3771 = vmatpush1.msra.mxu0 0.0
      %3772 = vmatprep.mubr.f32.mxu0 0.0
      %3773 = vmatmul.mubr.f32.gmra.mrb[0].mxu0 %v3685
      %v3774 = vpop.f32.mrb[0].mxu0
      %v3775 = vadd.f32 0.0, %v3774
      %v3776 = vpop.f32.mrb[0].mxu0
      %3777 = vmatprep.mubr.f32.mxu0 0.0
      %3778 = vmatmul.mubr.f32.gmra.mrb[0].mxu0 %v3687
      %v3779 = vpop.f32.mrb[0].mxu0
      %v3780 = vadd.f32 0.0, %v3779
      %v3781 = vpop.f32.mrb[0].mxu0
      %3782 = vmatprep.mubr.f32.mxu0 0.0
      %3783 = vmatmul.mubr.f32.gmra.mrb[0].mxu0 %v3689
      %v3784 = vpop.f32.mrb[0].mxu0
      %v3785 = vadd.f32 0.0, %v3784
      %v3786 = vpop.f32.mrb[0].mxu0
      %3787 = vmatprep.mubr.f32.mxu0 0.0
      %3788 = vmatmul.mubr.f32.gmra.mrb[0].mxu0 %v3691
      %v3789 = vpop.f32.mrb[0].mxu0
      %v3790 = vadd.f32 0.0, %v3789
      %v3791 = vpop.f32.mrb[0].mxu0
      %3792 = vdwg.mxu0
      %3793 = vmatprep.subr.mxu0 0.0
      %3794 = vmatpush1.msra.mxu0 %v3668
      %3795 = vmatprep.subr.mxu0 0.0
      %3796 = vmatpush1.msra.mxu0 %v3669
      %3797 = vmatprep.subr.mxu0 0.0
      %3798 = vmatpush1.msra.mxu0 %v3670
      %3799 = vmatprep.subr.mxu0 0.0
      %3800 = vmatpush1.msra.mxu0 %v3671
      %3801 = vmatprep.subr.mxu0 0.0
      %3802 = vmatpush1.msra.mxu0 %v3672
      %3803 = vmatprep.subr.mxu0 0.0
      %3804 = vmatpush1.msra.mxu0 %v3673
      %3805 = vmatprep.subr.mxu0 0.0
      %3806 = vmatpush1.msra.mxu0 %v3674
      %3807 = vmatprep.subr.mxu0 0.0
      %3808 = vmatpush1.msra.mxu0 %v3675
      %3809 = vmatprep.subr.mxu0 0.0
      %3810 = vmatpush1.msra.mxu0 %v3676
      %3811 = vmatprep.subr.mxu0 0.0
      %3812 = vmatpush1.msra.mxu0 %v3677
      %3813 = vmatprep.subr.mxu0 0.0
      %3814 = vmatpush1.msra.mxu0 %v3678
      %3815 = vmatprep.subr.mxu0 0.0
      %3816 = vmatpush1.msra.mxu0 %v3679
      %3817 = vmatprep.subr.mxu0 0.0
      %3818 = vmatpush1.msra.mxu0 %v3680
      %3819 = vmatprep.subr.mxu0 0.0
      %3820 = vmatpush1.msra.mxu0 %v3681
      %3821 = vmatprep.subr.mxu0 0.0
      %3822 = vmatpush1.msra.mxu0 %v3682
      %3823 = vmatprep.subr.mxu0 0.0
      %3824 = vmatpush1.msra.mxu0 %v3683
      %3825 = vmatprep.subr.mxu0 0.0
      %3826 = vmatpush1.msra.mxu0 0.0
      %3827 = vmatprep.subr.mxu0 0.0
      %3828 = vmatpush1.msra.mxu0 0.0
      %3829 = vmatprep.subr.mxu0 0.0
      %3830 = vmatpush1.msra.mxu0 0.0
      %3831 = vmatprep.subr.mxu0 0.0
      %3832 = vmatpush1.msra.mxu0 0.0
      %3833 = vmatprep.subr.mxu0 0.0
      %3834 = vmatpush1.msra.mxu0 0.0
      %3835 = vmatprep.subr.mxu0 0.0
      %3836 = vmatpush1.msra.mxu0 0.0
      %3837 = vmatprep.subr.mxu0 0.0
      %3838 = vmatpush1.msra.mxu0 0.0
      %3839 = vmatprep.subr.mxu0 0.0
      %3840 = vmatpush1.msra.mxu0 0.0
      %3841 = vmatprep.subr.mxu0 0.0
      %3842 = vmatpush1.msra.mxu0 0.0
      %3843 = vmatprep.subr.mxu0 0.0
      %3844 = vmatpush1.msra.mxu0 0.0
      %3845 = vmatprep.subr.mxu0 0.0
      %3846 = vmatpush1.msra.mxu0 0.0
      %3847 = vmatprep.subr.mxu0 0.0
      %3848 = vmatpush1.msra.mxu0 0.0
      %3849 = vmatprep.subr.mxu0 0.0
      %3850 = vmatpush1.msra.mxu0 0.0
      %3851 = vmatprep.subr.mxu0 0.0
      %3852 = vmatpush1.msra.mxu0 0.0
      %3853 = vmatprep.subr.mxu0 0.0
      %3854 = vmatpush1.msra.mxu0 0.0
      %3855 = vmatprep.subr.mxu0 0.0
      %3856 = vmatpush1.msra.mxu0 0.0
      %3857 = vmatprep.mubr.f32.mxu0 0.0
      %3858 = vmatmul.mubr.f32.gmra.mrb[0].mxu0 %v3661
      %v3859 = vpop.f32.mrb[0].mxu0
      %v3860 = vadd.f32 %v3775, %v3859
      %v3861 = vpop.f32.mrb[0].mxu0
      %3862 = vmatprep.mubr.f32.mxu0 0.0
      %3863 = vmatmul.mubr.f32.gmra.mrb[0].mxu0 %v3663
      %v3864 = vpop.f32.mrb[0].mxu0
      %v3865 = vadd.f32 %v3780, %v3864
      %v3866 = vpop.f32.mrb[0].mxu0
      %3867 = vmatprep.mubr.f32.mxu0 0.0
      %3868 = vmatmul.mubr.f32.gmra.mrb[0].mxu0 %v3665
      %v3869 = vpop.f32.mrb[0].mxu0
      %v3870 = vadd.f32 %v3785, %v3869
      %v3871 = vpop.f32.mrb[0].mxu0
      %3872 = vmatprep.mubr.f32.mxu0 0.0
      %3873 = vmatmul.mubr.f32.gmra.mrb[0].mxu0 %v3667
      %v3874 = vpop.f32.mrb[0].mxu0
      %v3875 = vadd.f32 %v3790, %v3874
      %v3876 = vpop.f32.mrb[0].mxu0
      %3877 = vdwg.mxu0
      %s3878 = scalar_lea.vmem [#allocation2], 146
      %v3879 = vld [vmem:[%s3878] ss:$2 sm:$0xff]
      %s3880 = scalar_lea.vmem [#allocation2], 162
      %v3881 = vld [vmem:[%s3880] ss:$2 sm:$0xff]
      %s3882 = scalar_lea.vmem [#allocation2], 178
      %v3883 = vld [vmem:[%s3882] ss:$2 sm:$0xff]
      %s3884 = scalar_lea.vmem [#allocation2], 194
      %v3885 = vld [vmem:[%s3884] ss:$2 sm:$0xff]
      %v3886 = vld [vmem:[%s989] sm:$0xff]
      %v3887 = vld [vmem:[%s989 + $0x8] sm:$0xff]
      %v3888 = vld [vmem:[%s989 + $0x10] sm:$0xff]
      %v3889 = vld [vmem:[%s989 + $0x18] sm:$0xff]
      %v3890 = vld [vmem:[%s989 + $0x20] sm:$0xff]
      %v3891 = vld [vmem:[%s989 + $0x28] sm:$0xff]
      %v3892 = vld [vmem:[%s989 + $0x30] sm:$0xff]
      %v3893 = vld [vmem:[%s989 + $0x38] sm:$0xff]
      %v3894 = vld [vmem:[%s989 + $0x40] sm:$0xff]
      %v3895 = vld [vmem:[%s989 + $0x48] sm:$0xff]
      %v3896 = vld [vmem:[%s989 + $0x50] sm:$0xff]
      %v3897 = vld [vmem:[%s989 + $0x58] sm:$0xff]
      %v3898 = vld [vmem:[%s989 + $0x60] sm:$0xff]
      %v3899 = vld [vmem:[%s989 + $0x68] sm:$0xff]
      %v3900 = vld [vmem:[%s989 + $0x70] sm:$0xff]
      %v3901 = vld [vmem:[%s989 + $0x78] sm:$0xff]
      %3902 = vmatprep.subr.mxu0 0.0
      %3903 = vmatpush1.msra.mxu0 %v3886
      %3904 = vmatprep.subr.mxu0 0.0
      %3905 = vmatpush1.msra.mxu0 %v3887
      %3906 = vmatprep.subr.mxu0 0.0
      %3907 = vmatpush1.msra.mxu0 %v3888
      %3908 = vmatprep.subr.mxu0 0.0
      %3909 = vmatpush1.msra.mxu0 %v3889
      %3910 = vmatprep.subr.mxu0 0.0
      %3911 = vmatpush1.msra.mxu0 %v3890
      %3912 = vmatprep.subr.mxu0 0.0
      %3913 = vmatpush1.msra.mxu0 %v3891
      %3914 = vmatprep.subr.mxu0 0.0
      %3915 = vmatpush1.msra.mxu0 %v3892
      %3916 = vmatprep.subr.mxu0 0.0
      %3917 = vmatpush1.msra.mxu0 %v3893
      %3918 = vmatprep.subr.mxu0 0.0
      %3919 = vmatpush1.msra.mxu0 %v3894
      %3920 = vmatprep.subr.mxu0 0.0
      %3921 = vmatpush1.msra.mxu0 %v3895
      %3922 = vmatprep.subr.mxu0 0.0
      %3923 = vmatpush1.msra.mxu0 %v3896
      %3924 = vmatprep.subr.mxu0 0.0
      %3925 = vmatpush1.msra.mxu0 %v3897
      %3926 = vmatprep.subr.mxu0 0.0
      %3927 = vmatpush1.msra.mxu0 %v3898
      %3928 = vmatprep.subr.mxu0 0.0
      %3929 = vmatpush1.msra.mxu0 %v3899
      %3930 = vmatprep.subr.mxu0 0.0
      %3931 = vmatpush1.msra.mxu0 %v3900
      %3932 = vmatprep.subr.mxu0 0.0
      %3933 = vmatpush1.msra.mxu0 %v3901
      %3934 = vmatprep.subr.mxu0 0.0
      %3935 = vmatpush1.msra.mxu0 0.0
      %3936 = vmatprep.subr.mxu0 0.0
      %3937 = vmatpush1.msra.mxu0 0.0
      %3938 = vmatprep.subr.mxu0 0.0
      %3939 = vmatpush1.msra.mxu0 0.0
      %3940 = vmatprep.subr.mxu0 0.0
      %3941 = vmatpush1.msra.mxu0 0.0
      %3942 = vmatprep.subr.mxu0 0.0
      %3943 = vmatpush1.msra.mxu0 0.0
      %3944 = vmatprep.subr.mxu0 0.0
      %3945 = vmatpush1.msra.mxu0 0.0
      %3946 = vmatprep.subr.mxu0 0.0
      %3947 = vmatpush1.msra.mxu0 0.0
      %3948 = vmatprep.subr.mxu0 0.0
      %3949 = vmatpush1.msra.mxu0 0.0
      %3950 = vmatprep.subr.mxu0 0.0
      %3951 = vmatpush1.msra.mxu0 0.0
      %3952 = vmatprep.subr.mxu0 0.0
      %3953 = vmatpush1.msra.mxu0 0.0
      %3954 = vmatprep.subr.mxu0 0.0
      %3955 = vmatpush1.msra.mxu0 0.0
      %3956 = vmatprep.subr.mxu0 0.0
      %3957 = vmatpush1.msra.mxu0 0.0
      %3958 = vmatprep.subr.mxu0 0.0
      %3959 = vmatpush1.msra.mxu0 0.0
      %3960 = vmatprep.subr.mxu0 0.0
      %3961 = vmatpush1.msra.mxu0 0.0
      %3962 = vmatprep.subr.mxu0 0.0
      %3963 = vmatpush1.msra.mxu0 0.0
      %3964 = vmatprep.subr.mxu0 0.0
      %3965 = vmatpush1.msra.mxu0 0.0
      %3966 = vmatprep.mubr.f32.mxu0 0.0
      %3967 = vmatmul.mubr.f32.gmra.mrb[0].mxu0 %v3879
      %v3968 = vpop.f32.mrb[0].mxu0
      %v3969 = vadd.f32 0.0, %v3968
      %v3970 = vpop.f32.mrb[0].mxu0
      %3971 = vmatprep.mubr.f32.mxu0 0.0
      %3972 = vmatmul.mubr.f32.gmra.mrb[0].mxu0 %v3881
      %v3973 = vpop.f32.mrb[0].mxu0
      %v3974 = vadd.f32 0.0, %v3973
      %v3975 = vpop.f32.mrb[0].mxu0
      %3976 = vmatprep.mubr.f32.mxu0 0.0
      %3977 = vmatmul.mubr.f32.gmra.mrb[0].mxu0 %v3883
      %v3978 = vpop.f32.mrb[0].mxu0
      %v3979 = vadd.f32 0.0, %v3978
      %v3980 = vpop.f32.mrb[0].mxu0
      %3981 = vmatprep.mubr.f32.mxu0 0.0
      %3982 = vmatmul.mubr.f32.gmra.mrb[0].mxu0 %v3885
      %v3983 = vpop.f32.mrb[0].mxu0
      %v3984 = vadd.f32 0.0, %v3983
      %v3985 = vpop.f32.mrb[0].mxu0
      %3986 = vdwg.mxu0
      %v3987 = vadd.f32 %v3860, %v3969
      %v3988 = vadd.f32 %v3865, %v3974
      %v3989 = vadd.f32 %v3870, %v3979
      %v3990 = vadd.f32 %v3875, %v3984
      %s3991 = scalar_lea.vmem [#allocation2], 147
      %v3992 = vld [vmem:[%s3991] ss:$2 sm:$0xff]
      %s3993 = scalar_lea.vmem [#allocation2], 163
      %v3994 = vld [vmem:[%s3993] ss:$2 sm:$0xff]
      %s3995 = scalar_lea.vmem [#allocation2], 179
      %v3996 = vld [vmem:[%s3995] ss:$2 sm:$0xff]
      %s3997 = scalar_lea.vmem [#allocation2], 195
      %v3998 = vld [vmem:[%s3997] ss:$2 sm:$0xff]
      %v3999 = vld [vmem:[%s1103] sm:$0xff]
      %v4000 = vld [vmem:[%s1103 + $0x8] sm:$0xff]
      %v4001 = vld [vmem:[%s1103 + $0x10] sm:$0xff]
      %v4002 = vld [vmem:[%s1103 + $0x18] sm:$0xff]
      %v4003 = vld [vmem:[%s1103 + $0x20] sm:$0xff]
      %v4004 = vld [vmem:[%s1103 + $0x28] sm:$0xff]
      %v4005 = vld [vmem:[%s1103 + $0x30] sm:$0xff]
      %v4006 = vld [vmem:[%s1103 + $0x38] sm:$0xff]
      %v4007 = vld [vmem:[%s1103 + $0x40] sm:$0xff]
      %v4008 = vld [vmem:[%s1103 + $0x48] sm:$0xff]
      %v4009 = vld [vmem:[%s1103 + $0x50] sm:$0xff]
      %v4010 = vld [vmem:[%s1103 + $0x58] sm:$0xff]
      %v4011 = vld [vmem:[%s1103 + $0x60] sm:$0xff]
      %v4012 = vld [vmem:[%s1103 + $0x68] sm:$0xff]
      %v4013 = vld [vmem:[%s1103 + $0x70] sm:$0xff]
      %v4014 = vld [vmem:[%s1103 + $0x78] sm:$0xff]
      %4015 = vmatprep.subr.mxu0 0.0
      %4016 = vmatpush1.msra.mxu0 %v3999
      %4017 = vmatprep.subr.mxu0 0.0
      %4018 = vmatpush1.msra.mxu0 %v4000
      %4019 = vmatprep.subr.mxu0 0.0
      %4020 = vmatpush1.msra.mxu0 %v4001
      %4021 = vmatprep.subr.mxu0 0.0
      %4022 = vmatpush1.msra.mxu0 %v4002
      %4023 = vmatprep.subr.mxu0 0.0
      %4024 = vmatpush1.msra.mxu0 %v4003
      %4025 = vmatprep.subr.mxu0 0.0
      %4026 = vmatpush1.msra.mxu0 %v4004
      %4027 = vmatprep.subr.mxu0 0.0
      %4028 = vmatpush1.msra.mxu0 %v4005
      %4029 = vmatprep.subr.mxu0 0.0
      %4030 = vmatpush1.msra.mxu0 %v4006
      %4031 = vmatprep.subr.mxu0 0.0
      %4032 = vmatpush1.msra.mxu0 %v4007
      %4033 = vmatprep.subr.mxu0 0.0
      %4034 = vmatpush1.msra.mxu0 %v4008
      %4035 = vmatprep.subr.mxu0 0.0
      %4036 = vmatpush1.msra.mxu0 %v4009
      %4037 = vmatprep.subr.mxu0 0.0
      %4038 = vmatpush1.msra.mxu0 %v4010
      %4039 = vmatprep.subr.mxu0 0.0
      %4040 = vmatpush1.msra.mxu0 %v4011
      %4041 = vmatprep.subr.mxu0 0.0
      %4042 = vmatpush1.msra.mxu0 %v4012
      %4043 = vmatprep.subr.mxu0 0.0
      %4044 = vmatpush1.msra.mxu0 %v4013
      %4045 = vmatprep.subr.mxu0 0.0
      %4046 = vmatpush1.msra.mxu0 %v4014
      %4047 = vmatprep.subr.mxu0 0.0
      %4048 = vmatpush1.msra.mxu0 0.0
      %4049 = vmatprep.subr.mxu0 0.0
      %4050 = vmatpush1.msra.mxu0 0.0
      %4051 = vmatprep.subr.mxu0 0.0
      %4052 = vmatpush1.msra.mxu0 0.0
      %4053 = vmatprep.subr.mxu0 0.0
      %4054 = vmatpush1.msra.mxu0 0.0
      %4055 = vmatprep.subr.mxu0 0.0
      %4056 = vmatpush1.msra.mxu0 0.0
      %4057 = vmatprep.subr.mxu0 0.0
      %4058 = vmatpush1.msra.mxu0 0.0
      %4059 = vmatprep.subr.mxu0 0.0
      %4060 = vmatpush1.msra.mxu0 0.0
      %4061 = vmatprep.subr.mxu0 0.0
      %4062 = vmatpush1.msra.mxu0 0.0
      %4063 = vmatprep.subr.mxu0 0.0
      %4064 = vmatpush1.msra.mxu0 0.0
      %4065 = vmatprep.subr.mxu0 0.0
      %4066 = vmatpush1.msra.mxu0 0.0
      %4067 = vmatprep.subr.mxu0 0.0
      %4068 = vmatpush1.msra.mxu0 0.0
      %4069 = vmatprep.subr.mxu0 0.0
      %4070 = vmatpush1.msra.mxu0 0.0
      %4071 = vmatprep.subr.mxu0 0.0
      %4072 = vmatpush1.msra.mxu0 0.0
      %4073 = vmatprep.subr.mxu0 0.0
      %4074 = vmatpush1.msra.mxu0 0.0
      %4075 = vmatprep.subr.mxu0 0.0
      %4076 = vmatpush1.msra.mxu0 0.0
      %4077 = vmatprep.subr.mxu0 0.0
      %4078 = vmatpush1.msra.mxu0 0.0
      %4079 = vmatprep.mubr.f32.mxu0 0.0
      %4080 = vmatmul.mubr.f32.gmra.mrb[0].mxu0 %v3992
      %v4081 = vpop.f32.mrb[0].mxu0
      %v4082 = vadd.f32 0.0, %v4081
      %v4083 = vpop.f32.mrb[0].mxu0
      %4084 = vmatprep.mubr.f32.mxu0 0.0
      %4085 = vmatmul.mubr.f32.gmra.mrb[0].mxu0 %v3994
      %v4086 = vpop.f32.mrb[0].mxu0
      %v4087 = vadd.f32 0.0, %v4086
      %v4088 = vpop.f32.mrb[0].mxu0
      %4089 = vmatprep.mubr.f32.mxu0 0.0
      %4090 = vmatmul.mubr.f32.gmra.mrb[0].mxu0 %v3996
      %v4091 = vpop.f32.mrb[0].mxu0
      %v4092 = vadd.f32 0.0, %v4091
      %v4093 = vpop.f32.mrb[0].mxu0
      %4094 = vmatprep.mubr.f32.mxu0 0.0
      %4095 = vmatmul.mubr.f32.gmra.mrb[0].mxu0 %v3998
      %v4096 = vpop.f32.mrb[0].mxu0
      %v4097 = vadd.f32 0.0, %v4096
      %v4098 = vpop.f32.mrb[0].mxu0
      %4099 = vdwg.mxu0
      %v4100 = vadd.f32 %v3987, %v4082
      %v4101 = vadd.f32 %v3988, %v4087
      %v4102 = vadd.f32 %v3989, %v4092
      %v4103 = vadd.f32 %v3990, %v4097
      %s4104 = scalar_lea.vmem [#allocation2], 148
      %v4105 = vld [vmem:[%s4104] ss:$2 sm:$0xff]
      %s4106 = scalar_lea.vmem [#allocation2], 164
      %v4107 = vld [vmem:[%s4106] ss:$2 sm:$0xff]
      %s4108 = scalar_lea.vmem [#allocation2], 180
      %v4109 = vld [vmem:[%s4108] ss:$2 sm:$0xff]
      %s4110 = scalar_lea.vmem [#allocation2], 196
      %v4111 = vld [vmem:[%s4110] ss:$2 sm:$0xff]
      %v4112 = vld [vmem:[%s1217] sm:$0xff]
      %v4113 = vld [vmem:[%s1217 + $0x8] sm:$0xff]
      %v4114 = vld [vmem:[%s1217 + $0x10] sm:$0xff]
      %v4115 = vld [vmem:[%s1217 + $0x18] sm:$0xff]
      %v4116 = vld [vmem:[%s1217 + $0x20] sm:$0xff]
      %v4117 = vld [vmem:[%s1217 + $0x28] sm:$0xff]
      %v4118 = vld [vmem:[%s1217 + $0x30] sm:$0xff]
      %v4119 = vld [vmem:[%s1217 + $0x38] sm:$0xff]
      %v4120 = vld [vmem:[%s1217 + $0x40] sm:$0xff]
      %v4121 = vld [vmem:[%s1217 + $0x48] sm:$0xff]
      %v4122 = vld [vmem:[%s1217 + $0x50] sm:$0xff]
      %v4123 = vld [vmem:[%s1217 + $0x58] sm:$0xff]
      %v4124 = vld [vmem:[%s1217 + $0x60] sm:$0xff]
      %v4125 = vld [vmem:[%s1217 + $0x68] sm:$0xff]
      %v4126 = vld [vmem:[%s1217 + $0x70] sm:$0xff]
      %v4127 = vld [vmem:[%s1217 + $0x78] sm:$0xff]
      %4128 = vmatprep.subr.mxu0 0.0
      %4129 = vmatpush1.msra.mxu0 %v4112
      %4130 = vmatprep.subr.mxu0 0.0
      %4131 = vmatpush1.msra.mxu0 %v4113
      %4132 = vmatprep.subr.mxu0 0.0
      %4133 = vmatpush1.msra.mxu0 %v4114
      %4134 = vmatprep.subr.mxu0 0.0
      %4135 = vmatpush1.msra.mxu0 %v4115
      %4136 = vmatprep.subr.mxu0 0.0
      %4137 = vmatpush1.msra.mxu0 %v4116
      %4138 = vmatprep.subr.mxu0 0.0
      %4139 = vmatpush1.msra.mxu0 %v4117
      %4140 = vmatprep.subr.mxu0 0.0
      %4141 = vmatpush1.msra.mxu0 %v4118
      %4142 = vmatprep.subr.mxu0 0.0
      %4143 = vmatpush1.msra.mxu0 %v4119
      %4144 = vmatprep.subr.mxu0 0.0
      %4145 = vmatpush1.msra.mxu0 %v4120
      %4146 = vmatprep.subr.mxu0 0.0
      %4147 = vmatpush1.msra.mxu0 %v4121
      %4148 = vmatprep.subr.mxu0 0.0
      %4149 = vmatpush1.msra.mxu0 %v4122
      %4150 = vmatprep.subr.mxu0 0.0
      %4151 = vmatpush1.msra.mxu0 %v4123
      %4152 = vmatprep.subr.mxu0 0.0
      %4153 = vmatpush1.msra.mxu0 %v4124
      %4154 = vmatprep.subr.mxu0 0.0
      %4155 = vmatpush1.msra.mxu0 %v4125
      %4156 = vmatprep.subr.mxu0 0.0
      %4157 = vmatpush1.msra.mxu0 %v4126
      %4158 = vmatprep.subr.mxu0 0.0
      %4159 = vmatpush1.msra.mxu0 %v4127
      %4160 = vmatprep.subr.mxu0 0.0
      %4161 = vmatpush1.msra.mxu0 0.0
      %4162 = vmatprep.subr.mxu0 0.0
      %4163 = vmatpush1.msra.mxu0 0.0
      %4164 = vmatprep.subr.mxu0 0.0
      %4165 = vmatpush1.msra.mxu0 0.0
      %4166 = vmatprep.subr.mxu0 0.0
      %4167 = vmatpush1.msra.mxu0 0.0
      %4168 = vmatprep.subr.mxu0 0.0
      %4169 = vmatpush1.msra.mxu0 0.0
      %4170 = vmatprep.subr.mxu0 0.0
      %4171 = vmatpush1.msra.mxu0 0.0
      %4172 = vmatprep.subr.mxu0 0.0
      %4173 = vmatpush1.msra.mxu0 0.0
      %4174 = vmatprep.subr.mxu0 0.0
      %4175 = vmatpush1.msra.mxu0 0.0
      %4176 = vmatprep.subr.mxu0 0.0
      %4177 = vmatpush1.msra.mxu0 0.0
      %4178 = vmatprep.subr.mxu0 0.0
      %4179 = vmatpush1.msra.mxu0 0.0
      %4180 = vmatprep.subr.mxu0 0.0
      %4181 = vmatpush1.msra.mxu0 0.0
      %4182 = vmatprep.subr.mxu0 0.0
      %4183 = vmatpush1.msra.mxu0 0.0
      %4184 = vmatprep.subr.mxu0 0.0
      %4185 = vmatpush1.msra.mxu0 0.0
      %4186 = vmatprep.subr.mxu0 0.0
      %4187 = vmatpush1.msra.mxu0 0.0
      %4188 = vmatprep.subr.mxu0 0.0
      %4189 = vmatpush1.msra.mxu0 0.0
      %4190 = vmatprep.subr.mxu0 0.0
      %4191 = vmatpush1.msra.mxu0 0.0
      %4192 = vmatprep.mubr.f32.mxu0 0.0
      %4193 = vmatmul.mubr.f32.gmra.mrb[0].mxu0 %v4105
      %v4194 = vpop.f32.mrb[0].mxu0
      %v4195 = vadd.f32 0.0, %v4194
      %v4196 = vpop.f32.mrb[0].mxu0
      %4197 = vmatprep.mubr.f32.mxu0 0.0
      %4198 = vmatmul.mubr.f32.gmra.mrb[0].mxu0 %v4107
      %v4199 = vpop.f32.mrb[0].mxu0
      %v4200 = vadd.f32 0.0, %v4199
      %v4201 = vpop.f32.mrb[0].mxu0
      %4202 = vmatprep.mubr.f32.mxu0 0.0
      %4203 = vmatmul.mubr.f32.gmra.mrb[0].mxu0 %v4109
      %v4204 = vpop.f32.mrb[0].mxu0
      %v4205 = vadd.f32 0.0, %v4204
      %v4206 = vpop.f32.mrb[0].mxu0
      %4207 = vmatprep.mubr.f32.mxu0 0.0
      %4208 = vmatmul.mubr.f32.gmra.mrb[0].mxu0 %v4111
      %v4209 = vpop.f32.mrb[0].mxu0
      %v4210 = vadd.f32 0.0, %v4209
      %v4211 = vpop.f32.mrb[0].mxu0
      %4212 = vdwg.mxu0
      %v4213 = vadd.f32 %v4100, %v4195
      %v4214 = vadd.f32 %v4101, %v4200
      %v4215 = vadd.f32 %v4102, %v4205
      %v4216 = vadd.f32 %v4103, %v4210
      %v4217 = vld [vmem:[%s6 + $0x1] sm:$0x1]
      %v4218 = vlaneseq
      %v4219 = vshrl.u32 %v4218, 7
      %v4220 = vsub.s32 0, %v4219
      %v4221 = vrot.slane %v4217, %v4220
      %v4222 = vadd.f32 %v4213, %v4221
      %v4223 = vadd.f32 %v4214, %v4221
      %v4224 = vadd.f32 %v4215, %v4221
      %v4225 = vadd.f32 %v4216, %v4221
      %v4226 = vmul.f32 %v4222, 0.5
      %v4227 = vmul.f32 %v4223, 0.5
      %v4228 = vmul.f32 %v4224, 0.5
      %v4229 = vmul.f32 %v4225, 0.5
      %v4230 = vtanh.pop %v4226
      %v4231 = vtanh.pop %v4227
      %v4232 = vtanh.pop %v4228
      %v4233 = vtanh.pop %v4229
      %v4234 = vmul.f32 %v4230, 0.5
      %v4235 = vmul.f32 %v4231, 0.5
      %v4236 = vmul.f32 %v4232, 0.5
      %v4237 = vmul.f32 %v4233, 0.5
      %v4238 = vadd.f32 %v4234, 0.5
      %v4239 = vadd.f32 %v4235, 0.5
      %v4240 = vadd.f32 %v4236, 0.5
      %v4241 = vadd.f32 %v4237, 0.5
      %v4242 = vmul.f32 %v4222, %v4238
      %v4243 = vmul.f32 %v4223, %v4239
      %v4244 = vmul.f32 %v4224, %v4240
      %v4245 = vmul.f32 %v4225, %v4241
      %4246 = vst [vmem:[#allocation3 + $0x40] sm:$0xff] %v4242
      %4247 = vst [vmem:[#allocation3 + $0x48] sm:$0xff] %v4243
      %4248 = vst [vmem:[#allocation3 + $0x50] sm:$0xff] %v4244
      %4249 = vst [vmem:[#allocation3 + $0x58] sm:$0xff] %v4245
      %s4250 = scalar_lea.vmem [#allocation3], 64
      %v4251 = vld [vmem:[%s4250] ss:$2 sm:$0xff]
      %s4252 = scalar_lea.vmem [#allocation3], 80
      %v4253 = vld [vmem:[%s4252] ss:$2 sm:$0x7f]
      %v4254 = vld [vmem:[%s3] sm:$0xff]
      %v4255 = vld [vmem:[%s3 + $0x8] sm:$0xff]
      %v4256 = vld [vmem:[%s3 + $0x10] sm:$0xff]
      %v4257 = vld [vmem:[%s3 + $0x18] sm:$0xff]
      %v4258 = vld [vmem:[%s3 + $0x20] sm:$0xff]
      %v4259 = vld [vmem:[%s3 + $0x28] sm:$0xff]
      %v4260 = vld [vmem:[%s3 + $0x30] sm:$0xff]
      %v4261 = vld [vmem:[%s3 + $0x38] sm:$0xff]
      %v4262 = vld [vmem:[%s3 + $0x40] sm:$0xff]
      %v4263 = vld [vmem:[%s3 + $0x48] sm:$0xff]
      %v4264 = vld [vmem:[%s3 + $0x50] sm:$0xff]
      %v4265 = vld [vmem:[%s3 + $0x58] sm:$0xff]
      %v4266 = vld [vmem:[%s3 + $0x60] sm:$0xff]
      %v4267 = vld [vmem:[%s3 + $0x68] sm:$0xff]
      %v4268 = vld [vmem:[%s3 + $0x70] sm:$0xff]
      %v4269 = vld [vmem:[%s3 + $0x78] sm:$0xff]
      %s4270 = scalar_lea.vmem [#allocation3], 65
      %v4271 = vld [vmem:[%s4270] ss:$2 sm:$0xff]
      %s4272 = scalar_lea.vmem [#allocation3], 81
      %v4273 = vld [vmem:[%s4272] ss:$2 sm:$0x7f]
      %v4274 = vld [vmem:[%s1379] sm:$0xff]
      %v4275 = vld [vmem:[%s1379 + $0x8] sm:$0xff]
      %v4276 = vld [vmem:[%s1379 + $0x10] sm:$0xff]
      %v4277 = vld [vmem:[%s1379 + $0x18] sm:$0xff]
      %v4278 = vld [vmem:[%s1379 + $0x20] sm:$0xff]
      %v4279 = vld [vmem:[%s1379 + $0x28] sm:$0xff]
      %v4280 = vld [vmem:[%s1379 + $0x30] sm:$0xff]
      %v4281 = vld [vmem:[%s1379 + $0x38] sm:$0xff]
      %v4282 = vld [vmem:[%s1379 + $0x40] sm:$0xff]
      %v4283 = vld [vmem:[%s1379 + $0x48] sm:$0xff]
      %v4284 = vld [vmem:[%s1379 + $0x50] sm:$0xff]
      %v4285 = vld [vmem:[%s1379 + $0x58] sm:$0xff]
      %v4286 = vld [vmem:[%s1379 + $0x60] sm:$0xff]
      %v4287 = vld [vmem:[%s1379 + $0x68] sm:$0xff]
      %v4288 = vld [vmem:[%s1379 + $0x70] sm:$0xff]
      %v4289 = vld [vmem:[%s1379 + $0x78] sm:$0xff]
      %4290 = vmatprep.subr.mxu0 0.0
      %4291 = vmatpush1.msra.mxu0 %v4274
      %4292 = vmatprep.subr.mxu0 0.0
      %4293 = vmatpush1.msra.mxu0 %v4275
      %4294 = vmatprep.subr.mxu0 0.0
      %4295 = vmatpush1.msra.mxu0 %v4276
      %4296 = vmatprep.subr.mxu0 0.0
      %4297 = vmatpush1.msra.mxu0 %v4277
      %4298 = vmatprep.subr.mxu0 0.0
      %4299 = vmatpush1.msra.mxu0 %v4278
      %4300 = vmatprep.subr.mxu0 0.0
      %4301 = vmatpush1.msra.mxu0 %v4279
      %4302 = vmatprep.subr.mxu0 0.0
      %4303 = vmatpush1.msra.mxu0 %v4280
      %4304 = vmatprep.subr.mxu0 0.0
      %4305 = vmatpush1.msra.mxu0 %v4281
      %4306 = vmatprep.subr.mxu0 0.0
      %4307 = vmatpush1.msra.mxu0 %v4282
      %4308 = vmatprep.subr.mxu0 0.0
      %4309 = vmatpush1.msra.mxu0 %v4283
      %4310 = vmatprep.subr.mxu0 0.0
      %4311 = vmatpush1.msra.mxu0 %v4284
      %4312 = vmatprep.subr.mxu0 0.0
      %4313 = vmatpush1.msra.mxu0 %v4285
      %4314 = vmatprep.subr.mxu0 0.0
      %4315 = vmatpush1.msra.mxu0 %v4286
      %4316 = vmatprep.subr.mxu0 0.0
      %4317 = vmatpush1.msra.mxu0 %v4287
      %4318 = vmatprep.subr.mxu0 0.0
      %4319 = vmatpush1.msra.mxu0 %v4288
      %4320 = vmatprep.subr.mxu0 0.0
      %4321 = vmatpush1.msra.mxu0 %v4289
      %4322 = vmatprep.subr.mxu0 0.0
      %4323 = vmatpush1.msra.mxu0 0.0
      %4324 = vmatprep.subr.mxu0 0.0
      %4325 = vmatpush1.msra.mxu0 0.0
      %4326 = vmatprep.subr.mxu0 0.0
      %4327 = vmatpush1.msra.mxu0 0.0
      %4328 = vmatprep.subr.mxu0 0.0
      %4329 = vmatpush1.msra.mxu0 0.0
      %4330 = vmatprep.subr.mxu0 0.0
      %4331 = vmatpush1.msra.mxu0 0.0
      %4332 = vmatprep.subr.mxu0 0.0
      %4333 = vmatpush1.msra.mxu0 0.0
      %4334 = vmatprep.subr.mxu0 0.0
      %4335 = vmatpush1.msra.mxu0 0.0
      %4336 = vmatprep.subr.mxu0 0.0
      %4337 = vmatpush1.msra.mxu0 0.0
      %4338 = vmatprep.subr.mxu0 0.0
      %4339 = vmatpush1.msra.mxu0 0.0
      %4340 = vmatprep.subr.mxu0 0.0
      %4341 = vmatpush1.msra.mxu0 0.0
      %4342 = vmatprep.subr.mxu0 0.0
      %4343 = vmatpush1.msra.mxu0 0.0
      %4344 = vmatprep.subr.mxu0 0.0
      %4345 = vmatpush1.msra.mxu0 0.0
      %4346 = vmatprep.subr.mxu0 0.0
      %4347 = vmatpush1.msra.mxu0 0.0
      %4348 = vmatprep.subr.mxu0 0.0
      %4349 = vmatpush1.msra.mxu0 0.0
      %4350 = vmatprep.subr.mxu0 0.0
      %4351 = vmatpush1.msra.mxu0 0.0
      %4352 = vmatprep.subr.mxu0 0.0
      %4353 = vmatpush1.msra.mxu0 0.0
      %4354 = vmatprep.mubr.f32.mxu0 0.0
      %4355 = vmatmul.mubr.f32.gmra.mrb[0].mxu0 %v4271
      %v4356 = vpop.f32.mrb[0].mxu0
      %v4357 = vadd.f32 0.0, %v4356
      %v4358 = vpop.f32.mrb[0].mxu0
      %4359 = vmatprep.mubr.f32.mxu0 0.0
      %4360 = vmatmul.mubr.f32.gmra.mrb[0].mxu0 %v4273
      %v4361 = vpop.f32.mrb[0].mxu0
      %v4362 = vadd.f32 0.0, %v4361
      %v4363 = vpop.f32.mrb[0].mxu0
      %4364 = vdwg.mxu0
      %4365 = vmatprep.subr.mxu0 0.0
      %4366 = vmatpush1.msra.mxu0 %v4254
      %4367 = vmatprep.subr.mxu0 0.0
      %4368 = vmatpush1.msra.mxu0 %v4255
      %4369 = vmatprep.subr.mxu0 0.0
      %4370 = vmatpush1.msra.mxu0 %v4256
      %4371 = vmatprep.subr.mxu0 0.0
      %4372 = vmatpush1.msra.mxu0 %v4257
      %4373 = vmatprep.subr.mxu0 0.0
      %4374 = vmatpush1.msra.mxu0 %v4258
      %4375 = vmatprep.subr.mxu0 0.0
      %4376 = vmatpush1.msra.mxu0 %v4259
      %4377 = vmatprep.subr.mxu0 0.0
      %4378 = vmatpush1.msra.mxu0 %v4260
      %4379 = vmatprep.subr.mxu0 0.0
      %4380 = vmatpush1.msra.mxu0 %v4261
      %4381 = vmatprep.subr.mxu0 0.0
      %4382 = vmatpush1.msra.mxu0 %v4262
      %4383 = vmatprep.subr.mxu0 0.0
      %4384 = vmatpush1.msra.mxu0 %v4263
      %4385 = vmatprep.subr.mxu0 0.0
      %4386 = vmatpush1.msra.mxu0 %v4264
      %4387 = vmatprep.subr.mxu0 0.0
      %4388 = vmatpush1.msra.mxu0 %v4265
      %4389 = vmatprep.subr.mxu0 0.0
      %4390 = vmatpush1.msra.mxu0 %v4266
      %4391 = vmatprep.subr.mxu0 0.0
      %4392 = vmatpush1.msra.mxu0 %v4267
      %4393 = vmatprep.subr.mxu0 0.0
      %4394 = vmatpush1.msra.mxu0 %v4268
      %4395 = vmatprep.subr.mxu0 0.0
      %4396 = vmatpush1.msra.mxu0 %v4269
      %4397 = vmatprep.subr.mxu0 0.0
      %4398 = vmatpush1.msra.mxu0 0.0
      %4399 = vmatprep.subr.mxu0 0.0
      %4400 = vmatpush1.msra.mxu0 0.0
      %4401 = vmatprep.subr.mxu0 0.0
      %4402 = vmatpush1.msra.mxu0 0.0
      %4403 = vmatprep.subr.mxu0 0.0
      %4404 = vmatpush1.msra.mxu0 0.0
      %4405 = vmatprep.subr.mxu0 0.0
      %4406 = vmatpush1.msra.mxu0 0.0
      %4407 = vmatprep.subr.mxu0 0.0
      %4408 = vmatpush1.msra.mxu0 0.0
      %4409 = vmatprep.subr.mxu0 0.0
      %4410 = vmatpush1.msra.mxu0 0.0
      %4411 = vmatprep.subr.mxu0 0.0
      %4412 = vmatpush1.msra.mxu0 0.0
      %4413 = vmatprep.subr.mxu0 0.0
      %4414 = vmatpush1.msra.mxu0 0.0
      %4415 = vmatprep.subr.mxu0 0.0
      %4416 = vmatpush1.msra.mxu0 0.0
      %4417 = vmatprep.subr.mxu0 0.0
      %4418 = vmatpush1.msra.mxu0 0.0
      %4419 = vmatprep.subr.mxu0 0.0
      %4420 = vmatpush1.msra.mxu0 0.0
      %4421 = vmatprep.subr.mxu0 0.0
      %4422 = vmatpush1.msra.mxu0 0.0
      %4423 = vmatprep.subr.mxu0 0.0
      %4424 = vmatpush1.msra.mxu0 0.0
      %4425 = vmatprep.subr.mxu0 0.0
      %4426 = vmatpush1.msra.mxu0 0.0
      %4427 = vmatprep.subr.mxu0 0.0
      %4428 = vmatpush1.msra.mxu0 0.0
      %4429 = vmatprep.mubr.f32.mxu0 0.0
      %4430 = vmatmul.mubr.f32.gmra.mrb[0].mxu0 %v4251
      %v4431 = vpop.f32.mrb[0].mxu0
      %v4432 = vadd.f32 %v4357, %v4431
      %v4433 = vpop.f32.mrb[0].mxu0
      %4434 = vmatprep.mubr.f32.mxu0 0.0
      %4435 = vmatmul.mubr.f32.gmra.mrb[0].mxu0 %v4253
      %v4436 = vpop.f32.mrb[0].mxu0
      %v4437 = vadd.f32 %v4362, %v4436
      %v4438 = vpop.f32.mrb[0].mxu0
      %4439 = vdwg.mxu0
      %s4440 = scalar_lea.vmem [#allocation3], 66
      %v4441 = vld [vmem:[%s4440] ss:$2 sm:$0xff]
      %s4442 = scalar_lea.vmem [#allocation3], 82
      %v4443 = vld [vmem:[%s4442] ss:$2 sm:$0x7f]
      %v4444 = vld [vmem:[%s1550] sm:$0xff]
      %v4445 = vld [vmem:[%s1550 + $0x8] sm:$0xff]
      %v4446 = vld [vmem:[%s1550 + $0x10] sm:$0xff]
      %v4447 = vld [vmem:[%s1550 + $0x18] sm:$0xff]
      %v4448 = vld [vmem:[%s1550 + $0x20] sm:$0xff]
      %v4449 = vld [vmem:[%s1550 + $0x28] sm:$0xff]
      %v4450 = vld [vmem:[%s1550 + $0x30] sm:$0xff]
      %v4451 = vld [vmem:[%s1550 + $0x38] sm:$0xff]
      %v4452 = vld [vmem:[%s1550 + $0x40] sm:$0xff]
      %v4453 = vld [vmem:[%s1550 + $0x48] sm:$0xff]
      %v4454 = vld [vmem:[%s1550 + $0x50] sm:$0xff]
      %v4455 = vld [vmem:[%s1550 + $0x58] sm:$0xff]
      %v4456 = vld [vmem:[%s1550 + $0x60] sm:$0xff]
      %v4457 = vld [vmem:[%s1550 + $0x68] sm:$0xff]
      %v4458 = vld [vmem:[%s1550 + $0x70] sm:$0xff]
      %v4459 = vld [vmem:[%s1550 + $0x78] sm:$0xff]
      %4460 = vmatprep.subr.mxu0 0.0
      %4461 = vmatpush1.msra.mxu0 %v4444
      %4462 = vmatprep.subr.mxu0 0.0
      %4463 = vmatpush1.msra.mxu0 %v4445
      %4464 = vmatprep.subr.mxu0 0.0
      %4465 = vmatpush1.msra.mxu0 %v4446
      %4466 = vmatprep.subr.mxu0 0.0
      %4467 = vmatpush1.msra.mxu0 %v4447
      %4468 = vmatprep.subr.mxu0 0.0
      %4469 = vmatpush1.msra.mxu0 %v4448
      %4470 = vmatprep.subr.mxu0 0.0
      %4471 = vmatpush1.msra.mxu0 %v4449
      %4472 = vmatprep.subr.mxu0 0.0
      %4473 = vmatpush1.msra.mxu0 %v4450
      %4474 = vmatprep.subr.mxu0 0.0
      %4475 = vmatpush1.msra.mxu0 %v4451
      %4476 = vmatprep.subr.mxu0 0.0
      %4477 = vmatpush1.msra.mxu0 %v4452
      %4478 = vmatprep.subr.mxu0 0.0
      %4479 = vmatpush1.msra.mxu0 %v4453
      %4480 = vmatprep.subr.mxu0 0.0
      %4481 = vmatpush1.msra.mxu0 %v4454
      %4482 = vmatprep.subr.mxu0 0.0
      %4483 = vmatpush1.msra.mxu0 %v4455
      %4484 = vmatprep.subr.mxu0 0.0
      %4485 = vmatpush1.msra.mxu0 %v4456
      %4486 = vmatprep.subr.mxu0 0.0
      %4487 = vmatpush1.msra.mxu0 %v4457
      %4488 = vmatprep.subr.mxu0 0.0
      %4489 = vmatpush1.msra.mxu0 %v4458
      %4490 = vmatprep.subr.mxu0 0.0
      %4491 = vmatpush1.msra.mxu0 %v4459
      %4492 = vmatprep.subr.mxu0 0.0
      %4493 = vmatpush1.msra.mxu0 0.0
      %4494 = vmatprep.subr.mxu0 0.0
      %4495 = vmatpush1.msra.mxu0 0.0
      %4496 = vmatprep.subr.mxu0 0.0
      %4497 = vmatpush1.msra.mxu0 0.0
      %4498 = vmatprep.subr.mxu0 0.0
      %4499 = vmatpush1.msra.mxu0 0.0
      %4500 = vmatprep.subr.mxu0 0.0
      %4501 = vmatpush1.msra.mxu0 0.0
      %4502 = vmatprep.subr.mxu0 0.0
      %4503 = vmatpush1.msra.mxu0 0.0
      %4504 = vmatprep.subr.mxu0 0.0
      %4505 = vmatpush1.msra.mxu0 0.0
      %4506 = vmatprep.subr.mxu0 0.0
      %4507 = vmatpush1.msra.mxu0 0.0
      %4508 = vmatprep.subr.mxu0 0.0
      %4509 = vmatpush1.msra.mxu0 0.0
      %4510 = vmatprep.subr.mxu0 0.0
      %4511 = vmatpush1.msra.mxu0 0.0
      %4512 = vmatprep.subr.mxu0 0.0
      %4513 = vmatpush1.msra.mxu0 0.0
      %4514 = vmatprep.subr.mxu0 0.0
      %4515 = vmatpush1.msra.mxu0 0.0
      %4516 = vmatprep.subr.mxu0 0.0
      %4517 = vmatpush1.msra.mxu0 0.0
      %4518 = vmatprep.subr.mxu0 0.0
      %4519 = vmatpush1.msra.mxu0 0.0
      %4520 = vmatprep.subr.mxu0 0.0
      %4521 = vmatpush1.msra.mxu0 0.0
      %4522 = vmatprep.subr.mxu0 0.0
      %4523 = vmatpush1.msra.mxu0 0.0
      %4524 = vmatprep.mubr.f32.mxu0 0.0
      %4525 = vmatmul.mubr.f32.gmra.mrb[0].mxu0 %v4441
      %v4526 = vpop.f32.mrb[0].mxu0
      %v4527 = vadd.f32 0.0, %v4526
      %v4528 = vpop.f32.mrb[0].mxu0
      %4529 = vmatprep.mubr.f32.mxu0 0.0
      %4530 = vmatmul.mubr.f32.gmra.mrb[0].mxu0 %v4443
      %v4531 = vpop.f32.mrb[0].mxu0
      %v4532 = vadd.f32 0.0, %v4531
      %v4533 = vpop.f32.mrb[0].mxu0
      %4534 = vdwg.mxu0
      %v4535 = vadd.f32 %v4432, %v4527
      %v4536 = vadd.f32 %v4437, %v4532
      %v4537 = vld [vmem:[%s6 + $0x2] sm:$0x1]
      %v4538 = vlaneseq
      %v4539 = vshrl.u32 %v4538, 7
      %v4540 = vsub.s32 0, %v4539
      %v4541 = vrot.slane %v4537, %v4540
      %v4542 = vadd.f32 %v4535, %v4541
      %v4543 = vadd.f32 %v4536, %v4541
      %v4544 = vmul.f32 %v4542, 0.5
      %v4545 = vmul.f32 %v4543, 0.5
      %v4546 = vtanh.pop %v4544
      %v4547 = vtanh.pop %v4545
      %v4548 = vmul.f32 %v4546, 0.5
      %v4549 = vmul.f32 %v4547, 0.5
      %v4550 = vadd.f32 %v4548, 0.5
      %v4551 = vadd.f32 %v4549, 0.5
      %v4552 = vmul.f32 %v4542, %v4550
      %v4553 = vmul.f32 %v4543, %v4551
      %4554 = vst [vmem:[#allocation4 + $0x20] sm:$0xff] %v4552
      %4555 = vst [vmem:[#allocation4 + $0x28] sm:$0x7f] %v4553
      %s4556 = scalar_lea.vmem [#allocation4], 32
      %v4557 = vld [vmem:[%s4556] ss:$2 sm:$0x7f]
      %v4558 = vld [vmem:[%s4] sm:$0xff]
      %v4559 = vld [vmem:[%s4 + $0x8] sm:$0xff]
      %v4560 = vld [vmem:[%s4 + $0x10] sm:$0xff]
      %v4561 = vld [vmem:[%s4 + $0x18] sm:$0xff]
      %v4562 = vld [vmem:[%s4 + $0x20] sm:$0xff]
      %v4563 = vld [vmem:[%s4 + $0x28] sm:$0xff]
      %v4564 = vld [vmem:[%s4 + $0x30] sm:$0xff]
      %v4565 = vld [vmem:[%s4 + $0x38] sm:$0xff]
      %v4566 = vld [vmem:[%s4 + $0x40] sm:$0xff]
      %v4567 = vld [vmem:[%s4 + $0x48] sm:$0xff]
      %v4568 = vld [vmem:[%s4 + $0x50] sm:$0xff]
      %v4569 = vld [vmem:[%s4 + $0x58] sm:$0xff]
      %v4570 = vld [vmem:[%s4 + $0x60] sm:$0xff]
      %v4571 = vld [vmem:[%s4 + $0x68] sm:$0xff]
      %v4572 = vld [vmem:[%s4 + $0x70] sm:$0xff]
      %v4573 = vld [vmem:[%s4 + $0x78] sm:$0xff]
      %s4574 = scalar_lea.vmem [#allocation4], 33
      %v4575 = vld [vmem:[%s4574] ss:$2 sm:$0x7f]
      %v4576 = vld [vmem:[%s1682] sm:$0xff]
      %v4577 = vld [vmem:[%s1682 + $0x8] sm:$0xff]
      %v4578 = vld [vmem:[%s1682 + $0x10] sm:$0xff]
      %v4579 = vld [vmem:[%s1682 + $0x18] sm:$0xff]
      %v4580 = vld [vmem:[%s1682 + $0x20] sm:$0xff]
      %v4581 = vld [vmem:[%s1682 + $0x28] sm:$0xff]
      %v4582 = vld [vmem:[%s1682 + $0x30] sm:$0xff]
      %v4583 = vld [vmem:[%s1682 + $0x38] sm:$0xff]
      %v4584 = vld [vmem:[%s1682 + $0x40] sm:$0xff]
      %v4585 = vld [vmem:[%s1682 + $0x48] sm:$0xff]
      %v4586 = vld [vmem:[%s1682 + $0x50] sm:$0xff]
      %v4587 = vld [vmem:[%s1682 + $0x58] sm:$0xff]
      %v4588 = vld [vmem:[%s1682 + $0x60] sm:$0xff]
      %v4589 = vld [vmem:[%s1682 + $0x68] sm:$0xff]
      %v4590 = vld [vmem:[%s1682 + $0x70] sm:$0xff]
      %v4591 = vld [vmem:[%s1682 + $0x78] sm:$0xff]
      %4592 = vmatprep.subr.mxu0 0.0
      %4593 = vmatpush1.msra.mxu0 %v4576
      %4594 = vmatprep.subr.mxu0 0.0
      %4595 = vmatpush1.msra.mxu0 %v4577
      %4596 = vmatprep.subr.mxu0 0.0
      %4597 = vmatpush1.msra.mxu0 %v4578
      %4598 = vmatprep.subr.mxu0 0.0
      %4599 = vmatpush1.msra.mxu0 %v4579
      %4600 = vmatprep.subr.mxu0 0.0
      %4601 = vmatpush1.msra.mxu0 %v4580
      %4602 = vmatprep.subr.mxu0 0.0
      %4603 = vmatpush1.msra.mxu0 %v4581
      %4604 = vmatprep.subr.mxu0 0.0
      %4605 = vmatpush1.msra.mxu0 %v4582
      %4606 = vmatprep.subr.mxu0 0.0
      %4607 = vmatpush1.msra.mxu0 %v4583
      %4608 = vmatprep.subr.mxu0 0.0
      %4609 = vmatpush1.msra.mxu0 %v4584
      %4610 = vmatprep.subr.mxu0 0.0
      %4611 = vmatpush1.msra.mxu0 %v4585
      %4612 = vmatprep.subr.mxu0 0.0
      %4613 = vmatpush1.msra.mxu0 %v4586
      %4614 = vmatprep.subr.mxu0 0.0
      %4615 = vmatpush1.msra.mxu0 %v4587
      %4616 = vmatprep.subr.mxu0 0.0
      %4617 = vmatpush1.msra.mxu0 %v4588
      %4618 = vmatprep.subr.mxu0 0.0
      %4619 = vmatpush1.msra.mxu0 %v4589
      %4620 = vmatprep.subr.mxu0 0.0
      %4621 = vmatpush1.msra.mxu0 %v4590
      %4622 = vmatprep.subr.mxu0 0.0
      %4623 = vmatpush1.msra.mxu0 %v4591
      %4624 = vmatprep.subr.mxu0 0.0
      %4625 = vmatpush1.msra.mxu0 0.0
      %4626 = vmatprep.subr.mxu0 0.0
      %4627 = vmatpush1.msra.mxu0 0.0
      %4628 = vmatprep.subr.mxu0 0.0
      %4629 = vmatpush1.msra.mxu0 0.0
      %4630 = vmatprep.subr.mxu0 0.0
      %4631 = vmatpush1.msra.mxu0 0.0
      %4632 = vmatprep.subr.mxu0 0.0
      %4633 = vmatpush1.msra.mxu0 0.0
      %4634 = vmatprep.subr.mxu0 0.0
      %4635 = vmatpush1.msra.mxu0 0.0
      %4636 = vmatprep.subr.mxu0 0.0
      %4637 = vmatpush1.msra.mxu0 0.0
      %4638 = vmatprep.subr.mxu0 0.0
      %4639 = vmatpush1.msra.mxu0 0.0
      %4640 = vmatprep.subr.mxu0 0.0
      %4641 = vmatpush1.msra.mxu0 0.0
      %4642 = vmatprep.subr.mxu0 0.0
      %4643 = vmatpush1.msra.mxu0 0.0
      %4644 = vmatprep.subr.mxu0 0.0
      %4645 = vmatpush1.msra.mxu0 0.0
      %4646 = vmatprep.subr.mxu0 0.0
      %4647 = vmatpush1.msra.mxu0 0.0
      %4648 = vmatprep.subr.mxu0 0.0
      %4649 = vmatpush1.msra.mxu0 0.0
      %4650 = vmatprep.subr.mxu0 0.0
      %4651 = vmatpush1.msra.mxu0 0.0
      %4652 = vmatprep.subr.mxu0 0.0
      %4653 = vmatpush1.msra.mxu0 0.0
      %4654 = vmatprep.subr.mxu0 0.0
      %4655 = vmatpush1.msra.mxu0 0.0
      %4656 = vmatprep.mubr.f32.mxu0 0.0
      %4657 = vmatmul.mubr.f32.gmra.mrb[0].mxu0 %v4575
      %v4658 = vpop.f32.mrb[0].mxu0
      %v4659 = vadd.f32 0.0, %v4658
      %v4660 = vpop.f32.mrb[0].mxu0
      %4661 = vdwg.mxu0
      %4662 = vmatprep.subr.mxu0 0.0
      %4663 = vmatpush1.msra.mxu0 %v4558
      %4664 = vmatprep.subr.mxu0 0.0
      %4665 = vmatpush1.msra.mxu0 %v4559
      %4666 = vmatprep.subr.mxu0 0.0
      %4667 = vmatpush1.msra.mxu0 %v4560
      %4668 = vmatprep.subr.mxu0 0.0
      %4669 = vmatpush1.msra.mxu0 %v4561
      %4670 = vmatprep.subr.mxu0 0.0
      %4671 = vmatpush1.msra.mxu0 %v4562
      %4672 = vmatprep.subr.mxu0 0.0
      %4673 = vmatpush1.msra.mxu0 %v4563
      %4674 = vmatprep.subr.mxu0 0.0
      %4675 = vmatpush1.msra.mxu0 %v4564
      %4676 = vmatprep.subr.mxu0 0.0
      %4677 = vmatpush1.msra.mxu0 %v4565
      %4678 = vmatprep.subr.mxu0 0.0
      %4679 = vmatpush1.msra.mxu0 %v4566
      %4680 = vmatprep.subr.mxu0 0.0
      %4681 = vmatpush1.msra.mxu0 %v4567
      %4682 = vmatprep.subr.mxu0 0.0
      %4683 = vmatpush1.msra.mxu0 %v4568
      %4684 = vmatprep.subr.mxu0 0.0
      %4685 = vmatpush1.msra.mxu0 %v4569
      %4686 = vmatprep.subr.mxu0 0.0
      %4687 = vmatpush1.msra.mxu0 %v4570
      %4688 = vmatprep.subr.mxu0 0.0
      %4689 = vmatpush1.msra.mxu0 %v4571
      %4690 = vmatprep.subr.mxu0 0.0
      %4691 = vmatpush1.msra.mxu0 %v4572
      %4692 = vmatprep.subr.mxu0 0.0
      %4693 = vmatpush1.msra.mxu0 %v4573
      %4694 = vmatprep.subr.mxu0 0.0
      %4695 = vmatpush1.msra.mxu0 0.0
      %4696 = vmatprep.subr.mxu0 0.0
      %4697 = vmatpush1.msra.mxu0 0.0
      %4698 = vmatprep.subr.mxu0 0.0
      %4699 = vmatpush1.msra.mxu0 0.0
      %4700 = vmatprep.subr.mxu0 0.0
      %4701 = vmatpush1.msra.mxu0 0.0
      %4702 = vmatprep.subr.mxu0 0.0
      %4703 = vmatpush1.msra.mxu0 0.0
      %4704 = vmatprep.subr.mxu0 0.0
      %4705 = vmatpush1.msra.mxu0 0.0
      %4706 = vmatprep.subr.mxu0 0.0
      %4707 = vmatpush1.msra.mxu0 0.0
      %4708 = vmatprep.subr.mxu0 0.0
      %4709 = vmatpush1.msra.mxu0 0.0
      %4710 = vmatprep.subr.mxu0 0.0
      %4711 = vmatpush1.msra.mxu0 0.0
      %4712 = vmatprep.subr.mxu0 0.0
      %4713 = vmatpush1.msra.mxu0 0.0
      %4714 = vmatprep.subr.mxu0 0.0
      %4715 = vmatpush1.msra.mxu0 0.0
      %4716 = vmatprep.subr.mxu0 0.0
      %4717 = vmatpush1.msra.mxu0 0.0
      %4718 = vmatprep.subr.mxu0 0.0
      %4719 = vmatpush1.msra.mxu0 0.0
      %4720 = vmatprep.subr.mxu0 0.0
      %4721 = vmatpush1.msra.mxu0 0.0
      %4722 = vmatprep.subr.mxu0 0.0
      %4723 = vmatpush1.msra.mxu0 0.0
      %4724 = vmatprep.subr.mxu0 0.0
      %4725 = vmatpush1.msra.mxu0 0.0
      %4726 = vmatprep.mubr.f32.mxu0 0.0
      %4727 = vmatmul.mubr.f32.gmra.mrb[0].mxu0 %v4557
      %v4728 = vpop.f32.mrb[0].mxu0
      %v4729 = vadd.f32 %v4659, %v4728
      %v4730 = vpop.f32.mrb[0].mxu0
      %4731 = vdwg.mxu0
      %s4732 = scalar_lea.vmem [#allocation4], 34
      %v4733 = vld [vmem:[%s4732] ss:$2 sm:$0x7f]
      %v4734 = vld [vmem:[%s1841] sm:$0xff]
      %v4735 = vld [vmem:[%s1841 + $0x8] sm:$0xff]
      %v4736 = vld [vmem:[%s1841 + $0x10] sm:$0xff]
      %v4737 = vld [vmem:[%s1841 + $0x18] sm:$0xff]
      %v4738 = vld [vmem:[%s1841 + $0x20] sm:$0xff]
      %v4739 = vld [vmem:[%s1841 + $0x28] sm:$0xff]
      %v4740 = vld [vmem:[%s1841 + $0x30] sm:$0xff]
      %v4741 = vld [vmem:[%s1841 + $0x38] sm:$0xff]
      %v4742 = vld [vmem:[%s1841 + $0x40] sm:$0xff]
      %v4743 = vld [vmem:[%s1841 + $0x48] sm:$0xff]
      %v4744 = vld [vmem:[%s1841 + $0x50] sm:$0xff]
      %v4745 = vld [vmem:[%s1841 + $0x58] sm:$0xff]
      %v4746 = vld [vmem:[%s1841 + $0x60] sm:$0xff]
      %v4747 = vld [vmem:[%s1841 + $0x68] sm:$0xff]
      %v4748 = vld [vmem:[%s1841 + $0x70] sm:$0xff]
      %v4749 = vld [vmem:[%s1841 + $0x78] sm:$0xff]
      %4750 = vmatprep.subr.mxu0 0.0
      %4751 = vmatpush1.msra.mxu0 %v4734
      %4752 = vmatprep.subr.mxu0 0.0
      %4753 = vmatpush1.msra.mxu0 %v4735
      %4754 = vmatprep.subr.mxu0 0.0
      %4755 = vmatpush1.msra.mxu0 %v4736
      %4756 = vmatprep.subr.mxu0 0.0
      %4757 = vmatpush1.msra.mxu0 %v4737
      %4758 = vmatprep.subr.mxu0 0.0
      %4759 = vmatpush1.msra.mxu0 %v4738
      %4760 = vmatprep.subr.mxu0 0.0
      %4761 = vmatpush1.msra.mxu0 %v4739
      %4762 = vmatprep.subr.mxu0 0.0
      %4763 = vmatpush1.msra.mxu0 %v4740
      %4764 = vmatprep.subr.mxu0 0.0
      %4765 = vmatpush1.msra.mxu0 %v4741
      %4766 = vmatprep.subr.mxu0 0.0
      %4767 = vmatpush1.msra.mxu0 %v4742
      %4768 = vmatprep.subr.mxu0 0.0
      %4769 = vmatpush1.msra.mxu0 %v4743
      %4770 = vmatprep.subr.mxu0 0.0
      %4771 = vmatpush1.msra.mxu0 %v4744
      %4772 = vmatprep.subr.mxu0 0.0
      %4773 = vmatpush1.msra.mxu0 %v4745
      %4774 = vmatprep.subr.mxu0 0.0
      %4775 = vmatpush1.msra.mxu0 %v4746
      %4776 = vmatprep.subr.mxu0 0.0
      %4777 = vmatpush1.msra.mxu0 %v4747
      %4778 = vmatprep.subr.mxu0 0.0
      %4779 = vmatpush1.msra.mxu0 %v4748
      %4780 = vmatprep.subr.mxu0 0.0
      %4781 = vmatpush1.msra.mxu0 %v4749
      %4782 = vmatprep.subr.mxu0 0.0
      %4783 = vmatpush1.msra.mxu0 0.0
      %4784 = vmatprep.subr.mxu0 0.0
      %4785 = vmatpush1.msra.mxu0 0.0
      %4786 = vmatprep.subr.mxu0 0.0
      %4787 = vmatpush1.msra.mxu0 0.0
      %4788 = vmatprep.subr.mxu0 0.0
      %4789 = vmatpush1.msra.mxu0 0.0
      %4790 = vmatprep.subr.mxu0 0.0
      %4791 = vmatpush1.msra.mxu0 0.0
      %4792 = vmatprep.subr.mxu0 0.0
      %4793 = vmatpush1.msra.mxu0 0.0
      %4794 = vmatprep.subr.mxu0 0.0
      %4795 = vmatpush1.msra.mxu0 0.0
      %4796 = vmatprep.subr.mxu0 0.0
      %4797 = vmatpush1.msra.mxu0 0.0
      %4798 = vmatprep.subr.mxu0 0.0
      %4799 = vmatpush1.msra.mxu0 0.0
      %4800 = vmatprep.subr.mxu0 0.0
      %4801 = vmatpush1.msra.mxu0 0.0
      %4802 = vmatprep.subr.mxu0 0.0
      %4803 = vmatpush1.msra.mxu0 0.0
      %4804 = vmatprep.subr.mxu0 0.0
      %4805 = vmatpush1.msra.mxu0 0.0
      %4806 = vmatprep.subr.mxu0 0.0
      %4807 = vmatpush1.msra.mxu0 0.0
      %4808 = vmatprep.subr.mxu0 0.0
      %4809 = vmatpush1.msra.mxu0 0.0
      %4810 = vmatprep.subr.mxu0 0.0
      %4811 = vmatpush1.msra.mxu0 0.0
      %4812 = vmatprep.subr.mxu0 0.0
      %4813 = vmatpush1.msra.mxu0 0.0
      %4814 = vmatprep.mubr.f32.mxu0 0.0
      %4815 = vmatmul.mubr.f32.gmra.mrb[0].mxu0 %v4733
      %v4816 = vpop.f32.mrb[0].mxu0
      %v4817 = vadd.f32 0.0, %v4816
      %v4818 = vpop.f32.mrb[0].mxu0
      %4819 = vdwg.mxu0
      %v4820 = vadd.f32 %v4729, %v4817
      %v4821 = vld [vmem:[%s6 + $0x3] sm:$0x1]
      %v4822 = vlaneseq
      %v4823 = vshrl.u32 %v4822, 7
      %v4824 = vsub.s32 0, %v4823
      %v4825 = vrot.slane %v4821, %v4824
      %v4826 = vadd.f32 %v4820, %v4825
      %v4827 = vmul.f32 %v4826, 0.5
      %v4828 = vtanh.pop %v4827
      %v4829 = vmul.f32 %v4828, 0.5
      %v4830 = vadd.f32 %v4829, 0.5
      %v4831 = vmul.f32 %v4826, %v4830
      %4832 = vst [vmem:[#allocation5 + $0x10] sm:$0x7f] %v4831
      %s4833 = scalar_lea.vmem [#allocation5], 16
      %v4834 = vld [vmem:[%s4833] ss:$2 sm:$0x7]
      %v4835 = vld [vmem:[%s5] sm:$0xff]
      %v4836 = vld [vmem:[%s5 + $0x8] sm:$0xff]
      %v4837 = vld [vmem:[%s5 + $0x10] sm:$0xff]
      %v4838 = vld [vmem:[%s5 + $0x18] sm:$0xff]
      %v4839 = vld [vmem:[%s5 + $0x20] sm:$0xff]
      %v4840 = vld [vmem:[%s5 + $0x28] sm:$0xff]
      %v4841 = vld [vmem:[%s5 + $0x30] sm:$0xff]
      %v4842 = vld [vmem:[%s5 + $0x38] sm:$0xff]
      %v4843 = vld [vmem:[%s5 + $0x40] sm:$0xff]
      %v4844 = vld [vmem:[%s5 + $0x48] sm:$0xff]
      %v4845 = vld [vmem:[%s5 + $0x50] sm:$0xff]
      %v4846 = vld [vmem:[%s5 + $0x58] sm:$0xff]
      %v4847 = vld [vmem:[%s5 + $0x60] sm:$0xff]
      %v4848 = vld [vmem:[%s5 + $0x68] sm:$0xff]
      %v4849 = vld [vmem:[%s5 + $0x70] sm:$0xff]
      %v4850 = vld [vmem:[%s5 + $0x78] sm:$0xff]
      %s4851 = scalar_lea.vmem [#allocation5], 17
      %v4852 = vld [vmem:[%s4851] ss:$2 sm:$0x7]
      %v4853 = vld [vmem:[%s1960] sm:$0xff]
      %v4854 = vld [vmem:[%s1960 + $0x8] sm:$0xff]
      %v4855 = vld [vmem:[%s1960 + $0x10] sm:$0xff]
      %v4856 = vld [vmem:[%s1960 + $0x18] sm:$0xff]
      %v4857 = vld [vmem:[%s1960 + $0x20] sm:$0xff]
      %v4858 = vld [vmem:[%s1960 + $0x28] sm:$0xff]
      %v4859 = vld [vmem:[%s1960 + $0x30] sm:$0xff]
      %v4860 = vld [vmem:[%s1960 + $0x38] sm:$0xff]
      %v4861 = vld [vmem:[%s1960 + $0x40] sm:$0xff]
      %v4862 = vld [vmem:[%s1960 + $0x48] sm:$0xff]
      %v4863 = vld [vmem:[%s1960 + $0x50] sm:$0xff]
      %v4864 = vld [vmem:[%s1960 + $0x58] sm:$0xff]
      %v4865 = vld [vmem:[%s1960 + $0x60] sm:$0xff]
      %v4866 = vld [vmem:[%s1960 + $0x68] sm:$0xff]
      %v4867 = vld [vmem:[%s1960 + $0x70] sm:$0xff]
      %v4868 = vld [vmem:[%s1960 + $0x78] sm:$0xff]
      %4869 = vmatprep.subr.mxu0 0.0
      %4870 = vmatpush1.msra.mxu0 %v4853
      %4871 = vmatprep.subr.mxu0 0.0
      %4872 = vmatpush1.msra.mxu0 %v4854
      %4873 = vmatprep.subr.mxu0 0.0
      %4874 = vmatpush1.msra.mxu0 %v4855
      %4875 = vmatprep.subr.mxu0 0.0
      %4876 = vmatpush1.msra.mxu0 %v4856
      %4877 = vmatprep.subr.mxu0 0.0
      %4878 = vmatpush1.msra.mxu0 %v4857
      %4879 = vmatprep.subr.mxu0 0.0
      %4880 = vmatpush1.msra.mxu0 %v4858
      %4881 = vmatprep.subr.mxu0 0.0
      %4882 = vmatpush1.msra.mxu0 %v4859
      %4883 = vmatprep.subr.mxu0 0.0
      %4884 = vmatpush1.msra.mxu0 %v4860
      %4885 = vmatprep.subr.mxu0 0.0
      %4886 = vmatpush1.msra.mxu0 %v4861
      %4887 = vmatprep.subr.mxu0 0.0
      %4888 = vmatpush1.msra.mxu0 %v4862
      %4889 = vmatprep.subr.mxu0 0.0
      %4890 = vmatpush1.msra.mxu0 %v4863
      %4891 = vmatprep.subr.mxu0 0.0
      %4892 = vmatpush1.msra.mxu0 %v4864
      %4893 = vmatprep.subr.mxu0 0.0
      %4894 = vmatpush1.msra.mxu0 %v4865
      %4895 = vmatprep.subr.mxu0 0.0
      %4896 = vmatpush1.msra.mxu0 %v4866
      %4897 = vmatprep.subr.mxu0 0.0
      %4898 = vmatpush1.msra.mxu0 %v4867
      %4899 = vmatprep.subr.mxu0 0.0
      %4900 = vmatpush1.msra.mxu0 %v4868
      %4901 = vmatprep.subr.mxu0 0.0
      %4902 = vmatpush1.msra.mxu0 0.0
      %4903 = vmatprep.subr.mxu0 0.0
      %4904 = vmatpush1.msra.mxu0 0.0
      %4905 = vmatprep.subr.mxu0 0.0
      %4906 = vmatpush1.msra.mxu0 0.0
      %4907 = vmatprep.subr.mxu0 0.0
      %4908 = vmatpush1.msra.mxu0 0.0
      %4909 = vmatprep.subr.mxu0 0.0
      %4910 = vmatpush1.msra.mxu0 0.0
      %4911 = vmatprep.subr.mxu0 0.0
      %4912 = vmatpush1.msra.mxu0 0.0
      %4913 = vmatprep.subr.mxu0 0.0
      %4914 = vmatpush1.msra.mxu0 0.0
      %4915 = vmatprep.subr.mxu0 0.0
      %4916 = vmatpush1.msra.mxu0 0.0
      %4917 = vmatprep.subr.mxu0 0.0
      %4918 = vmatpush1.msra.mxu0 0.0
      %4919 = vmatprep.subr.mxu0 0.0
      %4920 = vmatpush1.msra.mxu0 0.0
      %4921 = vmatprep.subr.mxu0 0.0
      %4922 = vmatpush1.msra.mxu0 0.0
      %4923 = vmatprep.subr.mxu0 0.0
      %4924 = vmatpush1.msra.mxu0 0.0
      %4925 = vmatprep.subr.mxu0 0.0
      %4926 = vmatpush1.msra.mxu0 0.0
      %4927 = vmatprep.subr.mxu0 0.0
      %4928 = vmatpush1.msra.mxu0 0.0
      %4929 = vmatprep.subr.mxu0 0.0
      %4930 = vmatpush1.msra.mxu0 0.0
      %4931 = vmatprep.subr.mxu0 0.0
      %4932 = vmatpush1.msra.mxu0 0.0
      %4933 = vmatprep.mubr.f32.mxu0 0.0
      %4934 = vmatmul.mubr.f32.gmra.mrb[0].mxu0 %v4852
      %v4935 = vpop.f32.mrb[0].mxu0
      %v4936 = vadd.f32 0.0, %v4935
      %v4937 = vpop.f32.mrb[0].mxu0
      %4938 = vdwg.mxu0
      %4939 = vmatprep.subr.mxu0 0.0
      %4940 = vmatpush1.msra.mxu0 %v4835
      %4941 = vmatprep.subr.mxu0 0.0
      %4942 = vmatpush1.msra.mxu0 %v4836
      %4943 = vmatprep.subr.mxu0 0.0
      %4944 = vmatpush1.msra.mxu0 %v4837
      %4945 = vmatprep.subr.mxu0 0.0
      %4946 = vmatpush1.msra.mxu0 %v4838
      %4947 = vmatprep.subr.mxu0 0.0
      %4948 = vmatpush1.msra.mxu0 %v4839
      %4949 = vmatprep.subr.mxu0 0.0
      %4950 = vmatpush1.msra.mxu0 %v4840
      %4951 = vmatprep.subr.mxu0 0.0
      %4952 = vmatpush1.msra.mxu0 %v4841
      %4953 = vmatprep.subr.mxu0 0.0
      %4954 = vmatpush1.msra.mxu0 %v4842
      %4955 = vmatprep.subr.mxu0 0.0
      %4956 = vmatpush1.msra.mxu0 %v4843
      %4957 = vmatprep.subr.mxu0 0.0
      %4958 = vmatpush1.msra.mxu0 %v4844
      %4959 = vmatprep.subr.mxu0 0.0
      %4960 = vmatpush1.msra.mxu0 %v4845
      %4961 = vmatprep.subr.mxu0 0.0
      %4962 = vmatpush1.msra.mxu0 %v4846
      %4963 = vmatprep.subr.mxu0 0.0
      %4964 = vmatpush1.msra.mxu0 %v4847
      %4965 = vmatprep.subr.mxu0 0.0
      %4966 = vmatpush1.msra.mxu0 %v4848
      %4967 = vmatprep.subr.mxu0 0.0
      %4968 = vmatpush1.msra.mxu0 %v4849
      %4969 = vmatprep.subr.mxu0 0.0
      %4970 = vmatpush1.msra.mxu0 %v4850
      %4971 = vmatprep.subr.mxu0 0.0
      %4972 = vmatpush1.msra.mxu0 0.0
      %4973 = vmatprep.subr.mxu0 0.0
      %4974 = vmatpush1.msra.mxu0 0.0
      %4975 = vmatprep.subr.mxu0 0.0
      %4976 = vmatpush1.msra.mxu0 0.0
      %4977 = vmatprep.subr.mxu0 0.0
      %4978 = vmatpush1.msra.mxu0 0.0
      %4979 = vmatprep.subr.mxu0 0.0
      %4980 = vmatpush1.msra.mxu0 0.0
      %4981 = vmatprep.subr.mxu0 0.0
      %4982 = vmatpush1.msra.mxu0 0.0
      %4983 = vmatprep.subr.mxu0 0.0
      %4984 = vmatpush1.msra.mxu0 0.0
      %4985 = vmatprep.subr.mxu0 0.0
      %4986 = vmatpush1.msra.mxu0 0.0
      %4987 = vmatprep.subr.mxu0 0.0
      %4988 = vmatpush1.msra.mxu0 0.0
      %4989 = vmatprep.subr.mxu0 0.0
      %4990 = vmatpush1.msra.mxu0 0.0
      %4991 = vmatprep.subr.mxu0 0.0
      %4992 = vmatpush1.msra.mxu0 0.0
      %4993 = vmatprep.subr.mxu0 0.0
      %4994 = vmatpush1.msra.mxu0 0.0
      %4995 = vmatprep.subr.mxu0 0.0
      %4996 = vmatpush1.msra.mxu0 0.0
      %4997 = vmatprep.subr.mxu0 0.0
      %4998 = vmatpush1.msra.mxu0 0.0
      %4999 = vmatprep.subr.mxu0 0.0
      %5000 = vmatpush1.msra.mxu0 0.0
      %5001 = vmatprep.subr.mxu0 0.0
      %5002 = vmatpush1.msra.mxu0 0.0
      %5003 = vmatprep.mubr.f32.mxu0 0.0
      %5004 = vmatmul.mubr.f32.gmra.mrb[0].mxu0 %v4834
      %v5005 = vpop.f32.mrb[0].mxu0
      %v5006 = vadd.f32 %v4936, %v5005
      %v5007 = vpop.f32.mrb[0].mxu0
      %5008 = vdwg.mxu0
      %s5009 = scalar_lea.vmem [#allocation5], 18
      %v5010 = vld [vmem:[%s5009] ss:$2 sm:$0x7]
      %v5011 = vld [vmem:[%s2119] sm:$0xff]
      %v5012 = vld [vmem:[%s2119 + $0x8] sm:$0xff]
      %v5013 = vld [vmem:[%s2119 + $0x10] sm:$0xff]
      %v5014 = vld [vmem:[%s2119 + $0x18] sm:$0xff]
      %v5015 = vld [vmem:[%s2119 + $0x20] sm:$0xff]
      %v5016 = vld [vmem:[%s2119 + $0x28] sm:$0xff]
      %v5017 = vld [vmem:[%s2119 + $0x30] sm:$0xff]
      %v5018 = vld [vmem:[%s2119 + $0x38] sm:$0xff]
      %v5019 = vld [vmem:[%s2119 + $0x40] sm:$0xff]
      %v5020 = vld [vmem:[%s2119 + $0x48] sm:$0xff]
      %v5021 = vld [vmem:[%s2119 + $0x50] sm:$0xff]
      %v5022 = vld [vmem:[%s2119 + $0x58] sm:$0xff]
      %v5023 = vld [vmem:[%s2119 + $0x60] sm:$0xff]
      %v5024 = vld [vmem:[%s2119 + $0x68] sm:$0xff]
      %v5025 = vld [vmem:[%s2119 + $0x70] sm:$0xff]
      %v5026 = vld [vmem:[%s2119 + $0x78] sm:$0xff]
      %5027 = vmatprep.subr.mxu0 0.0
      %5028 = vmatpush1.msra.mxu0 %v5011
      %5029 = vmatprep.subr.mxu0 0.0
      %5030 = vmatpush1.msra.mxu0 %v5012
      %5031 = vmatprep.subr.mxu0 0.0
      %5032 = vmatpush1.msra.mxu0 %v5013
      %5033 = vmatprep.subr.mxu0 0.0
      %5034 = vmatpush1.msra.mxu0 %v5014
      %5035 = vmatprep.subr.mxu0 0.0
      %5036 = vmatpush1.msra.mxu0 %v5015
      %5037 = vmatprep.subr.mxu0 0.0
      %5038 = vmatpush1.msra.mxu0 %v5016
      %5039 = vmatprep.subr.mxu0 0.0
      %5040 = vmatpush1.msra.mxu0 %v5017
      %5041 = vmatprep.subr.mxu0 0.0
      %5042 = vmatpush1.msra.mxu0 %v5018
      %5043 = vmatprep.subr.mxu0 0.0
      %5044 = vmatpush1.msra.mxu0 %v5019
      %5045 = vmatprep.subr.mxu0 0.0
      %5046 = vmatpush1.msra.mxu0 %v5020
      %5047 = vmatprep.subr.mxu0 0.0
      %5048 = vmatpush1.msra.mxu0 %v5021
      %5049 = vmatprep.subr.mxu0 0.0
      %5050 = vmatpush1.msra.mxu0 %v5022
      %5051 = vmatprep.subr.mxu0 0.0
      %5052 = vmatpush1.msra.mxu0 %v5023
      %5053 = vmatprep.subr.mxu0 0.0
      %5054 = vmatpush1.msra.mxu0 %v5024
      %5055 = vmatprep.subr.mxu0 0.0
      %5056 = vmatpush1.msra.mxu0 %v5025
      %5057 = vmatprep.subr.mxu0 0.0
      %5058 = vmatpush1.msra.mxu0 %v5026
      %5059 = vmatprep.subr.mxu0 0.0
      %5060 = vmatpush1.msra.mxu0 0.0
      %5061 = vmatprep.subr.mxu0 0.0
      %5062 = vmatpush1.msra.mxu0 0.0
      %5063 = vmatprep.subr.mxu0 0.0
      %5064 = vmatpush1.msra.mxu0 0.0
      %5065 = vmatprep.subr.mxu0 0.0
      %5066 = vmatpush1.msra.mxu0 0.0
      %5067 = vmatprep.subr.mxu0 0.0
      %5068 = vmatpush1.msra.mxu0 0.0
      %5069 = vmatprep.subr.mxu0 0.0
      %5070 = vmatpush1.msra.mxu0 0.0
      %5071 = vmatprep.subr.mxu0 0.0
      %5072 = vmatpush1.msra.mxu0 0.0
      %5073 = vmatprep.subr.mxu0 0.0
      %5074 = vmatpush1.msra.mxu0 0.0
      %5075 = vmatprep.subr.mxu0 0.0
      %5076 = vmatpush1.msra.mxu0 0.0
      %5077 = vmatprep.subr.mxu0 0.0
      %5078 = vmatpush1.msra.mxu0 0.0
      %5079 = vmatprep.subr.mxu0 0.0
      %5080 = vmatpush1.msra.mxu0 0.0
      %5081 = vmatprep.subr.mxu0 0.0
      %5082 = vmatpush1.msra.mxu0 0.0
      %5083 = vmatprep.subr.mxu0 0.0
      %5084 = vmatpush1.msra.mxu0 0.0
      %5085 = vmatprep.subr.mxu0 0.0
      %5086 = vmatpush1.msra.mxu0 0.0
      %5087 = vmatprep.subr.mxu0 0.0
      %5088 = vmatpush1.msra.mxu0 0.0
      %5089 = vmatprep.subr.mxu0 0.0
      %5090 = vmatpush1.msra.mxu0 0.0
      %5091 = vmatprep.mubr.f32.mxu0 0.0
      %5092 = vmatmul.mubr.f32.gmra.mrb[0].mxu0 %v5010
      %v5093 = vpop.f32.mrb[0].mxu0
      %v5094 = vadd.f32 0.0, %v5093
      %v5095 = vpop.f32.mrb[0].mxu0
      %5096 = vdwg.mxu0
      %v5097 = vadd.f32 %v5006, %v5094
      %v5098 = vld [vmem:[%s6 + $0x4] sm:$0x1]
      %v5099 = vlaneseq
      %v5100 = vshrl.u32 %v5099, 7
      %v5101 = vsub.s32 0, %v5100
      %v5102 = vrot.slane %v5098, %v5101
      %v5103 = vadd.f32 %v5097, %v5102
      %s5104 = scalar_lea.vmem %s283, 8
      %5105 = vst [vmem:[%s5104] sm:$0x7] %v5103
      %s5106 = scalar_lea.vmem [#allocation2], 216
      %v5107 = vld [vmem:[%s5106] ss:$2 sm:$0xff]
      %s5108 = scalar_lea.vmem [#allocation2], 232
      %v5109 = vld [vmem:[%s5108] ss:$2 sm:$0xff]
      %s5110 = scalar_lea.vmem [#allocation2], 248
      %v5111 = vld [vmem:[%s5110] ss:$2 sm:$0xff]
      %s5112 = scalar_lea.vmem [#allocation2], 264
      %v5113 = vld [vmem:[%s5112] ss:$2 sm:$0xff]
      %v5114 = vld [vmem:[%s2] sm:$0xff]
      %v5115 = vld [vmem:[%s2 + $0x8] sm:$0xff]
      %v5116 = vld [vmem:[%s2 + $0x10] sm:$0xff]
      %v5117 = vld [vmem:[%s2 + $0x18] sm:$0xff]
      %v5118 = vld [vmem:[%s2 + $0x20] sm:$0xff]
      %v5119 = vld [vmem:[%s2 + $0x28] sm:$0xff]
      %v5120 = vld [vmem:[%s2 + $0x30] sm:$0xff]
      %v5121 = vld [vmem:[%s2 + $0x38] sm:$0xff]
      %v5122 = vld [vmem:[%s2 + $0x40] sm:$0xff]
      %v5123 = vld [vmem:[%s2 + $0x48] sm:$0xff]
      %v5124 = vld [vmem:[%s2 + $0x50] sm:$0xff]
      %v5125 = vld [vmem:[%s2 + $0x58] sm:$0xff]
      %v5126 = vld [vmem:[%s2 + $0x60] sm:$0xff]
      %v5127 = vld [vmem:[%s2 + $0x68] sm:$0xff]
      %v5128 = vld [vmem:[%s2 + $0x70] sm:$0xff]
      %v5129 = vld [vmem:[%s2 + $0x78] sm:$0xff]
      %s5130 = scalar_lea.vmem [#allocation2], 217
      %v5131 = vld [vmem:[%s5130] ss:$2 sm:$0xff]
      %s5132 = scalar_lea.vmem [#allocation2], 233
      %v5133 = vld [vmem:[%s5132] ss:$2 sm:$0xff]
      %s5134 = scalar_lea.vmem [#allocation2], 249
      %v5135 = vld [vmem:[%s5134] ss:$2 sm:$0xff]
      %s5136 = scalar_lea.vmem [#allocation2], 265
      %v5137 = vld [vmem:[%s5136] ss:$2 sm:$0xff]
      %v5138 = vld [vmem:[%s794] sm:$0xff]
      %v5139 = vld [vmem:[%s794 + $0x8] sm:$0xff]
      %v5140 = vld [vmem:[%s794 + $0x10] sm:$0xff]
      %v5141 = vld [vmem:[%s794 + $0x18] sm:$0xff]
      %v5142 = vld [vmem:[%s794 + $0x20] sm:$0xff]
      %v5143 = vld [vmem:[%s794 + $0x28] sm:$0xff]
      %v5144 = vld [vmem:[%s794 + $0x30] sm:$0xff]
      %v5145 = vld [vmem:[%s794 + $0x38] sm:$0xff]
      %v5146 = vld [vmem:[%s794 + $0x40] sm:$0xff]
      %v5147 = vld [vmem:[%s794 + $0x48] sm:$0xff]
      %v5148 = vld [vmem:[%s794 + $0x50] sm:$0xff]
      %v5149 = vld [vmem:[%s794 + $0x58] sm:$0xff]
      %v5150 = vld [vmem:[%s794 + $0x60] sm:$0xff]
      %v5151 = vld [vmem:[%s794 + $0x68] sm:$0xff]
      %v5152 = vld [vmem:[%s794 + $0x70] sm:$0xff]
      %v5153 = vld [vmem:[%s794 + $0x78] sm:$0xff]
      %5154 = vmatprep.subr.mxu0 0.0
      %5155 = vmatpush1.msra.mxu0 %v5138
      %5156 = vmatprep.subr.mxu0 0.0
      %5157 = vmatpush1.msra.mxu0 %v5139
      %5158 = vmatprep.subr.mxu0 0.0
      %5159 = vmatpush1.msra.mxu0 %v5140
      %5160 = vmatprep.subr.mxu0 0.0
      %5161 = vmatpush1.msra.mxu0 %v5141
      %5162 = vmatprep.subr.mxu0 0.0
      %5163 = vmatpush1.msra.mxu0 %v5142
      %5164 = vmatprep.subr.mxu0 0.0
      %5165 = vmatpush1.msra.mxu0 %v5143
      %5166 = vmatprep.subr.mxu0 0.0
      %5167 = vmatpush1.msra.mxu0 %v5144
      %5168 = vmatprep.subr.mxu0 0.0
      %5169 = vmatpush1.msra.mxu0 %v5145
      %5170 = vmatprep.subr.mxu0 0.0
      %5171 = vmatpush1.msra.mxu0 %v5146
      %5172 = vmatprep.subr.mxu0 0.0
      %5173 = vmatpush1.msra.mxu0 %v5147
      %5174 = vmatprep.subr.mxu0 0.0
      %5175 = vmatpush1.msra.mxu0 %v5148
      %5176 = vmatprep.subr.mxu0 0.0
      %5177 = vmatpush1.msra.mxu0 %v5149
      %5178 = vmatprep.subr.mxu0 0.0
      %5179 = vmatpush1.msra.mxu0 %v5150
      %5180 = vmatprep.subr.mxu0 0.0
      %5181 = vmatpush1.msra.mxu0 %v5151
      %5182 = vmatprep.subr.mxu0 0.0
      %5183 = vmatpush1.msra.mxu0 %v5152
      %5184 = vmatprep.subr.mxu0 0.0
      %5185 = vmatpush1.msra.mxu0 %v5153
      %5186 = vmatprep.subr.mxu0 0.0
      %5187 = vmatpush1.msra.mxu0 0.0
      %5188 = vmatprep.subr.mxu0 0.0
      %5189 = vmatpush1.msra.mxu0 0.0
      %5190 = vmatprep.subr.mxu0 0.0
      %5191 = vmatpush1.msra.mxu0 0.0
      %5192 = vmatprep.subr.mxu0 0.0
      %5193 = vmatpush1.msra.mxu0 0.0
      %5194 = vmatprep.subr.mxu0 0.0
      %5195 = vmatpush1.msra.mxu0 0.0
      %5196 = vmatprep.subr.mxu0 0.0
      %5197 = vmatpush1.msra.mxu0 0.0
      %5198 = vmatprep.subr.mxu0 0.0
      %5199 = vmatpush1.msra.mxu0 0.0
      %5200 = vmatprep.subr.mxu0 0.0
      %5201 = vmatpush1.msra.mxu0 0.0
      %5202 = vmatprep.subr.mxu0 0.0
      %5203 = vmatpush1.msra.mxu0 0.0
      %5204 = vmatprep.subr.mxu0 0.0
      %5205 = vmatpush1.msra.mxu0 0.0
      %5206 = vmatprep.subr.mxu0 0.0
      %5207 = vmatpush1.msra.mxu0 0.0
      %5208 = vmatprep.subr.mxu0 0.0
      %5209 = vmatpush1.msra.mxu0 0.0
      %5210 = vmatprep.subr.mxu0 0.0
      %5211 = vmatpush1.msra.mxu0 0.0
      %5212 = vmatprep.subr.mxu0 0.0
      %5213 = vmatpush1.msra.mxu0 0.0
      %5214 = vmatprep.subr.mxu0 0.0
      %5215 = vmatpush1.msra.mxu0 0.0
      %5216 = vmatprep.subr.mxu0 0.0
      %5217 = vmatpush1.msra.mxu0 0.0
      %5218 = vmatprep.mubr.f32.mxu0 0.0
      %5219 = vmatmul.mubr.f32.gmra.mrb[0].mxu0 %v5131
      %v5220 = vpop.f32.mrb[0].mxu0
      %v5221 = vadd.f32 0.0, %v5220
      %v5222 = vpop.f32.mrb[0].mxu0
      %5223 = vmatprep.mubr.f32.mxu0 0.0
      %5224 = vmatmul.mubr.f32.gmra.mrb[0].mxu0 %v5133
      %v5225 = vpop.f32.mrb[0].mxu0
      %v5226 = vadd.f32 0.0, %v5225
      %v5227 = vpop.f32.mrb[0].mxu0
      %5228 = vmatprep.mubr.f32.mxu0 0.0
      %5229 = vmatmul.mubr.f32.gmra.mrb[0].mxu0 %v5135
      %v5230 = vpop.f32.mrb[0].mxu0
      %v5231 = vadd.f32 0.0, %v5230
      %v5232 = vpop.f32.mrb[0].mxu0
      %5233 = vmatprep.mubr.f32.mxu0 0.0
      %5234 = vmatmul.mubr.f32.gmra.mrb[0].mxu0 %v5137
      %v5235 = vpop.f32.mrb[0].mxu0
      %v5236 = vadd.f32 0.0, %v5235
      %v5237 = vpop.f32.mrb[0].mxu0
      %5238 = vdwg.mxu0
      %5239 = vmatprep.subr.mxu0 0.0
      %5240 = vmatpush1.msra.mxu0 %v5114
      %5241 = vmatprep.subr.mxu0 0.0
      %5242 = vmatpush1.msra.mxu0 %v5115
      %5243 = vmatprep.subr.mxu0 0.0
      %5244 = vmatpush1.msra.mxu0 %v5116
      %5245 = vmatprep.subr.mxu0 0.0
      %5246 = vmatpush1.msra.mxu0 %v5117
      %5247 = vmatprep.subr.mxu0 0.0
      %5248 = vmatpush1.msra.mxu0 %v5118
      %5249 = vmatprep.subr.mxu0 0.0
      %5250 = vmatpush1.msra.mxu0 %v5119
      %5251 = vmatprep.subr.mxu0 0.0
      %5252 = vmatpush1.msra.mxu0 %v5120
      %5253 = vmatprep.subr.mxu0 0.0
      %5254 = vmatpush1.msra.mxu0 %v5121
      %5255 = vmatprep.subr.mxu0 0.0
      %5256 = vmatpush1.msra.mxu0 %v5122
      %5257 = vmatprep.subr.mxu0 0.0
      %5258 = vmatpush1.msra.mxu0 %v5123
      %5259 = vmatprep.subr.mxu0 0.0
      %5260 = vmatpush1.msra.mxu0 %v5124
      %5261 = vmatprep.subr.mxu0 0.0
      %5262 = vmatpush1.msra.mxu0 %v5125
      %5263 = vmatprep.subr.mxu0 0.0
      %5264 = vmatpush1.msra.mxu0 %v5126
      %5265 = vmatprep.subr.mxu0 0.0
      %5266 = vmatpush1.msra.mxu0 %v5127
      %5267 = vmatprep.subr.mxu0 0.0
      %5268 = vmatpush1.msra.mxu0 %v5128
      %5269 = vmatprep.subr.mxu0 0.0
      %5270 = vmatpush1.msra.mxu0 %v5129
      %5271 = vmatprep.subr.mxu0 0.0
      %5272 = vmatpush1.msra.mxu0 0.0
      %5273 = vmatprep.subr.mxu0 0.0
      %5274 = vmatpush1.msra.mxu0 0.0
      %5275 = vmatprep.subr.mxu0 0.0
      %5276 = vmatpush1.msra.mxu0 0.0
      %5277 = vmatprep.subr.mxu0 0.0
      %5278 = vmatpush1.msra.mxu0 0.0
      %5279 = vmatprep.subr.mxu0 0.0
      %5280 = vmatpush1.msra.mxu0 0.0
      %5281 = vmatprep.subr.mxu0 0.0
      %5282 = vmatpush1.msra.mxu0 0.0
      %5283 = vmatprep.subr.mxu0 0.0
      %5284 = vmatpush1.msra.mxu0 0.0
      %5285 = vmatprep.subr.mxu0 0.0
      %5286 = vmatpush1.msra.mxu0 0.0
      %5287 = vmatprep.subr.mxu0 0.0
      %5288 = vmatpush1.msra.mxu0 0.0
      %5289 = vmatprep.subr.mxu0 0.0
      %5290 = vmatpush1.msra.mxu0 0.0
      %5291 = vmatprep.subr.mxu0 0.0
      %5292 = vmatpush1.msra.mxu0 0.0
      %5293 = vmatprep.subr.mxu0 0.0
      %5294 = vmatpush1.msra.mxu0 0.0
      %5295 = vmatprep.subr.mxu0 0.0
      %5296 = vmatpush1.msra.mxu0 0.0
      %5297 = vmatprep.subr.mxu0 0.0
      %5298 = vmatpush1.msra.mxu0 0.0
      %5299 = vmatprep.subr.mxu0 0.0
      %5300 = vmatpush1.msra.mxu0 0.0
      %5301 = vmatprep.subr.mxu0 0.0
      %5302 = vmatpush1.msra.mxu0 0.0
      %5303 = vmatprep.mubr.f32.mxu0 0.0
      %5304 = vmatmul.mubr.f32.gmra.mrb[0].mxu0 %v5107
      %v5305 = vpop.f32.mrb[0].mxu0
      %v5306 = vadd.f32 %v5221, %v5305
      %v5307 = vpop.f32.mrb[0].mxu0
      %5308 = vmatprep.mubr.f32.mxu0 0.0
      %5309 = vmatmul.mubr.f32.gmra.mrb[0].mxu0 %v5109
      %v5310 = vpop.f32.mrb[0].mxu0
      %v5311 = vadd.f32 %v5226, %v5310
      %v5312 = vpop.f32.mrb[0].mxu0
      %5313 = vmatprep.mubr.f32.mxu0 0.0
      %5314 = vmatmul.mubr.f32.gmra.mrb[0].mxu0 %v5111
      %v5315 = vpop.f32.mrb[0].mxu0
      %v5316 = vadd.f32 %v5231, %v5315
      %v5317 = vpop.f32.mrb[0].mxu0
      %5318 = vmatprep.mubr.f32.mxu0 0.0
      %5319 = vmatmul.mubr.f32.gmra.mrb[0].mxu0 %v5113
      %v5320 = vpop.f32.mrb[0].mxu0
      %v5321 = vadd.f32 %v5236, %v5320
      %v5322 = vpop.f32.mrb[0].mxu0
      %5323 = vdwg.mxu0
      %s5324 = scalar_lea.vmem [#allocation2], 218
      %v5325 = vld [vmem:[%s5324] ss:$2 sm:$0xff]
      %s5326 = scalar_lea.vmem [#allocation2], 234
      %v5327 = vld [vmem:[%s5326] ss:$2 sm:$0xff]
      %s5328 = scalar_lea.vmem [#allocation2], 250
      %v5329 = vld [vmem:[%s5328] ss:$2 sm:$0xff]
      %s5330 = scalar_lea.vmem [#allocation2], 266
      %v5331 = vld [vmem:[%s5330] ss:$2 sm:$0xff]
      %v5332 = vld [vmem:[%s989] sm:$0xff]
      %v5333 = vld [vmem:[%s989 + $0x8] sm:$0xff]
      %v5334 = vld [vmem:[%s989 + $0x10] sm:$0xff]
      %v5335 = vld [vmem:[%s989 + $0x18] sm:$0xff]
      %v5336 = vld [vmem:[%s989 + $0x20] sm:$0xff]
      %v5337 = vld [vmem:[%s989 + $0x28] sm:$0xff]
      %v5338 = vld [vmem:[%s989 + $0x30] sm:$0xff]
      %v5339 = vld [vmem:[%s989 + $0x38] sm:$0xff]
      %v5340 = vld [vmem:[%s989 + $0x40] sm:$0xff]
      %v5341 = vld [vmem:[%s989 + $0x48] sm:$0xff]
      %v5342 = vld [vmem:[%s989 + $0x50] sm:$0xff]
      %v5343 = vld [vmem:[%s989 + $0x58] sm:$0xff]
      %v5344 = vld [vmem:[%s989 + $0x60] sm:$0xff]
      %v5345 = vld [vmem:[%s989 + $0x68] sm:$0xff]
      %v5346 = vld [vmem:[%s989 + $0x70] sm:$0xff]
      %v5347 = vld [vmem:[%s989 + $0x78] sm:$0xff]
      %5348 = vmatprep.subr.mxu0 0.0
      %5349 = vmatpush1.msra.mxu0 %v5332
      %5350 = vmatprep.subr.mxu0 0.0
      %5351 = vmatpush1.msra.mxu0 %v5333
      %5352 = vmatprep.subr.mxu0 0.0
      %5353 = vmatpush1.msra.mxu0 %v5334
      %5354 = vmatprep.subr.mxu0 0.0
      %5355 = vmatpush1.msra.mxu0 %v5335
      %5356 = vmatprep.subr.mxu0 0.0
      %5357 = vmatpush1.msra.mxu0 %v5336
      %5358 = vmatprep.subr.mxu0 0.0
      %5359 = vmatpush1.msra.mxu0 %v5337
      %5360 = vmatprep.subr.mxu0 0.0
      %5361 = vmatpush1.msra.mxu0 %v5338
      %5362 = vmatprep.subr.mxu0 0.0
      %5363 = vmatpush1.msra.mxu0 %v5339
      %5364 = vmatprep.subr.mxu0 0.0
      %5365 = vmatpush1.msra.mxu0 %v5340
      %5366 = vmatprep.subr.mxu0 0.0
      %5367 = vmatpush1.msra.mxu0 %v5341
      %5368 = vmatprep.subr.mxu0 0.0
      %5369 = vmatpush1.msra.mxu0 %v5342
      %5370 = vmatprep.subr.mxu0 0.0
      %5371 = vmatpush1.msra.mxu0 %v5343
      %5372 = vmatprep.subr.mxu0 0.0
      %5373 = vmatpush1.msra.mxu0 %v5344
      %5374 = vmatprep.subr.mxu0 0.0
      %5375 = vmatpush1.msra.mxu0 %v5345
      %5376 = vmatprep.subr.mxu0 0.0
      %5377 = vmatpush1.msra.mxu0 %v5346
      %5378 = vmatprep.subr.mxu0 0.0
      %5379 = vmatpush1.msra.mxu0 %v5347
      %5380 = vmatprep.subr.mxu0 0.0
      %5381 = vmatpush1.msra.mxu0 0.0
      %5382 = vmatprep.subr.mxu0 0.0
      %5383 = vmatpush1.msra.mxu0 0.0
      %5384 = vmatprep.subr.mxu0 0.0
      %5385 = vmatpush1.msra.mxu0 0.0
      %5386 = vmatprep.subr.mxu0 0.0
      %5387 = vmatpush1.msra.mxu0 0.0
      %5388 = vmatprep.subr.mxu0 0.0
      %5389 = vmatpush1.msra.mxu0 0.0
      %5390 = vmatprep.subr.mxu0 0.0
      %5391 = vmatpush1.msra.mxu0 0.0
      %5392 = vmatprep.subr.mxu0 0.0
      %5393 = vmatpush1.msra.mxu0 0.0
      %5394 = vmatprep.subr.mxu0 0.0
      %5395 = vmatpush1.msra.mxu0 0.0
      %5396 = vmatprep.subr.mxu0 0.0
      %5397 = vmatpush1.msra.mxu0 0.0
      %5398 = vmatprep.subr.mxu0 0.0
      %5399 = vmatpush1.msra.mxu0 0.0
      %5400 = vmatprep.subr.mxu0 0.0
      %5401 = vmatpush1.msra.mxu0 0.0
      %5402 = vmatprep.subr.mxu0 0.0
      %5403 = vmatpush1.msra.mxu0 0.0
      %5404 = vmatprep.subr.mxu0 0.0
      %5405 = vmatpush1.msra.mxu0 0.0
      %5406 = vmatprep.subr.mxu0 0.0
      %5407 = vmatpush1.msra.mxu0 0.0
      %5408 = vmatprep.subr.mxu0 0.0
      %5409 = vmatpush1.msra.mxu0 0.0
      %5410 = vmatprep.subr.mxu0 0.0
      %5411 = vmatpush1.msra.mxu0 0.0
      %5412 = vmatprep.mubr.f32.mxu0 0.0
      %5413 = vmatmul.mubr.f32.gmra.mrb[0].mxu0 %v5325
      %v5414 = vpop.f32.mrb[0].mxu0
      %v5415 = vadd.f32 0.0, %v5414
      %v5416 = vpop.f32.mrb[0].mxu0
      %5417 = vmatprep.mubr.f32.mxu0 0.0
      %5418 = vmatmul.mubr.f32.gmra.mrb[0].mxu0 %v5327
      %v5419 = vpop.f32.mrb[0].mxu0
      %v5420 = vadd.f32 0.0, %v5419
      %v5421 = vpop.f32.mrb[0].mxu0
      %5422 = vmatprep.mubr.f32.mxu0 0.0
      %5423 = vmatmul.mubr.f32.gmra.mrb[0].mxu0 %v5329
      %v5424 = vpop.f32.mrb[0].mxu0
      %v5425 = vadd.f32 0.0, %v5424
      %v5426 = vpop.f32.mrb[0].mxu0
      %5427 = vmatprep.mubr.f32.mxu0 0.0
      %5428 = vmatmul.mubr.f32.gmra.mrb[0].mxu0 %v5331
      %v5429 = vpop.f32.mrb[0].mxu0
      %v5430 = vadd.f32 0.0, %v5429
      %v5431 = vpop.f32.mrb[0].mxu0
      %5432 = vdwg.mxu0
      %v5433 = vadd.f32 %v5306, %v5415
      %v5434 = vadd.f32 %v5311, %v5420
      %v5435 = vadd.f32 %v5316, %v5425
      %v5436 = vadd.f32 %v5321, %v5430
      %s5437 = scalar_lea.vmem [#allocation2], 219
      %v5438 = vld [vmem:[%s5437] ss:$2 sm:$0xff]
      %s5439 = scalar_lea.vmem [#allocation2], 235
      %v5440 = vld [vmem:[%s5439] ss:$2 sm:$0xff]
      %s5441 = scalar_lea.vmem [#allocation2], 251
      %v5442 = vld [vmem:[%s5441] ss:$2 sm:$0xff]
      %s5443 = scalar_lea.vmem [#allocation2], 267
      %v5444 = vld [vmem:[%s5443] ss:$2 sm:$0xff]
      %v5445 = vld [vmem:[%s1103] sm:$0xff]
      %v5446 = vld [vmem:[%s1103 + $0x8] sm:$0xff]
      %v5447 = vld [vmem:[%s1103 + $0x10] sm:$0xff]
      %v5448 = vld [vmem:[%s1103 + $0x18] sm:$0xff]
      %v5449 = vld [vmem:[%s1103 + $0x20] sm:$0xff]
      %v5450 = vld [vmem:[%s1103 + $0x28] sm:$0xff]
      %v5451 = vld [vmem:[%s1103 + $0x30] sm:$0xff]
      %v5452 = vld [vmem:[%s1103 + $0x38] sm:$0xff]
      %v5453 = vld [vmem:[%s1103 + $0x40] sm:$0xff]
      %v5454 = vld [vmem:[%s1103 + $0x48] sm:$0xff]
      %v5455 = vld [vmem:[%s1103 + $0x50] sm:$0xff]
      %v5456 = vld [vmem:[%s1103 + $0x58] sm:$0xff]
      %v5457 = vld [vmem:[%s1103 + $0x60] sm:$0xff]
      %v5458 = vld [vmem:[%s1103 + $0x68] sm:$0xff]
      %v5459 = vld [vmem:[%s1103 + $0x70] sm:$0xff]
      %v5460 = vld [vmem:[%s1103 + $0x78] sm:$0xff]
      %5461 = vmatprep.subr.mxu0 0.0
      %5462 = vmatpush1.msra.mxu0 %v5445
      %5463 = vmatprep.subr.mxu0 0.0
      %5464 = vmatpush1.msra.mxu0 %v5446
      %5465 = vmatprep.subr.mxu0 0.0
      %5466 = vmatpush1.msra.mxu0 %v5447
      %5467 = vmatprep.subr.mxu0 0.0
      %5468 = vmatpush1.msra.mxu0 %v5448
      %5469 = vmatprep.subr.mxu0 0.0
      %5470 = vmatpush1.msra.mxu0 %v5449
      %5471 = vmatprep.subr.mxu0 0.0
      %5472 = vmatpush1.msra.mxu0 %v5450
      %5473 = vmatprep.subr.mxu0 0.0
      %5474 = vmatpush1.msra.mxu0 %v5451
      %5475 = vmatprep.subr.mxu0 0.0
      %5476 = vmatpush1.msra.mxu0 %v5452
      %5477 = vmatprep.subr.mxu0 0.0
      %5478 = vmatpush1.msra.mxu0 %v5453
      %5479 = vmatprep.subr.mxu0 0.0
      %5480 = vmatpush1.msra.mxu0 %v5454
      %5481 = vmatprep.subr.mxu0 0.0
      %5482 = vmatpush1.msra.mxu0 %v5455
      %5483 = vmatprep.subr.mxu0 0.0
      %5484 = vmatpush1.msra.mxu0 %v5456
      %5485 = vmatprep.subr.mxu0 0.0
      %5486 = vmatpush1.msra.mxu0 %v5457
      %5487 = vmatprep.subr.mxu0 0.0
      %5488 = vmatpush1.msra.mxu0 %v5458
      %5489 = vmatprep.subr.mxu0 0.0
      %5490 = vmatpush1.msra.mxu0 %v5459
      %5491 = vmatprep.subr.mxu0 0.0
      %5492 = vmatpush1.msra.mxu0 %v5460
      %5493 = vmatprep.subr.mxu0 0.0
      %5494 = vmatpush1.msra.mxu0 0.0
      %5495 = vmatprep.subr.mxu0 0.0
      %5496 = vmatpush1.msra.mxu0 0.0
      %5497 = vmatprep.subr.mxu0 0.0
      %5498 = vmatpush1.msra.mxu0 0.0
      %5499 = vmatprep.subr.mxu0 0.0
      %5500 = vmatpush1.msra.mxu0 0.0
      %5501 = vmatprep.subr.mxu0 0.0
      %5502 = vmatpush1.msra.mxu0 0.0
      %5503 = vmatprep.subr.mxu0 0.0
      %5504 = vmatpush1.msra.mxu0 0.0
      %5505 = vmatprep.subr.mxu0 0.0
      %5506 = vmatpush1.msra.mxu0 0.0
      %5507 = vmatprep.subr.mxu0 0.0
      %5508 = vmatpush1.msra.mxu0 0.0
      %5509 = vmatprep.subr.mxu0 0.0
      %5510 = vmatpush1.msra.mxu0 0.0
      %5511 = vmatprep.subr.mxu0 0.0
      %5512 = vmatpush1.msra.mxu0 0.0
      %5513 = vmatprep.subr.mxu0 0.0
      %5514 = vmatpush1.msra.mxu0 0.0
      %5515 = vmatprep.subr.mxu0 0.0
      %5516 = vmatpush1.msra.mxu0 0.0
      %5517 = vmatprep.subr.mxu0 0.0
      %5518 = vmatpush1.msra.mxu0 0.0
      %5519 = vmatprep.subr.mxu0 0.0
      %5520 = vmatpush1.msra.mxu0 0.0
      %5521 = vmatprep.subr.mxu0 0.0
      %5522 = vmatpush1.msra.mxu0 0.0
      %5523 = vmatprep.subr.mxu0 0.0
      %5524 = vmatpush1.msra.mxu0 0.0
      %5525 = vmatprep.mubr.f32.mxu0 0.0
      %5526 = vmatmul.mubr.f32.gmra.mrb[0].mxu0 %v5438
      %v5527 = vpop.f32.mrb[0].mxu0
      %v5528 = vadd.f32 0.0, %v5527
      %v5529 = vpop.f32.mrb[0].mxu0
      %5530 = vmatprep.mubr.f32.mxu0 0.0
      %5531 = vmatmul.mubr.f32.gmra.mrb[0].mxu0 %v5440
      %v5532 = vpop.f32.mrb[0].mxu0
      %v5533 = vadd.f32 0.0, %v5532
      %v5534 = vpop.f32.mrb[0].mxu0
      %5535 = vmatprep.mubr.f32.mxu0 0.0
      %5536 = vmatmul.mubr.f32.gmra.mrb[0].mxu0 %v5442
      %v5537 = vpop.f32.mrb[0].mxu0
      %v5538 = vadd.f32 0.0, %v5537
      %v5539 = vpop.f32.mrb[0].mxu0
      %5540 = vmatprep.mubr.f32.mxu0 0.0
      %5541 = vmatmul.mubr.f32.gmra.mrb[0].mxu0 %v5444
      %v5542 = vpop.f32.mrb[0].mxu0
      %v5543 = vadd.f32 0.0, %v5542
      %v5544 = vpop.f32.mrb[0].mxu0
      %5545 = vdwg.mxu0
      %v5546 = vadd.f32 %v5433, %v5528
      %v5547 = vadd.f32 %v5434, %v5533
      %v5548 = vadd.f32 %v5435, %v5538
      %v5549 = vadd.f32 %v5436, %v5543
      %s5550 = scalar_lea.vmem [#allocation2], 220
      %v5551 = vld [vmem:[%s5550] ss:$2 sm:$0xff]
      %s5552 = scalar_lea.vmem [#allocation2], 236
      %v5553 = vld [vmem:[%s5552] ss:$2 sm:$0xff]
      %s5554 = scalar_lea.vmem [#allocation2], 252
      %v5555 = vld [vmem:[%s5554] ss:$2 sm:$0xff]
      %s5556 = scalar_lea.vmem [#allocation2], 268
      %v5557 = vld [vmem:[%s5556] ss:$2 sm:$0xff]
      %v5558 = vld [vmem:[%s1217] sm:$0xff]
      %v5559 = vld [vmem:[%s1217 + $0x8] sm:$0xff]
      %v5560 = vld [vmem:[%s1217 + $0x10] sm:$0xff]
      %v5561 = vld [vmem:[%s1217 + $0x18] sm:$0xff]
      %v5562 = vld [vmem:[%s1217 + $0x20] sm:$0xff]
      %v5563 = vld [vmem:[%s1217 + $0x28] sm:$0xff]
      %v5564 = vld [vmem:[%s1217 + $0x30] sm:$0xff]
      %v5565 = vld [vmem:[%s1217 + $0x38] sm:$0xff]
      %v5566 = vld [vmem:[%s1217 + $0x40] sm:$0xff]
      %v5567 = vld [vmem:[%s1217 + $0x48] sm:$0xff]
      %v5568 = vld [vmem:[%s1217 + $0x50] sm:$0xff]
      %v5569 = vld [vmem:[%s1217 + $0x58] sm:$0xff]
      %v5570 = vld [vmem:[%s1217 + $0x60] sm:$0xff]
      %v5571 = vld [vmem:[%s1217 + $0x68] sm:$0xff]
      %v5572 = vld [vmem:[%s1217 + $0x70] sm:$0xff]
      %v5573 = vld [vmem:[%s1217 + $0x78] sm:$0xff]
      %5574 = vmatprep.subr.mxu0 0.0
      %5575 = vmatpush1.msra.mxu0 %v5558
      %5576 = vmatprep.subr.mxu0 0.0
      %5577 = vmatpush1.msra.mxu0 %v5559
      %5578 = vmatprep.subr.mxu0 0.0
      %5579 = vmatpush1.msra.mxu0 %v5560
      %5580 = vmatprep.subr.mxu0 0.0
      %5581 = vmatpush1.msra.mxu0 %v5561
      %5582 = vmatprep.subr.mxu0 0.0
      %5583 = vmatpush1.msra.mxu0 %v5562
      %5584 = vmatprep.subr.mxu0 0.0
      %5585 = vmatpush1.msra.mxu0 %v5563
      %5586 = vmatprep.subr.mxu0 0.0
      %5587 = vmatpush1.msra.mxu0 %v5564
      %5588 = vmatprep.subr.mxu0 0.0
      %5589 = vmatpush1.msra.mxu0 %v5565
      %5590 = vmatprep.subr.mxu0 0.0
      %5591 = vmatpush1.msra.mxu0 %v5566
      %5592 = vmatprep.subr.mxu0 0.0
      %5593 = vmatpush1.msra.mxu0 %v5567
      %5594 = vmatprep.subr.mxu0 0.0
      %5595 = vmatpush1.msra.mxu0 %v5568
      %5596 = vmatprep.subr.mxu0 0.0
      %5597 = vmatpush1.msra.mxu0 %v5569
      %5598 = vmatprep.subr.mxu0 0.0
      %5599 = vmatpush1.msra.mxu0 %v5570
      %5600 = vmatprep.subr.mxu0 0.0
      %5601 = vmatpush1.msra.mxu0 %v5571
      %5602 = vmatprep.subr.mxu0 0.0
      %5603 = vmatpush1.msra.mxu0 %v5572
      %5604 = vmatprep.subr.mxu0 0.0
      %5605 = vmatpush1.msra.mxu0 %v5573
      %5606 = vmatprep.subr.mxu0 0.0
      %5607 = vmatpush1.msra.mxu0 0.0
      %5608 = vmatprep.subr.mxu0 0.0
      %5609 = vmatpush1.msra.mxu0 0.0
      %5610 = vmatprep.subr.mxu0 0.0
      %5611 = vmatpush1.msra.mxu0 0.0
      %5612 = vmatprep.subr.mxu0 0.0
      %5613 = vmatpush1.msra.mxu0 0.0
      %5614 = vmatprep.subr.mxu0 0.0
      %5615 = vmatpush1.msra.mxu0 0.0
      %5616 = vmatprep.subr.mxu0 0.0
      %5617 = vmatpush1.msra.mxu0 0.0
      %5618 = vmatprep.subr.mxu0 0.0
      %5619 = vmatpush1.msra.mxu0 0.0
      %5620 = vmatprep.subr.mxu0 0.0
      %5621 = vmatpush1.msra.mxu0 0.0
      %5622 = vmatprep.subr.mxu0 0.0
      %5623 = vmatpush1.msra.mxu0 0.0
      %5624 = vmatprep.subr.mxu0 0.0
      %5625 = vmatpush1.msra.mxu0 0.0
      %5626 = vmatprep.subr.mxu0 0.0
      %5627 = vmatpush1.msra.mxu0 0.0
      %5628 = vmatprep.subr.mxu0 0.0
      %5629 = vmatpush1.msra.mxu0 0.0
      %5630 = vmatprep.subr.mxu0 0.0
      %5631 = vmatpush1.msra.mxu0 0.0
      %5632 = vmatprep.subr.mxu0 0.0
      %5633 = vmatpush1.msra.mxu0 0.0
      %5634 = vmatprep.subr.mxu0 0.0
      %5635 = vmatpush1.msra.mxu0 0.0
      %5636 = vmatprep.subr.mxu0 0.0
      %5637 = vmatpush1.msra.mxu0 0.0
      %5638 = vmatprep.mubr.f32.mxu0 0.0
      %5639 = vmatmul.mubr.f32.gmra.mrb[0].mxu0 %v5551
      %v5640 = vpop.f32.mrb[0].mxu0
      %v5641 = vadd.f32 0.0, %v5640
      %v5642 = vpop.f32.mrb[0].mxu0
      %5643 = vmatprep.mubr.f32.mxu0 0.0
      %5644 = vmatmul.mubr.f32.gmra.mrb[0].mxu0 %v5553
      %v5645 = vpop.f32.mrb[0].mxu0
      %v5646 = vadd.f32 0.0, %v5645
      %v5647 = vpop.f32.mrb[0].mxu0
      %5648 = vmatprep.mubr.f32.mxu0 0.0
      %5649 = vmatmul.mubr.f32.gmra.mrb[0].mxu0 %v5555
      %v5650 = vpop.f32.mrb[0].mxu0
      %v5651 = vadd.f32 0.0, %v5650
      %v5652 = vpop.f32.mrb[0].mxu0
      %5653 = vmatprep.mubr.f32.mxu0 0.0
      %5654 = vmatmul.mubr.f32.gmra.mrb[0].mxu0 %v5557
      %v5655 = vpop.f32.mrb[0].mxu0
      %v5656 = vadd.f32 0.0, %v5655
      %v5657 = vpop.f32.mrb[0].mxu0
      %5658 = vdwg.mxu0
      %v5659 = vadd.f32 %v5546, %v5641
      %v5660 = vadd.f32 %v5547, %v5646
      %v5661 = vadd.f32 %v5548, %v5651
      %v5662 = vadd.f32 %v5549, %v5656
      %v5663 = vld [vmem:[%s6 + $0x1] sm:$0x1]
      %v5664 = vlaneseq
      %v5665 = vshrl.u32 %v5664, 7
      %v5666 = vsub.s32 0, %v5665
      %v5667 = vrot.slane %v5663, %v5666
      %v5668 = vadd.f32 %v5659, %v5667
      %v5669 = vadd.f32 %v5660, %v5667
      %v5670 = vadd.f32 %v5661, %v5667
      %v5671 = vadd.f32 %v5662, %v5667
      %v5672 = vmul.f32 %v5668, 0.5
      %v5673 = vmul.f32 %v5669, 0.5
      %v5674 = vmul.f32 %v5670, 0.5
      %v5675 = vmul.f32 %v5671, 0.5
      %v5676 = vtanh.pop %v5672
      %v5677 = vtanh.pop %v5673
      %v5678 = vtanh.pop %v5674
      %v5679 = vtanh.pop %v5675
      %v5680 = vmul.f32 %v5676, 0.5
      %v5681 = vmul.f32 %v5677, 0.5
      %v5682 = vmul.f32 %v5678, 0.5
      %v5683 = vmul.f32 %v5679, 0.5
      %v5684 = vadd.f32 %v5680, 0.5
      %v5685 = vadd.f32 %v5681, 0.5
      %v5686 = vadd.f32 %v5682, 0.5
      %v5687 = vadd.f32 %v5683, 0.5
      %v5688 = vmul.f32 %v5668, %v5684
      %v5689 = vmul.f32 %v5669, %v5685
      %v5690 = vmul.f32 %v5670, %v5686
      %v5691 = vmul.f32 %v5671, %v5687
      %5692 = vst [vmem:[#allocation3 + $0x60] sm:$0xff] %v5688
      %5693 = vst [vmem:[#allocation3 + $0x68] sm:$0xff] %v5689
      %5694 = vst [vmem:[#allocation3 + $0x70] sm:$0xff] %v5690
      %5695 = vst [vmem:[#allocation3 + $0x78] sm:$0xff] %v5691
      %s5696 = scalar_lea.vmem [#allocation3], 96
      %v5697 = vld [vmem:[%s5696] ss:$2 sm:$0xff]
      %s5698 = scalar_lea.vmem [#allocation3], 112
      %v5699 = vld [vmem:[%s5698] ss:$2 sm:$0x7f]
      %v5700 = vld [vmem:[%s3] sm:$0xff]
      %v5701 = vld [vmem:[%s3 + $0x8] sm:$0xff]
      %v5702 = vld [vmem:[%s3 + $0x10] sm:$0xff]
      %v5703 = vld [vmem:[%s3 + $0x18] sm:$0xff]
      %v5704 = vld [vmem:[%s3 + $0x20] sm:$0xff]
      %v5705 = vld [vmem:[%s3 + $0x28] sm:$0xff]
      %v5706 = vld [vmem:[%s3 + $0x30] sm:$0xff]
      %v5707 = vld [vmem:[%s3 + $0x38] sm:$0xff]
      %v5708 = vld [vmem:[%s3 + $0x40] sm:$0xff]
      %v5709 = vld [vmem:[%s3 + $0x48] sm:$0xff]
      %v5710 = vld [vmem:[%s3 + $0x50] sm:$0xff]
      %v5711 = vld [vmem:[%s3 + $0x58] sm:$0xff]
      %v5712 = vld [vmem:[%s3 + $0x60] sm:$0xff]
      %v5713 = vld [vmem:[%s3 + $0x68] sm:$0xff]
      %v5714 = vld [vmem:[%s3 + $0x70] sm:$0xff]
      %v5715 = vld [vmem:[%s3 + $0x78] sm:$0xff]
      %s5716 = scalar_lea.vmem [#allocation3], 97
      %v5717 = vld [vmem:[%s5716] ss:$2 sm:$0xff]
      %s5718 = scalar_lea.vmem [#allocation3], 113
      %v5719 = vld [vmem:[%s5718] ss:$2 sm:$0x7f]
      %v5720 = vld [vmem:[%s1379] sm:$0xff]
      %v5721 = vld [vmem:[%s1379 + $0x8] sm:$0xff]
      %v5722 = vld [vmem:[%s1379 + $0x10] sm:$0xff]
      %v5723 = vld [vmem:[%s1379 + $0x18] sm:$0xff]
      %v5724 = vld [vmem:[%s1379 + $0x20] sm:$0xff]
      %v5725 = vld [vmem:[%s1379 + $0x28] sm:$0xff]
      %v5726 = vld [vmem:[%s1379 + $0x30] sm:$0xff]
      %v5727 = vld [vmem:[%s1379 + $0x38] sm:$0xff]
      %v5728 = vld [vmem:[%s1379 + $0x40] sm:$0xff]
      %v5729 = vld [vmem:[%s1379 + $0x48] sm:$0xff]
      %v5730 = vld [vmem:[%s1379 + $0x50] sm:$0xff]
      %v5731 = vld [vmem:[%s1379 + $0x58] sm:$0xff]
      %v5732 = vld [vmem:[%s1379 + $0x60] sm:$0xff]
      %v5733 = vld [vmem:[%s1379 + $0x68] sm:$0xff]
      %v5734 = vld [vmem:[%s1379 + $0x70] sm:$0xff]
      %v5735 = vld [vmem:[%s1379 + $0x78] sm:$0xff]
      %5736 = vmatprep.subr.mxu0 0.0
      %5737 = vmatpush1.msra.mxu0 %v5720
      %5738 = vmatprep.subr.mxu0 0.0
      %5739 = vmatpush1.msra.mxu0 %v5721
      %5740 = vmatprep.subr.mxu0 0.0
      %5741 = vmatpush1.msra.mxu0 %v5722
      %5742 = vmatprep.subr.mxu0 0.0
      %5743 = vmatpush1.msra.mxu0 %v5723
      %5744 = vmatprep.subr.mxu0 0.0
      %5745 = vmatpush1.msra.mxu0 %v5724
      %5746 = vmatprep.subr.mxu0 0.0
      %5747 = vmatpush1.msra.mxu0 %v5725
      %5748 = vmatprep.subr.mxu0 0.0
      %5749 = vmatpush1.msra.mxu0 %v5726
      %5750 = vmatprep.subr.mxu0 0.0
      %5751 = vmatpush1.msra.mxu0 %v5727
      %5752 = vmatprep.subr.mxu0 0.0
      %5753 = vmatpush1.msra.mxu0 %v5728
      %5754 = vmatprep.subr.mxu0 0.0
      %5755 = vmatpush1.msra.mxu0 %v5729
      %5756 = vmatprep.subr.mxu0 0.0
      %5757 = vmatpush1.msra.mxu0 %v5730
      %5758 = vmatprep.subr.mxu0 0.0
      %5759 = vmatpush1.msra.mxu0 %v5731
      %5760 = vmatprep.subr.mxu0 0.0
      %5761 = vmatpush1.msra.mxu0 %v5732
      %5762 = vmatprep.subr.mxu0 0.0
      %5763 = vmatpush1.msra.mxu0 %v5733
      %5764 = vmatprep.subr.mxu0 0.0
      %5765 = vmatpush1.msra.mxu0 %v5734
      %5766 = vmatprep.subr.mxu0 0.0
      %5767 = vmatpush1.msra.mxu0 %v5735
      %5768 = vmatprep.subr.mxu0 0.0
      %5769 = vmatpush1.msra.mxu0 0.0
      %5770 = vmatprep.subr.mxu0 0.0
      %5771 = vmatpush1.msra.mxu0 0.0
      %5772 = vmatprep.subr.mxu0 0.0
      %5773 = vmatpush1.msra.mxu0 0.0
      %5774 = vmatprep.subr.mxu0 0.0
      %5775 = vmatpush1.msra.mxu0 0.0
      %5776 = vmatprep.subr.mxu0 0.0
      %5777 = vmatpush1.msra.mxu0 0.0
      %5778 = vmatprep.subr.mxu0 0.0
      %5779 = vmatpush1.msra.mxu0 0.0
      %5780 = vmatprep.subr.mxu0 0.0
      %5781 = vmatpush1.msra.mxu0 0.0
      %5782 = vmatprep.subr.mxu0 0.0
      %5783 = vmatpush1.msra.mxu0 0.0
      %5784 = vmatprep.subr.mxu0 0.0
      %5785 = vmatpush1.msra.mxu0 0.0
      %5786 = vmatprep.subr.mxu0 0.0
      %5787 = vmatpush1.msra.mxu0 0.0
      %5788 = vmatprep.subr.mxu0 0.0
      %5789 = vmatpush1.msra.mxu0 0.0
      %5790 = vmatprep.subr.mxu0 0.0
      %5791 = vmatpush1.msra.mxu0 0.0
      %5792 = vmatprep.subr.mxu0 0.0
      %5793 = vmatpush1.msra.mxu0 0.0
      %5794 = vmatprep.subr.mxu0 0.0
      %5795 = vmatpush1.msra.mxu0 0.0
      %5796 = vmatprep.subr.mxu0 0.0
      %5797 = vmatpush1.msra.mxu0 0.0
      %5798 = vmatprep.subr.mxu0 0.0
      %5799 = vmatpush1.msra.mxu0 0.0
      %5800 = vmatprep.mubr.f32.mxu0 0.0
      %5801 = vmatmul.mubr.f32.gmra.mrb[0].mxu0 %v5717
      %v5802 = vpop.f32.mrb[0].mxu0
      %v5803 = vadd.f32 0.0, %v5802
      %v5804 = vpop.f32.mrb[0].mxu0
      %5805 = vmatprep.mubr.f32.mxu0 0.0
      %5806 = vmatmul.mubr.f32.gmra.mrb[0].mxu0 %v5719
      %v5807 = vpop.f32.mrb[0].mxu0
      %v5808 = vadd.f32 0.0, %v5807
      %v5809 = vpop.f32.mrb[0].mxu0
      %5810 = vdwg.mxu0
      %5811 = vmatprep.subr.mxu0 0.0
      %5812 = vmatpush1.msra.mxu0 %v5700
      %5813 = vmatprep.subr.mxu0 0.0
      %5814 = vmatpush1.msra.mxu0 %v5701
      %5815 = vmatprep.subr.mxu0 0.0
      %5816 = vmatpush1.msra.mxu0 %v5702
      %5817 = vmatprep.subr.mxu0 0.0
      %5818 = vmatpush1.msra.mxu0 %v5703
      %5819 = vmatprep.subr.mxu0 0.0
      %5820 = vmatpush1.msra.mxu0 %v5704
      %5821 = vmatprep.subr.mxu0 0.0
      %5822 = vmatpush1.msra.mxu0 %v5705
      %5823 = vmatprep.subr.mxu0 0.0
      %5824 = vmatpush1.msra.mxu0 %v5706
      %5825 = vmatprep.subr.mxu0 0.0
      %5826 = vmatpush1.msra.mxu0 %v5707
      %5827 = vmatprep.subr.mxu0 0.0
      %5828 = vmatpush1.msra.mxu0 %v5708
      %5829 = vmatprep.subr.mxu0 0.0
      %5830 = vmatpush1.msra.mxu0 %v5709
      %5831 = vmatprep.subr.mxu0 0.0
      %5832 = vmatpush1.msra.mxu0 %v5710
      %5833 = vmatprep.subr.mxu0 0.0
      %5834 = vmatpush1.msra.mxu0 %v5711
      %5835 = vmatprep.subr.mxu0 0.0
      %5836 = vmatpush1.msra.mxu0 %v5712
      %5837 = vmatprep.subr.mxu0 0.0
      %5838 = vmatpush1.msra.mxu0 %v5713
      %5839 = vmatprep.subr.mxu0 0.0
      %5840 = vmatpush1.msra.mxu0 %v5714
      %5841 = vmatprep.subr.mxu0 0.0
      %5842 = vmatpush1.msra.mxu0 %v5715
      %5843 = vmatprep.subr.mxu0 0.0
      %5844 = vmatpush1.msra.mxu0 0.0
      %5845 = vmatprep.subr.mxu0 0.0
      %5846 = vmatpush1.msra.mxu0 0.0
      %5847 = vmatprep.subr.mxu0 0.0
      %5848 = vmatpush1.msra.mxu0 0.0
      %5849 = vmatprep.subr.mxu0 0.0
      %5850 = vmatpush1.msra.mxu0 0.0
      %5851 = vmatprep.subr.mxu0 0.0
      %5852 = vmatpush1.msra.mxu0 0.0
      %5853 = vmatprep.subr.mxu0 0.0
      %5854 = vmatpush1.msra.mxu0 0.0
      %5855 = vmatprep.subr.mxu0 0.0
      %5856 = vmatpush1.msra.mxu0 0.0
      %5857 = vmatprep.subr.mxu0 0.0
      %5858 = vmatpush1.msra.mxu0 0.0
      %5859 = vmatprep.subr.mxu0 0.0
      %5860 = vmatpush1.msra.mxu0 0.0
      %5861 = vmatprep.subr.mxu0 0.0
      %5862 = vmatpush1.msra.mxu0 0.0
      %5863 = vmatprep.subr.mxu0 0.0
      %5864 = vmatpush1.msra.mxu0 0.0
      %5865 = vmatprep.subr.mxu0 0.0
      %5866 = vmatpush1.msra.mxu0 0.0
      %5867 = vmatprep.subr.mxu0 0.0
      %5868 = vmatpush1.msra.mxu0 0.0
      %5869 = vmatprep.subr.mxu0 0.0
      %5870 = vmatpush1.msra.mxu0 0.0
      %5871 = vmatprep.subr.mxu0 0.0
      %5872 = vmatpush1.msra.mxu0 0.0
      %5873 = vmatprep.subr.mxu0 0.0
      %5874 = vmatpush1.msra.mxu0 0.0
      %5875 = vmatprep.mubr.f32.mxu0 0.0
      %5876 = vmatmul.mubr.f32.gmra.mrb[0].mxu0 %v5697
      %v5877 = vpop.f32.mrb[0].mxu0
      %v5878 = vadd.f32 %v5803, %v5877
      %v5879 = vpop.f32.mrb[0].mxu0
      %5880 = vmatprep.mubr.f32.mxu0 0.0
      %5881 = vmatmul.mubr.f32.gmra.mrb[0].mxu0 %v5699
      %v5882 = vpop.f32.mrb[0].mxu0
      %v5883 = vadd.f32 %v5808, %v5882
      %v5884 = vpop.f32.mrb[0].mxu0
      %5885 = vdwg.mxu0
      %s5886 = scalar_lea.vmem [#allocation3], 98
      %v5887 = vld [vmem:[%s5886] ss:$2 sm:$0xff]
      %s5888 = scalar_lea.vmem [#allocation3], 114
      %v5889 = vld [vmem:[%s5888] ss:$2 sm:$0x7f]
      %v5890 = vld [vmem:[%s1550] sm:$0xff]
      %v5891 = vld [vmem:[%s1550 + $0x8] sm:$0xff]
      %v5892 = vld [vmem:[%s1550 + $0x10] sm:$0xff]
      %v5893 = vld [vmem:[%s1550 + $0x18] sm:$0xff]
      %v5894 = vld [vmem:[%s1550 + $0x20] sm:$0xff]
      %v5895 = vld [vmem:[%s1550 + $0x28] sm:$0xff]
      %v5896 = vld [vmem:[%s1550 + $0x30] sm:$0xff]
      %v5897 = vld [vmem:[%s1550 + $0x38] sm:$0xff]
      %v5898 = vld [vmem:[%s1550 + $0x40] sm:$0xff]
      %v5899 = vld [vmem:[%s1550 + $0x48] sm:$0xff]
      %v5900 = vld [vmem:[%s1550 + $0x50] sm:$0xff]
      %v5901 = vld [vmem:[%s1550 + $0x58] sm:$0xff]
      %v5902 = vld [vmem:[%s1550 + $0x60] sm:$0xff]
      %v5903 = vld [vmem:[%s1550 + $0x68] sm:$0xff]
      %v5904 = vld [vmem:[%s1550 + $0x70] sm:$0xff]
      %v5905 = vld [vmem:[%s1550 + $0x78] sm:$0xff]
      %5906 = vmatprep.subr.mxu0 0.0
      %5907 = vmatpush1.msra.mxu0 %v5890
      %5908 = vmatprep.subr.mxu0 0.0
      %5909 = vmatpush1.msra.mxu0 %v5891
      %5910 = vmatprep.subr.mxu0 0.0
      %5911 = vmatpush1.msra.mxu0 %v5892
      %5912 = vmatprep.subr.mxu0 0.0
      %5913 = vmatpush1.msra.mxu0 %v5893
      %5914 = vmatprep.subr.mxu0 0.0
      %5915 = vmatpush1.msra.mxu0 %v5894
      %5916 = vmatprep.subr.mxu0 0.0
      %5917 = vmatpush1.msra.mxu0 %v5895
      %5918 = vmatprep.subr.mxu0 0.0
      %5919 = vmatpush1.msra.mxu0 %v5896
      %5920 = vmatprep.subr.mxu0 0.0
      %5921 = vmatpush1.msra.mxu0 %v5897
      %5922 = vmatprep.subr.mxu0 0.0
      %5923 = vmatpush1.msra.mxu0 %v5898
      %5924 = vmatprep.subr.mxu0 0.0
      %5925 = vmatpush1.msra.mxu0 %v5899
      %5926 = vmatprep.subr.mxu0 0.0
      %5927 = vmatpush1.msra.mxu0 %v5900
      %5928 = vmatprep.subr.mxu0 0.0
      %5929 = vmatpush1.msra.mxu0 %v5901
      %5930 = vmatprep.subr.mxu0 0.0
      %5931 = vmatpush1.msra.mxu0 %v5902
      %5932 = vmatprep.subr.mxu0 0.0
      %5933 = vmatpush1.msra.mxu0 %v5903
      %5934 = vmatprep.subr.mxu0 0.0
      %5935 = vmatpush1.msra.mxu0 %v5904
      %5936 = vmatprep.subr.mxu0 0.0
      %5937 = vmatpush1.msra.mxu0 %v5905
      %5938 = vmatprep.subr.mxu0 0.0
      %5939 = vmatpush1.msra.mxu0 0.0
      %5940 = vmatprep.subr.mxu0 0.0
      %5941 = vmatpush1.msra.mxu0 0.0
      %5942 = vmatprep.subr.mxu0 0.0
      %5943 = vmatpush1.msra.mxu0 0.0
      %5944 = vmatprep.subr.mxu0 0.0
      %5945 = vmatpush1.msra.mxu0 0.0
      %5946 = vmatprep.subr.mxu0 0.0
      %5947 = vmatpush1.msra.mxu0 0.0
      %5948 = vmatprep.subr.mxu0 0.0
      %5949 = vmatpush1.msra.mxu0 0.0
      %5950 = vmatprep.subr.mxu0 0.0
      %5951 = vmatpush1.msra.mxu0 0.0
      %5952 = vmatprep.subr.mxu0 0.0
      %5953 = vmatpush1.msra.mxu0 0.0
      %5954 = vmatprep.subr.mxu0 0.0
      %5955 = vmatpush1.msra.mxu0 0.0
      %5956 = vmatprep.subr.mxu0 0.0
      %5957 = vmatpush1.msra.mxu0 0.0
      %5958 = vmatprep.subr.mxu0 0.0
      %5959 = vmatpush1.msra.mxu0 0.0
      %5960 = vmatprep.subr.mxu0 0.0
      %5961 = vmatpush1.msra.mxu0 0.0
      %5962 = vmatprep.subr.mxu0 0.0
      %5963 = vmatpush1.msra.mxu0 0.0
      %5964 = vmatprep.subr.mxu0 0.0
      %5965 = vmatpush1.msra.mxu0 0.0
      %5966 = vmatprep.subr.mxu0 0.0
      %5967 = vmatpush1.msra.mxu0 0.0
      %5968 = vmatprep.subr.mxu0 0.0
      %5969 = vmatpush1.msra.mxu0 0.0
      %5970 = vmatprep.mubr.f32.mxu0 0.0
      %5971 = vmatmul.mubr.f32.gmra.mrb[0].mxu0 %v5887
      %v5972 = vpop.f32.mrb[0].mxu0
      %v5973 = vadd.f32 0.0, %v5972
      %v5974 = vpop.f32.mrb[0].mxu0
      %5975 = vmatprep.mubr.f32.mxu0 0.0
      %5976 = vmatmul.mubr.f32.gmra.mrb[0].mxu0 %v5889
      %v5977 = vpop.f32.mrb[0].mxu0
      %v5978 = vadd.f32 0.0, %v5977
      %v5979 = vpop.f32.mrb[0].mxu0
      %5980 = vdwg.mxu0
      %v5981 = vadd.f32 %v5878, %v5973
      %v5982 = vadd.f32 %v5883, %v5978
      %v5983 = vld [vmem:[%s6 + $0x2] sm:$0x1]
      %v5984 = vlaneseq
      %v5985 = vshrl.u32 %v5984, 7
      %v5986 = vsub.s32 0, %v5985
      %v5987 = vrot.slane %v5983, %v5986
      %v5988 = vadd.f32 %v5981, %v5987
      %v5989 = vadd.f32 %v5982, %v5987
      %v5990 = vmul.f32 %v5988, 0.5
      %v5991 = vmul.f32 %v5989, 0.5
      %v5992 = vtanh.pop %v5990
      %v5993 = vtanh.pop %v5991
      %v5994 = vmul.f32 %v5992, 0.5
      %v5995 = vmul.f32 %v5993, 0.5
      %v5996 = vadd.f32 %v5994, 0.5
      %v5997 = vadd.f32 %v5995, 0.5
      %v5998 = vmul.f32 %v5988, %v5996
      %v5999 = vmul.f32 %v5989, %v5997
      %6000 = vst [vmem:[#allocation4 + $0x30] sm:$0xff] %v5998
      %6001 = vst [vmem:[#allocation4 + $0x38] sm:$0x7f] %v5999
      %s6002 = scalar_lea.vmem [#allocation4], 48
      %v6003 = vld [vmem:[%s6002] ss:$2 sm:$0x7f]
      %v6004 = vld [vmem:[%s4] sm:$0xff]
      %v6005 = vld [vmem:[%s4 + $0x8] sm:$0xff]
      %v6006 = vld [vmem:[%s4 + $0x10] sm:$0xff]
      %v6007 = vld [vmem:[%s4 + $0x18] sm:$0xff]
      %v6008 = vld [vmem:[%s4 + $0x20] sm:$0xff]
      %v6009 = vld [vmem:[%s4 + $0x28] sm:$0xff]
      %v6010 = vld [vmem:[%s4 + $0x30] sm:$0xff]
      %v6011 = vld [vmem:[%s4 + $0x38] sm:$0xff]
      %v6012 = vld [vmem:[%s4 + $0x40] sm:$0xff]
      %v6013 = vld [vmem:[%s4 + $0x48] sm:$0xff]
      %v6014 = vld [vmem:[%s4 + $0x50] sm:$0xff]
      %v6015 = vld [vmem:[%s4 + $0x58] sm:$0xff]
      %v6016 = vld [vmem:[%s4 + $0x60] sm:$0xff]
      %v6017 = vld [vmem:[%s4 + $0x68] sm:$0xff]
      %v6018 = vld [vmem:[%s4 + $0x70] sm:$0xff]
      %v6019 = vld [vmem:[%s4 + $0x78] sm:$0xff]
      %s6020 = scalar_lea.vmem [#allocation4], 49
      %v6021 = vld [vmem:[%s6020] ss:$2 sm:$0x7f]
      %v6022 = vld [vmem:[%s1682] sm:$0xff]
      %v6023 = vld [vmem:[%s1682 + $0x8] sm:$0xff]
      %v6024 = vld [vmem:[%s1682 + $0x10] sm:$0xff]
      %v6025 = vld [vmem:[%s1682 + $0x18] sm:$0xff]
      %v6026 = vld [vmem:[%s1682 + $0x20] sm:$0xff]
      %v6027 = vld [vmem:[%s1682 + $0x28] sm:$0xff]
      %v6028 = vld [vmem:[%s1682 + $0x30] sm:$0xff]
      %v6029 = vld [vmem:[%s1682 + $0x38] sm:$0xff]
      %v6030 = vld [vmem:[%s1682 + $0x40] sm:$0xff]
      %v6031 = vld [vmem:[%s1682 + $0x48] sm:$0xff]
      %v6032 = vld [vmem:[%s1682 + $0x50] sm:$0xff]
      %v6033 = vld [vmem:[%s1682 + $0x58] sm:$0xff]
      %v6034 = vld [vmem:[%s1682 + $0x60] sm:$0xff]
      %v6035 = vld [vmem:[%s1682 + $0x68] sm:$0xff]
      %v6036 = vld [vmem:[%s1682 + $0x70] sm:$0xff]
      %v6037 = vld [vmem:[%s1682 + $0x78] sm:$0xff]
      %6038 = vmatprep.subr.mxu0 0.0
      %6039 = vmatpush1.msra.mxu0 %v6022
      %6040 = vmatprep.subr.mxu0 0.0
      %6041 = vmatpush1.msra.mxu0 %v6023
      %6042 = vmatprep.subr.mxu0 0.0
      %6043 = vmatpush1.msra.mxu0 %v6024
      %6044 = vmatprep.subr.mxu0 0.0
      %6045 = vmatpush1.msra.mxu0 %v6025
      %6046 = vmatprep.subr.mxu0 0.0
      %6047 = vmatpush1.msra.mxu0 %v6026
      %6048 = vmatprep.subr.mxu0 0.0
      %6049 = vmatpush1.msra.mxu0 %v6027
      %6050 = vmatprep.subr.mxu0 0.0
      %6051 = vmatpush1.msra.mxu0 %v6028
      %6052 = vmatprep.subr.mxu0 0.0
      %6053 = vmatpush1.msra.mxu0 %v6029
      %6054 = vmatprep.subr.mxu0 0.0
      %6055 = vmatpush1.msra.mxu0 %v6030
      %6056 = vmatprep.subr.mxu0 0.0
      %6057 = vmatpush1.msra.mxu0 %v6031
      %6058 = vmatprep.subr.mxu0 0.0
      %6059 = vmatpush1.msra.mxu0 %v6032
      %6060 = vmatprep.subr.mxu0 0.0
      %6061 = vmatpush1.msra.mxu0 %v6033
      %6062 = vmatprep.subr.mxu0 0.0
      %6063 = vmatpush1.msra.mxu0 %v6034
      %6064 = vmatprep.subr.mxu0 0.0
      %6065 = vmatpush1.msra.mxu0 %v6035
      %6066 = vmatprep.subr.mxu0 0.0
      %6067 = vmatpush1.msra.mxu0 %v6036
      %6068 = vmatprep.subr.mxu0 0.0
      %6069 = vmatpush1.msra.mxu0 %v6037
      %6070 = vmatprep.subr.mxu0 0.0
      %6071 = vmatpush1.msra.mxu0 0.0
      %6072 = vmatprep.subr.mxu0 0.0
      %6073 = vmatpush1.msra.mxu0 0.0
      %6074 = vmatprep.subr.mxu0 0.0
      %6075 = vmatpush1.msra.mxu0 0.0
      %6076 = vmatprep.subr.mxu0 0.0
      %6077 = vmatpush1.msra.mxu0 0.0
      %6078 = vmatprep.subr.mxu0 0.0
      %6079 = vmatpush1.msra.mxu0 0.0
      %6080 = vmatprep.subr.mxu0 0.0
      %6081 = vmatpush1.msra.mxu0 0.0
      %6082 = vmatprep.subr.mxu0 0.0
      %6083 = vmatpush1.msra.mxu0 0.0
      %6084 = vmatprep.subr.mxu0 0.0
      %6085 = vmatpush1.msra.mxu0 0.0
      %6086 = vmatprep.subr.mxu0 0.0
      %6087 = vmatpush1.msra.mxu0 0.0
      %6088 = vmatprep.subr.mxu0 0.0
      %6089 = vmatpush1.msra.mxu0 0.0
      %6090 = vmatprep.subr.mxu0 0.0
      %6091 = vmatpush1.msra.mxu0 0.0
      %6092 = vmatprep.subr.mxu0 0.0
      %6093 = vmatpush1.msra.mxu0 0.0
      %6094 = vmatprep.subr.mxu0 0.0
      %6095 = vmatpush1.msra.mxu0 0.0
      %6096 = vmatprep.subr.mxu0 0.0
      %6097 = vmatpush1.msra.mxu0 0.0
      %6098 = vmatprep.subr.mxu0 0.0
      %6099 = vmatpush1.msra.mxu0 0.0
      %6100 = vmatprep.subr.mxu0 0.0
      %6101 = vmatpush1.msra.mxu0 0.0
      %6102 = vmatprep.mubr.f32.mxu0 0.0
      %6103 = vmatmul.mubr.f32.gmra.mrb[0].mxu0 %v6021
      %v6104 = vpop.f32.mrb[0].mxu0
      %v6105 = vadd.f32 0.0, %v6104
      %v6106 = vpop.f32.mrb[0].mxu0
      %6107 = vdwg.mxu0
      %6108 = vmatprep.subr.mxu0 0.0
      %6109 = vmatpush1.msra.mxu0 %v6004
      %6110 = vmatprep.subr.mxu0 0.0
      %6111 = vmatpush1.msra.mxu0 %v6005
      %6112 = vmatprep.subr.mxu0 0.0
      %6113 = vmatpush1.msra.mxu0 %v6006
      %6114 = vmatprep.subr.mxu0 0.0
      %6115 = vmatpush1.msra.mxu0 %v6007
      %6116 = vmatprep.subr.mxu0 0.0
      %6117 = vmatpush1.msra.mxu0 %v6008
      %6118 = vmatprep.subr.mxu0 0.0
      %6119 = vmatpush1.msra.mxu0 %v6009
      %6120 = vmatprep.subr.mxu0 0.0
      %6121 = vmatpush1.msra.mxu0 %v6010
      %6122 = vmatprep.subr.mxu0 0.0
      %6123 = vmatpush1.msra.mxu0 %v6011
      %6124 = vmatprep.subr.mxu0 0.0
      %6125 = vmatpush1.msra.mxu0 %v6012
      %6126 = vmatprep.subr.mxu0 0.0
      %6127 = vmatpush1.msra.mxu0 %v6013
      %6128 = vmatprep.subr.mxu0 0.0
      %6129 = vmatpush1.msra.mxu0 %v6014
      %6130 = vmatprep.subr.mxu0 0.0
      %6131 = vmatpush1.msra.mxu0 %v6015
      %6132 = vmatprep.subr.mxu0 0.0
      %6133 = vmatpush1.msra.mxu0 %v6016
      %6134 = vmatprep.subr.mxu0 0.0
      %6135 = vmatpush1.msra.mxu0 %v6017
      %6136 = vmatprep.subr.mxu0 0.0
      %6137 = vmatpush1.msra.mxu0 %v6018
      %6138 = vmatprep.subr.mxu0 0.0
      %6139 = vmatpush1.msra.mxu0 %v6019
      %6140 = vmatprep.subr.mxu0 0.0
      %6141 = vmatpush1.msra.mxu0 0.0
      %6142 = vmatprep.subr.mxu0 0.0
      %6143 = vmatpush1.msra.mxu0 0.0
      %6144 = vmatprep.subr.mxu0 0.0
      %6145 = vmatpush1.msra.mxu0 0.0
      %6146 = vmatprep.subr.mxu0 0.0
      %6147 = vmatpush1.msra.mxu0 0.0
      %6148 = vmatprep.subr.mxu0 0.0
      %6149 = vmatpush1.msra.mxu0 0.0
      %6150 = vmatprep.subr.mxu0 0.0
      %6151 = vmatpush1.msra.mxu0 0.0
      %6152 = vmatprep.subr.mxu0 0.0
      %6153 = vmatpush1.msra.mxu0 0.0
      %6154 = vmatprep.subr.mxu0 0.0
      %6155 = vmatpush1.msra.mxu0 0.0
      %6156 = vmatprep.subr.mxu0 0.0
      %6157 = vmatpush1.msra.mxu0 0.0
      %6158 = vmatprep.subr.mxu0 0.0
      %6159 = vmatpush1.msra.mxu0 0.0
      %6160 = vmatprep.subr.mxu0 0.0
      %6161 = vmatpush1.msra.mxu0 0.0
      %6162 = vmatprep.subr.mxu0 0.0
      %6163 = vmatpush1.msra.mxu0 0.0
      %6164 = vmatprep.subr.mxu0 0.0
      %6165 = vmatpush1.msra.mxu0 0.0
      %6166 = vmatprep.subr.mxu0 0.0
      %6167 = vmatpush1.msra.mxu0 0.0
      %6168 = vmatprep.subr.mxu0 0.0
      %6169 = vmatpush1.msra.mxu0 0.0
      %6170 = vmatprep.subr.mxu0 0.0
      %6171 = vmatpush1.msra.mxu0 0.0
      %6172 = vmatprep.mubr.f32.mxu0 0.0
      %6173 = vmatmul.mubr.f32.gmra.mrb[0].mxu0 %v6003
      %v6174 = vpop.f32.mrb[0].mxu0
      %v6175 = vadd.f32 %v6105, %v6174
      %v6176 = vpop.f32.mrb[0].mxu0
      %6177 = vdwg.mxu0
      %s6178 = scalar_lea.vmem [#allocation4], 50
      %v6179 = vld [vmem:[%s6178] ss:$2 sm:$0x7f]
      %v6180 = vld [vmem:[%s1841] sm:$0xff]
      %v6181 = vld [vmem:[%s1841 + $0x8] sm:$0xff]
      %v6182 = vld [vmem:[%s1841 + $0x10] sm:$0xff]
      %v6183 = vld [vmem:[%s1841 + $0x18] sm:$0xff]
      %v6184 = vld [vmem:[%s1841 + $0x20] sm:$0xff]
      %v6185 = vld [vmem:[%s1841 + $0x28] sm:$0xff]
      %v6186 = vld [vmem:[%s1841 + $0x30] sm:$0xff]
      %v6187 = vld [vmem:[%s1841 + $0x38] sm:$0xff]
      %v6188 = vld [vmem:[%s1841 + $0x40] sm:$0xff]
      %v6189 = vld [vmem:[%s1841 + $0x48] sm:$0xff]
      %v6190 = vld [vmem:[%s1841 + $0x50] sm:$0xff]
      %v6191 = vld [vmem:[%s1841 + $0x58] sm:$0xff]
      %v6192 = vld [vmem:[%s1841 + $0x60] sm:$0xff]
      %v6193 = vld [vmem:[%s1841 + $0x68] sm:$0xff]
      %v6194 = vld [vmem:[%s1841 + $0x70] sm:$0xff]
      %v6195 = vld [vmem:[%s1841 + $0x78] sm:$0xff]
      %6196 = vmatprep.subr.mxu0 0.0
      %6197 = vmatpush1.msra.mxu0 %v6180
      %6198 = vmatprep.subr.mxu0 0.0
      %6199 = vmatpush1.msra.mxu0 %v6181
      %6200 = vmatprep.subr.mxu0 0.0
      %6201 = vmatpush1.msra.mxu0 %v6182
      %6202 = vmatprep.subr.mxu0 0.0
      %6203 = vmatpush1.msra.mxu0 %v6183
      %6204 = vmatprep.subr.mxu0 0.0
      %6205 = vmatpush1.msra.mxu0 %v6184
      %6206 = vmatprep.subr.mxu0 0.0
      %6207 = vmatpush1.msra.mxu0 %v6185
      %6208 = vmatprep.subr.mxu0 0.0
      %6209 = vmatpush1.msra.mxu0 %v6186
      %6210 = vmatprep.subr.mxu0 0.0
      %6211 = vmatpush1.msra.mxu0 %v6187
      %6212 = vmatprep.subr.mxu0 0.0
      %6213 = vmatpush1.msra.mxu0 %v6188
      %6214 = vmatprep.subr.mxu0 0.0
      %6215 = vmatpush1.msra.mxu0 %v6189
      %6216 = vmatprep.subr.mxu0 0.0
      %6217 = vmatpush1.msra.mxu0 %v6190
      %6218 = vmatprep.subr.mxu0 0.0
      %6219 = vmatpush1.msra.mxu0 %v6191
      %6220 = vmatprep.subr.mxu0 0.0
      %6221 = vmatpush1.msra.mxu0 %v6192
      %6222 = vmatprep.subr.mxu0 0.0
      %6223 = vmatpush1.msra.mxu0 %v6193
      %6224 = vmatprep.subr.mxu0 0.0
      %6225 = vmatpush1.msra.mxu0 %v6194
      %6226 = vmatprep.subr.mxu0 0.0
      %6227 = vmatpush1.msra.mxu0 %v6195
      %6228 = vmatprep.subr.mxu0 0.0
      %6229 = vmatpush1.msra.mxu0 0.0
      %6230 = vmatprep.subr.mxu0 0.0
      %6231 = vmatpush1.msra.mxu0 0.0
      %6232 = vmatprep.subr.mxu0 0.0
      %6233 = vmatpush1.msra.mxu0 0.0
      %6234 = vmatprep.subr.mxu0 0.0
      %6235 = vmatpush1.msra.mxu0 0.0
      %6236 = vmatprep.subr.mxu0 0.0
      %6237 = vmatpush1.msra.mxu0 0.0
      %6238 = vmatprep.subr.mxu0 0.0
      %6239 = vmatpush1.msra.mxu0 0.0
      %6240 = vmatprep.subr.mxu0 0.0
      %6241 = vmatpush1.msra.mxu0 0.0
      %6242 = vmatprep.subr.mxu0 0.0
      %6243 = vmatpush1.msra.mxu0 0.0
      %6244 = vmatprep.subr.mxu0 0.0
      %6245 = vmatpush1.msra.mxu0 0.0
      %6246 = vmatprep.subr.mxu0 0.0
      %6247 = vmatpush1.msra.mxu0 0.0
      %6248 = vmatprep.subr.mxu0 0.0
      %6249 = vmatpush1.msra.mxu0 0.0
      %6250 = vmatprep.subr.mxu0 0.0
      %6251 = vmatpush1.msra.mxu0 0.0
      %6252 = vmatprep.subr.mxu0 0.0
      %6253 = vmatpush1.msra.mxu0 0.0
      %6254 = vmatprep.subr.mxu0 0.0
      %6255 = vmatpush1.msra.mxu0 0.0
      %6256 = vmatprep.subr.mxu0 0.0
      %6257 = vmatpush1.msra.mxu0 0.0
      %6258 = vmatprep.subr.mxu0 0.0
      %6259 = vmatpush1.msra.mxu0 0.0
      %6260 = vmatprep.mubr.f32.mxu0 0.0
      %6261 = vmatmul.mubr.f32.gmra.mrb[0].mxu0 %v6179
      %v6262 = vpop.f32.mrb[0].mxu0
      %v6263 = vadd.f32 0.0, %v6262
      %v6264 = vpop.f32.mrb[0].mxu0
      %6265 = vdwg.mxu0
      %v6266 = vadd.f32 %v6175, %v6263
      %v6267 = vld [vmem:[%s6 + $0x3] sm:$0x1]
      %v6268 = vlaneseq
      %v6269 = vshrl.u32 %v6268, 7
      %v6270 = vsub.s32 0, %v6269
      %v6271 = vrot.slane %v6267, %v6270
      %v6272 = vadd.f32 %v6266, %v6271
      %v6273 = vmul.f32 %v6272, 0.5
      %v6274 = vtanh.pop %v6273
      %v6275 = vmul.f32 %v6274, 0.5
      %v6276 = vadd.f32 %v6275, 0.5
      %v6277 = vmul.f32 %v6272, %v6276
      %6278 = vst [vmem:[#allocation5 + $0x18] sm:$0x7f] %v6277
      %s6279 = scalar_lea.vmem [#allocation5], 24
      %v6280 = vld [vmem:[%s6279] ss:$2 sm:$0x7]
      %v6281 = vld [vmem:[%s5] sm:$0xff]
      %v6282 = vld [vmem:[%s5 + $0x8] sm:$0xff]
      %v6283 = vld [vmem:[%s5 + $0x10] sm:$0xff]
      %v6284 = vld [vmem:[%s5 + $0x18] sm:$0xff]
      %v6285 = vld [vmem:[%s5 + $0x20] sm:$0xff]
      %v6286 = vld [vmem:[%s5 + $0x28] sm:$0xff]
      %v6287 = vld [vmem:[%s5 + $0x30] sm:$0xff]
      %v6288 = vld [vmem:[%s5 + $0x38] sm:$0xff]
      %v6289 = vld [vmem:[%s5 + $0x40] sm:$0xff]
      %v6290 = vld [vmem:[%s5 + $0x48] sm:$0xff]
      %v6291 = vld [vmem:[%s5 + $0x50] sm:$0xff]
      %v6292 = vld [vmem:[%s5 + $0x58] sm:$0xff]
      %v6293 = vld [vmem:[%s5 + $0x60] sm:$0xff]
      %v6294 = vld [vmem:[%s5 + $0x68] sm:$0xff]
      %v6295 = vld [vmem:[%s5 + $0x70] sm:$0xff]
      %v6296 = vld [vmem:[%s5 + $0x78] sm:$0xff]
      %s6297 = scalar_lea.vmem [#allocation5], 25
      %v6298 = vld [vmem:[%s6297] ss:$2 sm:$0x7]
      %v6299 = vld [vmem:[%s1960] sm:$0xff]
      %v6300 = vld [vmem:[%s1960 + $0x8] sm:$0xff]
      %v6301 = vld [vmem:[%s1960 + $0x10] sm:$0xff]
      %v6302 = vld [vmem:[%s1960 + $0x18] sm:$0xff]
      %v6303 = vld [vmem:[%s1960 + $0x20] sm:$0xff]
      %v6304 = vld [vmem:[%s1960 + $0x28] sm:$0xff]
      %v6305 = vld [vmem:[%s1960 + $0x30] sm:$0xff]
      %v6306 = vld [vmem:[%s1960 + $0x38] sm:$0xff]
      %v6307 = vld [vmem:[%s1960 + $0x40] sm:$0xff]
      %v6308 = vld [vmem:[%s1960 + $0x48] sm:$0xff]
      %v6309 = vld [vmem:[%s1960 + $0x50] sm:$0xff]
      %v6310 = vld [vmem:[%s1960 + $0x58] sm:$0xff]
      %v6311 = vld [vmem:[%s1960 + $0x60] sm:$0xff]
      %v6312 = vld [vmem:[%s1960 + $0x68] sm:$0xff]
      %v6313 = vld [vmem:[%s1960 + $0x70] sm:$0xff]
      %v6314 = vld [vmem:[%s1960 + $0x78] sm:$0xff]
      %6315 = vmatprep.subr.mxu0 0.0
      %6316 = vmatpush1.msra.mxu0 %v6299
      %6317 = vmatprep.subr.mxu0 0.0
      %6318 = vmatpush1.msra.mxu0 %v6300
      %6319 = vmatprep.subr.mxu0 0.0
      %6320 = vmatpush1.msra.mxu0 %v6301
      %6321 = vmatprep.subr.mxu0 0.0
      %6322 = vmatpush1.msra.mxu0 %v6302
      %6323 = vmatprep.subr.mxu0 0.0
      %6324 = vmatpush1.msra.mxu0 %v6303
      %6325 = vmatprep.subr.mxu0 0.0
      %6326 = vmatpush1.msra.mxu0 %v6304
      %6327 = vmatprep.subr.mxu0 0.0
      %6328 = vmatpush1.msra.mxu0 %v6305
      %6329 = vmatprep.subr.mxu0 0.0
      %6330 = vmatpush1.msra.mxu0 %v6306
      %6331 = vmatprep.subr.mxu0 0.0
      %6332 = vmatpush1.msra.mxu0 %v6307
      %6333 = vmatprep.subr.mxu0 0.0
      %6334 = vmatpush1.msra.mxu0 %v6308
      %6335 = vmatprep.subr.mxu0 0.0
      %6336 = vmatpush1.msra.mxu0 %v6309
      %6337 = vmatprep.subr.mxu0 0.0
      %6338 = vmatpush1.msra.mxu0 %v6310
      %6339 = vmatprep.subr.mxu0 0.0
      %6340 = vmatpush1.msra.mxu0 %v6311
      %6341 = vmatprep.subr.mxu0 0.0
      %6342 = vmatpush1.msra.mxu0 %v6312
      %6343 = vmatprep.subr.mxu0 0.0
      %6344 = vmatpush1.msra.mxu0 %v6313
      %6345 = vmatprep.subr.mxu0 0.0
      %6346 = vmatpush1.msra.mxu0 %v6314
      %6347 = vmatprep.subr.mxu0 0.0
      %6348 = vmatpush1.msra.mxu0 0.0
      %6349 = vmatprep.subr.mxu0 0.0
      %6350 = vmatpush1.msra.mxu0 0.0
      %6351 = vmatprep.subr.mxu0 0.0
      %6352 = vmatpush1.msra.mxu0 0.0
      %6353 = vmatprep.subr.mxu0 0.0
      %6354 = vmatpush1.msra.mxu0 0.0
      %6355 = vmatprep.subr.mxu0 0.0
      %6356 = vmatpush1.msra.mxu0 0.0
      %6357 = vmatprep.subr.mxu0 0.0
      %6358 = vmatpush1.msra.mxu0 0.0
      %6359 = vmatprep.subr.mxu0 0.0
      %6360 = vmatpush1.msra.mxu0 0.0
      %6361 = vmatprep.subr.mxu0 0.0
      %6362 = vmatpush1.msra.mxu0 0.0
      %6363 = vmatprep.subr.mxu0 0.0
      %6364 = vmatpush1.msra.mxu0 0.0
      %6365 = vmatprep.subr.mxu0 0.0
      %6366 = vmatpush1.msra.mxu0 0.0
      %6367 = vmatprep.subr.mxu0 0.0
      %6368 = vmatpush1.msra.mxu0 0.0
      %6369 = vmatprep.subr.mxu0 0.0
      %6370 = vmatpush1.msra.mxu0 0.0
      %6371 = vmatprep.subr.mxu0 0.0
      %6372 = vmatpush1.msra.mxu0 0.0
      %6373 = vmatprep.subr.mxu0 0.0
      %6374 = vmatpush1.msra.mxu0 0.0
      %6375 = vmatprep.subr.mxu0 0.0
      %6376 = vmatpush1.msra.mxu0 0.0
      %6377 = vmatprep.subr.mxu0 0.0
      %6378 = vmatpush1.msra.mxu0 0.0
      %6379 = vmatprep.mubr.f32.mxu0 0.0
      %6380 = vmatmul.mubr.f32.gmra.mrb[0].mxu0 %v6298
      %v6381 = vpop.f32.mrb[0].mxu0
      %v6382 = vadd.f32 0.0, %v6381
      %v6383 = vpop.f32.mrb[0].mxu0
      %6384 = vdwg.mxu0
      %6385 = vmatprep.subr.mxu0 0.0
      %6386 = vmatpush1.msra.mxu0 %v6281
      %6387 = vmatprep.subr.mxu0 0.0
      %6388 = vmatpush1.msra.mxu0 %v6282
      %6389 = vmatprep.subr.mxu0 0.0
      %6390 = vmatpush1.msra.mxu0 %v6283
      %6391 = vmatprep.subr.mxu0 0.0
      %6392 = vmatpush1.msra.mxu0 %v6284
      %6393 = vmatprep.subr.mxu0 0.0
      %6394 = vmatpush1.msra.mxu0 %v6285
      %6395 = vmatprep.subr.mxu0 0.0
      %6396 = vmatpush1.msra.mxu0 %v6286
      %6397 = vmatprep.subr.mxu0 0.0
      %6398 = vmatpush1.msra.mxu0 %v6287
      %6399 = vmatprep.subr.mxu0 0.0
      %6400 = vmatpush1.msra.mxu0 %v6288
      %6401 = vmatprep.subr.mxu0 0.0
      %6402 = vmatpush1.msra.mxu0 %v6289
      %6403 = vmatprep.subr.mxu0 0.0
      %6404 = vmatpush1.msra.mxu0 %v6290
      %6405 = vmatprep.subr.mxu0 0.0
      %6406 = vmatpush1.msra.mxu0 %v6291
      %6407 = vmatprep.subr.mxu0 0.0
      %6408 = vmatpush1.msra.mxu0 %v6292
      %6409 = vmatprep.subr.mxu0 0.0
      %6410 = vmatpush1.msra.mxu0 %v6293
      %6411 = vmatprep.subr.mxu0 0.0
      %6412 = vmatpush1.msra.mxu0 %v6294
      %6413 = vmatprep.subr.mxu0 0.0
      %6414 = vmatpush1.msra.mxu0 %v6295
      %6415 = vmatprep.subr.mxu0 0.0
      %6416 = vmatpush1.msra.mxu0 %v6296
      %6417 = vmatprep.subr.mxu0 0.0
      %6418 = vmatpush1.msra.mxu0 0.0
      %6419 = vmatprep.subr.mxu0 0.0
      %6420 = vmatpush1.msra.mxu0 0.0
      %6421 = vmatprep.subr.mxu0 0.0
      %6422 = vmatpush1.msra.mxu0 0.0
      %6423 = vmatprep.subr.mxu0 0.0
      %6424 = vmatpush1.msra.mxu0 0.0
      %6425 = vmatprep.subr.mxu0 0.0
      %6426 = vmatpush1.msra.mxu0 0.0
      %6427 = vmatprep.subr.mxu0 0.0
      %6428 = vmatpush1.msra.mxu0 0.0
      %6429 = vmatprep.subr.mxu0 0.0
      %6430 = vmatpush1.msra.mxu0 0.0
      %6431 = vmatprep.subr.mxu0 0.0
      %6432 = vmatpush1.msra.mxu0 0.0
      %6433 = vmatprep.subr.mxu0 0.0
      %6434 = vmatpush1.msra.mxu0 0.0
      %6435 = vmatprep.subr.mxu0 0.0
      %6436 = vmatpush1.msra.mxu0 0.0
      %6437 = vmatprep.subr.mxu0 0.0
      %6438 = vmatpush1.msra.mxu0 0.0
      %6439 = vmatprep.subr.mxu0 0.0
      %6440 = vmatpush1.msra.mxu0 0.0
      %6441 = vmatprep.subr.mxu0 0.0
      %6442 = vmatpush1.msra.mxu0 0.0
      %6443 = vmatprep.subr.mxu0 0.0
      %6444 = vmatpush1.msra.mxu0 0.0
      %6445 = vmatprep.subr.mxu0 0.0
      %6446 = vmatpush1.msra.mxu0 0.0
      %6447 = vmatprep.subr.mxu0 0.0
      %6448 = vmatpush1.msra.mxu0 0.0
      %6449 = vmatprep.mubr.f32.mxu0 0.0
      %6450 = vmatmul.mubr.f32.gmra.mrb[0].mxu0 %v6280
      %v6451 = vpop.f32.mrb[0].mxu0
      %v6452 = vadd.f32 %v6382, %v6451
      %v6453 = vpop.f32.mrb[0].mxu0
      %6454 = vdwg.mxu0
      %s6455 = scalar_lea.vmem [#allocation5], 26
      %v6456 = vld [vmem:[%s6455] ss:$2 sm:$0x7]
      %v6457 = vld [vmem:[%s2119] sm:$0xff]
      %v6458 = vld [vmem:[%s2119 + $0x8] sm:$0xff]
      %v6459 = vld [vmem:[%s2119 + $0x10] sm:$0xff]
      %v6460 = vld [vmem:[%s2119 + $0x18] sm:$0xff]
      %v6461 = vld [vmem:[%s2119 + $0x20] sm:$0xff]
      %v6462 = vld [vmem:[%s2119 + $0x28] sm:$0xff]
      %v6463 = vld [vmem:[%s2119 + $0x30] sm:$0xff]
      %v6464 = vld [vmem:[%s2119 + $0x38] sm:$0xff]
      %v6465 = vld [vmem:[%s2119 + $0x40] sm:$0xff]
      %v6466 = vld [vmem:[%s2119 + $0x48] sm:$0xff]
      %v6467 = vld [vmem:[%s2119 + $0x50] sm:$0xff]
      %v6468 = vld [vmem:[%s2119 + $0x58] sm:$0xff]
      %v6469 = vld [vmem:[%s2119 + $0x60] sm:$0xff]
      %v6470 = vld [vmem:[%s2119 + $0x68] sm:$0xff]
      %v6471 = vld [vmem:[%s2119 + $0x70] sm:$0xff]
      %v6472 = vld [vmem:[%s2119 + $0x78] sm:$0xff]
      %6473 = vmatprep.subr.mxu0 0.0
      %6474 = vmatpush1.msra.mxu0 %v6457
      %6475 = vmatprep.subr.mxu0 0.0
      %6476 = vmatpush1.msra.mxu0 %v6458
      %6477 = vmatprep.subr.mxu0 0.0
      %6478 = vmatpush1.msra.mxu0 %v6459
      %6479 = vmatprep.subr.mxu0 0.0
      %6480 = vmatpush1.msra.mxu0 %v6460
      %6481 = vmatprep.subr.mxu0 0.0
      %6482 = vmatpush1.msra.mxu0 %v6461
      %6483 = vmatprep.subr.mxu0 0.0
      %6484 = vmatpush1.msra.mxu0 %v6462
      %6485 = vmatprep.subr.mxu0 0.0
      %6486 = vmatpush1.msra.mxu0 %v6463
      %6487 = vmatprep.subr.mxu0 0.0
      %6488 = vmatpush1.msra.mxu0 %v6464
      %6489 = vmatprep.subr.mxu0 0.0
      %6490 = vmatpush1.msra.mxu0 %v6465
      %6491 = vmatprep.subr.mxu0 0.0
      %6492 = vmatpush1.msra.mxu0 %v6466
      %6493 = vmatprep.subr.mxu0 0.0
      %6494 = vmatpush1.msra.mxu0 %v6467
      %6495 = vmatprep.subr.mxu0 0.0
      %6496 = vmatpush1.msra.mxu0 %v6468
      %6497 = vmatprep.subr.mxu0 0.0
      %6498 = vmatpush1.msra.mxu0 %v6469
      %6499 = vmatprep.subr.mxu0 0.0
      %6500 = vmatpush1.msra.mxu0 %v6470
      %6501 = vmatprep.subr.mxu0 0.0
      %6502 = vmatpush1.msra.mxu0 %v6471
      %6503 = vmatprep.subr.mxu0 0.0
      %6504 = vmatpush1.msra.mxu0 %v6472
      %6505 = vmatprep.subr.mxu0 0.0
      %6506 = vmatpush1.msra.mxu0 0.0
      %6507 = vmatprep.subr.mxu0 0.0
      %6508 = vmatpush1.msra.mxu0 0.0
      %6509 = vmatprep.subr.mxu0 0.0
      %6510 = vmatpush1.msra.mxu0 0.0
      %6511 = vmatprep.subr.mxu0 0.0
      %6512 = vmatpush1.msra.mxu0 0.0
      %6513 = vmatprep.subr.mxu0 0.0
      %6514 = vmatpush1.msra.mxu0 0.0
      %6515 = vmatprep.subr.mxu0 0.0
      %6516 = vmatpush1.msra.mxu0 0.0
      %6517 = vmatprep.subr.mxu0 0.0
      %6518 = vmatpush1.msra.mxu0 0.0
      %6519 = vmatprep.subr.mxu0 0.0
      %6520 = vmatpush1.msra.mxu0 0.0
      %6521 = vmatprep.subr.mxu0 0.0
      %6522 = vmatpush1.msra.mxu0 0.0
      %6523 = vmatprep.subr.mxu0 0.0
      %6524 = vmatpush1.msra.mxu0 0.0
      %6525 = vmatprep.subr.mxu0 0.0
      %6526 = vmatpush1.msra.mxu0 0.0
      %6527 = vmatprep.subr.mxu0 0.0
      %6528 = vmatpush1.msra.mxu0 0.0
      %6529 = vmatprep.subr.mxu0 0.0
      %6530 = vmatpush1.msra.mxu0 0.0
      %6531 = vmatprep.subr.mxu0 0.0
      %6532 = vmatpush1.msra.mxu0 0.0
      %6533 = vmatprep.subr.mxu0 0.0
      %6534 = vmatpush1.msra.mxu0 0.0
      %6535 = vmatprep.subr.mxu0 0.0
      %6536 = vmatpush1.msra.mxu0 0.0
      %6537 = vmatprep.mubr.f32.mxu0 0.0
      %6538 = vmatmul.mubr.f32.gmra.mrb[0].mxu0 %v6456
      %v6539 = vpop.f32.mrb[0].mxu0
      %v6540 = vadd.f32 0.0, %v6539
      %v6541 = vpop.f32.mrb[0].mxu0
      %6542 = vdwg.mxu0
      %v6543 = vadd.f32 %v6452, %v6540
      %v6544 = vld [vmem:[%s6 + $0x4] sm:$0x1]
      %v6545 = vlaneseq
      %v6546 = vshrl.u32 %v6545, 7
      %v6547 = vsub.s32 0, %v6546
      %v6548 = vrot.slane %v6544, %v6547
      %v6549 = vadd.f32 %v6543, %v6548
      %s6550 = scalar_lea.vmem %s283, 12
      %6551 = vst [vmem:[%s6550] sm:$0x7] %v6549
      %s6552 = smul.u32 4, %s18
      %p6553 = scmp.lt.s32.totalorder %s6552, 7
      %s6554 = scalar_select %p6553, %s6552, 7
      %s6555 = smul.addr %s6554, 4
      %s6556 = scalar_lea.vmem %s7, %s6555
      // Predicated region
      $region49: #{feature_network_medium.1} parent=47 // pred_check
        %p6557 = pneg %p188
      $region50: #{feature_network_medium.1} parent=47 // pred_check_branch
        %6559 = sbr.rel (%p6557) target = $region52
      $region51: #{feature_network_medium.1} parent=47 // pred_region
        %s6560 = smul.u32 4, %s18
      $region52: #{feature_network_medium.1} parent=47 // pred_fallthru
        _
    $region48: #{feature_network_medium.1} parent=5 // pred_fallthru
      _
    %p6561 = scmp.le.s32.totalorder 2, %s13
    // Predicated region
    $region53: #{feature_network_medium.1} parent=5 // pred_check
      %p6562 = pneg %p6561
    $region54: #{feature_network_medium.1} parent=5 // pred_check_branch
      %6564 = sbr.rel (%p6562) target = $region56
    $region55: #{feature_network_medium.1} parent=5 // pred_region
      %s6565 = ssub.s32 %s13, 2
      // Predicated region
      $region57: #{feature_network_medium.1} parent=55 // pred_check
        %p6566 = pneg %p194
      $region58: #{feature_network_medium.1} parent=55 // pred_check_branch
        %6568 = sbr.rel (%p6566) target = $region60
      $region59: #{feature_network_medium.1} parent=55 // pred_region
        %s6569 = smul.u32 4, %s19
        %p6570 = scmp.lt.s32.totalorder %s6569, 7
        %s6571 = scalar_select %p6570, %s6569, 7
        %s6572 = smul.addr %s6571, 4
        %s6573 = scalar_lea.vmem %s7, %s6572
      $region60: #{feature_network_medium.1} parent=55 // pred_fallthru
        _
    $region56: #{feature_network_medium.1} parent=5 // pred_fallthru
      _
  $region6: #{feature_network_medium.1} parent=0 // loop_footer
    %s17 = sadd.s32 1, %s13
  $region7: #{feature_network_medium.1} parent=0 // loop_footer_branch
    %12 = sbr.rel target = $region3
  $region8: #{feature_network_medium.1} parent=0 // loop_exit
    _

</llo_original>
